<compile_context>
chip_gen: v7x
topology: tpu7x:2x2x1
jax: 0.10.0
libtpu: 0.0.40
codegen_flags: <defaults>
</compile_context>

<pallas_src>
import functools

import jax
import jax.numpy as jnp
from jax.experimental import pallas as pl
from jax.experimental.pallas import tpu as pltpu

C_IN = 3          # xyz
C1, C2, C3 = 64, 128, 1024
F1, F2 = 512, 256
BN_EPS = 1e-5


def _device_tuning():
    """Per-generation (tn_cap, channel_splits, vmem_limit_bytes) for the point MLP."""
    kind = ""
    try:
        kind = jax.devices()[0].device_kind.lower()
    except Exception:
        pass
    if "v7" in kind:
        # v7x: 2 TensorCores, 64 MiB physical / 32 MiB scoped VMEM.  2-way channel
        # split keeps both cores busy at small B and halves the (TN, Csl) f32
        # intermediate (~4 MiB at TN=2048); total working set ~12 MiB.
        return 2048, 2, 32 * 1024 * 1024
    if any(v in kind for v in ("v4", "v5", "v6")):
        # Single TC, 128 MiB VMEM: biggest tile.  Working set at TN=4096:
        # ~16 MiB h3 f32 + ~4 MiB h1/h2 + ~4 MiB lane-padded x (2 buffers)
        # + <1 MiB bf16 weights  -> well under a 64 MiB scoped limit.
        return 4096, 1, 64 * 1024 * 1024
    # Unknown device / interpret mode: conservative but correct everywhere.
    return 2048, 1, 32 * 1024 * 1024


# ----------------------------------------------------------------------------
# Kernels
# ----------------------------------------------------------------------------
def _make_point_mlp_kernel(final_relu: bool):
    """Per-(batch, channel-slice, point-tile) point-wise MLP + running max.

    For one (b, c, k) grid step (trans already folded into w1_eff):
        h1  = relu(x_tile @ W1_eff[b] + b1)          # (TN, 64)
        h2  = relu(h1 @ W2 + b2)                     # (TN, 128)
        h3  = h2 @ W3[:, c-slice]                    # (TN, Csl)  (NO bias, NO relu)
        acc = max(acc, max_over_TN(h3))              # (1, Csl) f32 scratch
    At k == last: out = acc + b3[c-slice], optionally relu'd (hoisted; identical
    math because bias is per-column and max/ReLU commute for monotone ReLU).
    Weights arrive bf16, biases f32.
    """
    def kernel(x_ref, w1_ref, b1_ref, w2_ref, b2_ref, w3_ref, b3_ref,
               o_ref, acc_ref):
        k = pl.program_id(2)

        @pl.when(k == 0)
        def _():
            acc_ref[...] = jnp.full_like(acc_ref, -jnp.inf)

        x = x_ref[...].astype(jnp.bfloat16)                          # (TN, 3)
        h = jnp.dot(x, w1_ref[...], preferred_element_type=jnp.float32)
        h = jnp.maximum(h + b1_ref[...], 0.0)                        # f32 (TN, 64)
        h = jnp.dot(h.astype(jnp.bfloat16), w2_ref[...],
                    preferred_element_type=jnp.float32)
        h = jnp.maximum(h + b2_ref[...], 0.0)                        # f32 (TN, 128)
        # conv3 matmul only; its bias and the optional ReLU are hoisted past the
        # max reduction into the finalize block below.
        h = jnp.dot(h.astype(jnp.bfloat16), w3_ref[...],
                    preferred_element_type=jnp.float32)              # f32 (TN, Csl)
        acc_ref[...] = jnp.maximum(acc_ref[...],
                                   jnp.max(h, axis=0, keepdims=True))

        @pl.when(k == pl.num_programs(2) - 1)
        def _():
            o = acc_ref[...] + b3_ref[...]
            if final_relu:
                o = jnp.maximum(o, 0.0)
            o_ref[...] = o
    return kernel


def _make_head_kernel(apply_log_softmax: bool):
    """3-layer MLP head: relu(BN(fc1)), relu(BN(fc2)), fc3 [+ log_softmax].

    w1/w2 are bf16 (f32 accumulation), w3 and all biases are f32.
    """
    def kernel(x_ref, w1_ref, b1_ref, w2_ref, b2_ref, w3_ref, b3_ref, o_ref):
        h = jnp.dot(x_ref[...].astype(jnp.bfloat16), w1_ref[...],
                    preferred_element_type=jnp.float32) + b1_ref[...]
        h = jnp.maximum(h, 0.0)
        h = jnp.dot(h.astype(jnp.bfloat16), w2_ref[...],
                    preferred_element_type=jnp.float32) + b2_ref[...]
        h = jnp.maximum(h, 0.0)
        o = jnp.dot(h, w3_ref[...], preferred_element_type=jnp.float32) + b3_ref[...]
        if apply_log_softmax:
            m = jnp.max(o, axis=-1, keepdims=True)
            lse = m + jnp.log(jnp.sum(jnp.exp(o - m), axis=-1, keepdims=True))
            o = o - lse
        o_ref[...] = o
    return kernel


# ----------------------------------------------------------------------------
# Pallas wrappers
# ----------------------------------------------------------------------------
def point_mlp(x_bnc, w1_eff, conv_rest, *, final_relu):
    """x_bnc: (B, N, 3) f32.  w1_eff: (1 or B, 3, 64) bf16 (trans pre-folded).
    conv_rest = (b1, w2, b2, w3, b3) with w2/w3 bf16 and biases f32 (1, C).
    Returns the (B, 1024) max-pooled global feature."""
    B, N, _ = x_bnc.shape
    b1, w2, b2, w3, b3 = conv_rest
    tn_cap, nc, vmem_limit = _device_tuning()

    # Tile the point axis: fewest tiles under tn_cap, tile = ceil(N/nk) rounded up
    # to a sublane multiple (minimal edge-pad waste).  Padding edge-replicates the
    # last point: duplicated points give duplicated features, so the max-pool is
    # unchanged.
    nk = pl.cdiv(N, tn_cap)
    tn = ((pl.cdiv(N, nk) + 7) // 8) * 8
    n_pad = nk * tn
    if n_pad != N:
        x_bnc = jnp.pad(x_bnc, ((0, 0), (0, n_pad - N), (0, 0)), mode="edge")

    per_batch_w1 = w1_eff.shape[0] > 1
    w1_map = (lambda b, c, k: (b, 0, 0)) if per_batch_w1 else (lambda b, c, k: (0, 0, 0))

    def const2(a):
        return pl.BlockSpec(a.shape, lambda b, c, k: (0, 0))

    csl = C3 // nc

    out = pl.pallas_call(
        _make_point_mlp_kernel(final_relu),
        out_shape=jax.ShapeDtypeStruct((B, 1, C3), jnp.float32),
        grid=(B, nc, nk),
        in_specs=[
            # NOTE: the (tn, 3) x block is lane-sparse in VMEM (occupies tn x 128
            # lanes -> tn*512 B per buffer); accounted for in the VMEM budget above.
            pl.BlockSpec((None, tn, C_IN), lambda b, c, k: (b, k, 0)),
            pl.BlockSpec((None, 3, C1), w1_map),
            const2(b1), const2(w2), const2(b2),
            pl.BlockSpec((C2, csl), lambda b, c, k: (0, c)),
            pl.BlockSpec((1, csl), lambda b, c, k: (0, c)),
        ],
        out_specs=pl.BlockSpec((None, 1, csl), lambda b, c, k: (b, 0, c)),
        scratch_shapes=[pltpu.VMEM((1, csl), jnp.float32)],
        compiler_params=pltpu.CompilerParams(
            dimension_semantics=("parallel", "parallel", "arbitrary"),
            vmem_limit_bytes=vmem_limit),
    )(x_bnc, w1_eff, b1, w2, b2, w3, b3)
    return out[:, 0, :]                                    # (B, 1024)


def mlp_head(x, fc_params, *, apply_log_softmax):
    """x: (B, 1024) -> (B, out_dim). Pads B up to a sublane multiple (>=8) so the
    head matmuls use sublane-dense M; whole problem fits VMEM -> no grid."""
    w1, b1, w2, b2, w3, b3 = fc_params
    B = x.shape[0]
    out_dim = w3.shape[1]
    bp = max(8, ((B + 7) // 8) * 8)
    if bp != B:
        x = jnp.pad(x, ((0, bp - B), (0, 0)))
    out = pl.pallas_call(
        _make_head_kernel(apply_log_softmax),
        out_shape=jax.ShapeDtypeStruct((bp, out_dim), jnp.float32),
    )(x, w1, b1, w2, b2, w3, b3)
    return out[:B]


def _cast_head_params(fc_params):
    """bf16 weights for fc1/fc2 (MXU), f32 for the final logits layer + biases."""
    w1, b1, w2, b2, w3, b3 = fc_params
    return (w1.astype(jnp.bfloat16), b1, w2.astype(jnp.bfloat16), b2, w3, b3)


def _cast_conv_rest(conv_params):
    """Returns (b1, w2_bf16, b2, w3_bf16, b3) — everything except conv1's weight."""
    _, b1, w2, b2, w3, b3 = conv_params
    return (b1, w2.astype(jnp.bfloat16), b2, w3.astype(jnp.bfloat16), b3)


# ----------------------------------------------------------------------------
# Parameters (deterministic synthetic init; BN folded in eval mode)
# ----------------------------------------------------------------------------
def _init_linear_bn(key, cin, cout, with_bn=True):
    kw, kb, kg, kbe, km, kv = jax.random.split(key, 6)
    w = 0.05 * jax.random.normal(kw, (cin, cout), jnp.float32)
    b = 0.05 * jax.random.normal(kb, (cout,), jnp.float32)
    if with_bn:
        gamma = 1.0 + 0.1 * jax.random.normal(kg, (cout,), jnp.float32)
        beta = 0.1 * jax.random.normal(kbe, (cout,), jnp.float32)
        mean = 0.1 * jax.random.normal(km, (cout,), jnp.float32)
        var = 1.0 + 0.1 * jnp.abs(jax.random.normal(kv, (cout,), jnp.float32))
        scale = gamma / jnp.sqrt(var + BN_EPS)
        w = w * scale[None, :]
        b = b * scale + beta - mean * scale
    return w, b.reshape(1, cout)


def init_params(key, k_classes):
    keys = jax.random.split(key, 12)
    p = {}
    # STN3d conv stack (conv1/2/3 + bn1/2/3)
    p["stn_conv"] = sum((_init_linear_bn(keys[0], C_IN, C1),
                         _init_linear_bn(keys[1], C1, C2),
                         _init_linear_bn(keys[2], C2, C3)), ())
    # STN3d fc stack (fc1+bn4, fc2+bn5, fc3)
    p["stn_fc"] = sum((_init_linear_bn(keys[3], C3, F1),
                       _init_linear_bn(keys[4], F1, F2),
                       _init_linear_bn(keys[5], F2, 9, with_bn=False)), ())
    # PointNetfeat conv stack (conv1/2/3 + bn1/2/3)
    p["feat_conv"] = sum((_init_linear_bn(keys[6], C_IN, C1),
                          _init_linear_bn(keys[7], C1, C2),
                          _init_linear_bn(keys[8], C2, C3)), ())
    # PointNetCls fc stack (fc1+bn1, fc2+bn2, fc3)
    p["cls_fc"] = sum((_init_linear_bn(keys[9], C3, F1),
                       _init_linear_bn(keys[10], F1, F2),
                       _init_linear_bn(keys[11], F2, k_classes, with_bn=False)), ())
    return p


# ----------------------------------------------------------------------------
# Full forward pass (PointNetCls)
# ----------------------------------------------------------------------------
@jax.jit
def pointnet_cls_forward(x_bcn, params):
    """x_bcn: (B, 3, N) like the PyTorch module. Returns (log_probs, trans)."""
    B = x_bcn.shape[0]
    x_bnc = jnp.transpose(x_bcn, (0, 2, 1))                 # (B, N, 3)

    # --- STN3d: its input transform is the identity, so W1_eff == folded conv1 ---
    stn_w1 = params["stn_conv"][0].astype(jnp.bfloat16)[None]        # (1, 3, 64)
    stn_feat = point_mlp(x_bnc, stn_w1, _cast_conv_rest(params["stn_conv"]),
                         final_relu=True)                            # (B, 1024)
    stn_out = mlp_head(stn_feat, _cast_head_params(params["stn_fc"]),
                       apply_log_softmax=False)                      # (B, 9)
    iden = jnp.array([1, 0, 0, 0, 1, 0, 0, 0, 1], jnp.float32)
    trans = (stn_out + iden).reshape(B, 3, 3)

    # --- PointNetfeat (global_feat=True): fold bmm(x, trans) into conv1's weight ---
    #   (x @ trans) @ W1 == x @ (trans @ W1)  -> W1_eff[b] = trans[b] @ W1
    feat_w1 = jnp.einsum("bij,jc->bic", trans,
                         params["feat_conv"][0]).astype(jnp.bfloat16)  # (B, 3, 64)
    feat = point_mlp(x_bnc, feat_w1, _cast_conv_rest(params["feat_conv"]),
                     final_relu=False)                               # (B, 1024)

    # --- classification head ---
    log_probs = mlp_head(feat, _cast_head_params(params["cls_fc"]),
                         apply_log_softmax=True)                     # (B, k)
    return log_probs, trans


if __name__ == "__main__":
    B, N, K = 2, 128, 2          # small shapes: 2 clouds, 128 points, 2 classes
    key = jax.random.PRNGKey(0)
    kx, kp = jax.random.split(key)
    x = jax.random.normal(kx, (B, C_IN, N), jnp.float32)    # PyTorch layout (B,3,N)
    params = init_params(kp, K)

    log_probs, trans = jax.block_until_ready(pointnet_cls_forward(x, params))
    assert log_probs.shape == (B, K) and trans.shape == (B, 3, 3)
    assert bool(jnp.all(jnp.isfinite(log_probs))) and bool(jnp.all(jnp.isfinite(trans)))
    # log_softmax rows must (approximately) sum to 1 in prob space
    assert jnp.allclose(jnp.sum(jnp.exp(log_probs), axis=-1), 1.0, atol=1e-4)
    print("KERNEL_OK")
</pallas_src>

<mosaic_0001>
module attributes {stable_mosaic.version = 11 : i64} {
  func.func @kernel(%arg0: i32, %arg1: i32, %arg2: i32, %arg3: memref<1x128x3xf32, #tpu.memory_space<vmem>>, %arg4: memref<1x3x64xbf16, #tpu.memory_space<vmem>>, %arg5: memref<1x64xf32, #tpu.memory_space<vmem>>, %arg6: memref<64x128xbf16, #tpu.memory_space<vmem>>, %arg7: memref<1x128xf32, #tpu.memory_space<vmem>>, %arg8: memref<128x1024xbf16, #tpu.memory_space<vmem>>, %arg9: memref<1x1024xf32, #tpu.memory_space<vmem>>, %arg10: memref<1x1x1024xf32, #tpu.memory_space<vmem>>, %arg11: memref<1x1024xf32, #tpu.memory_space<vmem>>) attributes {dimension_semantics = [#tpu.dimension_semantics<parallel>, #tpu.dimension_semantics<parallel>, #tpu.dimension_semantics<arbitrary>], iteration_bounds = array<i64: 2, 1, 1>, scalar_prefetch = 0 : i64, scratch_operands = 1 : i64, tpu.core_type = #tpu.core_type<tc>, window_params = [{transform_indices = @transform_0, window_bounds = array<i64: 1, 128, 3>}, {pipeline_mode = #tpu.pipeline_mode<synchronous>, transform_indices = @transform_1, window_bounds = array<i64: 1, 3, 64>}, {pipeline_mode = #tpu.pipeline_mode<synchronous>, transform_indices = @transform_2, window_bounds = array<i64: 1, 64>}, {pipeline_mode = #tpu.pipeline_mode<synchronous>, transform_indices = @transform_3, window_bounds = array<i64: 64, 128>}, {pipeline_mode = #tpu.pipeline_mode<synchronous>, transform_indices = @transform_4, window_bounds = array<i64: 1, 128>}, {transform_indices = @transform_5, window_bounds = array<i64: 128, 1024>}, {transform_indices = @transform_6, window_bounds = array<i64: 1, 1024>}, {transform_indices = @transform_7, window_bounds = array<i64: 1, 1, 1024>}]} {
    %c0_i32 = arith.constant 0 : i32
    %0 = arith.cmpi eq, %arg2, %c0_i32 : i32
    %1 = arith.extui %0 : i1 to i32
    %c0_i32_0 = arith.constant 0 : i32
    %2 = arith.cmpi ne, %1, %c0_i32_0 : i32
    scf.if %2 {
      %cst_25 = arith.constant 0xFF800000 : f32
      %33 = vector.broadcast %cst_25 : f32 to vector<1x1024xf32>
      %c0_26 = arith.constant 0 : index
      %c0_27 = arith.constant 0 : index
      %34 = vector.load %arg11[%c0_26, %c0_27] : memref<1x1024xf32, #tpu.memory_space<vmem>>, vector<1x1024xf32>
      tpu.vector_store %arg11[%c0_26, %c0_27], %33 {strides = array<i32>} : memref<1x1024xf32, #tpu.memory_space<vmem>>, vector<1x1024xf32>,
    } else {
    }
    %c0 = arith.constant 0 : index
    %c0_1 = arith.constant 0 : index
    %c0_2 = arith.constant 0 : index
    %3 = vector.load %arg3[%c0, %c0_1, %c0_2] : memref<1x128x3xf32, #tpu.memory_space<vmem>>, vector<1x128x3xf32>
    %4 = vector.shape_cast %3 : vector<1x128x3xf32> to vector<128x3xf32>
    %5 = arith.truncf %4 : vector<128x3xf32> to vector<128x3xbf16>
    %c0_3 = arith.constant 0 : index
    %c0_4 = arith.constant 0 : index
    %c0_5 = arith.constant 0 : index
    %6 = vector.load %arg4[%c0_3, %c0_4, %c0_5] : memref<1x3x64xbf16, #tpu.memory_space<vmem>>, vector<1x3x64xbf16>
    %7 = vector.shape_cast %6 : vector<1x3x64xbf16> to vector<3x64xbf16>
    %cst = arith.constant dense<0.000000e+00> : vector<128x64xf32>
    %8 = tpu.matmul %5, %7, %cst {dimension_numbers = #tpu.dot_dimension_numbers<[1], [0], [0], [1], [0, 0, 1, 1], [], []>} : vector<128x3xbf16>, vector<3x64xbf16>, vector<128x64xf32> -> vector<128x64xf32>
    %c0_6 = arith.constant 0 : index
    %c0_7 = arith.constant 0 : index
    %9 = vector.load %arg5[%c0_6, %c0_7] : memref<1x64xf32, #tpu.memory_space<vmem>>, vector<1x64xf32>
    %10 = vector.broadcast %9 : vector<1x64xf32> to vector<128x64xf32>
    %11 = arith.addf %8, %10 : vector<128x64xf32>
    %cst_8 = arith.constant 0.000000e+00 : f32
    %12 = vector.broadcast %cst_8 : f32 to vector<128x64xf32>
    %13 = arith.maximumf %11, %12 : vector<128x64xf32>
    %14 = arith.truncf %13 : vector<128x64xf32> to vector<128x64xbf16>
    %c0_9 = arith.constant 0 : index
    %c0_10 = arith.constant 0 : index
    %15 = vector.load %arg6[%c0_9, %c0_10] : memref<64x128xbf16, #tpu.memory_space<vmem>>, vector<64x128xbf16>
    %cst_11 = arith.constant dense<0.000000e+00> : vector<128x128xf32>
    %16 = tpu.matmul %14, %15, %cst_11 {dimension_numbers = #tpu.dot_dimension_numbers<[1], [0], [0], [1], [0, 0, 1, 1], [], []>} : vector<128x64xbf16>, vector<64x128xbf16>, vector<128x128xf32> -> vector<128x128xf32>
    %c0_12 = arith.constant 0 : index
    %c0_13 = arith.constant 0 : index
    %17 = vector.load %arg7[%c0_12, %c0_13] : memref<1x128xf32, #tpu.memory_space<vmem>>, vector<1x128xf32>
    %18 = vector.broadcast %17 : vector<1x128xf32> to vector<128x128xf32>
    %19 = arith.addf %16, %18 : vector<128x128xf32>
    %cst_14 = arith.constant 0.000000e+00 : f32
    %20 = vector.broadcast %cst_14 : f32 to vector<128x128xf32>
    %21 = arith.maximumf %19, %20 : vector<128x128xf32>
    %22 = arith.truncf %21 : vector<128x128xf32> to vector<128x128xbf16>
    %c0_15 = arith.constant 0 : index
    %c0_16 = arith.constant 0 : index
    %23 = vector.load %arg8[%c0_15, %c0_16] : memref<128x1024xbf16, #tpu.memory_space<vmem>>, vector<128x1024xbf16>
    %cst_17 = arith.constant dense<0.000000e+00> : vector<128x1024xf32>
    %24 = tpu.matmul %22, %23, %cst_17 {dimension_numbers = #tpu.dot_dimension_numbers<[1], [0], [0], [1], [0, 0, 1, 1], [], []>} : vector<128x128xbf16>, vector<128x1024xbf16>, vector<128x1024xf32> -> vector<128x1024xf32>
    %c0_18 = arith.constant 0 : index
    %c0_19 = arith.constant 0 : index
    %25 = vector.load %arg11[%c0_18, %c0_19] : memref<1x1024xf32, #tpu.memory_space<vmem>>, vector<1x1024xf32>
    %cst_20 = arith.constant dense<0xFF800000> : vector<1024xf32>
    %26 = vector.multi_reduction <maximumf>, %24, %cst_20 [0] : vector<128x1024xf32> to vector<1024xf32>
    %27 = vector.shape_cast %26 : vector<1024xf32> to vector<1x1024xf32>
    %28 = arith.maximumf %25, %27 : vector<1x1024xf32>
    %c0_21 = arith.constant 0 : index
    %c0_22 = arith.constant 0 : index
    %29 = vector.load %arg11[%c0_21, %c0_22] : memref<1x1024xf32, #tpu.memory_space<vmem>>, vector<1x1024xf32>
    tpu.vector_store %arg11[%c0_21, %c0_22], %28 {strides = array<i32>} : memref<1x1024xf32, #tpu.memory_space<vmem>>, vector<1x1024xf32>,
    %c0_i32_23 = arith.constant 0 : i32
    %30 = arith.cmpi eq, %arg2, %c0_i32_23 : i32
    %31 = arith.extui %30 : i1 to i32
    %c0_i32_24 = arith.constant 0 : i32
    %32 = arith.cmpi ne, %31, %c0_i32_24 : i32
    scf.if %32 {
      %c0_25 = arith.constant 0 : index
      %c0_26 = arith.constant 0 : index
      %33 = vector.load %arg11[%c0_25, %c0_26] : memref<1x1024xf32, #tpu.memory_space<vmem>>, vector<1x1024xf32>
      %c0_27 = arith.constant 0 : index
      %c0_28 = arith.constant 0 : index
      %34 = vector.load %arg9[%c0_27, %c0_28] : memref<1x1024xf32, #tpu.memory_space<vmem>>, vector<1x1024xf32>
      %35 = arith.addf %33, %34 : vector<1x1024xf32>
      %cst_29 = arith.constant 0.000000e+00 : f32
      %36 = vector.broadcast %cst_29 : f32 to vector<1x1024xf32>
      %37 = arith.maximumf %35, %36 : vector<1x1024xf32>
      %c0_30 = arith.constant 0 : index
      %c0_31 = arith.constant 0 : index
      %c0_32 = arith.constant 0 : index
      %38 = vector.load %arg10[%c0_30, %c0_31, %c0_32] : memref<1x1x1024xf32, #tpu.memory_space<vmem>>, vector<1x1x1024xf32>
      %39 = vector.shape_cast %38 : vector<1x1x1024xf32> to vector<1x1024xf32>
      %40 = vector.shape_cast %37 : vector<1x1024xf32> to vector<1x1x1024xf32>
      tpu.vector_store %arg10[%c0_30, %c0_31, %c0_32], %40 {strides = array<i32>} : memref<1x1x1024xf32, #tpu.memory_space<vmem>>, vector<1x1x1024xf32>,
    } else {
    }
    return
  }
  func.func @transform_0(%arg0: i32, %arg1: i32, %arg2: i32) -> (i32, i32, i32) {
    %c0_i32 = arith.constant 0 : i32
    %c0_i32_0 = arith.constant 0 : i32
    return %arg0, %arg2, %c0_i32 : i32, i32, i32
  }
  func.func @transform_1(%arg0: i32, %arg1: i32, %arg2: i32) -> (i32, i32, i32) {
    %c0_i32 = arith.constant 0 : i32
    %c0_i32_0 = arith.constant 0 : i32
    %c0_i32_1 = arith.constant 0 : i32
    %c0_i32_2 = arith.constant 0 : i32
    return %c0_i32, %c0_i32_0, %c0_i32_1 : i32, i32, i32
  }
  func.func @transform_2(%arg0: i32, %arg1: i32, %arg2: i32) -> (i32, i32) {
    %c0_i32 = arith.constant 0 : i32
    %c0_i32_0 = arith.constant 0 : i32
    %c0_i32_1 = arith.constant 0 : i32
    return %c0_i32, %c0_i32_0 : i32, i32
  }
  func.func @transform_3(%arg0: i32, %arg1: i32, %arg2: i32) -> (i32, i32) {
    %c0_i32 = arith.constant 0 : i32
    %c0_i32_0 = arith.constant 0 : i32
    %c0_i32_1 = arith.constant 0 : i32
    return %c0_i32, %c0_i32_0 : i32, i32
  }
  func.func @transform_4(%arg0: i32, %arg1: i32, %arg2: i32) -> (i32, i32) {
    %c0_i32 = arith.constant 0 : i32
    %c0_i32_0 = arith.constant 0 : i32
    %c0_i32_1 = arith.constant 0 : i32
    return %c0_i32, %c0_i32_0 : i32, i32
  }
  func.func @transform_5(%arg0: i32, %arg1: i32, %arg2: i32) -> (i32, i32) {
    %c0_i32 = arith.constant 0 : i32
    %c0_i32_0 = arith.constant 0 : i32
    return %c0_i32, %arg1 : i32, i32
  }
  func.func @transform_6(%arg0: i32, %arg1: i32, %arg2: i32) -> (i32, i32) {
    %c0_i32 = arith.constant 0 : i32
    %c0_i32_0 = arith.constant 0 : i32
    return %c0_i32, %arg1 : i32, i32
  }
  func.func @transform_7(%arg0: i32, %arg1: i32, %arg2: i32) -> (i32, i32, i32) {
    %c0_i32 = arith.constant 0 : i32
    %c0_i32_0 = arith.constant 0 : i32
    return %arg0, %c0_i32, %arg1 : i32, i32, i32
  }
}

module attributes {stable_mosaic.version = 11 : i64} {
  func.func @kernel(%arg0: memref<8x1024xf32, #tpu.memory_space<vmem>>, %arg1: memref<1024x512xbf16, #tpu.memory_space<vmem>>, %arg2: memref<1x512xf32, #tpu.memory_space<vmem>>, %arg3: memref<512x256xbf16, #tpu.memory_space<vmem>>, %arg4: memref<1x256xf32, #tpu.memory_space<vmem>>, %arg5: memref<256x9xf32, #tpu.memory_space<vmem>>, %arg6: memref<1x9xf32, #tpu.memory_space<vmem>>, %arg7: memref<8x9xf32, #tpu.memory_space<vmem>>) attributes {dimension_semantics = [], scalar_prefetch = 0 : i64, scratch_operands = 0 : i64, tpu.core_type = #tpu.core_type<tc>} {
    %c0 = arith.constant 0 : index
    %c0_0 = arith.constant 0 : index
    %0 = vector.load %arg0[%c0, %c0_0] : memref<8x1024xf32, #tpu.memory_space<vmem>>, vector<8x1024xf32>
    %1 = arith.truncf %0 : vector<8x1024xf32> to vector<8x1024xbf16>
    %c0_1 = arith.constant 0 : index
    %c0_2 = arith.constant 0 : index
    %2 = vector.load %arg1[%c0_1, %c0_2] : memref<1024x512xbf16, #tpu.memory_space<vmem>>, vector<1024x512xbf16>
    %cst = arith.constant dense<0.000000e+00> : vector<8x512xf32>
    %3 = tpu.matmul %1, %2, %cst {dimension_numbers = #tpu.dot_dimension_numbers<[1], [0], [0], [1], [0, 0, 1, 1], [], []>} : vector<8x1024xbf16>, vector<1024x512xbf16>, vector<8x512xf32> -> vector<8x512xf32>
    %c0_3 = arith.constant 0 : index
    %c0_4 = arith.constant 0 : index
    %4 = vector.load %arg2[%c0_3, %c0_4] : memref<1x512xf32, #tpu.memory_space<vmem>>, vector<1x512xf32>
    %5 = vector.broadcast %4 : vector<1x512xf32> to vector<8x512xf32>
    %6 = arith.addf %3, %5 : vector<8x512xf32>
    %cst_5 = arith.constant 0.000000e+00 : f32
    %7 = vector.broadcast %cst_5 : f32 to vector<8x512xf32>
    %8 = arith.maximumf %6, %7 : vector<8x512xf32>
    %9 = arith.truncf %8 : vector<8x512xf32> to vector<8x512xbf16>
    %c0_6 = arith.constant 0 : index
    %c0_7 = arith.constant 0 : index
    %10 = vector.load %arg3[%c0_6, %c0_7] : memref<512x256xbf16, #tpu.memory_space<vmem>>, vector<512x256xbf16>
    %cst_8 = arith.constant dense<0.000000e+00> : vector<8x256xf32>
    %11 = tpu.matmul %9, %10, %cst_8 {dimension_numbers = #tpu.dot_dimension_numbers<[1], [0], [0], [1], [0, 0, 1, 1], [], []>} : vector<8x512xbf16>, vector<512x256xbf16>, vector<8x256xf32> -> vector<8x256xf32>
    %c0_9 = arith.constant 0 : index
    %c0_10 = arith.constant 0 : index
    %12 = vector.load %arg4[%c0_9, %c0_10] : memref<1x256xf32, #tpu.memory_space<vmem>>, vector<1x256xf32>
    %13 = vector.broadcast %12 : vector<1x256xf32> to vector<8x256xf32>
    %14 = arith.addf %11, %13 : vector<8x256xf32>
    %cst_11 = arith.constant 0.000000e+00 : f32
    %15 = vector.broadcast %cst_11 : f32 to vector<8x256xf32>
    %16 = arith.maximumf %14, %15 : vector<8x256xf32>
    %c0_12 = arith.constant 0 : index
    %c0_13 = arith.constant 0 : index
    %17 = vector.load %arg5[%c0_12, %c0_13] : memref<256x9xf32, #tpu.memory_space<vmem>>, vector<256x9xf32>
    %cst_14 = arith.constant dense<0.000000e+00> : vector<8x9xf32>
    %18 = tpu.matmul %16, %17, %cst_14 {dimension_numbers = #tpu.dot_dimension_numbers<[1], [0], [0], [1], [0, 0, 1, 1], [], []>} : vector<8x256xf32>, vector<256x9xf32>, vector<8x9xf32> -> vector<8x9xf32>
    %c0_15 = arith.constant 0 : index
    %c0_16 = arith.constant 0 : index
    %19 = vector.load %arg6[%c0_15, %c0_16] : memref<1x9xf32, #tpu.memory_space<vmem>>, vector<1x9xf32>
    %20 = vector.broadcast %19 : vector<1x9xf32> to vector<8x9xf32>
    %21 = arith.addf %18, %20 : vector<8x9xf32>
    %c0_17 = arith.constant 0 : index
    %c0_18 = arith.constant 0 : index
    %22 = vector.load %arg7[%c0_17, %c0_18] : memref<8x9xf32, #tpu.memory_space<vmem>>, vector<8x9xf32>
    tpu.vector_store %arg7[%c0_17, %c0_18], %21 {strides = array<i32>} : memref<8x9xf32, #tpu.memory_space<vmem>>, vector<8x9xf32>,
    return
  }
}

module attributes {stable_mosaic.version = 11 : i64} {
  func.func @kernel(%arg0: i32, %arg1: i32, %arg2: i32, %arg3: memref<1x128x3xf32, #tpu.memory_space<vmem>>, %arg4: memref<1x3x64xbf16, #tpu.memory_space<vmem>>, %arg5: memref<1x64xf32, #tpu.memory_space<vmem>>, %arg6: memref<64x128xbf16, #tpu.memory_space<vmem>>, %arg7: memref<1x128xf32, #tpu.memory_space<vmem>>, %arg8: memref<128x1024xbf16, #tpu.memory_space<vmem>>, %arg9: memref<1x1024xf32, #tpu.memory_space<vmem>>, %arg10: memref<1x1x1024xf32, #tpu.memory_space<vmem>>, %arg11: memref<1x1024xf32, #tpu.memory_space<vmem>>) attributes {dimension_semantics = [#tpu.dimension_semantics<parallel>, #tpu.dimension_semantics<parallel>, #tpu.dimension_semantics<arbitrary>], iteration_bounds = array<i64: 2, 1, 1>, scalar_prefetch = 0 : i64, scratch_operands = 1 : i64, tpu.core_type = #tpu.core_type<tc>, window_params = [{transform_indices = @transform_0, window_bounds = array<i64: 1, 128, 3>}, {transform_indices = @transform_1, window_bounds = array<i64: 1, 3, 64>}, {pipeline_mode = #tpu.pipeline_mode<synchronous>, transform_indices = @transform_2, window_bounds = array<i64: 1, 64>}, {pipeline_mode = #tpu.pipeline_mode<synchronous>, transform_indices = @transform_3, window_bounds = array<i64: 64, 128>}, {pipeline_mode = #tpu.pipeline_mode<synchronous>, transform_indices = @transform_4, window_bounds = array<i64: 1, 128>}, {transform_indices = @transform_5, window_bounds = array<i64: 128, 1024>}, {transform_indices = @transform_6, window_bounds = array<i64: 1, 1024>}, {transform_indices = @transform_7, window_bounds = array<i64: 1, 1, 1024>}]} {
    %c0_i32 = arith.constant 0 : i32
    %0 = arith.cmpi eq, %arg2, %c0_i32 : i32
    %1 = arith.extui %0 : i1 to i32
    %c0_i32_0 = arith.constant 0 : i32
    %2 = arith.cmpi ne, %1, %c0_i32_0 : i32
    scf.if %2 {
      %cst_25 = arith.constant 0xFF800000 : f32
      %33 = vector.broadcast %cst_25 : f32 to vector<1x1024xf32>
      %c0_26 = arith.constant 0 : index
      %c0_27 = arith.constant 0 : index
      %34 = vector.load %arg11[%c0_26, %c0_27] : memref<1x1024xf32, #tpu.memory_space<vmem>>, vector<1x1024xf32>
      tpu.vector_store %arg11[%c0_26, %c0_27], %33 {strides = array<i32>} : memref<1x1024xf32, #tpu.memory_space<vmem>>, vector<1x1024xf32>,
    } else {
    }
    %c0 = arith.constant 0 : index
    %c0_1 = arith.constant 0 : index
    %c0_2 = arith.constant 0 : index
    %3 = vector.load %arg3[%c0, %c0_1, %c0_2] : memref<1x128x3xf32, #tpu.memory_space<vmem>>, vector<1x128x3xf32>
    %4 = vector.shape_cast %3 : vector<1x128x3xf32> to vector<128x3xf32>
    %5 = arith.truncf %4 : vector<128x3xf32> to vector<128x3xbf16>
    %c0_3 = arith.constant 0 : index
    %c0_4 = arith.constant 0 : index
    %c0_5 = arith.constant 0 : index
    %6 = vector.load %arg4[%c0_3, %c0_4, %c0_5] : memref<1x3x64xbf16, #tpu.memory_space<vmem>>, vector<1x3x64xbf16>
    %7 = vector.shape_cast %6 : vector<1x3x64xbf16> to vector<3x64xbf16>
    %cst = arith.constant dense<0.000000e+00> : vector<128x64xf32>
    %8 = tpu.matmul %5, %7, %cst {dimension_numbers = #tpu.dot_dimension_numbers<[1], [0], [0], [1], [0, 0, 1, 1], [], []>} : vector<128x3xbf16>, vector<3x64xbf16>, vector<128x64xf32> -> vector<128x64xf32>
    %c0_6 = arith.constant 0 : index
    %c0_7 = arith.constant 0 : index
    %9 = vector.load %arg5[%c0_6, %c0_7] : memref<1x64xf32, #tpu.memory_space<vmem>>, vector<1x64xf32>
    %10 = vector.broadcast %9 : vector<1x64xf32> to vector<128x64xf32>
    %11 = arith.addf %8, %10 : vector<128x64xf32>
    %cst_8 = arith.constant 0.000000e+00 : f32
    %12 = vector.broadcast %cst_8 : f32 to vector<128x64xf32>
    %13 = arith.maximumf %11, %12 : vector<128x64xf32>
    %14 = arith.truncf %13 : vector<128x64xf32> to vector<128x64xbf16>
    %c0_9 = arith.constant 0 : index
    %c0_10 = arith.constant 0 : index
    %15 = vector.load %arg6[%c0_9, %c0_10] : memref<64x128xbf16, #tpu.memory_space<vmem>>, vector<64x128xbf16>
    %cst_11 = arith.constant dense<0.000000e+00> : vector<128x128xf32>
    %16 = tpu.matmul %14, %15, %cst_11 {dimension_numbers = #tpu.dot_dimension_numbers<[1], [0], [0], [1], [0, 0, 1, 1], [], []>} : vector<128x64xbf16>, vector<64x128xbf16>, vector<128x128xf32> -> vector<128x128xf32>
    %c0_12 = arith.constant 0 : index
    %c0_13 = arith.constant 0 : index
    %17 = vector.load %arg7[%c0_12, %c0_13] : memref<1x128xf32, #tpu.memory_space<vmem>>, vector<1x128xf32>
    %18 = vector.broadcast %17 : vector<1x128xf32> to vector<128x128xf32>
    %19 = arith.addf %16, %18 : vector<128x128xf32>
    %cst_14 = arith.constant 0.000000e+00 : f32
    %20 = vector.broadcast %cst_14 : f32 to vector<128x128xf32>
    %21 = arith.maximumf %19, %20 : vector<128x128xf32>
    %22 = arith.truncf %21 : vector<128x128xf32> to vector<128x128xbf16>
    %c0_15 = arith.constant 0 : index
    %c0_16 = arith.constant 0 : index
    %23 = vector.load %arg8[%c0_15, %c0_16] : memref<128x1024xbf16, #tpu.memory_space<vmem>>, vector<128x1024xbf16>
    %cst_17 = arith.constant dense<0.000000e+00> : vector<128x1024xf32>
    %24 = tpu.matmul %22, %23, %cst_17 {dimension_numbers = #tpu.dot_dimension_numbers<[1], [0], [0], [1], [0, 0, 1, 1], [], []>} : vector<128x128xbf16>, vector<128x1024xbf16>, vector<128x1024xf32> -> vector<128x1024xf32>
    %c0_18 = arith.constant 0 : index
    %c0_19 = arith.constant 0 : index
    %25 = vector.load %arg11[%c0_18, %c0_19] : memref<1x1024xf32, #tpu.memory_space<vmem>>, vector<1x1024xf32>
    %cst_20 = arith.constant dense<0xFF800000> : vector<1024xf32>
    %26 = vector.multi_reduction <maximumf>, %24, %cst_20 [0] : vector<128x1024xf32> to vector<1024xf32>
    %27 = vector.shape_cast %26 : vector<1024xf32> to vector<1x1024xf32>
    %28 = arith.maximumf %25, %27 : vector<1x1024xf32>
    %c0_21 = arith.constant 0 : index
    %c0_22 = arith.constant 0 : index
    %29 = vector.load %arg11[%c0_21, %c0_22] : memref<1x1024xf32, #tpu.memory_space<vmem>>, vector<1x1024xf32>
    tpu.vector_store %arg11[%c0_21, %c0_22], %28 {strides = array<i32>} : memref<1x1024xf32, #tpu.memory_space<vmem>>, vector<1x1024xf32>,
    %c0_i32_23 = arith.constant 0 : i32
    %30 = arith.cmpi eq, %arg2, %c0_i32_23 : i32
    %31 = arith.extui %30 : i1 to i32
    %c0_i32_24 = arith.constant 0 : i32
    %32 = arith.cmpi ne, %31, %c0_i32_24 : i32
    scf.if %32 {
      %c0_25 = arith.constant 0 : index
      %c0_26 = arith.constant 0 : index
      %33 = vector.load %arg11[%c0_25, %c0_26] : memref<1x1024xf32, #tpu.memory_space<vmem>>, vector<1x1024xf32>
      %c0_27 = arith.constant 0 : index
      %c0_28 = arith.constant 0 : index
      %34 = vector.load %arg9[%c0_27, %c0_28] : memref<1x1024xf32, #tpu.memory_space<vmem>>, vector<1x1024xf32>
      %35 = arith.addf %33, %34 : vector<1x1024xf32>
      %c0_29 = arith.constant 0 : index
      %c0_30 = arith.constant 0 : index
      %c0_31 = arith.constant 0 : index
      %36 = vector.load %arg10[%c0_29, %c0_30, %c0_31] : memref<1x1x1024xf32, #tpu.memory_space<vmem>>, vector<1x1x1024xf32>
      %37 = vector.shape_cast %36 : vector<1x1x1024xf32> to vector<1x1024xf32>
      %38 = vector.shape_cast %35 : vector<1x1024xf32> to vector<1x1x1024xf32>
      tpu.vector_store %arg10[%c0_29, %c0_30, %c0_31], %38 {strides = array<i32>} : memref<1x1x1024xf32, #tpu.memory_space<vmem>>, vector<1x1x1024xf32>,
    } else {
    }
    return
  }
  func.func @transform_0(%arg0: i32, %arg1: i32, %arg2: i32) -> (i32, i32, i32) {
    %c0_i32 = arith.constant 0 : i32
    %c0_i32_0 = arith.constant 0 : i32
    return %arg0, %arg2, %c0_i32 : i32, i32, i32
  }
  func.func @transform_1(%arg0: i32, %arg1: i32, %arg2: i32) -> (i32, i32, i32) {
    %c0_i32 = arith.constant 0 : i32
    %c0_i32_0 = arith.constant 0 : i32
    %c0_i32_1 = arith.constant 0 : i32
    return %arg0, %c0_i32, %c0_i32_0 : i32, i32, i32
  }
  func.func @transform_2(%arg0: i32, %arg1: i32, %arg2: i32) -> (i32, i32) {
    %c0_i32 = arith.constant 0 : i32
    %c0_i32_0 = arith.constant 0 : i32
    %c0_i32_1 = arith.constant 0 : i32
    return %c0_i32, %c0_i32_0 : i32, i32
  }
  func.func @transform_3(%arg0: i32, %arg1: i32, %arg2: i32) -> (i32, i32) {
    %c0_i32 = arith.constant 0 : i32
    %c0_i32_0 = arith.constant 0 : i32
    %c0_i32_1 = arith.constant 0 : i32
    return %c0_i32, %c0_i32_0 : i32, i32
  }
  func.func @transform_4(%arg0: i32, %arg1: i32, %arg2: i32) -> (i32, i32) {
    %c0_i32 = arith.constant 0 : i32
    %c0_i32_0 = arith.constant 0 : i32
    %c0_i32_1 = arith.constant 0 : i32
    return %c0_i32, %c0_i32_0 : i32, i32
  }
  func.func @transform_5(%arg0: i32, %arg1: i32, %arg2: i32) -> (i32, i32) {
    %c0_i32 = arith.constant 0 : i32
    %c0_i32_0 = arith.constant 0 : i32
    return %c0_i32, %arg1 : i32, i32
  }
  func.func @transform_6(%arg0: i32, %arg1: i32, %arg2: i32) -> (i32, i32) {
    %c0_i32 = arith.constant 0 : i32
    %c0_i32_0 = arith.constant 0 : i32
    return %c0_i32, %arg1 : i32, i32
  }
  func.func @transform_7(%arg0: i32, %arg1: i32, %arg2: i32) -> (i32, i32, i32) {
    %c0_i32 = arith.constant 0 : i32
    %c0_i32_0 = arith.constant 0 : i32
    return %arg0, %c0_i32, %arg1 : i32, i32, i32
  }
}

module attributes {stable_mosaic.version = 11 : i64} {
  func.func @kernel(%arg0: memref<8x1024xf32, #tpu.memory_space<vmem>>, %arg1: memref<1024x512xbf16, #tpu.memory_space<vmem>>, %arg2: memref<1x512xf32, #tpu.memory_space<vmem>>, %arg3: memref<512x256xbf16, #tpu.memory_space<vmem>>, %arg4: memref<1x256xf32, #tpu.memory_space<vmem>>, %arg5: memref<256x2xf32, #tpu.memory_space<vmem>>, %arg6: memref<1x2xf32, #tpu.memory_space<vmem>>, %arg7: memref<8x2xf32, #tpu.memory_space<vmem>>) attributes {dimension_semantics = [], scalar_prefetch = 0 : i64, scratch_operands = 0 : i64, tpu.core_type = #tpu.core_type<tc>} {
    %c0 = arith.constant 0 : index
    %c0_0 = arith.constant 0 : index
    %0 = vector.load %arg0[%c0, %c0_0] : memref<8x1024xf32, #tpu.memory_space<vmem>>, vector<8x1024xf32>
    %1 = arith.truncf %0 : vector<8x1024xf32> to vector<8x1024xbf16>
    %c0_1 = arith.constant 0 : index
    %c0_2 = arith.constant 0 : index
    %2 = vector.load %arg1[%c0_1, %c0_2] : memref<1024x512xbf16, #tpu.memory_space<vmem>>, vector<1024x512xbf16>
    %cst = arith.constant dense<0.000000e+00> : vector<8x512xf32>
    %3 = tpu.matmul %1, %2, %cst {dimension_numbers = #tpu.dot_dimension_numbers<[1], [0], [0], [1], [0, 0, 1, 1], [], []>} : vector<8x1024xbf16>, vector<1024x512xbf16>, vector<8x512xf32> -> vector<8x512xf32>
    %c0_3 = arith.constant 0 : index
    %c0_4 = arith.constant 0 : index
    %4 = vector.load %arg2[%c0_3, %c0_4] : memref<1x512xf32, #tpu.memory_space<vmem>>, vector<1x512xf32>
    %5 = vector.broadcast %4 : vector<1x512xf32> to vector<8x512xf32>
    %6 = arith.addf %3, %5 : vector<8x512xf32>
    %cst_5 = arith.constant 0.000000e+00 : f32
    %7 = vector.broadcast %cst_5 : f32 to vector<8x512xf32>
    %8 = arith.maximumf %6, %7 : vector<8x512xf32>
    %9 = arith.truncf %8 : vector<8x512xf32> to vector<8x512xbf16>
    %c0_6 = arith.constant 0 : index
    %c0_7 = arith.constant 0 : index
    %10 = vector.load %arg3[%c0_6, %c0_7] : memref<512x256xbf16, #tpu.memory_space<vmem>>, vector<512x256xbf16>
    %cst_8 = arith.constant dense<0.000000e+00> : vector<8x256xf32>
    %11 = tpu.matmul %9, %10, %cst_8 {dimension_numbers = #tpu.dot_dimension_numbers<[1], [0], [0], [1], [0, 0, 1, 1], [], []>} : vector<8x512xbf16>, vector<512x256xbf16>, vector<8x256xf32> -> vector<8x256xf32>
    %c0_9 = arith.constant 0 : index
    %c0_10 = arith.constant 0 : index
    %12 = vector.load %arg4[%c0_9, %c0_10] : memref<1x256xf32, #tpu.memory_space<vmem>>, vector<1x256xf32>
    %13 = vector.broadcast %12 : vector<1x256xf32> to vector<8x256xf32>
    %14 = arith.addf %11, %13 : vector<8x256xf32>
    %cst_11 = arith.constant 0.000000e+00 : f32
    %15 = vector.broadcast %cst_11 : f32 to vector<8x256xf32>
    %16 = arith.maximumf %14, %15 : vector<8x256xf32>
    %c0_12 = arith.constant 0 : index
    %c0_13 = arith.constant 0 : index
    %17 = vector.load %arg5[%c0_12, %c0_13] : memref<256x2xf32, #tpu.memory_space<vmem>>, vector<256x2xf32>
    %cst_14 = arith.constant dense<0.000000e+00> : vector<8x2xf32>
    %18 = tpu.matmul %16, %17, %cst_14 {dimension_numbers = #tpu.dot_dimension_numbers<[1], [0], [0], [1], [0, 0, 1, 1], [], []>} : vector<8x256xf32>, vector<256x2xf32>, vector<8x2xf32> -> vector<8x2xf32>
    %c0_15 = arith.constant 0 : index
    %c0_16 = arith.constant 0 : index
    %19 = vector.load %arg6[%c0_15, %c0_16] : memref<1x2xf32, #tpu.memory_space<vmem>>, vector<1x2xf32>
    %20 = vector.broadcast %19 : vector<1x2xf32> to vector<8x2xf32>
    %21 = arith.addf %18, %20 : vector<8x2xf32>
    %cst_17 = arith.constant dense<0xFF800000> : vector<8xf32>
    %22 = vector.multi_reduction <maximumf>, %21, %cst_17 [1] : vector<8x2xf32> to vector<8xf32>
    %23 = vector.shape_cast %22 : vector<8xf32> to vector<8x1xf32>
    %24 = vector.broadcast %23 : vector<8x1xf32> to vector<8x2xf32>
    %25 = arith.subf %21, %24 : vector<8x2xf32>
    %26 = math.exp %25 : vector<8x2xf32>
    %cst_18 = arith.constant dense<0.000000e+00> : vector<8xf32>
    %27 = vector.multi_reduction <add>, %26, %cst_18 [1] : vector<8x2xf32> to vector<8xf32>
    %28 = vector.shape_cast %27 : vector<8xf32> to vector<8x1xf32>
    %29 = math.log %28 : vector<8x1xf32>
    %30 = arith.addf %23, %29 : vector<8x1xf32>
    %31 = vector.broadcast %30 : vector<8x1xf32> to vector<8x2xf32>
    %32 = arith.subf %21, %31 : vector<8x2xf32>
    %c0_19 = arith.constant 0 : index
    %c0_20 = arith.constant 0 : index
    %33 = vector.load %arg7[%c0_19, %c0_20] : memref<8x2xf32, #tpu.memory_space<vmem>>, vector<8x2xf32>
    tpu.vector_store %arg7[%c0_19, %c0_20], %32 {strides = array<i32>} : memref<8x2xf32, #tpu.memory_space<vmem>>, vector<8x2xf32>,
    return
  }
}

</mosaic_0001>

<llo_original>
// kernel: pointnet_cls_forward.4
$region0: #{pointnet_cls_forward.4}
  #allocation0 [shape = 'u32[]', space=smem, size = 0x4, offset = 0x4, fixed_abs, tag = 'smem constant byte address 0x4 - core index']
  #allocation1 [shape = 'u32[144,128]{1,0:T(1,128)}', space=vmem, size = 0x12000, scoped, tag = 'internal scratch']
  #allocation2 [shape = 'f32[1,1024]{1,0:T(1,128)}', space=vmem, size = 0x1000, scoped, tag = 'scratch operand']
  %s0 = inlined_call_operand.vmem [shape: f32[2,128,3], index: 0, kind: input, shape index: {}]
  %s1 = inlined_call_operand.vmem [shape: bf16[1,3,64], index: 1, kind: input, shape index: {}]
  %s2 = inlined_call_operand.hbm [shape: f32[1,64], index: 2, kind: input, shape index: {}]
  %s3 = inlined_call_operand.vmem [shape: bf16[64,128], index: 3, kind: input, shape index: {}]
  %s4 = inlined_call_operand.hbm [shape: f32[1,128], index: 4, kind: input, shape index: {}]
  %s5 = inlined_call_operand.vmem [shape: bf16[128,1024], index: 5, kind: input, shape index: {}]
  %s6 = inlined_call_operand.hbm [shape: f32[1,1024], index: 6, kind: input, shape index: {}]
  %s7 = inlined_call_operand.vmem [shape: f32[2,1,1024], index: 7, kind: output, shape index: {}]
  %s8 = sld [smem:[#allocation0]]
  $region81: #{pointnet_cls_forward.4} parent=0
    _
  %s10 = ssub.s32 1, %s8
  %s11 = scalar_select 0, %s10, %s8
  $region1: #{pointnet_cls_forward.4} parent=0
    #allocation3 [shape = 'u8[512]{0}', space=vmem, size = 0x400, scoped, tag = 'input window, operand 2, single buffered']
    #allocation4 [shape = 's32[2]{0}', space=sflag, size = 0x8, scoped, tag = 'scoped memory for pointnet_cls_forward.4']
    #allocation5 [shape = 'u8[512]{0}', space=vmem, size = 0x400, scoped, tag = 'input window, operand 4, single buffered']
    #allocation6 [shape = 's32[1]{0}', space=sflag, size = 0x4, scoped, tag = 'scoped memory for pointnet_cls_forward.4']
    #allocation7 [shape = 'u8[4096]{0}', space=vmem, size = 0x1000, scoped, tag = 'input window, operand 6, single buffered']
    %12 = vsyncpa [#allocation4], 0
    %13 = vsyncpa [#allocation6], 0
    loop: start=0, step=1, limit=4
    $region2: #{pointnet_cls_forward.4} parent=1 // loop_pre_header
      _
    $region3: #{pointnet_cls_forward.4} parent=1 // loop_header
      %s15 = sphi 0, %s19
      %p16 = scmp.ge.s32.totalorder %s15, 4
      %s22 = sphi 0, %s41
      %s23 = sphi 0, %s37
      %s24 = sphi 0, %s33
      %s25 = sphi 0, %s22
      %s26 = sphi 0, %s23
      %s27 = sphi 0, %s24
      %s28 = sphi 0, %s25
      %s29 = sphi 0, %s26
      %s30 = sphi 0, %s27
      %s46 = sphi 0, %s48
      %s49 = sphi 0, %s46
      %s50 = sphi 0, %s49
      %s66 = sphi 0, %s50
      %s70 = sphi 0, %s70
      %s72 = sphi 0, %s70
      %s73 = sphi 0, %s72
      %s87 = sphi 0, %s73
      %s91 = sphi 0, %s91
      %s93 = sphi 0, %s91
      %s94 = sphi 0, %s93
      %s108 = sphi 0, %s94
      %s112 = sphi 0, %s112
      %s114 = sphi 0, %s112
      %s115 = sphi 0, %s114
      %s129 = sphi 0, %s115
      %s133 = sphi 0, %s133
      %s135 = sphi 0, %s133
      %s136 = sphi 0, %s135
      %s150 = sphi 0, %s136
      %s156 = sphi 0, %s158
      %s159 = sphi 0, %s156
      %s160 = sphi 0, %s159
      %s176 = sphi 0, %s160
      %s182 = sphi 0, %s184
      %s185 = sphi 0, %s182
      %s186 = sphi 0, %s185
      %s202 = sphi 0, %s186
      %s210 = sphi 0, %s212
      %s213 = sphi 0, %s210
      %s214 = sphi 0, %s213
      %s230 = sphi 0, %s214
    $region4: #{pointnet_cls_forward.4} parent=1 // loop_header_branch
      %18 = sbr.rel (%p16) target = $region8
    $region5: #{pointnet_cls_forward.4} parent=1 // loop_body
      %s20 = ssub.s32 %s15, 1
      %s21 = ssub.s32 %s15, 2
      %s31 = sadd.s32 1, %s24
      %p32 = scmp.ge.s32.totalorder %s31, 1
      %s33 = scalar_select %p32, 0, %s31
      %s34 = sadd.s32 1, %s23
      %s35 = scalar_select %p32, %s34, %s23
      %p36 = scmp.ge.s32.totalorder %s35, 1
      %s37 = scalar_select %p36, 0, %s35
      %s38 = sadd.s32 1, %s22
      %s39 = scalar_select %p36, %s38, %s22
      %p40 = scmp.ge.s32.totalorder %s39, 2
      %s41 = scalar_select %p40, 0, %s39
      %s42 = ssub.s32 %s22, %s41
      %s43 = ssub.s32 %s24, %s33
      %s44 = sor.u32 %s42, %s43
      %p45 = scmp.eq.s32.totalorder %s44, 0
      %s47 = sadd.s32 %s46, 1
      %s48 = scalar_select %p45, %s46, %s47
      %p51 = pneg %p45
      %p52 = scmp.eq.s32.totalorder %s15, 1
      %p53 = por %p51, %p52
      %p54 = scmp.ne.s32.totalorder %s46, %s49
      %p55 = scmp.eq.s32.totalorder %s15, 0
      %p56 = por %p54, %p55
      %p57 = scmp.ne.s32.totalorder %s46, %s49
      %p58 = scmp.eq.s32.totalorder %s20, 1
      %p59 = por %p57, %p58
      %p60 = scmp.ne.s32.totalorder %s49, %s50
      %p61 = scmp.eq.s32.totalorder %s20, 0
      %p62 = por %p60, %p61
      %p63 = scmp.ne.s32.totalorder %s49, %s50
      %p64 = scmp.eq.s32.totalorder %s21, 1
      %p65 = por %p63, %p64
      %p67 = scmp.ne.s32.totalorder %s50, %s66
      %p68 = scmp.eq.s32.totalorder %s21, 0
      %p69 = por %p67, %p68
      %s71 = sadd.s32 %s70, 1
      %p74 = scmp.eq.s32.totalorder %s15, 1
      %p75 = scmp.ne.s32.totalorder %s70, %s72
      %p76 = scmp.eq.s32.totalorder %s15, 0
      %p77 = por %p75, %p76
      %p78 = scmp.ne.s32.totalorder %s70, %s72
      %p79 = scmp.eq.s32.totalorder %s20, 1
      %p80 = por %p78, %p79
      %p81 = scmp.ne.s32.totalorder %s72, %s73
      %p82 = scmp.eq.s32.totalorder %s20, 0
      %p83 = por %p81, %p82
      %p84 = scmp.ne.s32.totalorder %s72, %s73
      %p85 = scmp.eq.s32.totalorder %s21, 1
      %p86 = por %p84, %p85
      %p88 = scmp.ne.s32.totalorder %s73, %s87
      %p89 = scmp.eq.s32.totalorder %s21, 0
      %p90 = por %p88, %p89
      %s92 = sadd.s32 %s91, 1
      %p95 = scmp.eq.s32.totalorder %s15, 1
      %p96 = scmp.ne.s32.totalorder %s91, %s93
      %p97 = scmp.eq.s32.totalorder %s15, 0
      %p98 = por %p96, %p97
      %p99 = scmp.ne.s32.totalorder %s91, %s93
      %p100 = scmp.eq.s32.totalorder %s20, 1
      %p101 = por %p99, %p100
      %p102 = scmp.ne.s32.totalorder %s93, %s94
      %p103 = scmp.eq.s32.totalorder %s20, 0
      %p104 = por %p102, %p103
      %p105 = scmp.ne.s32.totalorder %s93, %s94
      %p106 = scmp.eq.s32.totalorder %s21, 1
      %p107 = por %p105, %p106
      %p109 = scmp.ne.s32.totalorder %s94, %s108
      %p110 = scmp.eq.s32.totalorder %s21, 0
      %p111 = por %p109, %p110
      %s113 = sadd.s32 %s112, 1
      %p116 = scmp.eq.s32.totalorder %s15, 1
      %p117 = scmp.ne.s32.totalorder %s112, %s114
      %p118 = scmp.eq.s32.totalorder %s15, 0
      %p119 = por %p117, %p118
      %p120 = scmp.ne.s32.totalorder %s112, %s114
      %p121 = scmp.eq.s32.totalorder %s20, 1
      %p122 = por %p120, %p121
      %p123 = scmp.ne.s32.totalorder %s114, %s115
      %p124 = scmp.eq.s32.totalorder %s20, 0
      %p125 = por %p123, %p124
      %p126 = scmp.ne.s32.totalorder %s114, %s115
      %p127 = scmp.eq.s32.totalorder %s21, 1
      %p128 = por %p126, %p127
      %p130 = scmp.ne.s32.totalorder %s115, %s129
      %p131 = scmp.eq.s32.totalorder %s21, 0
      %p132 = por %p130, %p131
      %s134 = sadd.s32 %s133, 1
      %p137 = scmp.eq.s32.totalorder %s15, 1
      %p138 = scmp.ne.s32.totalorder %s133, %s135
      %p139 = scmp.eq.s32.totalorder %s15, 0
      %p140 = por %p138, %p139
      %p141 = scmp.ne.s32.totalorder %s133, %s135
      %p142 = scmp.eq.s32.totalorder %s20, 1
      %p143 = por %p141, %p142
      %p144 = scmp.ne.s32.totalorder %s135, %s136
      %p145 = scmp.eq.s32.totalorder %s20, 0
      %p146 = por %p144, %p145
      %p147 = scmp.ne.s32.totalorder %s135, %s136
      %p148 = scmp.eq.s32.totalorder %s21, 1
      %p149 = por %p147, %p148
      %p151 = scmp.ne.s32.totalorder %s136, %s150
      %p152 = scmp.eq.s32.totalorder %s21, 0
      %p153 = por %p151, %p152
      %s154 = ssub.s32 %s23, %s37
      %p155 = scmp.eq.s32.totalorder %s154, 0
      %s157 = sadd.s32 %s156, 1
      %s158 = scalar_select %p155, %s156, %s157
      %p161 = pneg %p155
      %p162 = scmp.eq.s32.totalorder %s15, 1
      %p163 = por %p161, %p162
      %p164 = scmp.ne.s32.totalorder %s156, %s159
      %p165 = scmp.eq.s32.totalorder %s15, 0
      %p166 = por %p164, %p165
      %p167 = scmp.ne.s32.totalorder %s156, %s159
      %p168 = scmp.eq.s32.totalorder %s20, 1
      %p169 = por %p167, %p168
      %p170 = scmp.ne.s32.totalorder %s159, %s160
      %p171 = scmp.eq.s32.totalorder %s20, 0
      %p172 = por %p170, %p171
      %p173 = scmp.ne.s32.totalorder %s159, %s160
      %p174 = scmp.eq.s32.totalorder %s21, 1
      %p175 = por %p173, %p174
      %p177 = scmp.ne.s32.totalorder %s160, %s176
      %p178 = scmp.eq.s32.totalorder %s21, 0
      %p179 = por %p177, %p178
      %s180 = ssub.s32 %s23, %s37
      %p181 = scmp.eq.s32.totalorder %s180, 0
      %s183 = sadd.s32 %s182, 1
      %s184 = scalar_select %p181, %s182, %s183
      %p187 = pneg %p181
      %p188 = scmp.eq.s32.totalorder %s15, 1
      %p189 = por %p187, %p188
      %p190 = scmp.ne.s32.totalorder %s182, %s185
      %p191 = scmp.eq.s32.totalorder %s15, 0
      %p192 = por %p190, %p191
      %p193 = scmp.ne.s32.totalorder %s182, %s185
      %p194 = scmp.eq.s32.totalorder %s20, 1
      %p195 = por %p193, %p194
      %p196 = scmp.ne.s32.totalorder %s185, %s186
      %p197 = scmp.eq.s32.totalorder %s20, 0
      %p198 = por %p196, %p197
      %p199 = scmp.ne.s32.totalorder %s185, %s186
      %p200 = scmp.eq.s32.totalorder %s21, 1
      %p201 = por %p199, %p200
      %p203 = scmp.ne.s32.totalorder %s186, %s202
      %p204 = scmp.eq.s32.totalorder %s21, 0
      %p205 = por %p203, %p204
      %s206 = ssub.s32 %s22, %s41
      %s207 = ssub.s32 %s23, %s37
      %s208 = sor.u32 %s206, %s207
      %p209 = scmp.eq.s32.totalorder %s208, 0
      %s211 = sadd.s32 %s210, 1
      %s212 = scalar_select %p209, %s210, %s211
      %p215 = pneg %p209
      %p216 = scmp.eq.s32.totalorder %s15, 1
      %p217 = por %p215, %p216
      %p218 = scmp.ne.s32.totalorder %s210, %s213
      %p219 = scmp.eq.s32.totalorder %s15, 0
      %p220 = por %p218, %p219
      %p221 = scmp.ne.s32.totalorder %s210, %s213
      %p222 = scmp.eq.s32.totalorder %s20, 1
      %p223 = por %p221, %p222
      %p224 = scmp.ne.s32.totalorder %s213, %s214
      %p225 = scmp.eq.s32.totalorder %s20, 0
      %p226 = por %p224, %p225
      %p227 = scmp.ne.s32.totalorder %s213, %s214
      %p228 = scmp.eq.s32.totalorder %s21, 1
      %p229 = por %p227, %p228
      %p231 = scmp.ne.s32.totalorder %s214, %s230
      %p232 = scmp.eq.s32.totalorder %s21, 0
      %p233 = por %p231, %p232
      %p234 = scmp.le.s32.totalorder 1, %s15
      %p235 = scmp.lt.s32.totalorder %s15, 3
      %p236 = pnand %p234, %p235
      %p237 = pneg %p236
      // Predicated region
      $region9: #{pointnet_cls_forward.4} parent=5 // pred_check
        _
      $region10: #{pointnet_cls_forward.4} parent=5 // pred_check_branch
        %239 = sbr.rel (%p236) target = $region12
      $region11: #{pointnet_cls_forward.4} parent=5 // pred_region
        %s240 = ssub.s32 %s15, 1
        // Predicated region
        $region13: #{pointnet_cls_forward.4} parent=11 // pred_check
          %p241 = pneg %p83
        $region14: #{pointnet_cls_forward.4} parent=11 // pred_check_branch
          %243 = sbr.rel (%p241) target = $region16
        $region15: #{pointnet_cls_forward.4} parent=11 // pred_region
          _
        $region16: #{pointnet_cls_forward.4} parent=11 // pred_fallthru
          _
        // Predicated region
        $region17: #{pointnet_cls_forward.4} parent=11 // pred_check
          %p244 = pneg %p104
        $region18: #{pointnet_cls_forward.4} parent=11 // pred_check_branch
          %246 = sbr.rel (%p244) target = $region20
        $region19: #{pointnet_cls_forward.4} parent=11 // pred_region
          %s248 = ssub.s32 16, 16
          %249 = vsyncadd [#allocation4], %s248
          %s251 = sshll.u32 [#allocation3], 4
          %s252 = int_to_ptr.vmem [resolvable:$true] %s251
          %254 = dma.hbm_to_vmem [thread:$0]  %s2, 16, %s252, [#allocation4]
        $region20: #{pointnet_cls_forward.4} parent=11 // pred_fallthru
          _
        // Predicated region
        $region21: #{pointnet_cls_forward.4} parent=11 // pred_check
          %p255 = pneg %p125
        $region22: #{pointnet_cls_forward.4} parent=11 // pred_check_branch
          %257 = sbr.rel (%p255) target = $region24
        $region23: #{pointnet_cls_forward.4} parent=11 // pred_region
          _
        $region24: #{pointnet_cls_forward.4} parent=11 // pred_fallthru
          _
        // Predicated region
        $region25: #{pointnet_cls_forward.4} parent=11 // pred_check
          %p258 = pneg %p146
        $region26: #{pointnet_cls_forward.4} parent=11 // pred_check_branch
          %260 = sbr.rel (%p258) target = $region28
        $region27: #{pointnet_cls_forward.4} parent=11 // pred_region
          %s262 = ssub.s32 16, 16
          %263 = vsyncadd [#allocation6], %s262
          %s265 = sshll.u32 [#allocation5], 4
          %s266 = int_to_ptr.vmem [resolvable:$true] %s265
          %268 = dma.hbm_to_vmem [thread:$0]  %s4, 16, %s266, [#allocation6]
        $region28: #{pointnet_cls_forward.4} parent=11 // pred_fallthru
          _
        // Predicated region
        $region29: #{pointnet_cls_forward.4} parent=11 // pred_check
          %p269 = pneg %p172
        $region30: #{pointnet_cls_forward.4} parent=11 // pred_check_branch
          %271 = sbr.rel (%p269) target = $region32
        $region31: #{pointnet_cls_forward.4} parent=11 // pred_region
          %s272 = smul.u32 8, %s26
          %p273 = scmp.lt.s32.totalorder %s272, 7
          %s274 = scalar_select %p273, %s272, 7
          %s275 = smul.addr %s274, 4
          %s276 = scalar_lea.vmem %s5, %s275
          %s277 = smul.u32 8, %s26
        $region32: #{pointnet_cls_forward.4} parent=11 // pred_fallthru
          _
        // Predicated region
        $region33: #{pointnet_cls_forward.4} parent=11 // pred_check
          %p278 = pneg %p198
        $region34: #{pointnet_cls_forward.4} parent=11 // pred_check_branch
          %280 = sbr.rel (%p278) target = $region36
        $region35: #{pointnet_cls_forward.4} parent=11 // pred_region
          %s281 = smul.u32 8, %s26
          %s283 = ssub.s32 128, 128
          %284 = vsyncadd [#allocation6], %s283
          %s285 = smul.addr %s281, 16
          %s286 = scalar_lea.hbm %s6, %s285
          %s288 = sshll.u32 [#allocation7], 4
          %s289 = int_to_ptr.vmem [resolvable:$true] %s288
          %291 = dma.hbm_to_vmem [thread:$0]  %s286, 128, %s289, [#allocation6]
        $region36: #{pointnet_cls_forward.4} parent=11 // pred_fallthru
          _
      $region12: #{pointnet_cls_forward.4} parent=5 // pred_fallthru
        _
      %p292 = scmp.lt.s32.totalorder %s15, 2
      // Predicated region
      $region37: #{pointnet_cls_forward.4} parent=5 // pred_check
        %p293 = pneg %p292
      $region38: #{pointnet_cls_forward.4} parent=5 // pred_check_branch
        %295 = sbr.rel (%p293) target = $region40
      $region39: #{pointnet_cls_forward.4} parent=5 // pred_region
        // Predicated region
        $region41: #{pointnet_cls_forward.4} parent=39 // pred_check
          %p296 = pneg %p56
        $region42: #{pointnet_cls_forward.4} parent=39 // pred_check_branch
          %298 = sbr.rel (%p296) target = $region44
        $region43: #{pointnet_cls_forward.4} parent=39 // pred_region
          %s299 = smul.u32 16, %s24
          %p300 = scmp.lt.s32.totalorder %s22, 1
          %s301 = scalar_select %p300, %s22, 1
          %p302 = scmp.lt.s32.totalorder %s299, 15
          %s303 = scalar_select %p302, %s299, 15
          %s304 = smul.addr %s301, 16
          %s305 = sadd.s32 %s303, %s304
          %s306 = smul.addr %s305, 8
          %s307 = scalar_lea.vmem %s0, %s306
          %s308 = smul.u32 16, %s24
        $region44: #{pointnet_cls_forward.4} parent=39 // pred_fallthru
          _
      $region40: #{pointnet_cls_forward.4} parent=5 // pred_fallthru
        _
      %p309 = scmp.le.s32.totalorder 1, %s15
      %p310 = scmp.lt.s32.totalorder %s15, 3
      %p311 = pnand %p309, %p310
      %p312 = pneg %p311
      // Predicated region
      $region45: #{pointnet_cls_forward.4} parent=5 // pred_check
        _
      $region46: #{pointnet_cls_forward.4} parent=5 // pred_check_branch
        %314 = sbr.rel (%p311) target = $region48
      $region47: #{pointnet_cls_forward.4} parent=5 // pred_region
        %s315 = ssub.s32 %s15, 1
        // Predicated region
        $region49: #{pointnet_cls_forward.4} parent=47 // pred_check
          %p316 = pneg %p104
        $region50: #{pointnet_cls_forward.4} parent=47 // pred_check_branch
          %318 = sbr.rel (%p316) target = $region52
        $region51: #{pointnet_cls_forward.4} parent=47 // pred_region
          %319 = dma.done [#allocation4], 16
        $region52: #{pointnet_cls_forward.4} parent=47 // pred_fallthru
          _
        // Predicated region
        $region53: #{pointnet_cls_forward.4} parent=47 // pred_check
          %p320 = pneg %p146
        $region54: #{pointnet_cls_forward.4} parent=47 // pred_check_branch
          %322 = sbr.rel (%p320) target = $region56
        $region55: #{pointnet_cls_forward.4} parent=47 // pred_region
          %323 = dma.done [#allocation6], 16
        $region56: #{pointnet_cls_forward.4} parent=47 // pred_fallthru
          _
        // Predicated region
        $region57: #{pointnet_cls_forward.4} parent=47 // pred_check
          %p324 = pneg %p198
        $region58: #{pointnet_cls_forward.4} parent=47 // pred_check_branch
          %326 = sbr.rel (%p324) target = $region60
        $region59: #{pointnet_cls_forward.4} parent=47 // pred_region
          %327 = dma.done [#allocation6], 128
        $region60: #{pointnet_cls_forward.4} parent=47 // pred_fallthru
          _
        %s328 = smul.u32 16, %s27
        %p329 = scmp.lt.s32.totalorder %s25, 1
        %s330 = scalar_select %p329, %s25, 1
        %p331 = scmp.lt.s32.totalorder %s328, 15
        %s332 = scalar_select %p331, %s328, 15
        %s333 = smul.addr %s330, 16
        %s334 = sadd.s32 %s332, %s333
        %s335 = smul.addr %s334, 8
        %s336 = scalar_lea.vmem %s0, %s335
        %p337 = pneg %p62
        %p338 = pneg %p59
        %p339 = pneg %p83
        %p340 = pneg %p80
        %p341 = pneg %p104
        %p342 = pneg %p101
        %p343 = pneg %p125
        %p344 = pneg %p122
        %p345 = pneg %p146
        %p346 = pneg %p143
        %s347 = smul.u32 8, %s26
        %p348 = scmp.lt.s32.totalorder %s347, 7
        %s349 = scalar_select %p348, %s347, 7
        %s350 = smul.addr %s349, 4
        %s351 = scalar_lea.vmem %s5, %s350
        %p352 = pneg %p172
        %p353 = pneg %p169
        %p354 = pneg %p198
        %p355 = pneg %p195
        %p356 = pneg %p226
        %p357 = pneg %p223
        %s358 = smul.u32 8, %s26
        %p359 = scmp.lt.s32.totalorder %s25, 1
        %s360 = scalar_select %p359, %s25, 1
        %p361 = scmp.lt.s32.totalorder %s358, 7
        %s362 = scalar_select %p361, %s358, 7
        %s363 = smul.addr %s360, 8
        %s364 = sadd.s32 %s362, %s363
        %s365 = scalar_lea.vmem %s7, %s364
        %s366 = smul.u32 16, %s27
        %p367 = scmp.lt.s32.totalorder %s25, 1
        %s368 = scalar_select %p367, %s25, 1
        %p369 = scmp.lt.s32.totalorder %s366, 15
        %s370 = scalar_select %p369, %s366, 15
        %s371 = smul.addr %s368, 16
        %s372 = sadd.s32 %s370, %s371
        %s373 = smul.addr %s372, 8
        %s374 = scalar_lea.vmem %s0, %s373
        %s375 = smul.u32 16, %s27
        %s376 = smul.u32 8, %s26
        %p377 = scmp.lt.s32.totalorder %s376, 7
        %s378 = scalar_select %p377, %s376, 7
        %s379 = smul.addr %s378, 4
        %s380 = scalar_lea.vmem %s5, %s379
        %s381 = smul.u32 8, %s26
        %s382 = smul.u32 8, %s26
        %s383 = smul.u32 8, %s26
        %p384 = scmp.lt.s32.totalorder %s25, 1
        %s385 = scalar_select %p384, %s25, 1
        %p386 = scmp.lt.s32.totalorder %s383, 7
        %s387 = scalar_select %p386, %s383, 7
        %s388 = smul.addr %s385, 8
        %s389 = sadd.s32 %s387, %s388
        %s390 = scalar_lea.vmem %s7, %s389
        %s391 = smul.u32 8, %s26
        %p393 = scmp.eq.s32.totalorder %s27, 0
        // Predicated region
        $region61: #{pointnet_cls_forward.4} parent=47 // pred_check
          %p394 = pneg %p393
        $region62: #{pointnet_cls_forward.4} parent=47 // pred_check_branch
          %396 = sbr.rel (%p394) target = $region64
        $region63: #{pointnet_cls_forward.4} parent=47 // pred_region
          %397 = vst [vmem:[#allocation2] sm:$0xff] -inf
        $region64: #{pointnet_cls_forward.4} parent=47 // pred_fallthru
          _
        %v398 = vld [vmem:[%s374] sm:$0xff]
        %v399 = vld [vmem:[%s374 + $0x8] sm:$0xff]
        %v400 = vld [vmem:[%s374 + $0x10] sm:$0xff]
        %v401 = vld [vmem:[%s374 + $0x18] sm:$0xff]
        %v402 = vld [vmem:[%s374 + $0x20] sm:$0xff]
        %v403 = vld [vmem:[%s374 + $0x28] sm:$0xff]
        %v404 = vld [vmem:[%s374 + $0x30] sm:$0xff]
        %v405 = vld [vmem:[%s374 + $0x38] sm:$0xff]
        %v406 = vld [vmem:[%s374 + $0x40] sm:$0xff]
        %v407 = vld [vmem:[%s374 + $0x48] sm:$0xff]
        %v408 = vld [vmem:[%s374 + $0x50] sm:$0xff]
        %v409 = vld [vmem:[%s374 + $0x58] sm:$0xff]
        %v410 = vld [vmem:[%s374 + $0x60] sm:$0xff]
        %v411 = vld [vmem:[%s374 + $0x68] sm:$0xff]
        %v412 = vld [vmem:[%s374 + $0x70] sm:$0xff]
        %v413 = vld [vmem:[%s374 + $0x78] sm:$0xff]
        %v414 = vpack.c.bf16 %v399, %v398
        %v415 = vpack.c.bf16 %v401, %v400
        %v416 = vpack.c.bf16 %v403, %v402
        %v417 = vpack.c.bf16 %v405, %v404
        %v418 = vpack.c.bf16 %v407, %v406
        %v419 = vpack.c.bf16 %v409, %v408
        %v420 = vpack.c.bf16 %v411, %v410
        %v421 = vpack.c.bf16 %v413, %v412
        %v422 = vld [vmem:[%s1] sm:$0x3]
        %v423 = vld [vmem:[#allocation3] sm:$0x1]
        %v425 = vlaneseq
        %v426 = vshrl.u32 %v425, 7
        %v427 = vsub.s32 0, %v426
        %v428 = vrot.slane %v423, %v427
        %vm430 = vcmask 23552
        %v432 = vsel %vm430, %v414, 0
        %v435 = vsel %vm430, %v415, 0
        %v438 = vsel %vm430, %v416, 0
        %v441 = vsel %vm430, %v417, 0
        %v444 = vsel %vm430, %v418, 0
        %v447 = vsel %vm430, %v419, 0
        %v450 = vsel %vm430, %v420, 0
        %v453 = vsel %vm430, %v421, 0
        %vm455 = vcmask 1040384
        %vm456 = vcmask 1041408
        %v457 = vsel %vm455, 4294967295, 65535
        %v458 = vsel %vm456, %v457, 0
        %v460 = vand.u32 %v422, %v458
        %462 = vmatprep.subr.bf16.mxu0 0
        %463 = vmatpush1.bf16.msra.mxu0 %v460
        %464 = vmatprep.subr.bf16.mxu0 0
        %465 = vmatpush1.bf16.msra.mxu0 0
        %466 = vmatprep.subr.bf16.mxu0 0
        %467 = vmatpush1.bf16.msra.mxu0 0
        %468 = vmatprep.subr.bf16.mxu0 0
        %469 = vmatpush1.bf16.msra.mxu0 0
        %470 = vmatprep.subr.bf16.mxu0 0
        %471 = vmatpush1.bf16.msra.mxu0 0
        %472 = vmatprep.subr.bf16.mxu0 0
        %473 = vmatpush1.bf16.msra.mxu0 0
        %474 = vmatprep.subr.bf16.mxu0 0
        %475 = vmatpush1.bf16.msra.mxu0 0
        %476 = vmatprep.subr.bf16.mxu0 0
        %477 = vmatpush1.bf16.msra.mxu0 0
        %478 = vmatprep.subr.bf16.mxu0 0
        %479 = vmatpush1.bf16.msra.mxu0 0
        %480 = vmatprep.subr.bf16.mxu0 0
        %481 = vmatpush1.bf16.msra.mxu0 0
        %482 = vmatprep.subr.bf16.mxu0 0
        %483 = vmatpush1.bf16.msra.mxu0 0
        %484 = vmatprep.subr.bf16.mxu0 0
        %485 = vmatpush1.bf16.msra.mxu0 0
        %486 = vmatprep.subr.bf16.mxu0 0
        %487 = vmatpush1.bf16.msra.mxu0 0
        %488 = vmatprep.subr.bf16.mxu0 0
        %489 = vmatpush1.bf16.msra.mxu0 0
        %490 = vmatprep.subr.bf16.mxu0 0
        %491 = vmatpush1.bf16.msra.mxu0 0
        %492 = vmatprep.subr.bf16.mxu0 0
        %493 = vmatpush1.bf16.msra.mxu0 0
        %494 = vmatprep.mubr.bf16.mxu0 0
        %495 = vmatmul.mubr.bf16.gmra.mrb[0].mxu0 %v432
        %v496 = vpop.f32.mrb[0].mxu0
        %v497 = vadd.f32 %v428, %v496
        %v498 = vpop.f32.mrb[0].mxu0
        %v499 = vpop.f32.mrb[0].mxu0
        %v500 = vadd.f32 %v428, %v499
        %v501 = vpop.f32.mrb[0].mxu0
        %502 = vmatprep.mubr.bf16.mxu0 0
        %503 = vmatmul.mubr.bf16.gmra.mrb[0].mxu0 %v435
        %v504 = vpop.f32.mrb[0].mxu0
        %v505 = vadd.f32 %v428, %v504
        %v506 = vpop.f32.mrb[0].mxu0
        %v507 = vpop.f32.mrb[0].mxu0
        %v508 = vadd.f32 %v428, %v507
        %v509 = vpop.f32.mrb[0].mxu0
        %510 = vmatprep.mubr.bf16.mxu0 0
        %511 = vmatmul.mubr.bf16.gmra.mrb[0].mxu0 %v438
        %v512 = vpop.f32.mrb[0].mxu0
        %v513 = vadd.f32 %v428, %v512
        %v514 = vpop.f32.mrb[0].mxu0
        %v515 = vpop.f32.mrb[0].mxu0
        %v516 = vadd.f32 %v428, %v515
        %v517 = vpop.f32.mrb[0].mxu0
        %518 = vmatprep.mubr.bf16.mxu0 0
        %519 = vmatmul.mubr.bf16.gmra.mrb[0].mxu0 %v441
        %v520 = vpop.f32.mrb[0].mxu0
        %v521 = vadd.f32 %v428, %v520
        %v522 = vpop.f32.mrb[0].mxu0
        %v523 = vpop.f32.mrb[0].mxu0
        %v524 = vadd.f32 %v428, %v523
        %v525 = vpop.f32.mrb[0].mxu0
        %526 = vmatprep.mubr.bf16.mxu0 0
        %527 = vmatmul.mubr.bf16.gmra.mrb[0].mxu0 %v444
        %v528 = vpop.f32.mrb[0].mxu0
        %v529 = vadd.f32 %v428, %v528
        %v530 = vpop.f32.mrb[0].mxu0
        %v531 = vpop.f32.mrb[0].mxu0
        %v532 = vadd.f32 %v428, %v531
        %v533 = vpop.f32.mrb[0].mxu0
        %534 = vmatprep.mubr.bf16.mxu0 0
        %535 = vmatmul.mubr.bf16.gmra.mrb[0].mxu0 %v447
        %v536 = vpop.f32.mrb[0].mxu0
        %v537 = vadd.f32 %v428, %v536
        %v538 = vpop.f32.mrb[0].mxu0
        %v539 = vpop.f32.mrb[0].mxu0
        %v540 = vadd.f32 %v428, %v539
        %v541 = vpop.f32.mrb[0].mxu0
        %542 = vmatprep.mubr.bf16.mxu0 0
        %543 = vmatmul.mubr.bf16.gmra.mrb[0].mxu0 %v450
        %v544 = vpop.f32.mrb[0].mxu0
        %v545 = vadd.f32 %v428, %v544
        %v546 = vpop.f32.mrb[0].mxu0
        %v547 = vpop.f32.mrb[0].mxu0
        %v548 = vadd.f32 %v428, %v547
        %v549 = vpop.f32.mrb[0].mxu0
        %550 = vmatprep.mubr.bf16.mxu0 0
        %551 = vmatmul.mubr.bf16.gmra.mrb[0].mxu0 %v453
        %v552 = vpop.f32.mrb[0].mxu0
        %v553 = vadd.f32 %v428, %v552
        %v554 = vpop.f32.mrb[0].mxu0
        %v555 = vpop.f32.mrb[0].mxu0
        %v556 = vadd.f32 %v428, %v555
        %v557 = vpop.f32.mrb[0].mxu0
        %558 = vdwg.mxu0
        %v559 = vmax.f32 %v497, 0.0
        %v560 = vmax.f32 %v500, 0.0
        %v561 = vmax.f32 %v505, 0.0
        %v562 = vmax.f32 %v508, 0.0
        %v563 = vmax.f32 %v513, 0.0
        %v564 = vmax.f32 %v516, 0.0
        %v565 = vmax.f32 %v521, 0.0
        %v566 = vmax.f32 %v524, 0.0
        %v567 = vmax.f32 %v529, 0.0
        %v568 = vmax.f32 %v532, 0.0
        %v569 = vmax.f32 %v537, 0.0
        %v570 = vmax.f32 %v540, 0.0
        %v571 = vmax.f32 %v545, 0.0
        %v572 = vmax.f32 %v548, 0.0
        %v573 = vmax.f32 %v553, 0.0
        %v574 = vmax.f32 %v556, 0.0
        %v575 = vpack.c.bf16 %v560, %v559
        %v576 = vpack.c.bf16 %v562, %v561
        %v577 = vpack.c.bf16 %v564, %v563
        %v578 = vpack.c.bf16 %v566, %v565
        %v579 = vpack.c.bf16 %v568, %v567
        %v580 = vpack.c.bf16 %v570, %v569
        %v581 = vpack.c.bf16 %v572, %v571
        %v582 = vpack.c.bf16 %v574, %v573
        %v583 = vld [vmem:[%s3] sm:$0xf]
        %v584 = vld [vmem:[%s3 + $0x4] sm:$0xf]
        %v585 = vld [vmem:[%s3 + $0x8] sm:$0xf]
        %v586 = vld [vmem:[%s3 + $0xc] sm:$0xf]
        %v587 = vld [vmem:[%s3 + $0x10] sm:$0xf]
        %v588 = vld [vmem:[%s3 + $0x14] sm:$0xf]
        %v589 = vld [vmem:[%s3 + $0x18] sm:$0xf]
        %v590 = vld [vmem:[%s3 + $0x1c] sm:$0xf]
        %v591 = vld [vmem:[#allocation5] sm:$0x1]
        %v593 = vlaneseq
        %v594 = vshrl.u32 %v593, 7
        %v595 = vsub.s32 0, %v594
        %v596 = vrot.slane %v591, %v595
        %v606 = vunpack.c.l.b16 %v583
        %v607 = vunpack.c.l.b16 %v584
        %v608 = vunpack.c.l.b16 %v585
        %v609 = vunpack.c.l.b16 %v586
        %v610 = vunpack.c.l.b16 %v587
        %v611 = vunpack.c.l.b16 %v588
        %v612 = vunpack.c.l.b16 %v589
        %v613 = vunpack.c.l.b16 %v590
        %v614 = vpack.c.b16 %v607, %v606
        %v615 = vpack.c.b16 %v609, %v608
        %v616 = vpack.c.b16 %v611, %v610
        %v617 = vpack.c.b16 %v613, %v612
        %vm622 = vcmask 523264
        %v624 = vsel %vm622, %v575, 0
        %v627 = vsel %vm622, %v576, 0
        %v630 = vsel %vm622, %v577, 0
        %v633 = vsel %vm622, %v578, 0
        %v636 = vsel %vm622, %v579, 0
        %v639 = vsel %vm622, %v580, 0
        %v642 = vsel %vm622, %v581, 0
        %v645 = vsel %vm622, %v582, 0
        %647 = vmatprep.subr.bf16.mxu0 0
        %648 = vmatpush1.bf16.msra.mxu0 %v614
        %649 = vmatprep.subr.bf16.mxu0 0
        %650 = vmatpush1.bf16.msra.mxu0 %v615
        %651 = vmatprep.subr.bf16.mxu0 0
        %652 = vmatpush1.bf16.msra.mxu0 %v616
        %653 = vmatprep.subr.bf16.mxu0 0
        %654 = vmatpush1.bf16.msra.mxu0 %v617
        %655 = vmatprep.subr.bf16.mxu0 0
        %656 = vmatpush1.bf16.msra.mxu0 0
        %657 = vmatprep.subr.bf16.mxu0 0
        %658 = vmatpush1.bf16.msra.mxu0 0
        %659 = vmatprep.subr.bf16.mxu0 0
        %660 = vmatpush1.bf16.msra.mxu0 0
        %661 = vmatprep.subr.bf16.mxu0 0
        %662 = vmatpush1.bf16.msra.mxu0 0
        %663 = vmatprep.subr.bf16.mxu0 0
        %664 = vmatpush1.bf16.msra.mxu0 0
        %665 = vmatprep.subr.bf16.mxu0 0
        %666 = vmatpush1.bf16.msra.mxu0 0
        %667 = vmatprep.subr.bf16.mxu0 0
        %668 = vmatpush1.bf16.msra.mxu0 0
        %669 = vmatprep.subr.bf16.mxu0 0
        %670 = vmatpush1.bf16.msra.mxu0 0
        %671 = vmatprep.subr.bf16.mxu0 0
        %672 = vmatpush1.bf16.msra.mxu0 0
        %673 = vmatprep.subr.bf16.mxu0 0
        %674 = vmatpush1.bf16.msra.mxu0 0
        %675 = vmatprep.subr.bf16.mxu0 0
        %676 = vmatpush1.bf16.msra.mxu0 0
        %677 = vmatprep.subr.bf16.mxu0 0
        %678 = vmatpush1.bf16.msra.mxu0 0
        %679 = vmatprep.mubr.bf16.mxu0 0
        %680 = vmatmul.mubr.bf16.gmra.mrb[0].mxu0 %v624
        %v681 = vpop.f32.mrb[0].mxu0
        %v682 = vadd.f32 %v596, %v681
        %v683 = vpop.f32.mrb[0].mxu0
        %v684 = vpop.f32.mrb[0].mxu0
        %v685 = vadd.f32 %v596, %v684
        %v686 = vpop.f32.mrb[0].mxu0
        %687 = vmatprep.mubr.bf16.mxu0 0
        %688 = vmatmul.mubr.bf16.gmra.mrb[0].mxu0 %v627
        %v689 = vpop.f32.mrb[0].mxu0
        %v690 = vadd.f32 %v596, %v689
        %v691 = vpop.f32.mrb[0].mxu0
        %v692 = vpop.f32.mrb[0].mxu0
        %v693 = vadd.f32 %v596, %v692
        %v694 = vpop.f32.mrb[0].mxu0
        %695 = vmatprep.mubr.bf16.mxu0 0
        %696 = vmatmul.mubr.bf16.gmra.mrb[0].mxu0 %v630
        %v697 = vpop.f32.mrb[0].mxu0
        %v698 = vadd.f32 %v596, %v697
        %v699 = vpop.f32.mrb[0].mxu0
        %v700 = vpop.f32.mrb[0].mxu0
        %v701 = vadd.f32 %v596, %v700
        %v702 = vpop.f32.mrb[0].mxu0
        %703 = vmatprep.mubr.bf16.mxu0 0
        %704 = vmatmul.mubr.bf16.gmra.mrb[0].mxu0 %v633
        %v705 = vpop.f32.mrb[0].mxu0
        %v706 = vadd.f32 %v596, %v705
        %v707 = vpop.f32.mrb[0].mxu0
        %v708 = vpop.f32.mrb[0].mxu0
        %v709 = vadd.f32 %v596, %v708
        %v710 = vpop.f32.mrb[0].mxu0
        %711 = vmatprep.mubr.bf16.mxu0 0
        %712 = vmatmul.mubr.bf16.gmra.mrb[0].mxu0 %v636
        %v713 = vpop.f32.mrb[0].mxu0
        %v714 = vadd.f32 %v596, %v713
        %v715 = vpop.f32.mrb[0].mxu0
        %v716 = vpop.f32.mrb[0].mxu0
        %v717 = vadd.f32 %v596, %v716
        %v718 = vpop.f32.mrb[0].mxu0
        %719 = vmatprep.mubr.bf16.mxu0 0
        %720 = vmatmul.mubr.bf16.gmra.mrb[0].mxu0 %v639
        %v721 = vpop.f32.mrb[0].mxu0
        %v722 = vadd.f32 %v596, %v721
        %v723 = vpop.f32.mrb[0].mxu0
        %v724 = vpop.f32.mrb[0].mxu0
        %v725 = vadd.f32 %v596, %v724
        %v726 = vpop.f32.mrb[0].mxu0
        %727 = vmatprep.mubr.bf16.mxu0 0
        %728 = vmatmul.mubr.bf16.gmra.mrb[0].mxu0 %v642
        %v729 = vpop.f32.mrb[0].mxu0
        %v730 = vadd.f32 %v596, %v729
        %v731 = vpop.f32.mrb[0].mxu0
        %v732 = vpop.f32.mrb[0].mxu0
        %v733 = vadd.f32 %v596, %v732
        %v734 = vpop.f32.mrb[0].mxu0
        %735 = vmatprep.mubr.bf16.mxu0 0
        %736 = vmatmul.mubr.bf16.gmra.mrb[0].mxu0 %v645
        %v737 = vpop.f32.mrb[0].mxu0
        %v738 = vadd.f32 %v596, %v737
        %v739 = vpop.f32.mrb[0].mxu0
        %v740 = vpop.f32.mrb[0].mxu0
        %v741 = vadd.f32 %v596, %v740
        %v742 = vpop.f32.mrb[0].mxu0
        %743 = vdwg.mxu0
        %v744 = vmax.f32 %v682, 0.0
        %v745 = vmax.f32 %v685, 0.0
        %v746 = vmax.f32 %v690, 0.0
        %v747 = vmax.f32 %v693, 0.0
        %v748 = vmax.f32 %v698, 0.0
        %v749 = vmax.f32 %v701, 0.0
        %v750 = vmax.f32 %v706, 0.0
        %v751 = vmax.f32 %v709, 0.0
        %v752 = vmax.f32 %v714, 0.0
        %v753 = vmax.f32 %v717, 0.0
        %v754 = vmax.f32 %v722, 0.0
        %v755 = vmax.f32 %v725, 0.0
        %v756 = vmax.f32 %v730, 0.0
        %v757 = vmax.f32 %v733, 0.0
        %v758 = vmax.f32 %v738, 0.0
        %v759 = vmax.f32 %v741, 0.0
        %v760 = vpack.c.bf16 %v745, %v744
        %v761 = vpack.c.bf16 %v747, %v746
        %v762 = vpack.c.bf16 %v749, %v748
        %v763 = vpack.c.bf16 %v751, %v750
        %v764 = vpack.c.bf16 %v753, %v752
        %v765 = vpack.c.bf16 %v755, %v754
        %v766 = vpack.c.bf16 %v757, %v756
        %v767 = vpack.c.bf16 %v759, %v758
        %v768 = vld [vmem:[%s380] sm:$0xff]
        %v769 = vld [vmem:[%s380 + $0x8] sm:$0xff]
        %v770 = vld [vmem:[%s380 + $0x10] sm:$0xff]
        %v771 = vld [vmem:[%s380 + $0x18] sm:$0xff]
        %v772 = vld [vmem:[%s380 + $0x20] sm:$0xff]
        %v773 = vld [vmem:[%s380 + $0x28] sm:$0xff]
        %v774 = vld [vmem:[%s380 + $0x30] sm:$0xff]
        %v775 = vld [vmem:[%s380 + $0x38] sm:$0xff]
        %v776 = vld [vmem:[%s380 + $0x40] sm:$0xff]
        %v777 = vld [vmem:[%s380 + $0x48] sm:$0xff]
        %v778 = vld [vmem:[%s380 + $0x50] sm:$0xff]
        %v779 = vld [vmem:[%s380 + $0x58] sm:$0xff]
        %v780 = vld [vmem:[%s380 + $0x60] sm:$0xff]
        %v781 = vld [vmem:[%s380 + $0x68] sm:$0xff]
        %v782 = vld [vmem:[%s380 + $0x70] sm:$0xff]
        %v783 = vld [vmem:[%s380 + $0x78] sm:$0xff]
        %v784 = vld [vmem:[%s380 + $0x80] sm:$0xff]
        %v785 = vld [vmem:[%s380 + $0x88] sm:$0xff]
        %v786 = vld [vmem:[%s380 + $0x90] sm:$0xff]
        %v787 = vld [vmem:[%s380 + $0x98] sm:$0xff]
        %v788 = vld [vmem:[%s380 + $0xa0] sm:$0xff]
        %v789 = vld [vmem:[%s380 + $0xa8] sm:$0xff]
        %v790 = vld [vmem:[%s380 + $0xb0] sm:$0xff]
        %v791 = vld [vmem:[%s380 + $0xb8] sm:$0xff]
        %v792 = vld [vmem:[%s380 + $0xc0] sm:$0xff]
        %v793 = vld [vmem:[%s380 + $0xc8] sm:$0xff]
        %v794 = vld [vmem:[%s380 + $0xd0] sm:$0xff]
        %v795 = vld [vmem:[%s380 + $0xd8] sm:$0xff]
        %v796 = vld [vmem:[%s380 + $0xe0] sm:$0xff]
        %v797 = vld [vmem:[%s380 + $0xe8] sm:$0xff]
        %v798 = vld [vmem:[%s380 + $0xf0] sm:$0xff]
        %v799 = vld [vmem:[%s380 + $0xf8] sm:$0xff]
        %v800 = vld [vmem:[%s380 + $0x100] sm:$0xff]
        %v801 = vld [vmem:[%s380 + $0x108] sm:$0xff]
        %v802 = vld [vmem:[%s380 + $0x110] sm:$0xff]
        %v803 = vld [vmem:[%s380 + $0x118] sm:$0xff]
        %v804 = vld [vmem:[%s380 + $0x120] sm:$0xff]
        %v805 = vld [vmem:[%s380 + $0x128] sm:$0xff]
        %v806 = vld [vmem:[%s380 + $0x130] sm:$0xff]
        %v807 = vld [vmem:[%s380 + $0x138] sm:$0xff]
        %v808 = vld [vmem:[%s380 + $0x140] sm:$0xff]
        %v809 = vld [vmem:[%s380 + $0x148] sm:$0xff]
        %v810 = vld [vmem:[%s380 + $0x150] sm:$0xff]
        %v811 = vld [vmem:[%s380 + $0x158] sm:$0xff]
        %v812 = vld [vmem:[%s380 + $0x160] sm:$0xff]
        %v813 = vld [vmem:[%s380 + $0x168] sm:$0xff]
        %v814 = vld [vmem:[%s380 + $0x170] sm:$0xff]
        %v815 = vld [vmem:[%s380 + $0x178] sm:$0xff]
        %v816 = vld [vmem:[%s380 + $0x180] sm:$0xff]
        %v817 = vld [vmem:[%s380 + $0x188] sm:$0xff]
        %v818 = vld [vmem:[%s380 + $0x190] sm:$0xff]
        %v819 = vld [vmem:[%s380 + $0x198] sm:$0xff]
        %v820 = vld [vmem:[%s380 + $0x1a0] sm:$0xff]
        %v821 = vld [vmem:[%s380 + $0x1a8] sm:$0xff]
        %v822 = vld [vmem:[%s380 + $0x1b0] sm:$0xff]
        %v823 = vld [vmem:[%s380 + $0x1b8] sm:$0xff]
        %v824 = vld [vmem:[%s380 + $0x1c0] sm:$0xff]
        %v825 = vld [vmem:[%s380 + $0x1c8] sm:$0xff]
        %v826 = vld [vmem:[%s380 + $0x1d0] sm:$0xff]
        %v827 = vld [vmem:[%s380 + $0x1d8] sm:$0xff]
        %v828 = vld [vmem:[%s380 + $0x1e0] sm:$0xff]
        %v829 = vld [vmem:[%s380 + $0x1e8] sm:$0xff]
        %v830 = vld [vmem:[%s380 + $0x1f0] sm:$0xff]
        %v831 = vld [vmem:[%s380 + $0x1f8] sm:$0xff]
        %v896 = vunpack.c.l.b16 %v768
        %v897 = vunpack.c.h.b16 %v768
        %v898 = vunpack.c.l.b16 %v769
        %v899 = vunpack.c.h.b16 %v769
        %v900 = vunpack.c.l.b16 %v770
        %v901 = vunpack.c.h.b16 %v770
        %v902 = vunpack.c.l.b16 %v771
        %v903 = vunpack.c.h.b16 %v771
        %v904 = vunpack.c.l.b16 %v772
        %v905 = vunpack.c.h.b16 %v772
        %v906 = vunpack.c.l.b16 %v773
        %v907 = vunpack.c.h.b16 %v773
        %v908 = vunpack.c.l.b16 %v774
        %v909 = vunpack.c.h.b16 %v774
        %v910 = vunpack.c.l.b16 %v775
        %v911 = vunpack.c.h.b16 %v775
        %v912 = vunpack.c.l.b16 %v776
        %v913 = vunpack.c.h.b16 %v776
        %v914 = vunpack.c.l.b16 %v777
        %v915 = vunpack.c.h.b16 %v777
        %v916 = vunpack.c.l.b16 %v778
        %v917 = vunpack.c.h.b16 %v778
        %v918 = vunpack.c.l.b16 %v779
        %v919 = vunpack.c.h.b16 %v779
        %v920 = vunpack.c.l.b16 %v780
        %v921 = vunpack.c.h.b16 %v780
        %v922 = vunpack.c.l.b16 %v781
        %v923 = vunpack.c.h.b16 %v781
        %v924 = vunpack.c.l.b16 %v782
        %v925 = vunpack.c.h.b16 %v782
        %v926 = vunpack.c.l.b16 %v783
        %v927 = vunpack.c.h.b16 %v783
        %v928 = vunpack.c.l.b16 %v784
        %v929 = vunpack.c.h.b16 %v784
        %v930 = vunpack.c.l.b16 %v785
        %v931 = vunpack.c.h.b16 %v785
        %v932 = vunpack.c.l.b16 %v786
        %v933 = vunpack.c.h.b16 %v786
        %v934 = vunpack.c.l.b16 %v787
        %v935 = vunpack.c.h.b16 %v787
        %v936 = vunpack.c.l.b16 %v788
        %v937 = vunpack.c.h.b16 %v788
        %v938 = vunpack.c.l.b16 %v789
        %v939 = vunpack.c.h.b16 %v789
        %v940 = vunpack.c.l.b16 %v790
        %v941 = vunpack.c.h.b16 %v790
        %v942 = vunpack.c.l.b16 %v791
        %v943 = vunpack.c.h.b16 %v791
        %v944 = vunpack.c.l.b16 %v792
        %v945 = vunpack.c.h.b16 %v792
        %v946 = vunpack.c.l.b16 %v793
        %v947 = vunpack.c.h.b16 %v793
        %v948 = vunpack.c.l.b16 %v794
        %v949 = vunpack.c.h.b16 %v794
        %v950 = vunpack.c.l.b16 %v795
        %v951 = vunpack.c.h.b16 %v795
        %v952 = vunpack.c.l.b16 %v796
        %v953 = vunpack.c.h.b16 %v796
        %v954 = vunpack.c.l.b16 %v797
        %v955 = vunpack.c.h.b16 %v797
        %v956 = vunpack.c.l.b16 %v798
        %v957 = vunpack.c.h.b16 %v798
        %v958 = vunpack.c.l.b16 %v799
        %v959 = vunpack.c.h.b16 %v799
        %v960 = vunpack.c.l.b16 %v800
        %v961 = vunpack.c.h.b16 %v800
        %v962 = vunpack.c.l.b16 %v801
        %v963 = vunpack.c.h.b16 %v801
        %v964 = vunpack.c.l.b16 %v802
        %v965 = vunpack.c.h.b16 %v802
        %v966 = vunpack.c.l.b16 %v803
        %v967 = vunpack.c.h.b16 %v803
        %v968 = vunpack.c.l.b16 %v804
        %v969 = vunpack.c.h.b16 %v804
        %v970 = vunpack.c.l.b16 %v805
        %v971 = vunpack.c.h.b16 %v805
        %v972 = vunpack.c.l.b16 %v806
        %v973 = vunpack.c.h.b16 %v806
        %v974 = vunpack.c.l.b16 %v807
        %v975 = vunpack.c.h.b16 %v807
        %v976 = vunpack.c.l.b16 %v808
        %v977 = vunpack.c.h.b16 %v808
        %v978 = vunpack.c.l.b16 %v809
        %v979 = vunpack.c.h.b16 %v809
        %v980 = vunpack.c.l.b16 %v810
        %v981 = vunpack.c.h.b16 %v810
        %v982 = vunpack.c.l.b16 %v811
        %v983 = vunpack.c.h.b16 %v811
        %v984 = vunpack.c.l.b16 %v812
        %v985 = vunpack.c.h.b16 %v812
        %v986 = vunpack.c.l.b16 %v813
        %v987 = vunpack.c.h.b16 %v813
        %v988 = vunpack.c.l.b16 %v814
        %v989 = vunpack.c.h.b16 %v814
        %v990 = vunpack.c.l.b16 %v815
        %v991 = vunpack.c.h.b16 %v815
        %v992 = vunpack.c.l.b16 %v816
        %v993 = vunpack.c.h.b16 %v816
        %v994 = vunpack.c.l.b16 %v817
        %v995 = vunpack.c.h.b16 %v817
        %v996 = vunpack.c.l.b16 %v818
        %v997 = vunpack.c.h.b16 %v818
        %v998 = vunpack.c.l.b16 %v819
        %v999 = vunpack.c.h.b16 %v819
        %v1000 = vunpack.c.l.b16 %v820
        %v1001 = vunpack.c.h.b16 %v820
        %v1002 = vunpack.c.l.b16 %v821
        %v1003 = vunpack.c.h.b16 %v821
        %v1004 = vunpack.c.l.b16 %v822
        %v1005 = vunpack.c.h.b16 %v822
        %v1006 = vunpack.c.l.b16 %v823
        %v1007 = vunpack.c.h.b16 %v823
        %v1008 = vunpack.c.l.b16 %v824
        %v1009 = vunpack.c.h.b16 %v824
        %v1010 = vunpack.c.l.b16 %v825
        %v1011 = vunpack.c.h.b16 %v825
        %v1012 = vunpack.c.l.b16 %v826
        %v1013 = vunpack.c.h.b16 %v826
        %v1014 = vunpack.c.l.b16 %v827
        %v1015 = vunpack.c.h.b16 %v827
        %v1016 = vunpack.c.l.b16 %v828
        %v1017 = vunpack.c.h.b16 %v828
        %v1018 = vunpack.c.l.b16 %v829
        %v1019 = vunpack.c.h.b16 %v829
        %v1020 = vunpack.c.l.b16 %v830
        %v1021 = vunpack.c.h.b16 %v830
        %v1022 = vunpack.c.l.b16 %v831
        %v1023 = vunpack.c.h.b16 %v831
        %v1024 = vpack.c.b16 %v904, %v896
        %v1025 = vpack.c.b16 %v905, %v897
        %v1026 = vpack.c.b16 %v906, %v898
        %v1027 = vpack.c.b16 %v907, %v899
        %v1028 = vpack.c.b16 %v908, %v900
        %v1029 = vpack.c.b16 %v909, %v901
        %v1030 = vpack.c.b16 %v910, %v902
        %v1031 = vpack.c.b16 %v911, %v903
        %v1032 = vpack.c.b16 %v920, %v912
        %v1033 = vpack.c.b16 %v921, %v913
        %v1034 = vpack.c.b16 %v922, %v914
        %v1035 = vpack.c.b16 %v923, %v915
        %v1036 = vpack.c.b16 %v924, %v916
        %v1037 = vpack.c.b16 %v925, %v917
        %v1038 = vpack.c.b16 %v926, %v918
        %v1039 = vpack.c.b16 %v927, %v919
        %v1040 = vpack.c.b16 %v936, %v928
        %v1041 = vpack.c.b16 %v937, %v929
        %v1042 = vpack.c.b16 %v938, %v930
        %v1043 = vpack.c.b16 %v939, %v931
        %v1044 = vpack.c.b16 %v940, %v932
        %v1045 = vpack.c.b16 %v941, %v933
        %v1046 = vpack.c.b16 %v942, %v934
        %v1047 = vpack.c.b16 %v943, %v935
        %v1048 = vpack.c.b16 %v952, %v944
        %v1049 = vpack.c.b16 %v953, %v945
        %v1050 = vpack.c.b16 %v954, %v946
        %v1051 = vpack.c.b16 %v955, %v947
        %v1052 = vpack.c.b16 %v956, %v948
        %v1053 = vpack.c.b16 %v957, %v949
        %v1054 = vpack.c.b16 %v958, %v950
        %v1055 = vpack.c.b16 %v959, %v951
        %v1056 = vpack.c.b16 %v968, %v960
        %v1057 = vpack.c.b16 %v969, %v961
        %v1058 = vpack.c.b16 %v970, %v962
        %v1059 = vpack.c.b16 %v971, %v963
        %v1060 = vpack.c.b16 %v972, %v964
        %v1061 = vpack.c.b16 %v973, %v965
        %v1062 = vpack.c.b16 %v974, %v966
        %v1063 = vpack.c.b16 %v975, %v967
        %v1064 = vpack.c.b16 %v984, %v976
        %v1065 = vpack.c.b16 %v985, %v977
        %v1066 = vpack.c.b16 %v986, %v978
        %v1067 = vpack.c.b16 %v987, %v979
        %v1068 = vpack.c.b16 %v988, %v980
        %v1069 = vpack.c.b16 %v989, %v981
        %v1070 = vpack.c.b16 %v990, %v982
        %v1071 = vpack.c.b16 %v991, %v983
        %v1072 = vpack.c.b16 %v1000, %v992
        %v1073 = vpack.c.b16 %v1001, %v993
        %v1074 = vpack.c.b16 %v1002, %v994
        %v1075 = vpack.c.b16 %v1003, %v995
        %v1076 = vpack.c.b16 %v1004, %v996
        %v1077 = vpack.c.b16 %v1005, %v997
        %v1078 = vpack.c.b16 %v1006, %v998
        %v1079 = vpack.c.b16 %v1007, %v999
        %v1080 = vpack.c.b16 %v1016, %v1008
        %v1081 = vpack.c.b16 %v1017, %v1009
        %v1082 = vpack.c.b16 %v1018, %v1010
        %v1083 = vpack.c.b16 %v1019, %v1011
        %v1084 = vpack.c.b16 %v1020, %v1012
        %v1085 = vpack.c.b16 %v1021, %v1013
        %v1086 = vpack.c.b16 %v1022, %v1014
        %v1087 = vpack.c.b16 %v1023, %v1015
        %1152 = vmatprep.subr.bf16.mxu0 %v1025
        %1153 = vmatpush1.bf16.msra.mxu0 %v1024
        %1154 = vmatprep.subr.bf16.mxu0 %v1033
        %1155 = vmatpush1.bf16.msra.mxu0 %v1032
        %1156 = vmatprep.subr.bf16.mxu0 %v1041
        %1157 = vmatpush1.bf16.msra.mxu0 %v1040
        %1158 = vmatprep.subr.bf16.mxu0 %v1049
        %1159 = vmatpush1.bf16.msra.mxu0 %v1048
        %1160 = vmatprep.subr.bf16.mxu0 %v1057
        %1161 = vmatpush1.bf16.msra.mxu0 %v1056
        %1162 = vmatprep.subr.bf16.mxu0 %v1065
        %1163 = vmatpush1.bf16.msra.mxu0 %v1064
        %1164 = vmatprep.subr.bf16.mxu0 %v1073
        %1165 = vmatpush1.bf16.msra.mxu0 %v1072
        %1166 = vmatprep.subr.bf16.mxu0 %v1081
        %1167 = vmatpush1.bf16.msra.mxu0 %v1080
        %1168 = vmatprep.subr.bf16.mxu0 0
        %1169 = vmatpush1.bf16.msra.mxu0 0
        %1170 = vmatprep.subr.bf16.mxu0 0
        %1171 = vmatpush1.bf16.msra.mxu0 0
        %1172 = vmatprep.subr.bf16.mxu0 0
        %1173 = vmatpush1.bf16.msra.mxu0 0
        %1174 = vmatprep.subr.bf16.mxu0 0
        %1175 = vmatpush1.bf16.msra.mxu0 0
        %1176 = vmatprep.subr.bf16.mxu0 0
        %1177 = vmatpush1.bf16.msra.mxu0 0
        %1178 = vmatprep.subr.bf16.mxu0 0
        %1179 = vmatpush1.bf16.msra.mxu0 0
        %1180 = vmatprep.subr.bf16.mxu0 0
        %1181 = vmatpush1.bf16.msra.mxu0 0
        %1182 = vmatprep.subr.bf16.mxu0 0
        %1183 = vmatpush1.bf16.msra.mxu0 0
        %1184 = vmatprep.mubr.bf16.mxu0 0
        %1185 = vmatmul.mubr.bf16.gmra.mrb[0].mxu0 %v760
        %v1186 = vpop.f32.mrb[0].mxu0
        %v1187 = vadd.f32 0.0, %v1186
        %v1188 = vpop.f32.mrb[0].mxu0
        %v1189 = vadd.f32 0.0, %v1188
        %v1190 = vpop.f32.mrb[0].mxu0
        %v1191 = vadd.f32 0.0, %v1190
        %v1192 = vpop.f32.mrb[0].mxu0
        %v1193 = vadd.f32 0.0, %v1192
        %1194 = vmatprep.mubr.bf16.mxu0 0
        %1195 = vmatmul.mubr.bf16.gmra.mrb[0].mxu0 %v761
        %v1196 = vpop.f32.mrb[0].mxu0
        %v1197 = vadd.f32 0.0, %v1196
        %v1198 = vpop.f32.mrb[0].mxu0
        %v1199 = vadd.f32 0.0, %v1198
        %v1200 = vpop.f32.mrb[0].mxu0
        %v1201 = vadd.f32 0.0, %v1200
        %v1202 = vpop.f32.mrb[0].mxu0
        %v1203 = vadd.f32 0.0, %v1202
        %1204 = vmatprep.mubr.bf16.mxu0 0
        %1205 = vmatmul.mubr.bf16.gmra.mrb[0].mxu0 %v762
        %v1206 = vpop.f32.mrb[0].mxu0
        %v1207 = vadd.f32 0.0, %v1206
        %v1208 = vpop.f32.mrb[0].mxu0
        %v1209 = vadd.f32 0.0, %v1208
        %v1210 = vpop.f32.mrb[0].mxu0
        %v1211 = vadd.f32 0.0, %v1210
        %v1212 = vpop.f32.mrb[0].mxu0
        %v1213 = vadd.f32 0.0, %v1212
        %1214 = vmatprep.mubr.bf16.mxu0 0
        %1215 = vmatmul.mubr.bf16.gmra.mrb[0].mxu0 %v763
        %v1216 = vpop.f32.mrb[0].mxu0
        %v1217 = vadd.f32 0.0, %v1216
        %v1218 = vpop.f32.mrb[0].mxu0
        %v1219 = vadd.f32 0.0, %v1218
        %v1220 = vpop.f32.mrb[0].mxu0
        %v1221 = vadd.f32 0.0, %v1220
        %v1222 = vpop.f32.mrb[0].mxu0
        %v1223 = vadd.f32 0.0, %v1222
        %1224 = vmatprep.mubr.bf16.mxu0 0
        %1225 = vmatmul.mubr.bf16.gmra.mrb[0].mxu0 %v764
        %v1226 = vpop.f32.mrb[0].mxu0
        %v1227 = vadd.f32 0.0, %v1226
        %v1228 = vpop.f32.mrb[0].mxu0
        %v1229 = vadd.f32 0.0, %v1228
        %v1230 = vpop.f32.mrb[0].mxu0
        %v1231 = vadd.f32 0.0, %v1230
        %v1232 = vpop.f32.mrb[0].mxu0
        %v1233 = vadd.f32 0.0, %v1232
        %1234 = vmatprep.mubr.bf16.mxu0 0
        %1235 = vmatmul.mubr.bf16.gmra.mrb[0].mxu0 %v765
        %v1236 = vpop.f32.mrb[0].mxu0
        %v1237 = vadd.f32 0.0, %v1236
        %v1238 = vpop.f32.mrb[0].mxu0
        %v1239 = vadd.f32 0.0, %v1238
        %v1240 = vpop.f32.mrb[0].mxu0
        %v1241 = vadd.f32 0.0, %v1240
        %v1242 = vpop.f32.mrb[0].mxu0
        %v1243 = vadd.f32 0.0, %v1242
        %1244 = vmatprep.mubr.bf16.mxu0 0
        %1245 = vmatmul.mubr.bf16.gmra.mrb[0].mxu0 %v766
        %v1246 = vpop.f32.mrb[0].mxu0
        %v1247 = vadd.f32 0.0, %v1246
        %v1248 = vpop.f32.mrb[0].mxu0
        %v1249 = vadd.f32 0.0, %v1248
        %v1250 = vpop.f32.mrb[0].mxu0
        %v1251 = vadd.f32 0.0, %v1250
        %v1252 = vpop.f32.mrb[0].mxu0
        %v1253 = vadd.f32 0.0, %v1252
        %1254 = vmatprep.mubr.bf16.mxu0 0
        %1255 = vmatmul.mubr.bf16.gmra.mrb[0].mxu0 %v767
        %v1256 = vpop.f32.mrb[0].mxu0
        %v1257 = vadd.f32 0.0, %v1256
        %v1258 = vpop.f32.mrb[0].mxu0
        %v1259 = vadd.f32 0.0, %v1258
        %v1260 = vpop.f32.mrb[0].mxu0
        %v1261 = vadd.f32 0.0, %v1260
        %v1262 = vpop.f32.mrb[0].mxu0
        %v1263 = vadd.f32 0.0, %v1262
        %1264 = vdwg.mxu0
        %1265 = vmatprep.subr.bf16.mxu0 %v1027
        %1266 = vmatpush1.bf16.msra.mxu0 %v1026
        %1267 = vmatprep.subr.bf16.mxu0 %v1035
        %1268 = vmatpush1.bf16.msra.mxu0 %v1034
        %1269 = vmatprep.subr.bf16.mxu0 %v1043
        %1270 = vmatpush1.bf16.msra.mxu0 %v1042
        %1271 = vmatprep.subr.bf16.mxu0 %v1051
        %1272 = vmatpush1.bf16.msra.mxu0 %v1050
        %1273 = vmatprep.subr.bf16.mxu0 %v1059
        %1274 = vmatpush1.bf16.msra.mxu0 %v1058
        %1275 = vmatprep.subr.bf16.mxu0 %v1067
        %1276 = vmatpush1.bf16.msra.mxu0 %v1066
        %1277 = vmatprep.subr.bf16.mxu0 %v1075
        %1278 = vmatpush1.bf16.msra.mxu0 %v1074
        %1279 = vmatprep.subr.bf16.mxu0 %v1083
        %1280 = vmatpush1.bf16.msra.mxu0 %v1082
        %1281 = vmatprep.subr.bf16.mxu0 0
        %1282 = vmatpush1.bf16.msra.mxu0 0
        %1283 = vmatprep.subr.bf16.mxu0 0
        %1284 = vmatpush1.bf16.msra.mxu0 0
        %1285 = vmatprep.subr.bf16.mxu0 0
        %1286 = vmatpush1.bf16.msra.mxu0 0
        %1287 = vmatprep.subr.bf16.mxu0 0
        %1288 = vmatpush1.bf16.msra.mxu0 0
        %1289 = vmatprep.subr.bf16.mxu0 0
        %1290 = vmatpush1.bf16.msra.mxu0 0
        %1291 = vmatprep.subr.bf16.mxu0 0
        %1292 = vmatpush1.bf16.msra.mxu0 0
        %1293 = vmatprep.subr.bf16.mxu0 0
        %1294 = vmatpush1.bf16.msra.mxu0 0
        %1295 = vmatprep.subr.bf16.mxu0 0
        %1296 = vmatpush1.bf16.msra.mxu0 0
        %1297 = vmatprep.mubr.bf16.mxu0 0
        %1298 = vmatmul.mubr.bf16.gmra.mrb[0].mxu0 %v760
        %v1299 = vpop.f32.mrb[0].mxu0
        %v1300 = vadd.f32 0.0, %v1299
        %v1301 = vpop.f32.mrb[0].mxu0
        %v1302 = vadd.f32 0.0, %v1301
        %v1303 = vpop.f32.mrb[0].mxu0
        %v1304 = vadd.f32 0.0, %v1303
        %v1305 = vpop.f32.mrb[0].mxu0
        %v1306 = vadd.f32 0.0, %v1305
        %1307 = vmatprep.mubr.bf16.mxu0 0
        %1308 = vmatmul.mubr.bf16.gmra.mrb[0].mxu0 %v761
        %v1309 = vpop.f32.mrb[0].mxu0
        %v1310 = vadd.f32 0.0, %v1309
        %v1311 = vpop.f32.mrb[0].mxu0
        %v1312 = vadd.f32 0.0, %v1311
        %v1313 = vpop.f32.mrb[0].mxu0
        %v1314 = vadd.f32 0.0, %v1313
        %v1315 = vpop.f32.mrb[0].mxu0
        %v1316 = vadd.f32 0.0, %v1315
        %1317 = vmatprep.mubr.bf16.mxu0 0
        %1318 = vmatmul.mubr.bf16.gmra.mrb[0].mxu0 %v762
        %v1319 = vpop.f32.mrb[0].mxu0
        %v1320 = vadd.f32 0.0, %v1319
        %v1321 = vpop.f32.mrb[0].mxu0
        %v1322 = vadd.f32 0.0, %v1321
        %v1323 = vpop.f32.mrb[0].mxu0
        %v1324 = vadd.f32 0.0, %v1323
        %v1325 = vpop.f32.mrb[0].mxu0
        %v1326 = vadd.f32 0.0, %v1325
        %1327 = vmatprep.mubr.bf16.mxu0 0
        %1328 = vmatmul.mubr.bf16.gmra.mrb[0].mxu0 %v763
        %v1329 = vpop.f32.mrb[0].mxu0
        %v1330 = vadd.f32 0.0, %v1329
        %v1331 = vpop.f32.mrb[0].mxu0
        %v1332 = vadd.f32 0.0, %v1331
        %v1333 = vpop.f32.mrb[0].mxu0
        %v1334 = vadd.f32 0.0, %v1333
        %v1335 = vpop.f32.mrb[0].mxu0
        %v1336 = vadd.f32 0.0, %v1335
        %1337 = vmatprep.mubr.bf16.mxu0 0
        %1338 = vmatmul.mubr.bf16.gmra.mrb[0].mxu0 %v764
        %v1339 = vpop.f32.mrb[0].mxu0
        %v1340 = vadd.f32 0.0, %v1339
        %v1341 = vpop.f32.mrb[0].mxu0
        %v1342 = vadd.f32 0.0, %v1341
        %v1343 = vpop.f32.mrb[0].mxu0
        %v1344 = vadd.f32 0.0, %v1343
        %v1345 = vpop.f32.mrb[0].mxu0
        %v1346 = vadd.f32 0.0, %v1345
        %1347 = vmatprep.mubr.bf16.mxu0 0
        %1348 = vmatmul.mubr.bf16.gmra.mrb[0].mxu0 %v765
        %v1349 = vpop.f32.mrb[0].mxu0
        %v1350 = vadd.f32 0.0, %v1349
        %v1351 = vpop.f32.mrb[0].mxu0
        %v1352 = vadd.f32 0.0, %v1351
        %v1353 = vpop.f32.mrb[0].mxu0
        %v1354 = vadd.f32 0.0, %v1353
        %v1355 = vpop.f32.mrb[0].mxu0
        %v1356 = vadd.f32 0.0, %v1355
        %1357 = vmatprep.mubr.bf16.mxu0 0
        %1358 = vmatmul.mubr.bf16.gmra.mrb[0].mxu0 %v766
        %v1359 = vpop.f32.mrb[0].mxu0
        %v1360 = vadd.f32 0.0, %v1359
        %v1361 = vpop.f32.mrb[0].mxu0
        %v1362 = vadd.f32 0.0, %v1361
        %v1363 = vpop.f32.mrb[0].mxu0
        %v1364 = vadd.f32 0.0, %v1363
        %v1365 = vpop.f32.mrb[0].mxu0
        %v1366 = vadd.f32 0.0, %v1365
        %1367 = vmatprep.mubr.bf16.mxu0 0
        %1368 = vmatmul.mubr.bf16.gmra.mrb[0].mxu0 %v767
        %v1369 = vpop.f32.mrb[0].mxu0
        %v1370 = vadd.f32 0.0, %v1369
        %v1371 = vpop.f32.mrb[0].mxu0
        %v1372 = vadd.f32 0.0, %v1371
        %v1373 = vpop.f32.mrb[0].mxu0
        %v1374 = vadd.f32 0.0, %v1373
        %v1375 = vpop.f32.mrb[0].mxu0
        %v1376 = vadd.f32 0.0, %v1375
        %1377 = vdwg.mxu0
        %1378 = vmatprep.subr.bf16.mxu0 %v1029
        %1379 = vmatpush1.bf16.msra.mxu0 %v1028
        %1380 = vmatprep.subr.bf16.mxu0 %v1037
        %1381 = vmatpush1.bf16.msra.mxu0 %v1036
        %1382 = vmatprep.subr.bf16.mxu0 %v1045
        %1383 = vmatpush1.bf16.msra.mxu0 %v1044
        %1384 = vmatprep.subr.bf16.mxu0 %v1053
        %1385 = vmatpush1.bf16.msra.mxu0 %v1052
        %1386 = vmatprep.subr.bf16.mxu0 %v1061
        %1387 = vmatpush1.bf16.msra.mxu0 %v1060
        %1388 = vmatprep.subr.bf16.mxu0 %v1069
        %1389 = vmatpush1.bf16.msra.mxu0 %v1068
        %1390 = vmatprep.subr.bf16.mxu0 %v1077
        %1391 = vmatpush1.bf16.msra.mxu0 %v1076
        %1392 = vmatprep.subr.bf16.mxu0 %v1085
        %1393 = vmatpush1.bf16.msra.mxu0 %v1084
        %1394 = vmatprep.subr.bf16.mxu0 0
        %1395 = vmatpush1.bf16.msra.mxu0 0
        %1396 = vmatprep.subr.bf16.mxu0 0
        %1397 = vmatpush1.bf16.msra.mxu0 0
        %1398 = vmatprep.subr.bf16.mxu0 0
        %1399 = vmatpush1.bf16.msra.mxu0 0
        %1400 = vmatprep.subr.bf16.mxu0 0
        %1401 = vmatpush1.bf16.msra.mxu0 0
        %1402 = vmatprep.subr.bf16.mxu0 0
        %1403 = vmatpush1.bf16.msra.mxu0 0
        %1404 = vmatprep.subr.bf16.mxu0 0
        %1405 = vmatpush1.bf16.msra.mxu0 0
        %1406 = vmatprep.subr.bf16.mxu0 0
        %1407 = vmatpush1.bf16.msra.mxu0 0
        %1408 = vmatprep.subr.bf16.mxu0 0
        %1409 = vmatpush1.bf16.msra.mxu0 0
        %1410 = vmatprep.mubr.bf16.mxu0 0
        %1411 = vmatmul.mubr.bf16.gmra.mrb[0].mxu0 %v760
        %v1412 = vpop.f32.mrb[0].mxu0
        %v1413 = vadd.f32 0.0, %v1412
        %v1414 = vpop.f32.mrb[0].mxu0
        %v1415 = vadd.f32 0.0, %v1414
        %v1416 = vpop.f32.mrb[0].mxu0
        %v1417 = vadd.f32 0.0, %v1416
        %v1418 = vpop.f32.mrb[0].mxu0
        %v1419 = vadd.f32 0.0, %v1418
        %1420 = vmatprep.mubr.bf16.mxu0 0
        %1421 = vmatmul.mubr.bf16.gmra.mrb[0].mxu0 %v761
        %v1422 = vpop.f32.mrb[0].mxu0
        %v1423 = vadd.f32 0.0, %v1422
        %v1424 = vpop.f32.mrb[0].mxu0
        %v1425 = vadd.f32 0.0, %v1424
        %v1426 = vpop.f32.mrb[0].mxu0
        %v1427 = vadd.f32 0.0, %v1426
        %v1428 = vpop.f32.mrb[0].mxu0
        %v1429 = vadd.f32 0.0, %v1428
        %1430 = vmatprep.mubr.bf16.mxu0 0
        %1431 = vmatmul.mubr.bf16.gmra.mrb[0].mxu0 %v762
        %v1432 = vpop.f32.mrb[0].mxu0
        %v1433 = vadd.f32 0.0, %v1432
        %v1434 = vpop.f32.mrb[0].mxu0
        %v1435 = vadd.f32 0.0, %v1434
        %v1436 = vpop.f32.mrb[0].mxu0
        %v1437 = vadd.f32 0.0, %v1436
        %v1438 = vpop.f32.mrb[0].mxu0
        %v1439 = vadd.f32 0.0, %v1438
        %1440 = vmatprep.mubr.bf16.mxu0 0
        %1441 = vmatmul.mubr.bf16.gmra.mrb[0].mxu0 %v763
        %v1442 = vpop.f32.mrb[0].mxu0
        %v1443 = vadd.f32 0.0, %v1442
        %v1444 = vpop.f32.mrb[0].mxu0
        %v1445 = vadd.f32 0.0, %v1444
        %v1446 = vpop.f32.mrb[0].mxu0
        %v1447 = vadd.f32 0.0, %v1446
        %v1448 = vpop.f32.mrb[0].mxu0
        %v1449 = vadd.f32 0.0, %v1448
        %1450 = vmatprep.mubr.bf16.mxu0 0
        %1451 = vmatmul.mubr.bf16.gmra.mrb[0].mxu0 %v764
        %v1452 = vpop.f32.mrb[0].mxu0
        %v1453 = vadd.f32 0.0, %v1452
        %v1454 = vpop.f32.mrb[0].mxu0
        %v1455 = vadd.f32 0.0, %v1454
        %v1456 = vpop.f32.mrb[0].mxu0
        %v1457 = vadd.f32 0.0, %v1456
        %v1458 = vpop.f32.mrb[0].mxu0
        %v1459 = vadd.f32 0.0, %v1458
        %1460 = vmatprep.mubr.bf16.mxu0 0
        %1461 = vmatmul.mubr.bf16.gmra.mrb[0].mxu0 %v765
        %v1462 = vpop.f32.mrb[0].mxu0
        %v1463 = vadd.f32 0.0, %v1462
        %v1464 = vpop.f32.mrb[0].mxu0
        %v1465 = vadd.f32 0.0, %v1464
        %v1466 = vpop.f32.mrb[0].mxu0
        %v1467 = vadd.f32 0.0, %v1466
        %v1468 = vpop.f32.mrb[0].mxu0
        %v1469 = vadd.f32 0.0, %v1468
        %1470 = vmatprep.mubr.bf16.mxu0 0
        %1471 = vmatmul.mubr.bf16.gmra.mrb[0].mxu0 %v766
        %v1472 = vpop.f32.mrb[0].mxu0
        %v1473 = vadd.f32 0.0, %v1472
        %v1474 = vpop.f32.mrb[0].mxu0
        %v1475 = vadd.f32 0.0, %v1474
        %v1476 = vpop.f32.mrb[0].mxu0
        %v1477 = vadd.f32 0.0, %v1476
        %v1478 = vpop.f32.mrb[0].mxu0
        %v1479 = vadd.f32 0.0, %v1478
        %1480 = vmatprep.mubr.bf16.mxu0 0
        %1481 = vmatmul.mubr.bf16.gmra.mrb[0].mxu0 %v767
        %v1482 = vpop.f32.mrb[0].mxu0
        %v1483 = vadd.f32 0.0, %v1482
        %v1484 = vpop.f32.mrb[0].mxu0
        %v1485 = vadd.f32 0.0, %v1484
        %v1486 = vpop.f32.mrb[0].mxu0
        %v1487 = vadd.f32 0.0, %v1486
        %v1488 = vpop.f32.mrb[0].mxu0
        %v1489 = vadd.f32 0.0, %v1488
        %1490 = vdwg.mxu0
        %1491 = vmatprep.subr.bf16.mxu0 %v1031
        %1492 = vmatpush1.bf16.msra.mxu0 %v1030
        %1493 = vmatprep.subr.bf16.mxu0 %v1039
        %1494 = vmatpush1.bf16.msra.mxu0 %v1038
        %1495 = vmatprep.subr.bf16.mxu0 %v1047
        %1496 = vmatpush1.bf16.msra.mxu0 %v1046
        %1497 = vmatprep.subr.bf16.mxu0 %v1055
        %1498 = vmatpush1.bf16.msra.mxu0 %v1054
        %1499 = vmatprep.subr.bf16.mxu0 %v1063
        %1500 = vmatpush1.bf16.msra.mxu0 %v1062
        %1501 = vmatprep.subr.bf16.mxu0 %v1071
        %1502 = vmatpush1.bf16.msra.mxu0 %v1070
        %1503 = vmatprep.subr.bf16.mxu0 %v1079
        %1504 = vmatpush1.bf16.msra.mxu0 %v1078
        %1505 = vmatprep.subr.bf16.mxu0 %v1087
        %1506 = vmatpush1.bf16.msra.mxu0 %v1086
        %1507 = vmatprep.subr.bf16.mxu0 0
        %1508 = vmatpush1.bf16.msra.mxu0 0
        %1509 = vmatprep.subr.bf16.mxu0 0
        %1510 = vmatpush1.bf16.msra.mxu0 0
        %1511 = vmatprep.subr.bf16.mxu0 0
        %1512 = vmatpush1.bf16.msra.mxu0 0
        %1513 = vmatprep.subr.bf16.mxu0 0
        %1514 = vmatpush1.bf16.msra.mxu0 0
        %1515 = vmatprep.subr.bf16.mxu0 0
        %1516 = vmatpush1.bf16.msra.mxu0 0
        %1517 = vmatprep.subr.bf16.mxu0 0
        %1518 = vmatpush1.bf16.msra.mxu0 0
        %1519 = vmatprep.subr.bf16.mxu0 0
        %1520 = vmatpush1.bf16.msra.mxu0 0
        %1521 = vmatprep.subr.bf16.mxu0 0
        %1522 = vmatpush1.bf16.msra.mxu0 0
        %1523 = vmatprep.mubr.bf16.mxu0 0
        %1524 = vmatmul.mubr.bf16.gmra.mrb[0].mxu0 %v760
        %v1525 = vpop.f32.mrb[0].mxu0
        %v1526 = vadd.f32 0.0, %v1525
        %v1527 = vpop.f32.mrb[0].mxu0
        %v1528 = vadd.f32 0.0, %v1527
        %v1529 = vpop.f32.mrb[0].mxu0
        %v1530 = vadd.f32 0.0, %v1529
        %v1531 = vpop.f32.mrb[0].mxu0
        %v1532 = vadd.f32 0.0, %v1531
        %1533 = vmatprep.mubr.bf16.mxu0 0
        %1534 = vmatmul.mubr.bf16.gmra.mrb[0].mxu0 %v761
        %v1535 = vpop.f32.mrb[0].mxu0
        %v1536 = vadd.f32 0.0, %v1535
        %v1537 = vpop.f32.mrb[0].mxu0
        %v1538 = vadd.f32 0.0, %v1537
        %v1539 = vpop.f32.mrb[0].mxu0
        %v1540 = vadd.f32 0.0, %v1539
        %v1541 = vpop.f32.mrb[0].mxu0
        %v1542 = vadd.f32 0.0, %v1541
        %1543 = vmatprep.mubr.bf16.mxu0 0
        %1544 = vmatmul.mubr.bf16.gmra.mrb[0].mxu0 %v762
        %v1545 = vpop.f32.mrb[0].mxu0
        %v1546 = vadd.f32 0.0, %v1545
        %v1547 = vpop.f32.mrb[0].mxu0
        %v1548 = vadd.f32 0.0, %v1547
        %v1549 = vpop.f32.mrb[0].mxu0
        %v1550 = vadd.f32 0.0, %v1549
        %v1551 = vpop.f32.mrb[0].mxu0
        %v1552 = vadd.f32 0.0, %v1551
        %1553 = vmatprep.mubr.bf16.mxu0 0
        %1554 = vmatmul.mubr.bf16.gmra.mrb[0].mxu0 %v763
        %v1555 = vpop.f32.mrb[0].mxu0
        %v1556 = vadd.f32 0.0, %v1555
        %v1557 = vpop.f32.mrb[0].mxu0
        %v1558 = vadd.f32 0.0, %v1557
        %v1559 = vpop.f32.mrb[0].mxu0
        %v1560 = vadd.f32 0.0, %v1559
        %v1561 = vpop.f32.mrb[0].mxu0
        %v1562 = vadd.f32 0.0, %v1561
        %1563 = vmatprep.mubr.bf16.mxu0 0
        %1564 = vmatmul.mubr.bf16.gmra.mrb[0].mxu0 %v764
        %v1565 = vpop.f32.mrb[0].mxu0
        %v1566 = vadd.f32 0.0, %v1565
        %v1567 = vpop.f32.mrb[0].mxu0
        %v1568 = vadd.f32 0.0, %v1567
        %v1569 = vpop.f32.mrb[0].mxu0
        %v1570 = vadd.f32 0.0, %v1569
        %v1571 = vpop.f32.mrb[0].mxu0
        %v1572 = vadd.f32 0.0, %v1571
        %1573 = vmatprep.mubr.bf16.mxu0 0
        %1574 = vmatmul.mubr.bf16.gmra.mrb[0].mxu0 %v765
        %v1575 = vpop.f32.mrb[0].mxu0
        %v1576 = vadd.f32 0.0, %v1575
        %v1577 = vpop.f32.mrb[0].mxu0
        %v1578 = vadd.f32 0.0, %v1577
        %v1579 = vpop.f32.mrb[0].mxu0
        %v1580 = vadd.f32 0.0, %v1579
        %v1581 = vpop.f32.mrb[0].mxu0
        %v1582 = vadd.f32 0.0, %v1581
        %1583 = vmatprep.mubr.bf16.mxu0 0
        %1584 = vmatmul.mubr.bf16.gmra.mrb[0].mxu0 %v766
        %v1585 = vpop.f32.mrb[0].mxu0
        %v1586 = vadd.f32 0.0, %v1585
        %v1587 = vpop.f32.mrb[0].mxu0
        %v1588 = vadd.f32 0.0, %v1587
        %v1589 = vpop.f32.mrb[0].mxu0
        %v1590 = vadd.f32 0.0, %v1589
        %v1591 = vpop.f32.mrb[0].mxu0
        %v1592 = vadd.f32 0.0, %v1591
        %1593 = vmatprep.mubr.bf16.mxu0 0
        %1594 = vmatmul.mubr.bf16.gmra.mrb[0].mxu0 %v767
        %v1595 = vpop.f32.mrb[0].mxu0
        %v1596 = vadd.f32 0.0, %v1595
        %v1597 = vpop.f32.mrb[0].mxu0
        %v1598 = vadd.f32 0.0, %v1597
        %v1599 = vpop.f32.mrb[0].mxu0
        %v1600 = vadd.f32 0.0, %v1599
        %v1601 = vpop.f32.mrb[0].mxu0
        %v1602 = vadd.f32 0.0, %v1601
        %1603 = vdwg.mxu0
        %v1604 = vld [vmem:[#allocation2] sm:$0xff]
        %v1605 = vmax.f32 %v1187, %v1191
        %v1606 = vmax.f32 %v1605, %v1197
        %v1607 = vmax.f32 %v1606, %v1201
        %v1608 = vmax.f32 %v1607, %v1207
        %v1609 = vmax.f32 %v1608, %v1211
        %v1610 = vmax.f32 %v1609, %v1217
        %v1611 = vmax.f32 %v1610, %v1221
        %v1612 = vmax.f32 %v1611, %v1227
        %v1613 = vmax.f32 %v1612, %v1231
        %v1614 = vmax.f32 %v1613, %v1237
        %v1615 = vmax.f32 %v1614, %v1241
        %v1616 = vmax.f32 %v1615, %v1247
        %v1617 = vmax.f32 %v1616, %v1251
        %v1618 = vmax.f32 %v1617, %v1257
        %v1619 = vmax.f32 %v1618, %v1261
        %v1620 = vrot.slane %v1619, 4
        %v1621 = vmax.f32 %v1619, %v1620
        %v1622 = vrot.slane %v1621, 2
        %v1623 = vmax.f32 %v1621, %v1622
        %v1624 = vrot.slane %v1623, 1
        %v1625 = vmax.f32 %v1623, %v1624
        %v1626 = vmax.f32 %v1189, %v1193
        %v1627 = vmax.f32 %v1626, %v1199
        %v1628 = vmax.f32 %v1627, %v1203
        %v1629 = vmax.f32 %v1628, %v1209
        %v1630 = vmax.f32 %v1629, %v1213
        %v1631 = vmax.f32 %v1630, %v1219
        %v1632 = vmax.f32 %v1631, %v1223
        %v1633 = vmax.f32 %v1632, %v1229
        %v1634 = vmax.f32 %v1633, %v1233
        %v1635 = vmax.f32 %v1634, %v1239
        %v1636 = vmax.f32 %v1635, %v1243
        %v1637 = vmax.f32 %v1636, %v1249
        %v1638 = vmax.f32 %v1637, %v1253
        %v1639 = vmax.f32 %v1638, %v1259
        %v1640 = vmax.f32 %v1639, %v1263
        %v1641 = vrot.slane %v1640, 4
        %v1642 = vmax.f32 %v1640, %v1641
        %v1643 = vrot.slane %v1642, 2
        %v1644 = vmax.f32 %v1642, %v1643
        %v1645 = vrot.slane %v1644, 1
        %v1646 = vmax.f32 %v1644, %v1645
        %v1647 = vmax.f32 %v1300, %v1304
        %v1648 = vmax.f32 %v1647, %v1310
        %v1649 = vmax.f32 %v1648, %v1314
        %v1650 = vmax.f32 %v1649, %v1320
        %v1651 = vmax.f32 %v1650, %v1324
        %v1652 = vmax.f32 %v1651, %v1330
        %v1653 = vmax.f32 %v1652, %v1334
        %v1654 = vmax.f32 %v1653, %v1340
        %v1655 = vmax.f32 %v1654, %v1344
        %v1656 = vmax.f32 %v1655, %v1350
        %v1657 = vmax.f32 %v1656, %v1354
        %v1658 = vmax.f32 %v1657, %v1360
        %v1659 = vmax.f32 %v1658, %v1364
        %v1660 = vmax.f32 %v1659, %v1370
        %v1661 = vmax.f32 %v1660, %v1374
        %v1662 = vrot.slane %v1661, 4
        %v1663 = vmax.f32 %v1661, %v1662
        %v1664 = vrot.slane %v1663, 2
        %v1665 = vmax.f32 %v1663, %v1664
        %v1666 = vrot.slane %v1665, 1
        %v1667 = vmax.f32 %v1665, %v1666
        %v1668 = vmax.f32 %v1302, %v1306
        %v1669 = vmax.f32 %v1668, %v1312
        %v1670 = vmax.f32 %v1669, %v1316
        %v1671 = vmax.f32 %v1670, %v1322
        %v1672 = vmax.f32 %v1671, %v1326
        %v1673 = vmax.f32 %v1672, %v1332
        %v1674 = vmax.f32 %v1673, %v1336
        %v1675 = vmax.f32 %v1674, %v1342
        %v1676 = vmax.f32 %v1675, %v1346
        %v1677 = vmax.f32 %v1676, %v1352
        %v1678 = vmax.f32 %v1677, %v1356
        %v1679 = vmax.f32 %v1678, %v1362
        %v1680 = vmax.f32 %v1679, %v1366
        %v1681 = vmax.f32 %v1680, %v1372
        %v1682 = vmax.f32 %v1681, %v1376
        %v1683 = vrot.slane %v1682, 4
        %v1684 = vmax.f32 %v1682, %v1683
        %v1685 = vrot.slane %v1684, 2
        %v1686 = vmax.f32 %v1684, %v1685
        %v1687 = vrot.slane %v1686, 1
        %v1688 = vmax.f32 %v1686, %v1687
        %v1689 = vmax.f32 %v1413, %v1417
        %v1690 = vmax.f32 %v1689, %v1423
        %v1691 = vmax.f32 %v1690, %v1427
        %v1692 = vmax.f32 %v1691, %v1433
        %v1693 = vmax.f32 %v1692, %v1437
        %v1694 = vmax.f32 %v1693, %v1443
        %v1695 = vmax.f32 %v1694, %v1447
        %v1696 = vmax.f32 %v1695, %v1453
        %v1697 = vmax.f32 %v1696, %v1457
        %v1698 = vmax.f32 %v1697, %v1463
        %v1699 = vmax.f32 %v1698, %v1467
        %v1700 = vmax.f32 %v1699, %v1473
        %v1701 = vmax.f32 %v1700, %v1477
        %v1702 = vmax.f32 %v1701, %v1483
        %v1703 = vmax.f32 %v1702, %v1487
        %v1704 = vrot.slane %v1703, 4
        %v1705 = vmax.f32 %v1703, %v1704
        %v1706 = vrot.slane %v1705, 2
        %v1707 = vmax.f32 %v1705, %v1706
        %v1708 = vrot.slane %v1707, 1
        %v1709 = vmax.f32 %v1707, %v1708
        %v1710 = vmax.f32 %v1415, %v1419
        %v1711 = vmax.f32 %v1710, %v1425
        %v1712 = vmax.f32 %v1711, %v1429
        %v1713 = vmax.f32 %v1712, %v1435
        %v1714 = vmax.f32 %v1713, %v1439
        %v1715 = vmax.f32 %v1714, %v1445
        %v1716 = vmax.f32 %v1715, %v1449
        %v1717 = vmax.f32 %v1716, %v1455
        %v1718 = vmax.f32 %v1717, %v1459
        %v1719 = vmax.f32 %v1718, %v1465
        %v1720 = vmax.f32 %v1719, %v1469
        %v1721 = vmax.f32 %v1720, %v1475
        %v1722 = vmax.f32 %v1721, %v1479
        %v1723 = vmax.f32 %v1722, %v1485
        %v1724 = vmax.f32 %v1723, %v1489
        %v1725 = vrot.slane %v1724, 4
        %v1726 = vmax.f32 %v1724, %v1725
        %v1727 = vrot.slane %v1726, 2
        %v1728 = vmax.f32 %v1726, %v1727
        %v1729 = vrot.slane %v1728, 1
        %v1730 = vmax.f32 %v1728, %v1729
        %v1731 = vmax.f32 %v1526, %v1530
        %v1732 = vmax.f32 %v1731, %v1536
        %v1733 = vmax.f32 %v1732, %v1540
        %v1734 = vmax.f32 %v1733, %v1546
        %v1735 = vmax.f32 %v1734, %v1550
        %v1736 = vmax.f32 %v1735, %v1556
        %v1737 = vmax.f32 %v1736, %v1560
        %v1738 = vmax.f32 %v1737, %v1566
        %v1739 = vmax.f32 %v1738, %v1570
        %v1740 = vmax.f32 %v1739, %v1576
        %v1741 = vmax.f32 %v1740, %v1580
        %v1742 = vmax.f32 %v1741, %v1586
        %v1743 = vmax.f32 %v1742, %v1590
        %v1744 = vmax.f32 %v1743, %v1596
        %v1745 = vmax.f32 %v1744, %v1600
        %v1746 = vrot.slane %v1745, 4
        %v1747 = vmax.f32 %v1745, %v1746
        %v1748 = vrot.slane %v1747, 2
        %v1749 = vmax.f32 %v1747, %v1748
        %v1750 = vrot.slane %v1749, 1
        %v1751 = vmax.f32 %v1749, %v1750
        %v1752 = vmax.f32 %v1528, %v1532
        %v1753 = vmax.f32 %v1752, %v1538
        %v1754 = vmax.f32 %v1753, %v1542
        %v1755 = vmax.f32 %v1754, %v1548
        %v1756 = vmax.f32 %v1755, %v1552
        %v1757 = vmax.f32 %v1756, %v1558
        %v1758 = vmax.f32 %v1757, %v1562
        %v1759 = vmax.f32 %v1758, %v1568
        %v1760 = vmax.f32 %v1759, %v1572
        %v1761 = vmax.f32 %v1760, %v1578
        %v1762 = vmax.f32 %v1761, %v1582
        %v1763 = vmax.f32 %v1762, %v1588
        %v1764 = vmax.f32 %v1763, %v1592
        %v1765 = vmax.f32 %v1764, %v1598
        %v1766 = vmax.f32 %v1765, %v1602
        %v1767 = vrot.slane %v1766, 4
        %v1768 = vmax.f32 %v1766, %v1767
        %v1769 = vrot.slane %v1768, 2
        %v1770 = vmax.f32 %v1768, %v1769
        %v1771 = vrot.slane %v1770, 1
        %v1772 = vmax.f32 %v1770, %v1771
        %v1781 = vcombine.low %v1625, %v1646
        %v1782 = vcombine.low %v1667, %v1688
        %v1783 = vcombine.low %v1709, %v1730
        %v1784 = vcombine.low %v1751, %v1772
        %v1786 = vunpack.c.l.s4 1966171168
        %v1787 = vunpack.c.0.s8 %v1786
        %v1788 = vlaneseq
        %v1789 = vshrl.u32 %v1788, 7
        %v1790 = vsub.s32 %v1787, %v1789
        %v1791 = vrot.slane %v1781, %v1790
        %v1793 = vunpack.c.l.s4 1966171168
        %v1794 = vunpack.c.0.s8 %v1793
        %v1795 = vlaneseq
        %v1796 = vshrl.u32 %v1795, 7
        %v1797 = vsub.s32 %v1794, %v1796
        %v1798 = vrot.slane %v1782, %v1797
        %v1800 = vunpack.c.l.s4 1966171168
        %v1801 = vunpack.c.0.s8 %v1800
        %v1802 = vlaneseq
        %v1803 = vshrl.u32 %v1802, 7
        %v1804 = vsub.s32 %v1801, %v1803
        %v1805 = vrot.slane %v1783, %v1804
        %v1807 = vunpack.c.l.s4 1966171168
        %v1808 = vunpack.c.0.s8 %v1807
        %v1809 = vlaneseq
        %v1810 = vshrl.u32 %v1809, 7
        %v1811 = vsub.s32 %v1808, %v1810
        %v1812 = vrot.slane %v1784, %v1811
        %v1813 = vcombine.low %v1791, %v1798
        %v1814 = vcombine.low %v1805, %v1812
        %v1816 = vunpack.c.l.s4 1966171168
        %v1817 = vunpack.c.0.s8 %v1816
        %v1818 = vlaneseq
        %v1819 = vshrl.u32 %v1818, 7
        %v1820 = vsub.s32 %v1817, %v1819
        %v1821 = vrot.slane %v1813, %v1820
        %v1823 = vunpack.c.l.s4 1966171168
        %v1824 = vunpack.c.0.s8 %v1823
        %v1825 = vlaneseq
        %v1826 = vshrl.u32 %v1825, 7
        %v1827 = vsub.s32 %v1824, %v1826
        %v1828 = vrot.slane %v1814, %v1827
        %v1829 = vcombine.low %v1821, %v1828
        %v1831 = vmax.f32 %v1604, %v1829
        %1832 = vst [vmem:[#allocation2] sm:$0xff] %v1831
        // Predicated region
        $region65: #{pointnet_cls_forward.4} parent=47 // pred_check
          %p1833 = pneg %p393
        $region66: #{pointnet_cls_forward.4} parent=47 // pred_check_branch
          %1835 = sbr.rel (%p1833) target = $region68
        $region67: #{pointnet_cls_forward.4} parent=47 // pred_region
          %v1836 = vld [vmem:[#allocation2] sm:$0xff]
          %v1837 = vld [vmem:[#allocation7] sm:$0xff]
          %v1838 = vadd.f32 %v1836, %v1837
          %v1839 = vmax.f32 %v1838, 0.0
          %1840 = vst [vmem:[%s390] sm:$0xff] %v1839
        $region68: #{pointnet_cls_forward.4} parent=47 // pred_fallthru
          _
        %s1841 = smul.u32 8, %s26
        %p1842 = scmp.lt.s32.totalorder %s25, 1
        %s1843 = scalar_select %p1842, %s25, 1
        %p1844 = scmp.lt.s32.totalorder %s1841, 7
        %s1845 = scalar_select %p1844, %s1841, 7
        %s1846 = smul.addr %s1843, 8
        %s1847 = sadd.s32 %s1845, %s1846
        %s1848 = scalar_lea.vmem %s7, %s1847
        // Predicated region
        $region69: #{pointnet_cls_forward.4} parent=47 // pred_check
          %p1849 = pneg %p223
        $region70: #{pointnet_cls_forward.4} parent=47 // pred_check_branch
          %1851 = sbr.rel (%p1849) target = $region72
        $region71: #{pointnet_cls_forward.4} parent=47 // pred_region
          %s1852 = smul.u32 8, %s26
        $region72: #{pointnet_cls_forward.4} parent=47 // pred_fallthru
          _
      $region48: #{pointnet_cls_forward.4} parent=5 // pred_fallthru
        _
      %p1853 = scmp.le.s32.totalorder 2, %s15
      // Predicated region
      $region73: #{pointnet_cls_forward.4} parent=5 // pred_check
        %p1854 = pneg %p1853
      $region74: #{pointnet_cls_forward.4} parent=5 // pred_check_branch
        %1856 = sbr.rel (%p1854) target = $region76
      $region75: #{pointnet_cls_forward.4} parent=5 // pred_region
        %s1857 = ssub.s32 %s15, 2
        // Predicated region
        $region77: #{pointnet_cls_forward.4} parent=75 // pred_check
          %p1858 = pneg %p229
        $region78: #{pointnet_cls_forward.4} parent=75 // pred_check_branch
          %1860 = sbr.rel (%p1858) target = $region80
        $region79: #{pointnet_cls_forward.4} parent=75 // pred_region
          %s1861 = smul.u32 8, %s29
          %p1862 = scmp.lt.s32.totalorder %s28, 1
          %s1863 = scalar_select %p1862, %s28, 1
          %p1864 = scmp.lt.s32.totalorder %s1861, 7
          %s1865 = scalar_select %p1864, %s1861, 7
          %s1866 = smul.addr %s1863, 8
          %s1867 = sadd.s32 %s1865, %s1866
          %s1868 = scalar_lea.vmem %s7, %s1867
        $region80: #{pointnet_cls_forward.4} parent=75 // pred_fallthru
          _
      $region76: #{pointnet_cls_forward.4} parent=5 // pred_fallthru
        _
    $region6: #{pointnet_cls_forward.4} parent=1 // loop_footer
      %s19 = sadd.s32 1, %s15
    $region7: #{pointnet_cls_forward.4} parent=1 // loop_footer_branch
      %14 = sbr.rel target = $region3
    $region8: #{pointnet_cls_forward.4} parent=1 // loop_exit
      _
    %1869 = vsyncpa [#allocation4], 1
    %s1870 = scalar_lea.sflag [#allocation4], 1
    %1871 = vsyncpa %s1870, 1
    %1872 = vsyncpa [#allocation6], 1

// kernel: pointnet_cls_forward.5
$region0: #{pointnet_cls_forward.5}
  #allocation0 [shape = 'u32[]', space=smem, size = 0x4, offset = 0x4, fixed_abs, tag = 'smem constant byte address 0x4 - core index']
  #allocation1 [shape = 'u32[144,128]{1,0:T(1,128)}', space=vmem, size = 0x12000, scoped, tag = 'internal scratch']
  %s0 = inlined_call_operand.vmem [shape: f32[8,1024], index: 0, kind: input, shape index: {}]
  %s1 = inlined_call_operand.vmem [shape: bf16[1024,512], index: 1, kind: input, shape index: {}]
  %s2 = inlined_call_operand.vmem [shape: f32[1,512], index: 2, kind: input, shape index: {}]
  %s3 = inlined_call_operand.vmem [shape: bf16[512,256], index: 3, kind: input, shape index: {}]
  %s4 = inlined_call_operand.vmem [shape: f32[1,256], index: 4, kind: input, shape index: {}]
  %s5 = inlined_call_operand.vmem [shape: f32[256,9], index: 5, kind: input, shape index: {}]
  %s6 = inlined_call_operand.vmem [shape: f32[1,9], index: 6, kind: input, shape index: {}]
  %s7 = inlined_call_operand.vmem [shape: f32[8,9], index: 7, kind: output, shape index: {}]
  %s8 = sld [smem:[#allocation0]]
  $region38: #{pointnet_cls_forward.5} parent=0
    _
  %s10 = ssub.s32 1, %s8
  %s11 = scalar_select 0, %s10, %s8
  // Predicated region
  $region2: #{pointnet_cls_forward.5} parent=0 // pred_check
    _
  $region3: #{pointnet_cls_forward.5} parent=0 // pred_check_branch
    %13 = sbr.rel (0) target = $region5
  $region4: #{pointnet_cls_forward.5} parent=0 // pred_region
    _
  $region5: #{pointnet_cls_forward.5} parent=0 // pred_fallthru
    _
  // Predicated region
  $region6: #{pointnet_cls_forward.5} parent=0 // pred_check
    _
  $region7: #{pointnet_cls_forward.5} parent=0 // pred_check_branch
    %15 = sbr.rel (0) target = $region9
  $region8: #{pointnet_cls_forward.5} parent=0 // pred_region
    _
  $region9: #{pointnet_cls_forward.5} parent=0 // pred_fallthru
    _
  // Predicated region
  $region10: #{pointnet_cls_forward.5} parent=0 // pred_check
    _
  $region11: #{pointnet_cls_forward.5} parent=0 // pred_check_branch
    %17 = sbr.rel (0) target = $region13
  $region12: #{pointnet_cls_forward.5} parent=0 // pred_region
    _
  $region13: #{pointnet_cls_forward.5} parent=0 // pred_fallthru
    _
  // Predicated region
  $region14: #{pointnet_cls_forward.5} parent=0 // pred_check
    _
  $region15: #{pointnet_cls_forward.5} parent=0 // pred_check_branch
    %19 = sbr.rel (0) target = $region17
  $region16: #{pointnet_cls_forward.5} parent=0 // pred_region
    _
  $region17: #{pointnet_cls_forward.5} parent=0 // pred_fallthru
    _
  // Predicated region
  $region18: #{pointnet_cls_forward.5} parent=0 // pred_check
    _
  $region19: #{pointnet_cls_forward.5} parent=0 // pred_check_branch
    %21 = sbr.rel (0) target = $region21
  $region20: #{pointnet_cls_forward.5} parent=0 // pred_region
    _
  $region21: #{pointnet_cls_forward.5} parent=0 // pred_fallthru
    _
  // Predicated region
  $region22: #{pointnet_cls_forward.5} parent=0 // pred_check
    _
  $region23: #{pointnet_cls_forward.5} parent=0 // pred_check_branch
    %23 = sbr.rel (0) target = $region25
  $region24: #{pointnet_cls_forward.5} parent=0 // pred_region
    _
  $region25: #{pointnet_cls_forward.5} parent=0 // pred_fallthru
    _
  // Predicated region
  $region26: #{pointnet_cls_forward.5} parent=0 // pred_check
    _
  $region27: #{pointnet_cls_forward.5} parent=0 // pred_check_branch
    %25 = sbr.rel (0) target = $region29
  $region28: #{pointnet_cls_forward.5} parent=0 // pred_region
    _
  $region29: #{pointnet_cls_forward.5} parent=0 // pred_fallthru
    _
  %v26 = vld [vmem:[%s0] sm:$0xff]
  %v27 = vld [vmem:[%s0 + $0x8] sm:$0xff]
  %v28 = vld [vmem:[%s0 + $0x10] sm:$0xff]
  %v29 = vld [vmem:[%s0 + $0x18] sm:$0xff]
  %v30 = vld [vmem:[%s0 + $0x20] sm:$0xff]
  %v31 = vld [vmem:[%s0 + $0x28] sm:$0xff]
  %v32 = vld [vmem:[%s0 + $0x30] sm:$0xff]
  %v33 = vld [vmem:[%s0 + $0x38] sm:$0xff]
  %v34 = vpack.c.bf16 %v26, %v26
  %v35 = vpack.c.bf16 %v27, %v27
  %v36 = vpack.c.bf16 %v28, %v28
  %v37 = vpack.c.bf16 %v29, %v29
  %v38 = vpack.c.bf16 %v30, %v30
  %v39 = vpack.c.bf16 %v31, %v31
  %v40 = vpack.c.bf16 %v32, %v32
  %v41 = vpack.c.bf16 %v33, %v33
  %v42 = vld [vmem:[%s1] sm:$0xff]
  %v43 = vld [vmem:[%s1 + $0x8] sm:$0xff]
  %v44 = vld [vmem:[%s1 + $0x10] sm:$0xff]
  %v45 = vld [vmem:[%s1 + $0x18] sm:$0xff]
  %v46 = vld [vmem:[%s1 + $0x20] sm:$0xff]
  %v47 = vld [vmem:[%s1 + $0x28] sm:$0xff]
  %v48 = vld [vmem:[%s1 + $0x30] sm:$0xff]
  %v49 = vld [vmem:[%s1 + $0x38] sm:$0xff]
  %v50 = vld [vmem:[%s1 + $0x40] sm:$0xff]
  %v51 = vld [vmem:[%s1 + $0x48] sm:$0xff]
  %v52 = vld [vmem:[%s1 + $0x50] sm:$0xff]
  %v53 = vld [vmem:[%s1 + $0x58] sm:$0xff]
  %v54 = vld [vmem:[%s1 + $0x60] sm:$0xff]
  %v55 = vld [vmem:[%s1 + $0x68] sm:$0xff]
  %v56 = vld [vmem:[%s1 + $0x70] sm:$0xff]
  %v57 = vld [vmem:[%s1 + $0x78] sm:$0xff]
  %v58 = vld [vmem:[%s1 + $0x80] sm:$0xff]
  %v59 = vld [vmem:[%s1 + $0x88] sm:$0xff]
  %v60 = vld [vmem:[%s1 + $0x90] sm:$0xff]
  %v61 = vld [vmem:[%s1 + $0x98] sm:$0xff]
  %v62 = vld [vmem:[%s1 + $0xa0] sm:$0xff]
  %v63 = vld [vmem:[%s1 + $0xa8] sm:$0xff]
  %v64 = vld [vmem:[%s1 + $0xb0] sm:$0xff]
  %v65 = vld [vmem:[%s1 + $0xb8] sm:$0xff]
  %v66 = vld [vmem:[%s1 + $0xc0] sm:$0xff]
  %v67 = vld [vmem:[%s1 + $0xc8] sm:$0xff]
  %v68 = vld [vmem:[%s1 + $0xd0] sm:$0xff]
  %v69 = vld [vmem:[%s1 + $0xd8] sm:$0xff]
  %v70 = vld [vmem:[%s1 + $0xe0] sm:$0xff]
  %v71 = vld [vmem:[%s1 + $0xe8] sm:$0xff]
  %v72 = vld [vmem:[%s1 + $0xf0] sm:$0xff]
  %v73 = vld [vmem:[%s1 + $0xf8] sm:$0xff]
  %v74 = vld [vmem:[%s1 + $0x100] sm:$0xff]
  %v75 = vld [vmem:[%s1 + $0x108] sm:$0xff]
  %v76 = vld [vmem:[%s1 + $0x110] sm:$0xff]
  %v77 = vld [vmem:[%s1 + $0x118] sm:$0xff]
  %v78 = vld [vmem:[%s1 + $0x120] sm:$0xff]
  %v79 = vld [vmem:[%s1 + $0x128] sm:$0xff]
  %v80 = vld [vmem:[%s1 + $0x130] sm:$0xff]
  %v81 = vld [vmem:[%s1 + $0x138] sm:$0xff]
  %v82 = vld [vmem:[%s1 + $0x140] sm:$0xff]
  %v83 = vld [vmem:[%s1 + $0x148] sm:$0xff]
  %v84 = vld [vmem:[%s1 + $0x150] sm:$0xff]
  %v85 = vld [vmem:[%s1 + $0x158] sm:$0xff]
  %v86 = vld [vmem:[%s1 + $0x160] sm:$0xff]
  %v87 = vld [vmem:[%s1 + $0x168] sm:$0xff]
  %v88 = vld [vmem:[%s1 + $0x170] sm:$0xff]
  %v89 = vld [vmem:[%s1 + $0x178] sm:$0xff]
  %v90 = vld [vmem:[%s1 + $0x180] sm:$0xff]
  %v91 = vld [vmem:[%s1 + $0x188] sm:$0xff]
  %v92 = vld [vmem:[%s1 + $0x190] sm:$0xff]
  %v93 = vld [vmem:[%s1 + $0x198] sm:$0xff]
  %v94 = vld [vmem:[%s1 + $0x1a0] sm:$0xff]
  %v95 = vld [vmem:[%s1 + $0x1a8] sm:$0xff]
  %v96 = vld [vmem:[%s1 + $0x1b0] sm:$0xff]
  %v97 = vld [vmem:[%s1 + $0x1b8] sm:$0xff]
  %v98 = vld [vmem:[%s1 + $0x1c0] sm:$0xff]
  %v99 = vld [vmem:[%s1 + $0x1c8] sm:$0xff]
  %v100 = vld [vmem:[%s1 + $0x1d0] sm:$0xff]
  %v101 = vld [vmem:[%s1 + $0x1d8] sm:$0xff]
  %v102 = vld [vmem:[%s1 + $0x1e0] sm:$0xff]
  %v103 = vld [vmem:[%s1 + $0x1e8] sm:$0xff]
  %v104 = vld [vmem:[%s1 + $0x1f0] sm:$0xff]
  %v105 = vld [vmem:[%s1 + $0x1f8] sm:$0xff]
  %v106 = vld [vmem:[%s1 + $0x200] sm:$0xff]
  %v107 = vld [vmem:[%s1 + $0x208] sm:$0xff]
  %v108 = vld [vmem:[%s1 + $0x210] sm:$0xff]
  %v109 = vld [vmem:[%s1 + $0x218] sm:$0xff]
  %v110 = vld [vmem:[%s1 + $0x220] sm:$0xff]
  %v111 = vld [vmem:[%s1 + $0x228] sm:$0xff]
  %v112 = vld [vmem:[%s1 + $0x230] sm:$0xff]
  %v113 = vld [vmem:[%s1 + $0x238] sm:$0xff]
  %v114 = vld [vmem:[%s1 + $0x240] sm:$0xff]
  %v115 = vld [vmem:[%s1 + $0x248] sm:$0xff]
  %v116 = vld [vmem:[%s1 + $0x250] sm:$0xff]
  %v117 = vld [vmem:[%s1 + $0x258] sm:$0xff]
  %v118 = vld [vmem:[%s1 + $0x260] sm:$0xff]
  %v119 = vld [vmem:[%s1 + $0x268] sm:$0xff]
  %v120 = vld [vmem:[%s1 + $0x270] sm:$0xff]
  %v121 = vld [vmem:[%s1 + $0x278] sm:$0xff]
  %v122 = vld [vmem:[%s1 + $0x280] sm:$0xff]
  %v123 = vld [vmem:[%s1 + $0x288] sm:$0xff]
  %v124 = vld [vmem:[%s1 + $0x290] sm:$0xff]
  %v125 = vld [vmem:[%s1 + $0x298] sm:$0xff]
  %v126 = vld [vmem:[%s1 + $0x2a0] sm:$0xff]
  %v127 = vld [vmem:[%s1 + $0x2a8] sm:$0xff]
  %v128 = vld [vmem:[%s1 + $0x2b0] sm:$0xff]
  %v129 = vld [vmem:[%s1 + $0x2b8] sm:$0xff]
  %v130 = vld [vmem:[%s1 + $0x2c0] sm:$0xff]
  %v131 = vld [vmem:[%s1 + $0x2c8] sm:$0xff]
  %v132 = vld [vmem:[%s1 + $0x2d0] sm:$0xff]
  %v133 = vld [vmem:[%s1 + $0x2d8] sm:$0xff]
  %v134 = vld [vmem:[%s1 + $0x2e0] sm:$0xff]
  %v135 = vld [vmem:[%s1 + $0x2e8] sm:$0xff]
  %v136 = vld [vmem:[%s1 + $0x2f0] sm:$0xff]
  %v137 = vld [vmem:[%s1 + $0x2f8] sm:$0xff]
  %v138 = vld [vmem:[%s1 + $0x300] sm:$0xff]
  %v139 = vld [vmem:[%s1 + $0x308] sm:$0xff]
  %v140 = vld [vmem:[%s1 + $0x310] sm:$0xff]
  %v141 = vld [vmem:[%s1 + $0x318] sm:$0xff]
  %v142 = vld [vmem:[%s1 + $0x320] sm:$0xff]
  %v143 = vld [vmem:[%s1 + $0x328] sm:$0xff]
  %v144 = vld [vmem:[%s1 + $0x330] sm:$0xff]
  %v145 = vld [vmem:[%s1 + $0x338] sm:$0xff]
  %v146 = vld [vmem:[%s1 + $0x340] sm:$0xff]
  %v147 = vld [vmem:[%s1 + $0x348] sm:$0xff]
  %v148 = vld [vmem:[%s1 + $0x350] sm:$0xff]
  %v149 = vld [vmem:[%s1 + $0x358] sm:$0xff]
  %v150 = vld [vmem:[%s1 + $0x360] sm:$0xff]
  %v151 = vld [vmem:[%s1 + $0x368] sm:$0xff]
  %v152 = vld [vmem:[%s1 + $0x370] sm:$0xff]
  %v153 = vld [vmem:[%s1 + $0x378] sm:$0xff]
  %v154 = vld [vmem:[%s1 + $0x380] sm:$0xff]
  %v155 = vld [vmem:[%s1 + $0x388] sm:$0xff]
  %v156 = vld [vmem:[%s1 + $0x390] sm:$0xff]
  %v157 = vld [vmem:[%s1 + $0x398] sm:$0xff]
  %v158 = vld [vmem:[%s1 + $0x3a0] sm:$0xff]
  %v159 = vld [vmem:[%s1 + $0x3a8] sm:$0xff]
  %v160 = vld [vmem:[%s1 + $0x3b0] sm:$0xff]
  %v161 = vld [vmem:[%s1 + $0x3b8] sm:$0xff]
  %v162 = vld [vmem:[%s1 + $0x3c0] sm:$0xff]
  %v163 = vld [vmem:[%s1 + $0x3c8] sm:$0xff]
  %v164 = vld [vmem:[%s1 + $0x3d0] sm:$0xff]
  %v165 = vld [vmem:[%s1 + $0x3d8] sm:$0xff]
  %v166 = vld [vmem:[%s1 + $0x3e0] sm:$0xff]
  %v167 = vld [vmem:[%s1 + $0x3e8] sm:$0xff]
  %v168 = vld [vmem:[%s1 + $0x3f0] sm:$0xff]
  %v169 = vld [vmem:[%s1 + $0x3f8] sm:$0xff]
  %v170 = vld [vmem:[%s1 + $0x400] sm:$0xff]
  %v171 = vld [vmem:[%s1 + $0x408] sm:$0xff]
  %v172 = vld [vmem:[%s1 + $0x410] sm:$0xff]
  %v173 = vld [vmem:[%s1 + $0x418] sm:$0xff]
  %v174 = vld [vmem:[%s1 + $0x420] sm:$0xff]
  %v175 = vld [vmem:[%s1 + $0x428] sm:$0xff]
  %v176 = vld [vmem:[%s1 + $0x430] sm:$0xff]
  %v177 = vld [vmem:[%s1 + $0x438] sm:$0xff]
  %v178 = vld [vmem:[%s1 + $0x440] sm:$0xff]
  %v179 = vld [vmem:[%s1 + $0x448] sm:$0xff]
  %v180 = vld [vmem:[%s1 + $0x450] sm:$0xff]
  %v181 = vld [vmem:[%s1 + $0x458] sm:$0xff]
  %v182 = vld [vmem:[%s1 + $0x460] sm:$0xff]
  %v183 = vld [vmem:[%s1 + $0x468] sm:$0xff]
  %v184 = vld [vmem:[%s1 + $0x470] sm:$0xff]
  %v185 = vld [vmem:[%s1 + $0x478] sm:$0xff]
  %v186 = vld [vmem:[%s1 + $0x480] sm:$0xff]
  %v187 = vld [vmem:[%s1 + $0x488] sm:$0xff]
  %v188 = vld [vmem:[%s1 + $0x490] sm:$0xff]
  %v189 = vld [vmem:[%s1 + $0x498] sm:$0xff]
  %v190 = vld [vmem:[%s1 + $0x4a0] sm:$0xff]
  %v191 = vld [vmem:[%s1 + $0x4a8] sm:$0xff]
  %v192 = vld [vmem:[%s1 + $0x4b0] sm:$0xff]
  %v193 = vld [vmem:[%s1 + $0x4b8] sm:$0xff]
  %v194 = vld [vmem:[%s1 + $0x4c0] sm:$0xff]
  %v195 = vld [vmem:[%s1 + $0x4c8] sm:$0xff]
  %v196 = vld [vmem:[%s1 + $0x4d0] sm:$0xff]
  %v197 = vld [vmem:[%s1 + $0x4d8] sm:$0xff]
  %v198 = vld [vmem:[%s1 + $0x4e0] sm:$0xff]
  %v199 = vld [vmem:[%s1 + $0x4e8] sm:$0xff]
  %v200 = vld [vmem:[%s1 + $0x4f0] sm:$0xff]
  %v201 = vld [vmem:[%s1 + $0x4f8] sm:$0xff]
  %v202 = vld [vmem:[%s1 + $0x500] sm:$0xff]
  %v203 = vld [vmem:[%s1 + $0x508] sm:$0xff]
  %v204 = vld [vmem:[%s1 + $0x510] sm:$0xff]
  %v205 = vld [vmem:[%s1 + $0x518] sm:$0xff]
  %v206 = vld [vmem:[%s1 + $0x520] sm:$0xff]
  %v207 = vld [vmem:[%s1 + $0x528] sm:$0xff]
  %v208 = vld [vmem:[%s1 + $0x530] sm:$0xff]
  %v209 = vld [vmem:[%s1 + $0x538] sm:$0xff]
  %v210 = vld [vmem:[%s1 + $0x540] sm:$0xff]
  %v211 = vld [vmem:[%s1 + $0x548] sm:$0xff]
  %v212 = vld [vmem:[%s1 + $0x550] sm:$0xff]
  %v213 = vld [vmem:[%s1 + $0x558] sm:$0xff]
  %v214 = vld [vmem:[%s1 + $0x560] sm:$0xff]
  %v215 = vld [vmem:[%s1 + $0x568] sm:$0xff]
  %v216 = vld [vmem:[%s1 + $0x570] sm:$0xff]
  %v217 = vld [vmem:[%s1 + $0x578] sm:$0xff]
  %v218 = vld [vmem:[%s1 + $0x580] sm:$0xff]
  %v219 = vld [vmem:[%s1 + $0x588] sm:$0xff]
  %v220 = vld [vmem:[%s1 + $0x590] sm:$0xff]
  %v221 = vld [vmem:[%s1 + $0x598] sm:$0xff]
  %v222 = vld [vmem:[%s1 + $0x5a0] sm:$0xff]
  %v223 = vld [vmem:[%s1 + $0x5a8] sm:$0xff]
  %v224 = vld [vmem:[%s1 + $0x5b0] sm:$0xff]
  %v225 = vld [vmem:[%s1 + $0x5b8] sm:$0xff]
  %v226 = vld [vmem:[%s1 + $0x5c0] sm:$0xff]
  %v227 = vld [vmem:[%s1 + $0x5c8] sm:$0xff]
  %v228 = vld [vmem:[%s1 + $0x5d0] sm:$0xff]
  %v229 = vld [vmem:[%s1 + $0x5d8] sm:$0xff]
  %v230 = vld [vmem:[%s1 + $0x5e0] sm:$0xff]
  %v231 = vld [vmem:[%s1 + $0x5e8] sm:$0xff]
  %v232 = vld [vmem:[%s1 + $0x5f0] sm:$0xff]
  %v233 = vld [vmem:[%s1 + $0x5f8] sm:$0xff]
  %v234 = vld [vmem:[%s1 + $0x600] sm:$0xff]
  %v235 = vld [vmem:[%s1 + $0x608] sm:$0xff]
  %v236 = vld [vmem:[%s1 + $0x610] sm:$0xff]
  %v237 = vld [vmem:[%s1 + $0x618] sm:$0xff]
  %v238 = vld [vmem:[%s1 + $0x620] sm:$0xff]
  %v239 = vld [vmem:[%s1 + $0x628] sm:$0xff]
  %v240 = vld [vmem:[%s1 + $0x630] sm:$0xff]
  %v241 = vld [vmem:[%s1 + $0x638] sm:$0xff]
  %v242 = vld [vmem:[%s1 + $0x640] sm:$0xff]
  %v243 = vld [vmem:[%s1 + $0x648] sm:$0xff]
  %v244 = vld [vmem:[%s1 + $0x650] sm:$0xff]
  %v245 = vld [vmem:[%s1 + $0x658] sm:$0xff]
  %v246 = vld [vmem:[%s1 + $0x660] sm:$0xff]
  %v247 = vld [vmem:[%s1 + $0x668] sm:$0xff]
  %v248 = vld [vmem:[%s1 + $0x670] sm:$0xff]
  %v249 = vld [vmem:[%s1 + $0x678] sm:$0xff]
  %v250 = vld [vmem:[%s1 + $0x680] sm:$0xff]
  %v251 = vld [vmem:[%s1 + $0x688] sm:$0xff]
  %v252 = vld [vmem:[%s1 + $0x690] sm:$0xff]
  %v253 = vld [vmem:[%s1 + $0x698] sm:$0xff]
  %v254 = vld [vmem:[%s1 + $0x6a0] sm:$0xff]
  %v255 = vld [vmem:[%s1 + $0x6a8] sm:$0xff]
  %v256 = vld [vmem:[%s1 + $0x6b0] sm:$0xff]
  %v257 = vld [vmem:[%s1 + $0x6b8] sm:$0xff]
  %v258 = vld [vmem:[%s1 + $0x6c0] sm:$0xff]
  %v259 = vld [vmem:[%s1 + $0x6c8] sm:$0xff]
  %v260 = vld [vmem:[%s1 + $0x6d0] sm:$0xff]
  %v261 = vld [vmem:[%s1 + $0x6d8] sm:$0xff]
  %v262 = vld [vmem:[%s1 + $0x6e0] sm:$0xff]
  %v263 = vld [vmem:[%s1 + $0x6e8] sm:$0xff]
  %v264 = vld [vmem:[%s1 + $0x6f0] sm:$0xff]
  %v265 = vld [vmem:[%s1 + $0x6f8] sm:$0xff]
  %v266 = vld [vmem:[%s1 + $0x700] sm:$0xff]
  %v267 = vld [vmem:[%s1 + $0x708] sm:$0xff]
  %v268 = vld [vmem:[%s1 + $0x710] sm:$0xff]
  %v269 = vld [vmem:[%s1 + $0x718] sm:$0xff]
  %v270 = vld [vmem:[%s1 + $0x720] sm:$0xff]
  %v271 = vld [vmem:[%s1 + $0x728] sm:$0xff]
  %v272 = vld [vmem:[%s1 + $0x730] sm:$0xff]
  %v273 = vld [vmem:[%s1 + $0x738] sm:$0xff]
  %v274 = vld [vmem:[%s1 + $0x740] sm:$0xff]
  %v275 = vld [vmem:[%s1 + $0x748] sm:$0xff]
  %v276 = vld [vmem:[%s1 + $0x750] sm:$0xff]
  %v277 = vld [vmem:[%s1 + $0x758] sm:$0xff]
  %v278 = vld [vmem:[%s1 + $0x760] sm:$0xff]
  %v279 = vld [vmem:[%s1 + $0x768] sm:$0xff]
  %v280 = vld [vmem:[%s1 + $0x770] sm:$0xff]
  %v281 = vld [vmem:[%s1 + $0x778] sm:$0xff]
  %v282 = vld [vmem:[%s1 + $0x780] sm:$0xff]
  %v283 = vld [vmem:[%s1 + $0x788] sm:$0xff]
  %v284 = vld [vmem:[%s1 + $0x790] sm:$0xff]
  %v285 = vld [vmem:[%s1 + $0x798] sm:$0xff]
  %v286 = vld [vmem:[%s1 + $0x7a0] sm:$0xff]
  %v287 = vld [vmem:[%s1 + $0x7a8] sm:$0xff]
  %v288 = vld [vmem:[%s1 + $0x7b0] sm:$0xff]
  %v289 = vld [vmem:[%s1 + $0x7b8] sm:$0xff]
  %v290 = vld [vmem:[%s1 + $0x7c0] sm:$0xff]
  %v291 = vld [vmem:[%s1 + $0x7c8] sm:$0xff]
  %v292 = vld [vmem:[%s1 + $0x7d0] sm:$0xff]
  %v293 = vld [vmem:[%s1 + $0x7d8] sm:$0xff]
  %v294 = vld [vmem:[%s1 + $0x7e0] sm:$0xff]
  %v295 = vld [vmem:[%s1 + $0x7e8] sm:$0xff]
  %v296 = vld [vmem:[%s1 + $0x7f0] sm:$0xff]
  %v297 = vld [vmem:[%s1 + $0x7f8] sm:$0xff]
  %v298 = vld [vmem:[%s2] sm:$0xf]
  %v300 = vlaneseq
  %v301 = vshrl.u32 %v300, 7
  %v302 = vsub.s32 0, %v301
  %v303 = vrot.slane %v298, %v302
  %v304 = vlaneseq
  %v305 = vshrl.u32 %v304, 7
  %v306 = vsub.s32 1, %v305
  %v307 = vrot.slane %v298, %v306
  %v308 = vlaneseq
  %v309 = vshrl.u32 %v308, 7
  %v310 = vsub.s32 2, %v309
  %v311 = vrot.slane %v298, %v310
  %v312 = vlaneseq
  %v313 = vshrl.u32 %v312, 7
  %v314 = vsub.s32 3, %v313
  %v315 = vrot.slane %v298, %v314
  %v576 = vunpack.c.l.b16 %v42
  %v577 = vunpack.c.h.b16 %v42
  %v578 = vunpack.c.l.b16 %v43
  %v579 = vunpack.c.h.b16 %v43
  %v580 = vunpack.c.l.b16 %v44
  %v581 = vunpack.c.h.b16 %v44
  %v582 = vunpack.c.l.b16 %v45
  %v583 = vunpack.c.h.b16 %v45
  %v584 = vunpack.c.l.b16 %v46
  %v585 = vunpack.c.h.b16 %v46
  %v586 = vunpack.c.l.b16 %v47
  %v587 = vunpack.c.h.b16 %v47
  %v588 = vunpack.c.l.b16 %v48
  %v589 = vunpack.c.h.b16 %v48
  %v590 = vunpack.c.l.b16 %v49
  %v591 = vunpack.c.h.b16 %v49
  %v592 = vunpack.c.l.b16 %v50
  %v593 = vunpack.c.h.b16 %v50
  %v594 = vunpack.c.l.b16 %v51
  %v595 = vunpack.c.h.b16 %v51
  %v596 = vunpack.c.l.b16 %v52
  %v597 = vunpack.c.h.b16 %v52
  %v598 = vunpack.c.l.b16 %v53
  %v599 = vunpack.c.h.b16 %v53
  %v600 = vunpack.c.l.b16 %v54
  %v601 = vunpack.c.h.b16 %v54
  %v602 = vunpack.c.l.b16 %v55
  %v603 = vunpack.c.h.b16 %v55
  %v604 = vunpack.c.l.b16 %v56
  %v605 = vunpack.c.h.b16 %v56
  %v606 = vunpack.c.l.b16 %v57
  %v607 = vunpack.c.h.b16 %v57
  %v608 = vunpack.c.l.b16 %v58
  %v609 = vunpack.c.h.b16 %v58
  %v610 = vunpack.c.l.b16 %v59
  %v611 = vunpack.c.h.b16 %v59
  %v612 = vunpack.c.l.b16 %v60
  %v613 = vunpack.c.h.b16 %v60
  %v614 = vunpack.c.l.b16 %v61
  %v615 = vunpack.c.h.b16 %v61
  %v616 = vunpack.c.l.b16 %v62
  %v617 = vunpack.c.h.b16 %v62
  %v618 = vunpack.c.l.b16 %v63
  %v619 = vunpack.c.h.b16 %v63
  %v620 = vunpack.c.l.b16 %v64
  %v621 = vunpack.c.h.b16 %v64
  %v622 = vunpack.c.l.b16 %v65
  %v623 = vunpack.c.h.b16 %v65
  %v624 = vunpack.c.l.b16 %v66
  %v625 = vunpack.c.h.b16 %v66
  %v626 = vunpack.c.l.b16 %v67
  %v627 = vunpack.c.h.b16 %v67
  %v628 = vunpack.c.l.b16 %v68
  %v629 = vunpack.c.h.b16 %v68
  %v630 = vunpack.c.l.b16 %v69
  %v631 = vunpack.c.h.b16 %v69
  %v632 = vunpack.c.l.b16 %v70
  %v633 = vunpack.c.h.b16 %v70
  %v634 = vunpack.c.l.b16 %v71
  %v635 = vunpack.c.h.b16 %v71
  %v636 = vunpack.c.l.b16 %v72
  %v637 = vunpack.c.h.b16 %v72
  %v638 = vunpack.c.l.b16 %v73
  %v639 = vunpack.c.h.b16 %v73
  %v640 = vunpack.c.l.b16 %v74
  %v641 = vunpack.c.h.b16 %v74
  %v642 = vunpack.c.l.b16 %v75
  %v643 = vunpack.c.h.b16 %v75
  %v644 = vunpack.c.l.b16 %v76
  %v645 = vunpack.c.h.b16 %v76
  %v646 = vunpack.c.l.b16 %v77
  %v647 = vunpack.c.h.b16 %v77
  %v648 = vunpack.c.l.b16 %v78
  %v649 = vunpack.c.h.b16 %v78
  %v650 = vunpack.c.l.b16 %v79
  %v651 = vunpack.c.h.b16 %v79
  %v652 = vunpack.c.l.b16 %v80
  %v653 = vunpack.c.h.b16 %v80
  %v654 = vunpack.c.l.b16 %v81
  %v655 = vunpack.c.h.b16 %v81
  %v656 = vunpack.c.l.b16 %v82
  %v657 = vunpack.c.h.b16 %v82
  %v658 = vunpack.c.l.b16 %v83
  %v659 = vunpack.c.h.b16 %v83
  %v660 = vunpack.c.l.b16 %v84
  %v661 = vunpack.c.h.b16 %v84
  %v662 = vunpack.c.l.b16 %v85
  %v663 = vunpack.c.h.b16 %v85
  %v664 = vunpack.c.l.b16 %v86
  %v665 = vunpack.c.h.b16 %v86
  %v666 = vunpack.c.l.b16 %v87
  %v667 = vunpack.c.h.b16 %v87
  %v668 = vunpack.c.l.b16 %v88
  %v669 = vunpack.c.h.b16 %v88
  %v670 = vunpack.c.l.b16 %v89
  %v671 = vunpack.c.h.b16 %v89
  %v672 = vunpack.c.l.b16 %v90
  %v673 = vunpack.c.h.b16 %v90
  %v674 = vunpack.c.l.b16 %v91
  %v675 = vunpack.c.h.b16 %v91
  %v676 = vunpack.c.l.b16 %v92
  %v677 = vunpack.c.h.b16 %v92
  %v678 = vunpack.c.l.b16 %v93
  %v679 = vunpack.c.h.b16 %v93
  %v680 = vunpack.c.l.b16 %v94
  %v681 = vunpack.c.h.b16 %v94
  %v682 = vunpack.c.l.b16 %v95
  %v683 = vunpack.c.h.b16 %v95
  %v684 = vunpack.c.l.b16 %v96
  %v685 = vunpack.c.h.b16 %v96
  %v686 = vunpack.c.l.b16 %v97
  %v687 = vunpack.c.h.b16 %v97
  %v688 = vunpack.c.l.b16 %v98
  %v689 = vunpack.c.h.b16 %v98
  %v690 = vunpack.c.l.b16 %v99
  %v691 = vunpack.c.h.b16 %v99
  %v692 = vunpack.c.l.b16 %v100
  %v693 = vunpack.c.h.b16 %v100
  %v694 = vunpack.c.l.b16 %v101
  %v695 = vunpack.c.h.b16 %v101
  %v696 = vunpack.c.l.b16 %v102
  %v697 = vunpack.c.h.b16 %v102
  %v698 = vunpack.c.l.b16 %v103
  %v699 = vunpack.c.h.b16 %v103
  %v700 = vunpack.c.l.b16 %v104
  %v701 = vunpack.c.h.b16 %v104
  %v702 = vunpack.c.l.b16 %v105
  %v703 = vunpack.c.h.b16 %v105
  %v704 = vunpack.c.l.b16 %v106
  %v705 = vunpack.c.h.b16 %v106
  %v706 = vunpack.c.l.b16 %v107
  %v707 = vunpack.c.h.b16 %v107
  %v708 = vunpack.c.l.b16 %v108
  %v709 = vunpack.c.h.b16 %v108
  %v710 = vunpack.c.l.b16 %v109
  %v711 = vunpack.c.h.b16 %v109
  %v712 = vunpack.c.l.b16 %v110
  %v713 = vunpack.c.h.b16 %v110
  %v714 = vunpack.c.l.b16 %v111
  %v715 = vunpack.c.h.b16 %v111
  %v716 = vunpack.c.l.b16 %v112
  %v717 = vunpack.c.h.b16 %v112
  %v718 = vunpack.c.l.b16 %v113
  %v719 = vunpack.c.h.b16 %v113
  %v720 = vunpack.c.l.b16 %v114
  %v721 = vunpack.c.h.b16 %v114
  %v722 = vunpack.c.l.b16 %v115
  %v723 = vunpack.c.h.b16 %v115
  %v724 = vunpack.c.l.b16 %v116
  %v725 = vunpack.c.h.b16 %v116
  %v726 = vunpack.c.l.b16 %v117
  %v727 = vunpack.c.h.b16 %v117
  %v728 = vunpack.c.l.b16 %v118
  %v729 = vunpack.c.h.b16 %v118
  %v730 = vunpack.c.l.b16 %v119
  %v731 = vunpack.c.h.b16 %v119
  %v732 = vunpack.c.l.b16 %v120
  %v733 = vunpack.c.h.b16 %v120
  %v734 = vunpack.c.l.b16 %v121
  %v735 = vunpack.c.h.b16 %v121
  %v736 = vunpack.c.l.b16 %v122
  %v737 = vunpack.c.h.b16 %v122
  %v738 = vunpack.c.l.b16 %v123
  %v739 = vunpack.c.h.b16 %v123
  %v740 = vunpack.c.l.b16 %v124
  %v741 = vunpack.c.h.b16 %v124
  %v742 = vunpack.c.l.b16 %v125
  %v743 = vunpack.c.h.b16 %v125
  %v744 = vunpack.c.l.b16 %v126
  %v745 = vunpack.c.h.b16 %v126
  %v746 = vunpack.c.l.b16 %v127
  %v747 = vunpack.c.h.b16 %v127
  %v748 = vunpack.c.l.b16 %v128
  %v749 = vunpack.c.h.b16 %v128
  %v750 = vunpack.c.l.b16 %v129
  %v751 = vunpack.c.h.b16 %v129
  %v752 = vunpack.c.l.b16 %v130
  %v753 = vunpack.c.h.b16 %v130
  %v754 = vunpack.c.l.b16 %v131
  %v755 = vunpack.c.h.b16 %v131
  %v756 = vunpack.c.l.b16 %v132
  %v757 = vunpack.c.h.b16 %v132
  %v758 = vunpack.c.l.b16 %v133
  %v759 = vunpack.c.h.b16 %v133
  %v760 = vunpack.c.l.b16 %v134
  %v761 = vunpack.c.h.b16 %v134
  %v762 = vunpack.c.l.b16 %v135
  %v763 = vunpack.c.h.b16 %v135
  %v764 = vunpack.c.l.b16 %v136
  %v765 = vunpack.c.h.b16 %v136
  %v766 = vunpack.c.l.b16 %v137
  %v767 = vunpack.c.h.b16 %v137
  %v768 = vunpack.c.l.b16 %v138
  %v769 = vunpack.c.h.b16 %v138
  %v770 = vunpack.c.l.b16 %v139
  %v771 = vunpack.c.h.b16 %v139
  %v772 = vunpack.c.l.b16 %v140
  %v773 = vunpack.c.h.b16 %v140
  %v774 = vunpack.c.l.b16 %v141
  %v775 = vunpack.c.h.b16 %v141
  %v776 = vunpack.c.l.b16 %v142
  %v777 = vunpack.c.h.b16 %v142
  %v778 = vunpack.c.l.b16 %v143
  %v779 = vunpack.c.h.b16 %v143
  %v780 = vunpack.c.l.b16 %v144
  %v781 = vunpack.c.h.b16 %v144
  %v782 = vunpack.c.l.b16 %v145
  %v783 = vunpack.c.h.b16 %v145
  %v784 = vunpack.c.l.b16 %v146
  %v785 = vunpack.c.h.b16 %v146
  %v786 = vunpack.c.l.b16 %v147
  %v787 = vunpack.c.h.b16 %v147
  %v788 = vunpack.c.l.b16 %v148
  %v789 = vunpack.c.h.b16 %v148
  %v790 = vunpack.c.l.b16 %v149
  %v791 = vunpack.c.h.b16 %v149
  %v792 = vunpack.c.l.b16 %v150
  %v793 = vunpack.c.h.b16 %v150
  %v794 = vunpack.c.l.b16 %v151
  %v795 = vunpack.c.h.b16 %v151
  %v796 = vunpack.c.l.b16 %v152
  %v797 = vunpack.c.h.b16 %v152
  %v798 = vunpack.c.l.b16 %v153
  %v799 = vunpack.c.h.b16 %v153
  %v800 = vunpack.c.l.b16 %v154
  %v801 = vunpack.c.h.b16 %v154
  %v802 = vunpack.c.l.b16 %v155
  %v803 = vunpack.c.h.b16 %v155
  %v804 = vunpack.c.l.b16 %v156
  %v805 = vunpack.c.h.b16 %v156
  %v806 = vunpack.c.l.b16 %v157
  %v807 = vunpack.c.h.b16 %v157
  %v808 = vunpack.c.l.b16 %v158
  %v809 = vunpack.c.h.b16 %v158
  %v810 = vunpack.c.l.b16 %v159
  %v811 = vunpack.c.h.b16 %v159
  %v812 = vunpack.c.l.b16 %v160
  %v813 = vunpack.c.h.b16 %v160
  %v814 = vunpack.c.l.b16 %v161
  %v815 = vunpack.c.h.b16 %v161
  %v816 = vunpack.c.l.b16 %v162
  %v817 = vunpack.c.h.b16 %v162
  %v818 = vunpack.c.l.b16 %v163
  %v819 = vunpack.c.h.b16 %v163
  %v820 = vunpack.c.l.b16 %v164
  %v821 = vunpack.c.h.b16 %v164
  %v822 = vunpack.c.l.b16 %v165
  %v823 = vunpack.c.h.b16 %v165
  %v824 = vunpack.c.l.b16 %v166
  %v825 = vunpack.c.h.b16 %v166
  %v826 = vunpack.c.l.b16 %v167
  %v827 = vunpack.c.h.b16 %v167
  %v828 = vunpack.c.l.b16 %v168
  %v829 = vunpack.c.h.b16 %v168
  %v830 = vunpack.c.l.b16 %v169
  %v831 = vunpack.c.h.b16 %v169
  %v832 = vunpack.c.l.b16 %v170
  %v833 = vunpack.c.h.b16 %v170
  %v834 = vunpack.c.l.b16 %v171
  %v835 = vunpack.c.h.b16 %v171
  %v836 = vunpack.c.l.b16 %v172
  %v837 = vunpack.c.h.b16 %v172
  %v838 = vunpack.c.l.b16 %v173
  %v839 = vunpack.c.h.b16 %v173
  %v840 = vunpack.c.l.b16 %v174
  %v841 = vunpack.c.h.b16 %v174
  %v842 = vunpack.c.l.b16 %v175
  %v843 = vunpack.c.h.b16 %v175
  %v844 = vunpack.c.l.b16 %v176
  %v845 = vunpack.c.h.b16 %v176
  %v846 = vunpack.c.l.b16 %v177
  %v847 = vunpack.c.h.b16 %v177
  %v848 = vunpack.c.l.b16 %v178
  %v849 = vunpack.c.h.b16 %v178
  %v850 = vunpack.c.l.b16 %v179
  %v851 = vunpack.c.h.b16 %v179
  %v852 = vunpack.c.l.b16 %v180
  %v853 = vunpack.c.h.b16 %v180
  %v854 = vunpack.c.l.b16 %v181
  %v855 = vunpack.c.h.b16 %v181
  %v856 = vunpack.c.l.b16 %v182
  %v857 = vunpack.c.h.b16 %v182
  %v858 = vunpack.c.l.b16 %v183
  %v859 = vunpack.c.h.b16 %v183
  %v860 = vunpack.c.l.b16 %v184
  %v861 = vunpack.c.h.b16 %v184
  %v862 = vunpack.c.l.b16 %v185
  %v863 = vunpack.c.h.b16 %v185
  %v864 = vunpack.c.l.b16 %v186
  %v865 = vunpack.c.h.b16 %v186
  %v866 = vunpack.c.l.b16 %v187
  %v867 = vunpack.c.h.b16 %v187
  %v868 = vunpack.c.l.b16 %v188
  %v869 = vunpack.c.h.b16 %v188
  %v870 = vunpack.c.l.b16 %v189
  %v871 = vunpack.c.h.b16 %v189
  %v872 = vunpack.c.l.b16 %v190
  %v873 = vunpack.c.h.b16 %v190
  %v874 = vunpack.c.l.b16 %v191
  %v875 = vunpack.c.h.b16 %v191
  %v876 = vunpack.c.l.b16 %v192
  %v877 = vunpack.c.h.b16 %v192
  %v878 = vunpack.c.l.b16 %v193
  %v879 = vunpack.c.h.b16 %v193
  %v880 = vunpack.c.l.b16 %v194
  %v881 = vunpack.c.h.b16 %v194
  %v882 = vunpack.c.l.b16 %v195
  %v883 = vunpack.c.h.b16 %v195
  %v884 = vunpack.c.l.b16 %v196
  %v885 = vunpack.c.h.b16 %v196
  %v886 = vunpack.c.l.b16 %v197
  %v887 = vunpack.c.h.b16 %v197
  %v888 = vunpack.c.l.b16 %v198
  %v889 = vunpack.c.h.b16 %v198
  %v890 = vunpack.c.l.b16 %v199
  %v891 = vunpack.c.h.b16 %v199
  %v892 = vunpack.c.l.b16 %v200
  %v893 = vunpack.c.h.b16 %v200
  %v894 = vunpack.c.l.b16 %v201
  %v895 = vunpack.c.h.b16 %v201
  %v896 = vunpack.c.l.b16 %v202
  %v897 = vunpack.c.h.b16 %v202
  %v898 = vunpack.c.l.b16 %v203
  %v899 = vunpack.c.h.b16 %v203
  %v900 = vunpack.c.l.b16 %v204
  %v901 = vunpack.c.h.b16 %v204
  %v902 = vunpack.c.l.b16 %v205
  %v903 = vunpack.c.h.b16 %v205
  %v904 = vunpack.c.l.b16 %v206
  %v905 = vunpack.c.h.b16 %v206
  %v906 = vunpack.c.l.b16 %v207
  %v907 = vunpack.c.h.b16 %v207
  %v908 = vunpack.c.l.b16 %v208
  %v909 = vunpack.c.h.b16 %v208
  %v910 = vunpack.c.l.b16 %v209
  %v911 = vunpack.c.h.b16 %v209
  %v912 = vunpack.c.l.b16 %v210
  %v913 = vunpack.c.h.b16 %v210
  %v914 = vunpack.c.l.b16 %v211
  %v915 = vunpack.c.h.b16 %v211
  %v916 = vunpack.c.l.b16 %v212
  %v917 = vunpack.c.h.b16 %v212
  %v918 = vunpack.c.l.b16 %v213
  %v919 = vunpack.c.h.b16 %v213
  %v920 = vunpack.c.l.b16 %v214
  %v921 = vunpack.c.h.b16 %v214
  %v922 = vunpack.c.l.b16 %v215
  %v923 = vunpack.c.h.b16 %v215
  %v924 = vunpack.c.l.b16 %v216
  %v925 = vunpack.c.h.b16 %v216
  %v926 = vunpack.c.l.b16 %v217
  %v927 = vunpack.c.h.b16 %v217
  %v928 = vunpack.c.l.b16 %v218
  %v929 = vunpack.c.h.b16 %v218
  %v930 = vunpack.c.l.b16 %v219
  %v931 = vunpack.c.h.b16 %v219
  %v932 = vunpack.c.l.b16 %v220
  %v933 = vunpack.c.h.b16 %v220
  %v934 = vunpack.c.l.b16 %v221
  %v935 = vunpack.c.h.b16 %v221
  %v936 = vunpack.c.l.b16 %v222
  %v937 = vunpack.c.h.b16 %v222
  %v938 = vunpack.c.l.b16 %v223
  %v939 = vunpack.c.h.b16 %v223
  %v940 = vunpack.c.l.b16 %v224
  %v941 = vunpack.c.h.b16 %v224
  %v942 = vunpack.c.l.b16 %v225
  %v943 = vunpack.c.h.b16 %v225
  %v944 = vunpack.c.l.b16 %v226
  %v945 = vunpack.c.h.b16 %v226
  %v946 = vunpack.c.l.b16 %v227
  %v947 = vunpack.c.h.b16 %v227
  %v948 = vunpack.c.l.b16 %v228
  %v949 = vunpack.c.h.b16 %v228
  %v950 = vunpack.c.l.b16 %v229
  %v951 = vunpack.c.h.b16 %v229
  %v952 = vunpack.c.l.b16 %v230
  %v953 = vunpack.c.h.b16 %v230
  %v954 = vunpack.c.l.b16 %v231
  %v955 = vunpack.c.h.b16 %v231
  %v956 = vunpack.c.l.b16 %v232
  %v957 = vunpack.c.h.b16 %v232
  %v958 = vunpack.c.l.b16 %v233
  %v959 = vunpack.c.h.b16 %v233
  %v960 = vunpack.c.l.b16 %v234
  %v961 = vunpack.c.h.b16 %v234
  %v962 = vunpack.c.l.b16 %v235
  %v963 = vunpack.c.h.b16 %v235
  %v964 = vunpack.c.l.b16 %v236
  %v965 = vunpack.c.h.b16 %v236
  %v966 = vunpack.c.l.b16 %v237
  %v967 = vunpack.c.h.b16 %v237
  %v968 = vunpack.c.l.b16 %v238
  %v969 = vunpack.c.h.b16 %v238
  %v970 = vunpack.c.l.b16 %v239
  %v971 = vunpack.c.h.b16 %v239
  %v972 = vunpack.c.l.b16 %v240
  %v973 = vunpack.c.h.b16 %v240
  %v974 = vunpack.c.l.b16 %v241
  %v975 = vunpack.c.h.b16 %v241
  %v976 = vunpack.c.l.b16 %v242
  %v977 = vunpack.c.h.b16 %v242
  %v978 = vunpack.c.l.b16 %v243
  %v979 = vunpack.c.h.b16 %v243
  %v980 = vunpack.c.l.b16 %v244
  %v981 = vunpack.c.h.b16 %v244
  %v982 = vunpack.c.l.b16 %v245
  %v983 = vunpack.c.h.b16 %v245
  %v984 = vunpack.c.l.b16 %v246
  %v985 = vunpack.c.h.b16 %v246
  %v986 = vunpack.c.l.b16 %v247
  %v987 = vunpack.c.h.b16 %v247
  %v988 = vunpack.c.l.b16 %v248
  %v989 = vunpack.c.h.b16 %v248
  %v990 = vunpack.c.l.b16 %v249
  %v991 = vunpack.c.h.b16 %v249
  %v992 = vunpack.c.l.b16 %v250
  %v993 = vunpack.c.h.b16 %v250
  %v994 = vunpack.c.l.b16 %v251
  %v995 = vunpack.c.h.b16 %v251
  %v996 = vunpack.c.l.b16 %v252
  %v997 = vunpack.c.h.b16 %v252
  %v998 = vunpack.c.l.b16 %v253
  %v999 = vunpack.c.h.b16 %v253
  %v1000 = vunpack.c.l.b16 %v254
  %v1001 = vunpack.c.h.b16 %v254
  %v1002 = vunpack.c.l.b16 %v255
  %v1003 = vunpack.c.h.b16 %v255
  %v1004 = vunpack.c.l.b16 %v256
  %v1005 = vunpack.c.h.b16 %v256
  %v1006 = vunpack.c.l.b16 %v257
  %v1007 = vunpack.c.h.b16 %v257
  %v1008 = vunpack.c.l.b16 %v258
  %v1009 = vunpack.c.h.b16 %v258
  %v1010 = vunpack.c.l.b16 %v259
  %v1011 = vunpack.c.h.b16 %v259
  %v1012 = vunpack.c.l.b16 %v260
  %v1013 = vunpack.c.h.b16 %v260
  %v1014 = vunpack.c.l.b16 %v261
  %v1015 = vunpack.c.h.b16 %v261
  %v1016 = vunpack.c.l.b16 %v262
  %v1017 = vunpack.c.h.b16 %v262
  %v1018 = vunpack.c.l.b16 %v263
  %v1019 = vunpack.c.h.b16 %v263
  %v1020 = vunpack.c.l.b16 %v264
  %v1021 = vunpack.c.h.b16 %v264
  %v1022 = vunpack.c.l.b16 %v265
  %v1023 = vunpack.c.h.b16 %v265
  %v1024 = vunpack.c.l.b16 %v266
  %v1025 = vunpack.c.h.b16 %v266
  %v1026 = vunpack.c.l.b16 %v267
  %v1027 = vunpack.c.h.b16 %v267
  %v1028 = vunpack.c.l.b16 %v268
  %v1029 = vunpack.c.h.b16 %v268
  %v1030 = vunpack.c.l.b16 %v269
  %v1031 = vunpack.c.h.b16 %v269
  %v1032 = vunpack.c.l.b16 %v270
  %v1033 = vunpack.c.h.b16 %v270
  %v1034 = vunpack.c.l.b16 %v271
  %v1035 = vunpack.c.h.b16 %v271
  %v1036 = vunpack.c.l.b16 %v272
  %v1037 = vunpack.c.h.b16 %v272
  %v1038 = vunpack.c.l.b16 %v273
  %v1039 = vunpack.c.h.b16 %v273
  %v1040 = vunpack.c.l.b16 %v274
  %v1041 = vunpack.c.h.b16 %v274
  %v1042 = vunpack.c.l.b16 %v275
  %v1043 = vunpack.c.h.b16 %v275
  %v1044 = vunpack.c.l.b16 %v276
  %v1045 = vunpack.c.h.b16 %v276
  %v1046 = vunpack.c.l.b16 %v277
  %v1047 = vunpack.c.h.b16 %v277
  %v1048 = vunpack.c.l.b16 %v278
  %v1049 = vunpack.c.h.b16 %v278
  %v1050 = vunpack.c.l.b16 %v279
  %v1051 = vunpack.c.h.b16 %v279
  %v1052 = vunpack.c.l.b16 %v280
  %v1053 = vunpack.c.h.b16 %v280
  %v1054 = vunpack.c.l.b16 %v281
  %v1055 = vunpack.c.h.b16 %v281
  %v1056 = vunpack.c.l.b16 %v282
  %v1057 = vunpack.c.h.b16 %v282
  %v1058 = vunpack.c.l.b16 %v283
  %v1059 = vunpack.c.h.b16 %v283
  %v1060 = vunpack.c.l.b16 %v284
  %v1061 = vunpack.c.h.b16 %v284
  %v1062 = vunpack.c.l.b16 %v285
  %v1063 = vunpack.c.h.b16 %v285
  %v1064 = vunpack.c.l.b16 %v286
  %v1065 = vunpack.c.h.b16 %v286
  %v1066 = vunpack.c.l.b16 %v287
  %v1067 = vunpack.c.h.b16 %v287
  %v1068 = vunpack.c.l.b16 %v288
  %v1069 = vunpack.c.h.b16 %v288
  %v1070 = vunpack.c.l.b16 %v289
  %v1071 = vunpack.c.h.b16 %v289
  %v1072 = vunpack.c.l.b16 %v290
  %v1073 = vunpack.c.h.b16 %v290
  %v1074 = vunpack.c.l.b16 %v291
  %v1075 = vunpack.c.h.b16 %v291
  %v1076 = vunpack.c.l.b16 %v292
  %v1077 = vunpack.c.h.b16 %v292
  %v1078 = vunpack.c.l.b16 %v293
  %v1079 = vunpack.c.h.b16 %v293
  %v1080 = vunpack.c.l.b16 %v294
  %v1081 = vunpack.c.h.b16 %v294
  %v1082 = vunpack.c.l.b16 %v295
  %v1083 = vunpack.c.h.b16 %v295
  %v1084 = vunpack.c.l.b16 %v296
  %v1085 = vunpack.c.h.b16 %v296
  %v1086 = vunpack.c.l.b16 %v297
  %v1087 = vunpack.c.h.b16 %v297
  %v1088 = vpack.c.b16 %v580, %v576
  %v1089 = vpack.c.b16 %v581, %v577
  %v1090 = vpack.c.b16 %v582, %v578
  %v1091 = vpack.c.b16 %v583, %v579
  %v1092 = vpack.c.b16 %v588, %v584
  %v1093 = vpack.c.b16 %v589, %v585
  %v1094 = vpack.c.b16 %v590, %v586
  %v1095 = vpack.c.b16 %v591, %v587
  %v1096 = vpack.c.b16 %v596, %v592
  %v1097 = vpack.c.b16 %v597, %v593
  %v1098 = vpack.c.b16 %v598, %v594
  %v1099 = vpack.c.b16 %v599, %v595
  %v1100 = vpack.c.b16 %v604, %v600
  %v1101 = vpack.c.b16 %v605, %v601
  %v1102 = vpack.c.b16 %v606, %v602
  %v1103 = vpack.c.b16 %v607, %v603
  %v1104 = vpack.c.b16 %v612, %v608
  %v1105 = vpack.c.b16 %v613, %v609
  %v1106 = vpack.c.b16 %v614, %v610
  %v1107 = vpack.c.b16 %v615, %v611
  %v1108 = vpack.c.b16 %v620, %v616
  %v1109 = vpack.c.b16 %v621, %v617
  %v1110 = vpack.c.b16 %v622, %v618
  %v1111 = vpack.c.b16 %v623, %v619
  %v1112 = vpack.c.b16 %v628, %v624
  %v1113 = vpack.c.b16 %v629, %v625
  %v1114 = vpack.c.b16 %v630, %v626
  %v1115 = vpack.c.b16 %v631, %v627
  %v1116 = vpack.c.b16 %v636, %v632
  %v1117 = vpack.c.b16 %v637, %v633
  %v1118 = vpack.c.b16 %v638, %v634
  %v1119 = vpack.c.b16 %v639, %v635
  %v1120 = vpack.c.b16 %v644, %v640
  %v1121 = vpack.c.b16 %v645, %v641
  %v1122 = vpack.c.b16 %v646, %v642
  %v1123 = vpack.c.b16 %v647, %v643
  %v1124 = vpack.c.b16 %v652, %v648
  %v1125 = vpack.c.b16 %v653, %v649
  %v1126 = vpack.c.b16 %v654, %v650
  %v1127 = vpack.c.b16 %v655, %v651
  %v1128 = vpack.c.b16 %v660, %v656
  %v1129 = vpack.c.b16 %v661, %v657
  %v1130 = vpack.c.b16 %v662, %v658
  %v1131 = vpack.c.b16 %v663, %v659
  %v1132 = vpack.c.b16 %v668, %v664
  %v1133 = vpack.c.b16 %v669, %v665
  %v1134 = vpack.c.b16 %v670, %v666
  %v1135 = vpack.c.b16 %v671, %v667
  %v1136 = vpack.c.b16 %v676, %v672
  %v1137 = vpack.c.b16 %v677, %v673
  %v1138 = vpack.c.b16 %v678, %v674
  %v1139 = vpack.c.b16 %v679, %v675
  %v1140 = vpack.c.b16 %v684, %v680
  %v1141 = vpack.c.b16 %v685, %v681
  %v1142 = vpack.c.b16 %v686, %v682
  %v1143 = vpack.c.b16 %v687, %v683
  %v1144 = vpack.c.b16 %v692, %v688
  %v1145 = vpack.c.b16 %v693, %v689
  %v1146 = vpack.c.b16 %v694, %v690
  %v1147 = vpack.c.b16 %v695, %v691
  %v1148 = vpack.c.b16 %v700, %v696
  %v1149 = vpack.c.b16 %v701, %v697
  %v1150 = vpack.c.b16 %v702, %v698
  %v1151 = vpack.c.b16 %v703, %v699
  %v1152 = vpack.c.b16 %v708, %v704
  %v1153 = vpack.c.b16 %v709, %v705
  %v1154 = vpack.c.b16 %v710, %v706
  %v1155 = vpack.c.b16 %v711, %v707
  %v1156 = vpack.c.b16 %v716, %v712
  %v1157 = vpack.c.b16 %v717, %v713
  %v1158 = vpack.c.b16 %v718, %v714
  %v1159 = vpack.c.b16 %v719, %v715
  %v1160 = vpack.c.b16 %v724, %v720
  %v1161 = vpack.c.b16 %v725, %v721
  %v1162 = vpack.c.b16 %v726, %v722
  %v1163 = vpack.c.b16 %v727, %v723
  %v1164 = vpack.c.b16 %v732, %v728
  %v1165 = vpack.c.b16 %v733, %v729
  %v1166 = vpack.c.b16 %v734, %v730
  %v1167 = vpack.c.b16 %v735, %v731
  %v1168 = vpack.c.b16 %v740, %v736
  %v1169 = vpack.c.b16 %v741, %v737
  %v1170 = vpack.c.b16 %v742, %v738
  %v1171 = vpack.c.b16 %v743, %v739
  %v1172 = vpack.c.b16 %v748, %v744
  %v1173 = vpack.c.b16 %v749, %v745
  %v1174 = vpack.c.b16 %v750, %v746
  %v1175 = vpack.c.b16 %v751, %v747
  %v1176 = vpack.c.b16 %v756, %v752
  %v1177 = vpack.c.b16 %v757, %v753
  %v1178 = vpack.c.b16 %v758, %v754
  %v1179 = vpack.c.b16 %v759, %v755
  %v1180 = vpack.c.b16 %v764, %v760
  %v1181 = vpack.c.b16 %v765, %v761
  %v1182 = vpack.c.b16 %v766, %v762
  %v1183 = vpack.c.b16 %v767, %v763
  %v1184 = vpack.c.b16 %v772, %v768
  %v1185 = vpack.c.b16 %v773, %v769
  %v1186 = vpack.c.b16 %v774, %v770
  %v1187 = vpack.c.b16 %v775, %v771
  %v1188 = vpack.c.b16 %v780, %v776
  %v1189 = vpack.c.b16 %v781, %v777
  %v1190 = vpack.c.b16 %v782, %v778
  %v1191 = vpack.c.b16 %v783, %v779
  %v1192 = vpack.c.b16 %v788, %v784
  %v1193 = vpack.c.b16 %v789, %v785
  %v1194 = vpack.c.b16 %v790, %v786
  %v1195 = vpack.c.b16 %v791, %v787
  %v1196 = vpack.c.b16 %v796, %v792
  %v1197 = vpack.c.b16 %v797, %v793
  %v1198 = vpack.c.b16 %v798, %v794
  %v1199 = vpack.c.b16 %v799, %v795
  %v1200 = vpack.c.b16 %v804, %v800
  %v1201 = vpack.c.b16 %v805, %v801
  %v1202 = vpack.c.b16 %v806, %v802
  %v1203 = vpack.c.b16 %v807, %v803
  %v1204 = vpack.c.b16 %v812, %v808
  %v1205 = vpack.c.b16 %v813, %v809
  %v1206 = vpack.c.b16 %v814, %v810
  %v1207 = vpack.c.b16 %v815, %v811
  %v1208 = vpack.c.b16 %v820, %v816
  %v1209 = vpack.c.b16 %v821, %v817
  %v1210 = vpack.c.b16 %v822, %v818
  %v1211 = vpack.c.b16 %v823, %v819
  %v1212 = vpack.c.b16 %v828, %v824
  %v1213 = vpack.c.b16 %v829, %v825
  %v1214 = vpack.c.b16 %v830, %v826
  %v1215 = vpack.c.b16 %v831, %v827
  %v1216 = vpack.c.b16 %v836, %v832
  %v1217 = vpack.c.b16 %v837, %v833
  %v1218 = vpack.c.b16 %v838, %v834
  %v1219 = vpack.c.b16 %v839, %v835
  %v1220 = vpack.c.b16 %v844, %v840
  %v1221 = vpack.c.b16 %v845, %v841
  %v1222 = vpack.c.b16 %v846, %v842
  %v1223 = vpack.c.b16 %v847, %v843
  %v1224 = vpack.c.b16 %v852, %v848
  %v1225 = vpack.c.b16 %v853, %v849
  %v1226 = vpack.c.b16 %v854, %v850
  %v1227 = vpack.c.b16 %v855, %v851
  %v1228 = vpack.c.b16 %v860, %v856
  %v1229 = vpack.c.b16 %v861, %v857
  %v1230 = vpack.c.b16 %v862, %v858
  %v1231 = vpack.c.b16 %v863, %v859
  %v1232 = vpack.c.b16 %v868, %v864
  %v1233 = vpack.c.b16 %v869, %v865
  %v1234 = vpack.c.b16 %v870, %v866
  %v1235 = vpack.c.b16 %v871, %v867
  %v1236 = vpack.c.b16 %v876, %v872
  %v1237 = vpack.c.b16 %v877, %v873
  %v1238 = vpack.c.b16 %v878, %v874
  %v1239 = vpack.c.b16 %v879, %v875
  %v1240 = vpack.c.b16 %v884, %v880
  %v1241 = vpack.c.b16 %v885, %v881
  %v1242 = vpack.c.b16 %v886, %v882
  %v1243 = vpack.c.b16 %v887, %v883
  %v1244 = vpack.c.b16 %v892, %v888
  %v1245 = vpack.c.b16 %v893, %v889
  %v1246 = vpack.c.b16 %v894, %v890
  %v1247 = vpack.c.b16 %v895, %v891
  %v1248 = vpack.c.b16 %v900, %v896
  %v1249 = vpack.c.b16 %v901, %v897
  %v1250 = vpack.c.b16 %v902, %v898
  %v1251 = vpack.c.b16 %v903, %v899
  %v1252 = vpack.c.b16 %v908, %v904
  %v1253 = vpack.c.b16 %v909, %v905
  %v1254 = vpack.c.b16 %v910, %v906
  %v1255 = vpack.c.b16 %v911, %v907
  %v1256 = vpack.c.b16 %v916, %v912
  %v1257 = vpack.c.b16 %v917, %v913
  %v1258 = vpack.c.b16 %v918, %v914
  %v1259 = vpack.c.b16 %v919, %v915
  %v1260 = vpack.c.b16 %v924, %v920
  %v1261 = vpack.c.b16 %v925, %v921
  %v1262 = vpack.c.b16 %v926, %v922
  %v1263 = vpack.c.b16 %v927, %v923
  %v1264 = vpack.c.b16 %v932, %v928
  %v1265 = vpack.c.b16 %v933, %v929
  %v1266 = vpack.c.b16 %v934, %v930
  %v1267 = vpack.c.b16 %v935, %v931
  %v1268 = vpack.c.b16 %v940, %v936
  %v1269 = vpack.c.b16 %v941, %v937
  %v1270 = vpack.c.b16 %v942, %v938
  %v1271 = vpack.c.b16 %v943, %v939
  %v1272 = vpack.c.b16 %v948, %v944
  %v1273 = vpack.c.b16 %v949, %v945
  %v1274 = vpack.c.b16 %v950, %v946
  %v1275 = vpack.c.b16 %v951, %v947
  %v1276 = vpack.c.b16 %v956, %v952
  %v1277 = vpack.c.b16 %v957, %v953
  %v1278 = vpack.c.b16 %v958, %v954
  %v1279 = vpack.c.b16 %v959, %v955
  %v1280 = vpack.c.b16 %v964, %v960
  %v1281 = vpack.c.b16 %v965, %v961
  %v1282 = vpack.c.b16 %v966, %v962
  %v1283 = vpack.c.b16 %v967, %v963
  %v1284 = vpack.c.b16 %v972, %v968
  %v1285 = vpack.c.b16 %v973, %v969
  %v1286 = vpack.c.b16 %v974, %v970
  %v1287 = vpack.c.b16 %v975, %v971
  %v1288 = vpack.c.b16 %v980, %v976
  %v1289 = vpack.c.b16 %v981, %v977
  %v1290 = vpack.c.b16 %v982, %v978
  %v1291 = vpack.c.b16 %v983, %v979
  %v1292 = vpack.c.b16 %v988, %v984
  %v1293 = vpack.c.b16 %v989, %v985
  %v1294 = vpack.c.b16 %v990, %v986
  %v1295 = vpack.c.b16 %v991, %v987
  %v1296 = vpack.c.b16 %v996, %v992
  %v1297 = vpack.c.b16 %v997, %v993
  %v1298 = vpack.c.b16 %v998, %v994
  %v1299 = vpack.c.b16 %v999, %v995
  %v1300 = vpack.c.b16 %v1004, %v1000
  %v1301 = vpack.c.b16 %v1005, %v1001
  %v1302 = vpack.c.b16 %v1006, %v1002
  %v1303 = vpack.c.b16 %v1007, %v1003
  %v1304 = vpack.c.b16 %v1012, %v1008
  %v1305 = vpack.c.b16 %v1013, %v1009
  %v1306 = vpack.c.b16 %v1014, %v1010
  %v1307 = vpack.c.b16 %v1015, %v1011
  %v1308 = vpack.c.b16 %v1020, %v1016
  %v1309 = vpack.c.b16 %v1021, %v1017
  %v1310 = vpack.c.b16 %v1022, %v1018
  %v1311 = vpack.c.b16 %v1023, %v1019
  %v1312 = vpack.c.b16 %v1028, %v1024
  %v1313 = vpack.c.b16 %v1029, %v1025
  %v1314 = vpack.c.b16 %v1030, %v1026
  %v1315 = vpack.c.b16 %v1031, %v1027
  %v1316 = vpack.c.b16 %v1036, %v1032
  %v1317 = vpack.c.b16 %v1037, %v1033
  %v1318 = vpack.c.b16 %v1038, %v1034
  %v1319 = vpack.c.b16 %v1039, %v1035
  %v1320 = vpack.c.b16 %v1044, %v1040
  %v1321 = vpack.c.b16 %v1045, %v1041
  %v1322 = vpack.c.b16 %v1046, %v1042
  %v1323 = vpack.c.b16 %v1047, %v1043
  %v1324 = vpack.c.b16 %v1052, %v1048
  %v1325 = vpack.c.b16 %v1053, %v1049
  %v1326 = vpack.c.b16 %v1054, %v1050
  %v1327 = vpack.c.b16 %v1055, %v1051
  %v1328 = vpack.c.b16 %v1060, %v1056
  %v1329 = vpack.c.b16 %v1061, %v1057
  %v1330 = vpack.c.b16 %v1062, %v1058
  %v1331 = vpack.c.b16 %v1063, %v1059
  %v1332 = vpack.c.b16 %v1068, %v1064
  %v1333 = vpack.c.b16 %v1069, %v1065
  %v1334 = vpack.c.b16 %v1070, %v1066
  %v1335 = vpack.c.b16 %v1071, %v1067
  %v1336 = vpack.c.b16 %v1076, %v1072
  %v1337 = vpack.c.b16 %v1077, %v1073
  %v1338 = vpack.c.b16 %v1078, %v1074
  %v1339 = vpack.c.b16 %v1079, %v1075
  %v1340 = vpack.c.b16 %v1084, %v1080
  %v1341 = vpack.c.b16 %v1085, %v1081
  %v1342 = vpack.c.b16 %v1086, %v1082
  %v1343 = vpack.c.b16 %v1087, %v1083
  %1600 = vmatprep.subr.bf16.mxu0 %v1089
  %1601 = vmatpush1.bf16.msra.mxu0 %v1088
  %1602 = vmatprep.subr.bf16.mxu0 %v1093
  %1603 = vmatpush1.bf16.msra.mxu0 %v1092
  %1604 = vmatprep.subr.bf16.mxu0 %v1097
  %1605 = vmatpush1.bf16.msra.mxu0 %v1096
  %1606 = vmatprep.subr.bf16.mxu0 %v1101
  %1607 = vmatpush1.bf16.msra.mxu0 %v1100
  %1608 = vmatprep.subr.bf16.mxu0 %v1105
  %1609 = vmatpush1.bf16.msra.mxu0 %v1104
  %1610 = vmatprep.subr.bf16.mxu0 %v1109
  %1611 = vmatpush1.bf16.msra.mxu0 %v1108
  %1612 = vmatprep.subr.bf16.mxu0 %v1113
  %1613 = vmatpush1.bf16.msra.mxu0 %v1112
  %1614 = vmatprep.subr.bf16.mxu0 %v1117
  %1615 = vmatpush1.bf16.msra.mxu0 %v1116
  %1616 = vmatprep.subr.bf16.mxu0 %v1121
  %1617 = vmatpush1.bf16.msra.mxu0 %v1120
  %1618 = vmatprep.subr.bf16.mxu0 %v1125
  %1619 = vmatpush1.bf16.msra.mxu0 %v1124
  %1620 = vmatprep.subr.bf16.mxu0 %v1129
  %1621 = vmatpush1.bf16.msra.mxu0 %v1128
  %1622 = vmatprep.subr.bf16.mxu0 %v1133
  %1623 = vmatpush1.bf16.msra.mxu0 %v1132
  %1624 = vmatprep.subr.bf16.mxu0 %v1137
  %1625 = vmatpush1.bf16.msra.mxu0 %v1136
  %1626 = vmatprep.subr.bf16.mxu0 %v1141
  %1627 = vmatpush1.bf16.msra.mxu0 %v1140
  %1628 = vmatprep.subr.bf16.mxu0 %v1145
  %1629 = vmatpush1.bf16.msra.mxu0 %v1144
  %1630 = vmatprep.subr.bf16.mxu0 %v1149
  %1631 = vmatpush1.bf16.msra.mxu0 %v1148
  %1632 = vmatprep.mubr.bf16.mxu0 %v35
  %1633 = vmatmul.mubr.bf16.gmra.mrb[0].mxu0 %v34
  %v1634 = vpop.f32.mrb[0].mxu0
  %v1635 = vadd.f32 %v303, %v1634
  %v1636 = vpop.f32.mrb[0].mxu0
  %v1637 = vadd.f32 %v307, %v1636
  %v1638 = vpop.f32.mrb[0].mxu0
  %v1639 = vpop.f32.mrb[0].mxu0
  %1640 = vdwg.mxu0
  %1641 = vmatprep.subr.bf16.mxu0 %v1153
  %1642 = vmatpush1.bf16.msra.mxu0 %v1152
  %1643 = vmatprep.subr.bf16.mxu0 %v1157
  %1644 = vmatpush1.bf16.msra.mxu0 %v1156
  %1645 = vmatprep.subr.bf16.mxu0 %v1161
  %1646 = vmatpush1.bf16.msra.mxu0 %v1160
  %1647 = vmatprep.subr.bf16.mxu0 %v1165
  %1648 = vmatpush1.bf16.msra.mxu0 %v1164
  %1649 = vmatprep.subr.bf16.mxu0 %v1169
  %1650 = vmatpush1.bf16.msra.mxu0 %v1168
  %1651 = vmatprep.subr.bf16.mxu0 %v1173
  %1652 = vmatpush1.bf16.msra.mxu0 %v1172
  %1653 = vmatprep.subr.bf16.mxu0 %v1177
  %1654 = vmatpush1.bf16.msra.mxu0 %v1176
  %1655 = vmatprep.subr.bf16.mxu0 %v1181
  %1656 = vmatpush1.bf16.msra.mxu0 %v1180
  %1657 = vmatprep.subr.bf16.mxu0 %v1185
  %1658 = vmatpush1.bf16.msra.mxu0 %v1184
  %1659 = vmatprep.subr.bf16.mxu0 %v1189
  %1660 = vmatpush1.bf16.msra.mxu0 %v1188
  %1661 = vmatprep.subr.bf16.mxu0 %v1193
  %1662 = vmatpush1.bf16.msra.mxu0 %v1192
  %1663 = vmatprep.subr.bf16.mxu0 %v1197
  %1664 = vmatpush1.bf16.msra.mxu0 %v1196
  %1665 = vmatprep.subr.bf16.mxu0 %v1201
  %1666 = vmatpush1.bf16.msra.mxu0 %v1200
  %1667 = vmatprep.subr.bf16.mxu0 %v1205
  %1668 = vmatpush1.bf16.msra.mxu0 %v1204
  %1669 = vmatprep.subr.bf16.mxu0 %v1209
  %1670 = vmatpush1.bf16.msra.mxu0 %v1208
  %1671 = vmatprep.subr.bf16.mxu0 %v1213
  %1672 = vmatpush1.bf16.msra.mxu0 %v1212
  %1673 = vmatprep.mubr.bf16.mxu0 %v37
  %1674 = vmatmul.mubr.bf16.gmra.mrb[0].mxu0 %v36
  %v1675 = vpop.f32.mrb[0].mxu0
  %v1676 = vadd.f32 %v1635, %v1675
  %v1677 = vpop.f32.mrb[0].mxu0
  %v1678 = vadd.f32 %v1637, %v1677
  %v1679 = vpop.f32.mrb[0].mxu0
  %v1680 = vpop.f32.mrb[0].mxu0
  %1681 = vdwg.mxu0
  %1682 = vmatprep.subr.bf16.mxu0 %v1217
  %1683 = vmatpush1.bf16.msra.mxu0 %v1216
  %1684 = vmatprep.subr.bf16.mxu0 %v1221
  %1685 = vmatpush1.bf16.msra.mxu0 %v1220
  %1686 = vmatprep.subr.bf16.mxu0 %v1225
  %1687 = vmatpush1.bf16.msra.mxu0 %v1224
  %1688 = vmatprep.subr.bf16.mxu0 %v1229
  %1689 = vmatpush1.bf16.msra.mxu0 %v1228
  %1690 = vmatprep.subr.bf16.mxu0 %v1233
  %1691 = vmatpush1.bf16.msra.mxu0 %v1232
  %1692 = vmatprep.subr.bf16.mxu0 %v1237
  %1693 = vmatpush1.bf16.msra.mxu0 %v1236
  %1694 = vmatprep.subr.bf16.mxu0 %v1241
  %1695 = vmatpush1.bf16.msra.mxu0 %v1240
  %1696 = vmatprep.subr.bf16.mxu0 %v1245
  %1697 = vmatpush1.bf16.msra.mxu0 %v1244
  %1698 = vmatprep.subr.bf16.mxu0 %v1249
  %1699 = vmatpush1.bf16.msra.mxu0 %v1248
  %1700 = vmatprep.subr.bf16.mxu0 %v1253
  %1701 = vmatpush1.bf16.msra.mxu0 %v1252
  %1702 = vmatprep.subr.bf16.mxu0 %v1257
  %1703 = vmatpush1.bf16.msra.mxu0 %v1256
  %1704 = vmatprep.subr.bf16.mxu0 %v1261
  %1705 = vmatpush1.bf16.msra.mxu0 %v1260
  %1706 = vmatprep.subr.bf16.mxu0 %v1265
  %1707 = vmatpush1.bf16.msra.mxu0 %v1264
  %1708 = vmatprep.subr.bf16.mxu0 %v1269
  %1709 = vmatpush1.bf16.msra.mxu0 %v1268
  %1710 = vmatprep.subr.bf16.mxu0 %v1273
  %1711 = vmatpush1.bf16.msra.mxu0 %v1272
  %1712 = vmatprep.subr.bf16.mxu0 %v1277
  %1713 = vmatpush1.bf16.msra.mxu0 %v1276
  %1714 = vmatprep.mubr.bf16.mxu0 %v39
  %1715 = vmatmul.mubr.bf16.gmra.mrb[0].mxu0 %v38
  %v1716 = vpop.f32.mrb[0].mxu0
  %v1717 = vadd.f32 %v1676, %v1716
  %v1718 = vpop.f32.mrb[0].mxu0
  %v1719 = vadd.f32 %v1678, %v1718
  %v1720 = vpop.f32.mrb[0].mxu0
  %v1721 = vpop.f32.mrb[0].mxu0
  %1722 = vdwg.mxu0
  %1723 = vmatprep.subr.bf16.mxu0 %v1281
  %1724 = vmatpush1.bf16.msra.mxu0 %v1280
  %1725 = vmatprep.subr.bf16.mxu0 %v1285
  %1726 = vmatpush1.bf16.msra.mxu0 %v1284
  %1727 = vmatprep.subr.bf16.mxu0 %v1289
  %1728 = vmatpush1.bf16.msra.mxu0 %v1288
  %1729 = vmatprep.subr.bf16.mxu0 %v1293
  %1730 = vmatpush1.bf16.msra.mxu0 %v1292
  %1731 = vmatprep.subr.bf16.mxu0 %v1297
  %1732 = vmatpush1.bf16.msra.mxu0 %v1296
  %1733 = vmatprep.subr.bf16.mxu0 %v1301
  %1734 = vmatpush1.bf16.msra.mxu0 %v1300
  %1735 = vmatprep.subr.bf16.mxu0 %v1305
  %1736 = vmatpush1.bf16.msra.mxu0 %v1304
  %1737 = vmatprep.subr.bf16.mxu0 %v1309
  %1738 = vmatpush1.bf16.msra.mxu0 %v1308
  %1739 = vmatprep.subr.bf16.mxu0 %v1313
  %1740 = vmatpush1.bf16.msra.mxu0 %v1312
  %1741 = vmatprep.subr.bf16.mxu0 %v1317
  %1742 = vmatpush1.bf16.msra.mxu0 %v1316
  %1743 = vmatprep.subr.bf16.mxu0 %v1321
  %1744 = vmatpush1.bf16.msra.mxu0 %v1320
  %1745 = vmatprep.subr.bf16.mxu0 %v1325
  %1746 = vmatpush1.bf16.msra.mxu0 %v1324
  %1747 = vmatprep.subr.bf16.mxu0 %v1329
  %1748 = vmatpush1.bf16.msra.mxu0 %v1328
  %1749 = vmatprep.subr.bf16.mxu0 %v1333
  %1750 = vmatpush1.bf16.msra.mxu0 %v1332
  %1751 = vmatprep.subr.bf16.mxu0 %v1337
  %1752 = vmatpush1.bf16.msra.mxu0 %v1336
  %1753 = vmatprep.subr.bf16.mxu0 %v1341
  %1754 = vmatpush1.bf16.msra.mxu0 %v1340
  %1755 = vmatprep.mubr.bf16.mxu0 %v41
  %1756 = vmatmul.mubr.bf16.gmra.mrb[0].mxu0 %v40
  %v1757 = vpop.f32.mrb[0].mxu0
  %v1758 = vadd.f32 %v1717, %v1757
  %v1759 = vpop.f32.mrb[0].mxu0
  %v1760 = vadd.f32 %v1719, %v1759
  %v1761 = vpop.f32.mrb[0].mxu0
  %v1762 = vpop.f32.mrb[0].mxu0
  %1763 = vdwg.mxu0
  %1764 = vmatprep.subr.bf16.mxu0 %v1091
  %1765 = vmatpush1.bf16.msra.mxu0 %v1090
  %1766 = vmatprep.subr.bf16.mxu0 %v1095
  %1767 = vmatpush1.bf16.msra.mxu0 %v1094
  %1768 = vmatprep.subr.bf16.mxu0 %v1099
  %1769 = vmatpush1.bf16.msra.mxu0 %v1098
  %1770 = vmatprep.subr.bf16.mxu0 %v1103
  %1771 = vmatpush1.bf16.msra.mxu0 %v1102
  %1772 = vmatprep.subr.bf16.mxu0 %v1107
  %1773 = vmatpush1.bf16.msra.mxu0 %v1106
  %1774 = vmatprep.subr.bf16.mxu0 %v1111
  %1775 = vmatpush1.bf16.msra.mxu0 %v1110
  %1776 = vmatprep.subr.bf16.mxu0 %v1115
  %1777 = vmatpush1.bf16.msra.mxu0 %v1114
  %1778 = vmatprep.subr.bf16.mxu0 %v1119
  %1779 = vmatpush1.bf16.msra.mxu0 %v1118
  %1780 = vmatprep.subr.bf16.mxu0 %v1123
  %1781 = vmatpush1.bf16.msra.mxu0 %v1122
  %1782 = vmatprep.subr.bf16.mxu0 %v1127
  %1783 = vmatpush1.bf16.msra.mxu0 %v1126
  %1784 = vmatprep.subr.bf16.mxu0 %v1131
  %1785 = vmatpush1.bf16.msra.mxu0 %v1130
  %1786 = vmatprep.subr.bf16.mxu0 %v1135
  %1787 = vmatpush1.bf16.msra.mxu0 %v1134
  %1788 = vmatprep.subr.bf16.mxu0 %v1139
  %1789 = vmatpush1.bf16.msra.mxu0 %v1138
  %1790 = vmatprep.subr.bf16.mxu0 %v1143
  %1791 = vmatpush1.bf16.msra.mxu0 %v1142
  %1792 = vmatprep.subr.bf16.mxu0 %v1147
  %1793 = vmatpush1.bf16.msra.mxu0 %v1146
  %1794 = vmatprep.subr.bf16.mxu0 %v1151
  %1795 = vmatpush1.bf16.msra.mxu0 %v1150
  %1796 = vmatprep.mubr.bf16.mxu0 %v35
  %1797 = vmatmul.mubr.bf16.gmra.mrb[0].mxu0 %v34
  %v1798 = vpop.f32.mrb[0].mxu0
  %v1799 = vadd.f32 %v311, %v1798
  %v1800 = vpop.f32.mrb[0].mxu0
  %v1801 = vadd.f32 %v315, %v1800
  %v1802 = vpop.f32.mrb[0].mxu0
  %v1803 = vpop.f32.mrb[0].mxu0
  %1804 = vdwg.mxu0
  %1805 = vmatprep.subr.bf16.mxu0 %v1155
  %1806 = vmatpush1.bf16.msra.mxu0 %v1154
  %1807 = vmatprep.subr.bf16.mxu0 %v1159
  %1808 = vmatpush1.bf16.msra.mxu0 %v1158
  %1809 = vmatprep.subr.bf16.mxu0 %v1163
  %1810 = vmatpush1.bf16.msra.mxu0 %v1162
  %1811 = vmatprep.subr.bf16.mxu0 %v1167
  %1812 = vmatpush1.bf16.msra.mxu0 %v1166
  %1813 = vmatprep.subr.bf16.mxu0 %v1171
  %1814 = vmatpush1.bf16.msra.mxu0 %v1170
  %1815 = vmatprep.subr.bf16.mxu0 %v1175
  %1816 = vmatpush1.bf16.msra.mxu0 %v1174
  %1817 = vmatprep.subr.bf16.mxu0 %v1179
  %1818 = vmatpush1.bf16.msra.mxu0 %v1178
  %1819 = vmatprep.subr.bf16.mxu0 %v1183
  %1820 = vmatpush1.bf16.msra.mxu0 %v1182
  %1821 = vmatprep.subr.bf16.mxu0 %v1187
  %1822 = vmatpush1.bf16.msra.mxu0 %v1186
  %1823 = vmatprep.subr.bf16.mxu0 %v1191
  %1824 = vmatpush1.bf16.msra.mxu0 %v1190
  %1825 = vmatprep.subr.bf16.mxu0 %v1195
  %1826 = vmatpush1.bf16.msra.mxu0 %v1194
  %1827 = vmatprep.subr.bf16.mxu0 %v1199
  %1828 = vmatpush1.bf16.msra.mxu0 %v1198
  %1829 = vmatprep.subr.bf16.mxu0 %v1203
  %1830 = vmatpush1.bf16.msra.mxu0 %v1202
  %1831 = vmatprep.subr.bf16.mxu0 %v1207
  %1832 = vmatpush1.bf16.msra.mxu0 %v1206
  %1833 = vmatprep.subr.bf16.mxu0 %v1211
  %1834 = vmatpush1.bf16.msra.mxu0 %v1210
  %1835 = vmatprep.subr.bf16.mxu0 %v1215
  %1836 = vmatpush1.bf16.msra.mxu0 %v1214
  %1837 = vmatprep.mubr.bf16.mxu0 %v37
  %1838 = vmatmul.mubr.bf16.gmra.mrb[0].mxu0 %v36
  %v1839 = vpop.f32.mrb[0].mxu0
  %v1840 = vadd.f32 %v1799, %v1839
  %v1841 = vpop.f32.mrb[0].mxu0
  %v1842 = vadd.f32 %v1801, %v1841
  %v1843 = vpop.f32.mrb[0].mxu0
  %v1844 = vpop.f32.mrb[0].mxu0
  %1845 = vdwg.mxu0
  %1846 = vmatprep.subr.bf16.mxu0 %v1219
  %1847 = vmatpush1.bf16.msra.mxu0 %v1218
  %1848 = vmatprep.subr.bf16.mxu0 %v1223
  %1849 = vmatpush1.bf16.msra.mxu0 %v1222
  %1850 = vmatprep.subr.bf16.mxu0 %v1227
  %1851 = vmatpush1.bf16.msra.mxu0 %v1226
  %1852 = vmatprep.subr.bf16.mxu0 %v1231
  %1853 = vmatpush1.bf16.msra.mxu0 %v1230
  %1854 = vmatprep.subr.bf16.mxu0 %v1235
  %1855 = vmatpush1.bf16.msra.mxu0 %v1234
  %1856 = vmatprep.subr.bf16.mxu0 %v1239
  %1857 = vmatpush1.bf16.msra.mxu0 %v1238
  %1858 = vmatprep.subr.bf16.mxu0 %v1243
  %1859 = vmatpush1.bf16.msra.mxu0 %v1242
  %1860 = vmatprep.subr.bf16.mxu0 %v1247
  %1861 = vmatpush1.bf16.msra.mxu0 %v1246
  %1862 = vmatprep.subr.bf16.mxu0 %v1251
  %1863 = vmatpush1.bf16.msra.mxu0 %v1250
  %1864 = vmatprep.subr.bf16.mxu0 %v1255
  %1865 = vmatpush1.bf16.msra.mxu0 %v1254
  %1866 = vmatprep.subr.bf16.mxu0 %v1259
  %1867 = vmatpush1.bf16.msra.mxu0 %v1258
  %1868 = vmatprep.subr.bf16.mxu0 %v1263
  %1869 = vmatpush1.bf16.msra.mxu0 %v1262
  %1870 = vmatprep.subr.bf16.mxu0 %v1267
  %1871 = vmatpush1.bf16.msra.mxu0 %v1266
  %1872 = vmatprep.subr.bf16.mxu0 %v1271
  %1873 = vmatpush1.bf16.msra.mxu0 %v1270
  %1874 = vmatprep.subr.bf16.mxu0 %v1275
  %1875 = vmatpush1.bf16.msra.mxu0 %v1274
  %1876 = vmatprep.subr.bf16.mxu0 %v1279
  %1877 = vmatpush1.bf16.msra.mxu0 %v1278
  %1878 = vmatprep.mubr.bf16.mxu0 %v39
  %1879 = vmatmul.mubr.bf16.gmra.mrb[0].mxu0 %v38
  %v1880 = vpop.f32.mrb[0].mxu0
  %v1881 = vadd.f32 %v1840, %v1880
  %v1882 = vpop.f32.mrb[0].mxu0
  %v1883 = vadd.f32 %v1842, %v1882
  %v1884 = vpop.f32.mrb[0].mxu0
  %v1885 = vpop.f32.mrb[0].mxu0
  %1886 = vdwg.mxu0
  %1887 = vmatprep.subr.bf16.mxu0 %v1283
  %1888 = vmatpush1.bf16.msra.mxu0 %v1282
  %1889 = vmatprep.subr.bf16.mxu0 %v1287
  %1890 = vmatpush1.bf16.msra.mxu0 %v1286
  %1891 = vmatprep.subr.bf16.mxu0 %v1291
  %1892 = vmatpush1.bf16.msra.mxu0 %v1290
  %1893 = vmatprep.subr.bf16.mxu0 %v1295
  %1894 = vmatpush1.bf16.msra.mxu0 %v1294
  %1895 = vmatprep.subr.bf16.mxu0 %v1299
  %1896 = vmatpush1.bf16.msra.mxu0 %v1298
  %1897 = vmatprep.subr.bf16.mxu0 %v1303
  %1898 = vmatpush1.bf16.msra.mxu0 %v1302
  %1899 = vmatprep.subr.bf16.mxu0 %v1307
  %1900 = vmatpush1.bf16.msra.mxu0 %v1306
  %1901 = vmatprep.subr.bf16.mxu0 %v1311
  %1902 = vmatpush1.bf16.msra.mxu0 %v1310
  %1903 = vmatprep.subr.bf16.mxu0 %v1315
  %1904 = vmatpush1.bf16.msra.mxu0 %v1314
  %1905 = vmatprep.subr.bf16.mxu0 %v1319
  %1906 = vmatpush1.bf16.msra.mxu0 %v1318
  %1907 = vmatprep.subr.bf16.mxu0 %v1323
  %1908 = vmatpush1.bf16.msra.mxu0 %v1322
  %1909 = vmatprep.subr.bf16.mxu0 %v1327
  %1910 = vmatpush1.bf16.msra.mxu0 %v1326
  %1911 = vmatprep.subr.bf16.mxu0 %v1331
  %1912 = vmatpush1.bf16.msra.mxu0 %v1330
  %1913 = vmatprep.subr.bf16.mxu0 %v1335
  %1914 = vmatpush1.bf16.msra.mxu0 %v1334
  %1915 = vmatprep.subr.bf16.mxu0 %v1339
  %1916 = vmatpush1.bf16.msra.mxu0 %v1338
  %1917 = vmatprep.subr.bf16.mxu0 %v1343
  %1918 = vmatpush1.bf16.msra.mxu0 %v1342
  %1919 = vmatprep.mubr.bf16.mxu0 %v41
  %1920 = vmatmul.mubr.bf16.gmra.mrb[0].mxu0 %v40
  %v1921 = vpop.f32.mrb[0].mxu0
  %v1922 = vadd.f32 %v1881, %v1921
  %v1923 = vpop.f32.mrb[0].mxu0
  %v1924 = vadd.f32 %v1883, %v1923
  %v1925 = vpop.f32.mrb[0].mxu0
  %v1926 = vpop.f32.mrb[0].mxu0
  %1927 = vdwg.mxu0
  %v1928 = vmax.f32 %v1758, 0.0
  %v1929 = vmax.f32 %v1760, 0.0
  %v1930 = vmax.f32 %v1922, 0.0
  %v1931 = vmax.f32 %v1924, 0.0
  %v1932 = vpack.c.bf16 %v1928, %v1928
  %v1933 = vpack.c.bf16 %v1929, %v1929
  %v1934 = vpack.c.bf16 %v1930, %v1930
  %v1935 = vpack.c.bf16 %v1931, %v1931
  %v1936 = vld [vmem:[%s3] sm:$0xff]
  %v1937 = vld [vmem:[%s3 + $0x8] sm:$0xff]
  %v1938 = vld [vmem:[%s3 + $0x10] sm:$0xff]
  %v1939 = vld [vmem:[%s3 + $0x18] sm:$0xff]
  %v1940 = vld [vmem:[%s3 + $0x20] sm:$0xff]
  %v1941 = vld [vmem:[%s3 + $0x28] sm:$0xff]
  %v1942 = vld [vmem:[%s3 + $0x30] sm:$0xff]
  %v1943 = vld [vmem:[%s3 + $0x38] sm:$0xff]
  %v1944 = vld [vmem:[%s3 + $0x40] sm:$0xff]
  %v1945 = vld [vmem:[%s3 + $0x48] sm:$0xff]
  %v1946 = vld [vmem:[%s3 + $0x50] sm:$0xff]
  %v1947 = vld [vmem:[%s3 + $0x58] sm:$0xff]
  %v1948 = vld [vmem:[%s3 + $0x60] sm:$0xff]
  %v1949 = vld [vmem:[%s3 + $0x68] sm:$0xff]
  %v1950 = vld [vmem:[%s3 + $0x70] sm:$0xff]
  %v1951 = vld [vmem:[%s3 + $0x78] sm:$0xff]
  %v1952 = vld [vmem:[%s3 + $0x80] sm:$0xff]
  %v1953 = vld [vmem:[%s3 + $0x88] sm:$0xff]
  %v1954 = vld [vmem:[%s3 + $0x90] sm:$0xff]
  %v1955 = vld [vmem:[%s3 + $0x98] sm:$0xff]
  %v1956 = vld [vmem:[%s3 + $0xa0] sm:$0xff]
  %v1957 = vld [vmem:[%s3 + $0xa8] sm:$0xff]
  %v1958 = vld [vmem:[%s3 + $0xb0] sm:$0xff]
  %v1959 = vld [vmem:[%s3 + $0xb8] sm:$0xff]
  %v1960 = vld [vmem:[%s3 + $0xc0] sm:$0xff]
  %v1961 = vld [vmem:[%s3 + $0xc8] sm:$0xff]
  %v1962 = vld [vmem:[%s3 + $0xd0] sm:$0xff]
  %v1963 = vld [vmem:[%s3 + $0xd8] sm:$0xff]
  %v1964 = vld [vmem:[%s3 + $0xe0] sm:$0xff]
  %v1965 = vld [vmem:[%s3 + $0xe8] sm:$0xff]
  %v1966 = vld [vmem:[%s3 + $0xf0] sm:$0xff]
  %v1967 = vld [vmem:[%s3 + $0xf8] sm:$0xff]
  %v1968 = vld [vmem:[%s3 + $0x100] sm:$0xff]
  %v1969 = vld [vmem:[%s3 + $0x108] sm:$0xff]
  %v1970 = vld [vmem:[%s3 + $0x110] sm:$0xff]
  %v1971 = vld [vmem:[%s3 + $0x118] sm:$0xff]
  %v1972 = vld [vmem:[%s3 + $0x120] sm:$0xff]
  %v1973 = vld [vmem:[%s3 + $0x128] sm:$0xff]
  %v1974 = vld [vmem:[%s3 + $0x130] sm:$0xff]
  %v1975 = vld [vmem:[%s3 + $0x138] sm:$0xff]
  %v1976 = vld [vmem:[%s3 + $0x140] sm:$0xff]
  %v1977 = vld [vmem:[%s3 + $0x148] sm:$0xff]
  %v1978 = vld [vmem:[%s3 + $0x150] sm:$0xff]
  %v1979 = vld [vmem:[%s3 + $0x158] sm:$0xff]
  %v1980 = vld [vmem:[%s3 + $0x160] sm:$0xff]
  %v1981 = vld [vmem:[%s3 + $0x168] sm:$0xff]
  %v1982 = vld [vmem:[%s3 + $0x170] sm:$0xff]
  %v1983 = vld [vmem:[%s3 + $0x178] sm:$0xff]
  %v1984 = vld [vmem:[%s3 + $0x180] sm:$0xff]
  %v1985 = vld [vmem:[%s3 + $0x188] sm:$0xff]
  %v1986 = vld [vmem:[%s3 + $0x190] sm:$0xff]
  %v1987 = vld [vmem:[%s3 + $0x198] sm:$0xff]
  %v1988 = vld [vmem:[%s3 + $0x1a0] sm:$0xff]
  %v1989 = vld [vmem:[%s3 + $0x1a8] sm:$0xff]
  %v1990 = vld [vmem:[%s3 + $0x1b0] sm:$0xff]
  %v1991 = vld [vmem:[%s3 + $0x1b8] sm:$0xff]
  %v1992 = vld [vmem:[%s3 + $0x1c0] sm:$0xff]
  %v1993 = vld [vmem:[%s3 + $0x1c8] sm:$0xff]
  %v1994 = vld [vmem:[%s3 + $0x1d0] sm:$0xff]
  %v1995 = vld [vmem:[%s3 + $0x1d8] sm:$0xff]
  %v1996 = vld [vmem:[%s3 + $0x1e0] sm:$0xff]
  %v1997 = vld [vmem:[%s3 + $0x1e8] sm:$0xff]
  %v1998 = vld [vmem:[%s3 + $0x1f0] sm:$0xff]
  %v1999 = vld [vmem:[%s3 + $0x1f8] sm:$0xff]
  %v2000 = vld [vmem:[%s4] sm:$0x3]
  %v2002 = vlaneseq
  %v2003 = vshrl.u32 %v2002, 7
  %v2004 = vsub.s32 0, %v2003
  %v2005 = vrot.slane %v2000, %v2004
  %v2006 = vlaneseq
  %v2007 = vshrl.u32 %v2006, 7
  %v2008 = vsub.s32 1, %v2007
  %v2009 = vrot.slane %v2000, %v2008
  %v2076 = vunpack.c.l.b16 %v1936
  %v2077 = vunpack.c.h.b16 %v1936
  %v2078 = vunpack.c.l.b16 %v1937
  %v2079 = vunpack.c.h.b16 %v1937
  %v2080 = vunpack.c.l.b16 %v1938
  %v2081 = vunpack.c.h.b16 %v1938
  %v2082 = vunpack.c.l.b16 %v1939
  %v2083 = vunpack.c.h.b16 %v1939
  %v2084 = vunpack.c.l.b16 %v1940
  %v2085 = vunpack.c.h.b16 %v1940
  %v2086 = vunpack.c.l.b16 %v1941
  %v2087 = vunpack.c.h.b16 %v1941
  %v2088 = vunpack.c.l.b16 %v1942
  %v2089 = vunpack.c.h.b16 %v1942
  %v2090 = vunpack.c.l.b16 %v1943
  %v2091 = vunpack.c.h.b16 %v1943
  %v2092 = vunpack.c.l.b16 %v1944
  %v2093 = vunpack.c.h.b16 %v1944
  %v2094 = vunpack.c.l.b16 %v1945
  %v2095 = vunpack.c.h.b16 %v1945
  %v2096 = vunpack.c.l.b16 %v1946
  %v2097 = vunpack.c.h.b16 %v1946
  %v2098 = vunpack.c.l.b16 %v1947
  %v2099 = vunpack.c.h.b16 %v1947
  %v2100 = vunpack.c.l.b16 %v1948
  %v2101 = vunpack.c.h.b16 %v1948
  %v2102 = vunpack.c.l.b16 %v1949
  %v2103 = vunpack.c.h.b16 %v1949
  %v2104 = vunpack.c.l.b16 %v1950
  %v2105 = vunpack.c.h.b16 %v1950
  %v2106 = vunpack.c.l.b16 %v1951
  %v2107 = vunpack.c.h.b16 %v1951
  %v2108 = vunpack.c.l.b16 %v1952
  %v2109 = vunpack.c.h.b16 %v1952
  %v2110 = vunpack.c.l.b16 %v1953
  %v2111 = vunpack.c.h.b16 %v1953
  %v2112 = vunpack.c.l.b16 %v1954
  %v2113 = vunpack.c.h.b16 %v1954
  %v2114 = vunpack.c.l.b16 %v1955
  %v2115 = vunpack.c.h.b16 %v1955
  %v2116 = vunpack.c.l.b16 %v1956
  %v2117 = vunpack.c.h.b16 %v1956
  %v2118 = vunpack.c.l.b16 %v1957
  %v2119 = vunpack.c.h.b16 %v1957
  %v2120 = vunpack.c.l.b16 %v1958
  %v2121 = vunpack.c.h.b16 %v1958
  %v2122 = vunpack.c.l.b16 %v1959
  %v2123 = vunpack.c.h.b16 %v1959
  %v2124 = vunpack.c.l.b16 %v1960
  %v2125 = vunpack.c.h.b16 %v1960
  %v2126 = vunpack.c.l.b16 %v1961
  %v2127 = vunpack.c.h.b16 %v1961
  %v2128 = vunpack.c.l.b16 %v1962
  %v2129 = vunpack.c.h.b16 %v1962
  %v2130 = vunpack.c.l.b16 %v1963
  %v2131 = vunpack.c.h.b16 %v1963
  %v2132 = vunpack.c.l.b16 %v1964
  %v2133 = vunpack.c.h.b16 %v1964
  %v2134 = vunpack.c.l.b16 %v1965
  %v2135 = vunpack.c.h.b16 %v1965
  %v2136 = vunpack.c.l.b16 %v1966
  %v2137 = vunpack.c.h.b16 %v1966
  %v2138 = vunpack.c.l.b16 %v1967
  %v2139 = vunpack.c.h.b16 %v1967
  %v2140 = vunpack.c.l.b16 %v1968
  %v2141 = vunpack.c.h.b16 %v1968
  %v2142 = vunpack.c.l.b16 %v1969
  %v2143 = vunpack.c.h.b16 %v1969
  %v2144 = vunpack.c.l.b16 %v1970
  %v2145 = vunpack.c.h.b16 %v1970
  %v2146 = vunpack.c.l.b16 %v1971
  %v2147 = vunpack.c.h.b16 %v1971
  %v2148 = vunpack.c.l.b16 %v1972
  %v2149 = vunpack.c.h.b16 %v1972
  %v2150 = vunpack.c.l.b16 %v1973
  %v2151 = vunpack.c.h.b16 %v1973
  %v2152 = vunpack.c.l.b16 %v1974
  %v2153 = vunpack.c.h.b16 %v1974
  %v2154 = vunpack.c.l.b16 %v1975
  %v2155 = vunpack.c.h.b16 %v1975
  %v2156 = vunpack.c.l.b16 %v1976
  %v2157 = vunpack.c.h.b16 %v1976
  %v2158 = vunpack.c.l.b16 %v1977
  %v2159 = vunpack.c.h.b16 %v1977
  %v2160 = vunpack.c.l.b16 %v1978
  %v2161 = vunpack.c.h.b16 %v1978
  %v2162 = vunpack.c.l.b16 %v1979
  %v2163 = vunpack.c.h.b16 %v1979
  %v2164 = vunpack.c.l.b16 %v1980
  %v2165 = vunpack.c.h.b16 %v1980
  %v2166 = vunpack.c.l.b16 %v1981
  %v2167 = vunpack.c.h.b16 %v1981
  %v2168 = vunpack.c.l.b16 %v1982
  %v2169 = vunpack.c.h.b16 %v1982
  %v2170 = vunpack.c.l.b16 %v1983
  %v2171 = vunpack.c.h.b16 %v1983
  %v2172 = vunpack.c.l.b16 %v1984
  %v2173 = vunpack.c.h.b16 %v1984
  %v2174 = vunpack.c.l.b16 %v1985
  %v2175 = vunpack.c.h.b16 %v1985
  %v2176 = vunpack.c.l.b16 %v1986
  %v2177 = vunpack.c.h.b16 %v1986
  %v2178 = vunpack.c.l.b16 %v1987
  %v2179 = vunpack.c.h.b16 %v1987
  %v2180 = vunpack.c.l.b16 %v1988
  %v2181 = vunpack.c.h.b16 %v1988
  %v2182 = vunpack.c.l.b16 %v1989
  %v2183 = vunpack.c.h.b16 %v1989
  %v2184 = vunpack.c.l.b16 %v1990
  %v2185 = vunpack.c.h.b16 %v1990
  %v2186 = vunpack.c.l.b16 %v1991
  %v2187 = vunpack.c.h.b16 %v1991
  %v2188 = vunpack.c.l.b16 %v1992
  %v2189 = vunpack.c.h.b16 %v1992
  %v2190 = vunpack.c.l.b16 %v1993
  %v2191 = vunpack.c.h.b16 %v1993
  %v2192 = vunpack.c.l.b16 %v1994
  %v2193 = vunpack.c.h.b16 %v1994
  %v2194 = vunpack.c.l.b16 %v1995
  %v2195 = vunpack.c.h.b16 %v1995
  %v2196 = vunpack.c.l.b16 %v1996
  %v2197 = vunpack.c.h.b16 %v1996
  %v2198 = vunpack.c.l.b16 %v1997
  %v2199 = vunpack.c.h.b16 %v1997
  %v2200 = vunpack.c.l.b16 %v1998
  %v2201 = vunpack.c.h.b16 %v1998
  %v2202 = vunpack.c.l.b16 %v1999
  %v2203 = vunpack.c.h.b16 %v1999
  %v2204 = vpack.c.b16 %v2078, %v2076
  %v2205 = vpack.c.b16 %v2079, %v2077
  %v2206 = vpack.c.b16 %v2082, %v2080
  %v2207 = vpack.c.b16 %v2083, %v2081
  %v2208 = vpack.c.b16 %v2086, %v2084
  %v2209 = vpack.c.b16 %v2087, %v2085
  %v2210 = vpack.c.b16 %v2090, %v2088
  %v2211 = vpack.c.b16 %v2091, %v2089
  %v2212 = vpack.c.b16 %v2094, %v2092
  %v2213 = vpack.c.b16 %v2095, %v2093
  %v2214 = vpack.c.b16 %v2098, %v2096
  %v2215 = vpack.c.b16 %v2099, %v2097
  %v2216 = vpack.c.b16 %v2102, %v2100
  %v2217 = vpack.c.b16 %v2103, %v2101
  %v2218 = vpack.c.b16 %v2106, %v2104
  %v2219 = vpack.c.b16 %v2107, %v2105
  %v2220 = vpack.c.b16 %v2110, %v2108
  %v2221 = vpack.c.b16 %v2111, %v2109
  %v2222 = vpack.c.b16 %v2114, %v2112
  %v2223 = vpack.c.b16 %v2115, %v2113
  %v2224 = vpack.c.b16 %v2118, %v2116
  %v2225 = vpack.c.b16 %v2119, %v2117
  %v2226 = vpack.c.b16 %v2122, %v2120
  %v2227 = vpack.c.b16 %v2123, %v2121
  %v2228 = vpack.c.b16 %v2126, %v2124
  %v2229 = vpack.c.b16 %v2127, %v2125
  %v2230 = vpack.c.b16 %v2130, %v2128
  %v2231 = vpack.c.b16 %v2131, %v2129
  %v2232 = vpack.c.b16 %v2134, %v2132
  %v2233 = vpack.c.b16 %v2135, %v2133
  %v2234 = vpack.c.b16 %v2138, %v2136
  %v2235 = vpack.c.b16 %v2139, %v2137
  %v2236 = vpack.c.b16 %v2142, %v2140
  %v2237 = vpack.c.b16 %v2143, %v2141
  %v2238 = vpack.c.b16 %v2146, %v2144
  %v2239 = vpack.c.b16 %v2147, %v2145
  %v2240 = vpack.c.b16 %v2150, %v2148
  %v2241 = vpack.c.b16 %v2151, %v2149
  %v2242 = vpack.c.b16 %v2154, %v2152
  %v2243 = vpack.c.b16 %v2155, %v2153
  %v2244 = vpack.c.b16 %v2158, %v2156
  %v2245 = vpack.c.b16 %v2159, %v2157
  %v2246 = vpack.c.b16 %v2162, %v2160
  %v2247 = vpack.c.b16 %v2163, %v2161
  %v2248 = vpack.c.b16 %v2166, %v2164
  %v2249 = vpack.c.b16 %v2167, %v2165
  %v2250 = vpack.c.b16 %v2170, %v2168
  %v2251 = vpack.c.b16 %v2171, %v2169
  %v2252 = vpack.c.b16 %v2174, %v2172
  %v2253 = vpack.c.b16 %v2175, %v2173
  %v2254 = vpack.c.b16 %v2178, %v2176
  %v2255 = vpack.c.b16 %v2179, %v2177
  %v2256 = vpack.c.b16 %v2182, %v2180
  %v2257 = vpack.c.b16 %v2183, %v2181
  %v2258 = vpack.c.b16 %v2186, %v2184
  %v2259 = vpack.c.b16 %v2187, %v2185
  %v2260 = vpack.c.b16 %v2190, %v2188
  %v2261 = vpack.c.b16 %v2191, %v2189
  %v2262 = vpack.c.b16 %v2194, %v2192
  %v2263 = vpack.c.b16 %v2195, %v2193
  %v2264 = vpack.c.b16 %v2198, %v2196
  %v2265 = vpack.c.b16 %v2199, %v2197
  %v2266 = vpack.c.b16 %v2202, %v2200
  %v2267 = vpack.c.b16 %v2203, %v2201
  %2332 = vmatprep.subr.bf16.mxu0 %v2205
  %2333 = vmatpush1.bf16.msra.mxu0 %v2204
  %2334 = vmatprep.subr.bf16.mxu0 %v2207
  %2335 = vmatpush1.bf16.msra.mxu0 %v2206
  %2336 = vmatprep.subr.bf16.mxu0 %v2209
  %2337 = vmatpush1.bf16.msra.mxu0 %v2208
  %2338 = vmatprep.subr.bf16.mxu0 %v2211
  %2339 = vmatpush1.bf16.msra.mxu0 %v2210
  %2340 = vmatprep.subr.bf16.mxu0 %v2213
  %2341 = vmatpush1.bf16.msra.mxu0 %v2212
  %2342 = vmatprep.subr.bf16.mxu0 %v2215
  %2343 = vmatpush1.bf16.msra.mxu0 %v2214
  %2344 = vmatprep.subr.bf16.mxu0 %v2217
  %2345 = vmatpush1.bf16.msra.mxu0 %v2216
  %2346 = vmatprep.subr.bf16.mxu0 %v2219
  %2347 = vmatpush1.bf16.msra.mxu0 %v2218
  %2348 = vmatprep.subr.bf16.mxu0 %v2221
  %2349 = vmatpush1.bf16.msra.mxu0 %v2220
  %2350 = vmatprep.subr.bf16.mxu0 %v2223
  %2351 = vmatpush1.bf16.msra.mxu0 %v2222
  %2352 = vmatprep.subr.bf16.mxu0 %v2225
  %2353 = vmatpush1.bf16.msra.mxu0 %v2224
  %2354 = vmatprep.subr.bf16.mxu0 %v2227
  %2355 = vmatpush1.bf16.msra.mxu0 %v2226
  %2356 = vmatprep.subr.bf16.mxu0 %v2229
  %2357 = vmatpush1.bf16.msra.mxu0 %v2228
  %2358 = vmatprep.subr.bf16.mxu0 %v2231
  %2359 = vmatpush1.bf16.msra.mxu0 %v2230
  %2360 = vmatprep.subr.bf16.mxu0 %v2233
  %2361 = vmatpush1.bf16.msra.mxu0 %v2232
  %2362 = vmatprep.subr.bf16.mxu0 %v2235
  %2363 = vmatpush1.bf16.msra.mxu0 %v2234
  %2364 = vmatprep.mubr.bf16.mxu0 %v1933
  %2365 = vmatmul.mubr.bf16.gmra.mrb[0].mxu0 %v1932
  %v2366 = vpop.f32.mrb[0].mxu0
  %v2367 = vadd.f32 %v2005, %v2366
  %v2368 = vpop.f32.mrb[0].mxu0
  %v2369 = vadd.f32 %v2009, %v2368
  %v2370 = vpop.f32.mrb[0].mxu0
  %v2371 = vpop.f32.mrb[0].mxu0
  %2372 = vdwg.mxu0
  %2373 = vmatprep.subr.bf16.mxu0 %v2237
  %2374 = vmatpush1.bf16.msra.mxu0 %v2236
  %2375 = vmatprep.subr.bf16.mxu0 %v2239
  %2376 = vmatpush1.bf16.msra.mxu0 %v2238
  %2377 = vmatprep.subr.bf16.mxu0 %v2241
  %2378 = vmatpush1.bf16.msra.mxu0 %v2240
  %2379 = vmatprep.subr.bf16.mxu0 %v2243
  %2380 = vmatpush1.bf16.msra.mxu0 %v2242
  %2381 = vmatprep.subr.bf16.mxu0 %v2245
  %2382 = vmatpush1.bf16.msra.mxu0 %v2244
  %2383 = vmatprep.subr.bf16.mxu0 %v2247
  %2384 = vmatpush1.bf16.msra.mxu0 %v2246
  %2385 = vmatprep.subr.bf16.mxu0 %v2249
  %2386 = vmatpush1.bf16.msra.mxu0 %v2248
  %2387 = vmatprep.subr.bf16.mxu0 %v2251
  %2388 = vmatpush1.bf16.msra.mxu0 %v2250
  %2389 = vmatprep.subr.bf16.mxu0 %v2253
  %2390 = vmatpush1.bf16.msra.mxu0 %v2252
  %2391 = vmatprep.subr.bf16.mxu0 %v2255
  %2392 = vmatpush1.bf16.msra.mxu0 %v2254
  %2393 = vmatprep.subr.bf16.mxu0 %v2257
  %2394 = vmatpush1.bf16.msra.mxu0 %v2256
  %2395 = vmatprep.subr.bf16.mxu0 %v2259
  %2396 = vmatpush1.bf16.msra.mxu0 %v2258
  %2397 = vmatprep.subr.bf16.mxu0 %v2261
  %2398 = vmatpush1.bf16.msra.mxu0 %v2260
  %2399 = vmatprep.subr.bf16.mxu0 %v2263
  %2400 = vmatpush1.bf16.msra.mxu0 %v2262
  %2401 = vmatprep.subr.bf16.mxu0 %v2265
  %2402 = vmatpush1.bf16.msra.mxu0 %v2264
  %2403 = vmatprep.subr.bf16.mxu0 %v2267
  %2404 = vmatpush1.bf16.msra.mxu0 %v2266
  %2405 = vmatprep.mubr.bf16.mxu0 %v1935
  %2406 = vmatmul.mubr.bf16.gmra.mrb[0].mxu0 %v1934
  %v2407 = vpop.f32.mrb[0].mxu0
  %v2408 = vadd.f32 %v2367, %v2407
  %v2409 = vpop.f32.mrb[0].mxu0
  %v2410 = vadd.f32 %v2369, %v2409
  %v2411 = vpop.f32.mrb[0].mxu0
  %v2412 = vpop.f32.mrb[0].mxu0
  %2413 = vdwg.mxu0
  %v2414 = vmax.f32 %v2408, 0.0
  %v2415 = vmax.f32 %v2410, 0.0
  %v2416 = vld [vmem:[%s5] sm:$0xff]
  %v2417 = vld [vmem:[%s5 + $0x8] sm:$0xff]
  %v2418 = vld [vmem:[%s5 + $0x10] sm:$0xff]
  %v2419 = vld [vmem:[%s5 + $0x18] sm:$0xff]
  %v2420 = vld [vmem:[%s5 + $0x20] sm:$0xff]
  %v2421 = vld [vmem:[%s5 + $0x28] sm:$0xff]
  %v2422 = vld [vmem:[%s5 + $0x30] sm:$0xff]
  %v2423 = vld [vmem:[%s5 + $0x38] sm:$0xff]
  %v2424 = vld [vmem:[%s5 + $0x40] sm:$0xff]
  %v2425 = vld [vmem:[%s5 + $0x48] sm:$0xff]
  %v2426 = vld [vmem:[%s5 + $0x50] sm:$0xff]
  %v2427 = vld [vmem:[%s5 + $0x58] sm:$0xff]
  %v2428 = vld [vmem:[%s5 + $0x60] sm:$0xff]
  %v2429 = vld [vmem:[%s5 + $0x68] sm:$0xff]
  %v2430 = vld [vmem:[%s5 + $0x70] sm:$0xff]
  %v2431 = vld [vmem:[%s5 + $0x78] sm:$0xff]
  %v2432 = vld [vmem:[%s5 + $0x80] sm:$0xff]
  %v2433 = vld [vmem:[%s5 + $0x88] sm:$0xff]
  %v2434 = vld [vmem:[%s5 + $0x90] sm:$0xff]
  %v2435 = vld [vmem:[%s5 + $0x98] sm:$0xff]
  %v2436 = vld [vmem:[%s5 + $0xa0] sm:$0xff]
  %v2437 = vld [vmem:[%s5 + $0xa8] sm:$0xff]
  %v2438 = vld [vmem:[%s5 + $0xb0] sm:$0xff]
  %v2439 = vld [vmem:[%s5 + $0xb8] sm:$0xff]
  %v2440 = vld [vmem:[%s5 + $0xc0] sm:$0xff]
  %v2441 = vld [vmem:[%s5 + $0xc8] sm:$0xff]
  %v2442 = vld [vmem:[%s5 + $0xd0] sm:$0xff]
  %v2443 = vld [vmem:[%s5 + $0xd8] sm:$0xff]
  %v2444 = vld [vmem:[%s5 + $0xe0] sm:$0xff]
  %v2445 = vld [vmem:[%s5 + $0xe8] sm:$0xff]
  %v2446 = vld [vmem:[%s5 + $0xf0] sm:$0xff]
  %v2447 = vld [vmem:[%s5 + $0xf8] sm:$0xff]
  %v2448 = vld [vmem:[%s6] sm:$0x1]
  %v2450 = vlaneseq
  %v2451 = vshrl.u32 %v2450, 7
  %v2452 = vsub.s32 0, %v2451
  %v2453 = vrot.slane %v2448, %v2452
  %2455 = vmatprep.subr.mxu0 0.0
  %2456 = vmatpush1.msra.mxu0 %v2416
  %2457 = vmatprep.subr.mxu0 0.0
  %2458 = vmatpush1.msra.mxu0 %v2417
  %2459 = vmatprep.subr.mxu0 0.0
  %2460 = vmatpush1.msra.mxu0 %v2418
  %2461 = vmatprep.subr.mxu0 0.0
  %2462 = vmatpush1.msra.mxu0 %v2419
  %2463 = vmatprep.subr.mxu0 0.0
  %2464 = vmatpush1.msra.mxu0 %v2420
  %2465 = vmatprep.subr.mxu0 0.0
  %2466 = vmatpush1.msra.mxu0 %v2421
  %2467 = vmatprep.subr.mxu0 0.0
  %2468 = vmatpush1.msra.mxu0 %v2422
  %2469 = vmatprep.subr.mxu0 0.0
  %2470 = vmatpush1.msra.mxu0 %v2423
  %2471 = vmatprep.subr.mxu0 0.0
  %2472 = vmatpush1.msra.mxu0 %v2424
  %2473 = vmatprep.subr.mxu0 0.0
  %2474 = vmatpush1.msra.mxu0 %v2425
  %2475 = vmatprep.subr.mxu0 0.0
  %2476 = vmatpush1.msra.mxu0 %v2426
  %2477 = vmatprep.subr.mxu0 0.0
  %2478 = vmatpush1.msra.mxu0 %v2427
  %2479 = vmatprep.subr.mxu0 0.0
  %2480 = vmatpush1.msra.mxu0 %v2428
  %2481 = vmatprep.subr.mxu0 0.0
  %2482 = vmatpush1.msra.mxu0 %v2429
  %2483 = vmatprep.subr.mxu0 0.0
  %2484 = vmatpush1.msra.mxu0 %v2430
  %2485 = vmatprep.subr.mxu0 0.0
  %2486 = vmatpush1.msra.mxu0 %v2431
  %2487 = vmatprep.subr.mxu0 0.0
  %2488 = vmatpush1.msra.mxu0 %v2432
  %2489 = vmatprep.subr.mxu0 0.0
  %2490 = vmatpush1.msra.mxu0 %v2433
  %2491 = vmatprep.subr.mxu0 0.0
  %2492 = vmatpush1.msra.mxu0 %v2434
  %2493 = vmatprep.subr.mxu0 0.0
  %2494 = vmatpush1.msra.mxu0 %v2435
  %2495 = vmatprep.subr.mxu0 0.0
  %2496 = vmatpush1.msra.mxu0 %v2436
  %2497 = vmatprep.subr.mxu0 0.0
  %2498 = vmatpush1.msra.mxu0 %v2437
  %2499 = vmatprep.subr.mxu0 0.0
  %2500 = vmatpush1.msra.mxu0 %v2438
  %2501 = vmatprep.subr.mxu0 0.0
  %2502 = vmatpush1.msra.mxu0 %v2439
  %2503 = vmatprep.subr.mxu0 0.0
  %2504 = vmatpush1.msra.mxu0 %v2440
  %2505 = vmatprep.subr.mxu0 0.0
  %2506 = vmatpush1.msra.mxu0 %v2441
  %2507 = vmatprep.subr.mxu0 0.0
  %2508 = vmatpush1.msra.mxu0 %v2442
  %2509 = vmatprep.subr.mxu0 0.0
  %2510 = vmatpush1.msra.mxu0 %v2443
  %2511 = vmatprep.subr.mxu0 0.0
  %2512 = vmatpush1.msra.mxu0 %v2444
  %2513 = vmatprep.subr.mxu0 0.0
  %2514 = vmatpush1.msra.mxu0 %v2445
  %2515 = vmatprep.subr.mxu0 0.0
  %2516 = vmatpush1.msra.mxu0 %v2446
  %2517 = vmatprep.subr.mxu0 0.0
  %2518 = vmatpush1.msra.mxu0 %v2447
  %2519 = vmatprep.mubr.f32.mxu0 %v2415
  %2520 = vmatmul.mubr.f32.gmra.mrb[0].mxu0 %v2414
  %v2521 = vpop.f32.mrb[0].mxu0
  %v2522 = vadd.f32 %v2453, %v2521
  %v2523 = vpop.f32.mrb[0].mxu0
  %2524 = vdwg.mxu0
  %vm2525 = vcmask 72704
  %2526 = vst.msk [vmem:[%s7] sm:$0xff] %vm2525, %v2522
  // Predicated region
  $region30: #{pointnet_cls_forward.5} parent=0 // pred_check
    _
  $region31: #{pointnet_cls_forward.5} parent=0 // pred_check_branch
    %2528 = sbr.rel (0) target = $region33
  $region32: #{pointnet_cls_forward.5} parent=0 // pred_region
    _
  $region33: #{pointnet_cls_forward.5} parent=0 // pred_fallthru
    _
  // Predicated region
  $region34: #{pointnet_cls_forward.5} parent=0 // pred_check
    _
  $region35: #{pointnet_cls_forward.5} parent=0 // pred_check_branch
    %2530 = sbr.rel (0) target = $region37
  $region36: #{pointnet_cls_forward.5} parent=0 // pred_region
    _
  $region37: #{pointnet_cls_forward.5} parent=0 // pred_fallthru
    _

// kernel: pointnet_cls_forward.6
$region0: #{pointnet_cls_forward.6}
  #allocation0 [shape = 'u32[]', space=smem, size = 0x4, offset = 0x4, fixed_abs, tag = 'smem constant byte address 0x4 - core index']
  #allocation1 [shape = 'u32[144,128]{1,0:T(1,128)}', space=vmem, size = 0x12000, scoped, tag = 'internal scratch']
  #allocation2 [shape = 'f32[1,1024]{1,0:T(1,128)}', space=vmem, size = 0x1000, scoped, tag = 'scratch operand']
  %s0 = inlined_call_operand.vmem [shape: f32[2,128,3], index: 0, kind: input, shape index: {}]
  %s1 = inlined_call_operand.vmem [shape: bf16[2,3,64], index: 1, kind: input, shape index: {}]
  %s2 = inlined_call_operand.vmem [shape: f32[1,64], index: 2, kind: input, shape index: {}]
  %s3 = inlined_call_operand.vmem [shape: bf16[64,128], index: 3, kind: input, shape index: {}]
  %s4 = inlined_call_operand.vmem [shape: f32[1,128], index: 4, kind: input, shape index: {}]
  %s5 = inlined_call_operand.vmem [shape: bf16[128,1024], index: 5, kind: input, shape index: {}]
  %s6 = inlined_call_operand.vmem [shape: f32[1,1024], index: 6, kind: input, shape index: {}]
  %s7 = inlined_call_operand.vmem [shape: f32[2,1,1024], index: 7, kind: output, shape index: {}]
  %s8 = sld [smem:[#allocation0]]
  $region69: #{pointnet_cls_forward.6} parent=0
    _
  %s10 = ssub.s32 1, %s8
  %s11 = scalar_select 0, %s10, %s8
  loop: start=0, step=1, limit=4
  $region2: #{pointnet_cls_forward.6} parent=0 // loop_pre_header
    _
  $region3: #{pointnet_cls_forward.6} parent=0 // loop_header
    %s13 = sphi 0, %s17
    %p14 = scmp.ge.s32.totalorder %s13, 4
    %s20 = sphi 0, %s39
    %s21 = sphi 0, %s35
    %s22 = sphi 0, %s31
    %s23 = sphi 0, %s20
    %s24 = sphi 0, %s21
    %s25 = sphi 0, %s22
    %s26 = sphi 0, %s23
    %s27 = sphi 0, %s24
    %s28 = sphi 0, %s25
    %s44 = sphi 0, %s46
    %s47 = sphi 0, %s44
    %s48 = sphi 0, %s47
    %s64 = sphi 0, %s48
    %s70 = sphi 0, %s72
    %s73 = sphi 0, %s70
    %s74 = sphi 0, %s73
    %s90 = sphi 0, %s74
    %s94 = sphi 0, %s94
    %s96 = sphi 0, %s94
    %s97 = sphi 0, %s96
    %s111 = sphi 0, %s97
    %s115 = sphi 0, %s115
    %s117 = sphi 0, %s115
    %s118 = sphi 0, %s117
    %s132 = sphi 0, %s118
    %s136 = sphi 0, %s136
    %s138 = sphi 0, %s136
    %s139 = sphi 0, %s138
    %s153 = sphi 0, %s139
    %s159 = sphi 0, %s161
    %s162 = sphi 0, %s159
    %s163 = sphi 0, %s162
    %s179 = sphi 0, %s163
    %s185 = sphi 0, %s187
    %s188 = sphi 0, %s185
    %s189 = sphi 0, %s188
    %s205 = sphi 0, %s189
    %s213 = sphi 0, %s215
    %s216 = sphi 0, %s213
    %s217 = sphi 0, %s216
    %s233 = sphi 0, %s217
  $region4: #{pointnet_cls_forward.6} parent=0 // loop_header_branch
    %16 = sbr.rel (%p14) target = $region8
  $region5: #{pointnet_cls_forward.6} parent=0 // loop_body
    %s18 = ssub.s32 %s13, 1
    %s19 = ssub.s32 %s13, 2
    %s29 = sadd.s32 1, %s22
    %p30 = scmp.ge.s32.totalorder %s29, 1
    %s31 = scalar_select %p30, 0, %s29
    %s32 = sadd.s32 1, %s21
    %s33 = scalar_select %p30, %s32, %s21
    %p34 = scmp.ge.s32.totalorder %s33, 1
    %s35 = scalar_select %p34, 0, %s33
    %s36 = sadd.s32 1, %s20
    %s37 = scalar_select %p34, %s36, %s20
    %p38 = scmp.ge.s32.totalorder %s37, 2
    %s39 = scalar_select %p38, 0, %s37
    %s40 = ssub.s32 %s20, %s39
    %s41 = ssub.s32 %s22, %s31
    %s42 = sor.u32 %s40, %s41
    %p43 = scmp.eq.s32.totalorder %s42, 0
    %s45 = sadd.s32 %s44, 1
    %s46 = scalar_select %p43, %s44, %s45
    %p49 = pneg %p43
    %p50 = scmp.eq.s32.totalorder %s13, 1
    %p51 = por %p49, %p50
    %p52 = scmp.ne.s32.totalorder %s44, %s47
    %p53 = scmp.eq.s32.totalorder %s13, 0
    %p54 = por %p52, %p53
    %p55 = scmp.ne.s32.totalorder %s44, %s47
    %p56 = scmp.eq.s32.totalorder %s18, 1
    %p57 = por %p55, %p56
    %p58 = scmp.ne.s32.totalorder %s47, %s48
    %p59 = scmp.eq.s32.totalorder %s18, 0
    %p60 = por %p58, %p59
    %p61 = scmp.ne.s32.totalorder %s47, %s48
    %p62 = scmp.eq.s32.totalorder %s19, 1
    %p63 = por %p61, %p62
    %p65 = scmp.ne.s32.totalorder %s48, %s64
    %p66 = scmp.eq.s32.totalorder %s19, 0
    %p67 = por %p65, %p66
    %s68 = ssub.s32 %s20, %s39
    %p69 = scmp.eq.s32.totalorder %s68, 0
    %s71 = sadd.s32 %s70, 1
    %s72 = scalar_select %p69, %s70, %s71
    %p75 = pneg %p69
    %p76 = scmp.eq.s32.totalorder %s13, 1
    %p77 = por %p75, %p76
    %p78 = scmp.ne.s32.totalorder %s70, %s73
    %p79 = scmp.eq.s32.totalorder %s13, 0
    %p80 = por %p78, %p79
    %p81 = scmp.ne.s32.totalorder %s70, %s73
    %p82 = scmp.eq.s32.totalorder %s18, 1
    %p83 = por %p81, %p82
    %p84 = scmp.ne.s32.totalorder %s73, %s74
    %p85 = scmp.eq.s32.totalorder %s18, 0
    %p86 = por %p84, %p85
    %p87 = scmp.ne.s32.totalorder %s73, %s74
    %p88 = scmp.eq.s32.totalorder %s19, 1
    %p89 = por %p87, %p88
    %p91 = scmp.ne.s32.totalorder %s74, %s90
    %p92 = scmp.eq.s32.totalorder %s19, 0
    %p93 = por %p91, %p92
    %s95 = sadd.s32 %s94, 1
    %p98 = scmp.eq.s32.totalorder %s13, 1
    %p99 = scmp.ne.s32.totalorder %s94, %s96
    %p100 = scmp.eq.s32.totalorder %s13, 0
    %p101 = por %p99, %p100
    %p102 = scmp.ne.s32.totalorder %s94, %s96
    %p103 = scmp.eq.s32.totalorder %s18, 1
    %p104 = por %p102, %p103
    %p105 = scmp.ne.s32.totalorder %s96, %s97
    %p106 = scmp.eq.s32.totalorder %s18, 0
    %p107 = por %p105, %p106
    %p108 = scmp.ne.s32.totalorder %s96, %s97
    %p109 = scmp.eq.s32.totalorder %s19, 1
    %p110 = por %p108, %p109
    %p112 = scmp.ne.s32.totalorder %s97, %s111
    %p113 = scmp.eq.s32.totalorder %s19, 0
    %p114 = por %p112, %p113
    %s116 = sadd.s32 %s115, 1
    %p119 = scmp.eq.s32.totalorder %s13, 1
    %p120 = scmp.ne.s32.totalorder %s115, %s117
    %p121 = scmp.eq.s32.totalorder %s13, 0
    %p122 = por %p120, %p121
    %p123 = scmp.ne.s32.totalorder %s115, %s117
    %p124 = scmp.eq.s32.totalorder %s18, 1
    %p125 = por %p123, %p124
    %p126 = scmp.ne.s32.totalorder %s117, %s118
    %p127 = scmp.eq.s32.totalorder %s18, 0
    %p128 = por %p126, %p127
    %p129 = scmp.ne.s32.totalorder %s117, %s118
    %p130 = scmp.eq.s32.totalorder %s19, 1
    %p131 = por %p129, %p130
    %p133 = scmp.ne.s32.totalorder %s118, %s132
    %p134 = scmp.eq.s32.totalorder %s19, 0
    %p135 = por %p133, %p134
    %s137 = sadd.s32 %s136, 1
    %p140 = scmp.eq.s32.totalorder %s13, 1
    %p141 = scmp.ne.s32.totalorder %s136, %s138
    %p142 = scmp.eq.s32.totalorder %s13, 0
    %p143 = por %p141, %p142
    %p144 = scmp.ne.s32.totalorder %s136, %s138
    %p145 = scmp.eq.s32.totalorder %s18, 1
    %p146 = por %p144, %p145
    %p147 = scmp.ne.s32.totalorder %s138, %s139
    %p148 = scmp.eq.s32.totalorder %s18, 0
    %p149 = por %p147, %p148
    %p150 = scmp.ne.s32.totalorder %s138, %s139
    %p151 = scmp.eq.s32.totalorder %s19, 1
    %p152 = por %p150, %p151
    %p154 = scmp.ne.s32.totalorder %s139, %s153
    %p155 = scmp.eq.s32.totalorder %s19, 0
    %p156 = por %p154, %p155
    %s157 = ssub.s32 %s21, %s35
    %p158 = scmp.eq.s32.totalorder %s157, 0
    %s160 = sadd.s32 %s159, 1
    %s161 = scalar_select %p158, %s159, %s160
    %p164 = pneg %p158
    %p165 = scmp.eq.s32.totalorder %s13, 1
    %p166 = por %p164, %p165
    %p167 = scmp.ne.s32.totalorder %s159, %s162
    %p168 = scmp.eq.s32.totalorder %s13, 0
    %p169 = por %p167, %p168
    %p170 = scmp.ne.s32.totalorder %s159, %s162
    %p171 = scmp.eq.s32.totalorder %s18, 1
    %p172 = por %p170, %p171
    %p173 = scmp.ne.s32.totalorder %s162, %s163
    %p174 = scmp.eq.s32.totalorder %s18, 0
    %p175 = por %p173, %p174
    %p176 = scmp.ne.s32.totalorder %s162, %s163
    %p177 = scmp.eq.s32.totalorder %s19, 1
    %p178 = por %p176, %p177
    %p180 = scmp.ne.s32.totalorder %s163, %s179
    %p181 = scmp.eq.s32.totalorder %s19, 0
    %p182 = por %p180, %p181
    %s183 = ssub.s32 %s21, %s35
    %p184 = scmp.eq.s32.totalorder %s183, 0
    %s186 = sadd.s32 %s185, 1
    %s187 = scalar_select %p184, %s185, %s186
    %p190 = pneg %p184
    %p191 = scmp.eq.s32.totalorder %s13, 1
    %p192 = por %p190, %p191
    %p193 = scmp.ne.s32.totalorder %s185, %s188
    %p194 = scmp.eq.s32.totalorder %s13, 0
    %p195 = por %p193, %p194
    %p196 = scmp.ne.s32.totalorder %s185, %s188
    %p197 = scmp.eq.s32.totalorder %s18, 1
    %p198 = por %p196, %p197
    %p199 = scmp.ne.s32.totalorder %s188, %s189
    %p200 = scmp.eq.s32.totalorder %s18, 0
    %p201 = por %p199, %p200
    %p202 = scmp.ne.s32.totalorder %s188, %s189
    %p203 = scmp.eq.s32.totalorder %s19, 1
    %p204 = por %p202, %p203
    %p206 = scmp.ne.s32.totalorder %s189, %s205
    %p207 = scmp.eq.s32.totalorder %s19, 0
    %p208 = por %p206, %p207
    %s209 = ssub.s32 %s20, %s39
    %s210 = ssub.s32 %s21, %s35
    %s211 = sor.u32 %s209, %s210
    %p212 = scmp.eq.s32.totalorder %s211, 0
    %s214 = sadd.s32 %s213, 1
    %s215 = scalar_select %p212, %s213, %s214
    %p218 = pneg %p212
    %p219 = scmp.eq.s32.totalorder %s13, 1
    %p220 = por %p218, %p219
    %p221 = scmp.ne.s32.totalorder %s213, %s216
    %p222 = scmp.eq.s32.totalorder %s13, 0
    %p223 = por %p221, %p222
    %p224 = scmp.ne.s32.totalorder %s213, %s216
    %p225 = scmp.eq.s32.totalorder %s18, 1
    %p226 = por %p224, %p225
    %p227 = scmp.ne.s32.totalorder %s216, %s217
    %p228 = scmp.eq.s32.totalorder %s18, 0
    %p229 = por %p227, %p228
    %p230 = scmp.ne.s32.totalorder %s216, %s217
    %p231 = scmp.eq.s32.totalorder %s19, 1
    %p232 = por %p230, %p231
    %p234 = scmp.ne.s32.totalorder %s217, %s233
    %p235 = scmp.eq.s32.totalorder %s19, 0
    %p236 = por %p234, %p235
    %p237 = scmp.le.s32.totalorder 1, %s13
    %p238 = scmp.lt.s32.totalorder %s13, 3
    %p239 = pnand %p237, %p238
    %p240 = pneg %p239
    // Predicated region
    $region9: #{pointnet_cls_forward.6} parent=5 // pred_check
      _
    $region10: #{pointnet_cls_forward.6} parent=5 // pred_check_branch
      %242 = sbr.rel (%p239) target = $region12
    $region11: #{pointnet_cls_forward.6} parent=5 // pred_region
      %s243 = ssub.s32 %s13, 1
      // Predicated region
      $region13: #{pointnet_cls_forward.6} parent=11 // pred_check
        %p244 = pneg %p107
      $region14: #{pointnet_cls_forward.6} parent=11 // pred_check_branch
        %246 = sbr.rel (%p244) target = $region16
      $region15: #{pointnet_cls_forward.6} parent=11 // pred_region
        _
      $region16: #{pointnet_cls_forward.6} parent=11 // pred_fallthru
        _
      // Predicated region
      $region17: #{pointnet_cls_forward.6} parent=11 // pred_check
        %p247 = pneg %p128
      $region18: #{pointnet_cls_forward.6} parent=11 // pred_check_branch
        %249 = sbr.rel (%p247) target = $region20
      $region19: #{pointnet_cls_forward.6} parent=11 // pred_region
        _
      $region20: #{pointnet_cls_forward.6} parent=11 // pred_fallthru
        _
      // Predicated region
      $region21: #{pointnet_cls_forward.6} parent=11 // pred_check
        %p250 = pneg %p149
      $region22: #{pointnet_cls_forward.6} parent=11 // pred_check_branch
        %252 = sbr.rel (%p250) target = $region24
      $region23: #{pointnet_cls_forward.6} parent=11 // pred_region
        _
      $region24: #{pointnet_cls_forward.6} parent=11 // pred_fallthru
        _
      // Predicated region
      $region25: #{pointnet_cls_forward.6} parent=11 // pred_check
        %p253 = pneg %p175
      $region26: #{pointnet_cls_forward.6} parent=11 // pred_check_branch
        %255 = sbr.rel (%p253) target = $region28
      $region27: #{pointnet_cls_forward.6} parent=11 // pred_region
        %s256 = smul.u32 8, %s24
        %p257 = scmp.lt.s32.totalorder %s256, 7
        %s258 = scalar_select %p257, %s256, 7
        %s259 = smul.addr %s258, 4
        %s260 = scalar_lea.vmem %s5, %s259
        %s261 = smul.u32 8, %s24
      $region28: #{pointnet_cls_forward.6} parent=11 // pred_fallthru
        _
      // Predicated region
      $region29: #{pointnet_cls_forward.6} parent=11 // pred_check
        %p262 = pneg %p201
      $region30: #{pointnet_cls_forward.6} parent=11 // pred_check_branch
        %264 = sbr.rel (%p262) target = $region32
      $region31: #{pointnet_cls_forward.6} parent=11 // pred_region
        %s265 = smul.u32 8, %s24
        %p266 = scmp.lt.s32.totalorder %s265, 7
        %s267 = scalar_select %p266, %s265, 7
        %s268 = scalar_lea.vmem %s6, %s267
        %s269 = smul.u32 8, %s24
      $region32: #{pointnet_cls_forward.6} parent=11 // pred_fallthru
        _
    $region12: #{pointnet_cls_forward.6} parent=5 // pred_fallthru
      _
    %p270 = scmp.lt.s32.totalorder %s13, 2
    // Predicated region
    $region33: #{pointnet_cls_forward.6} parent=5 // pred_check
      %p271 = pneg %p270
    $region34: #{pointnet_cls_forward.6} parent=5 // pred_check_branch
      %273 = sbr.rel (%p271) target = $region36
    $region35: #{pointnet_cls_forward.6} parent=5 // pred_region
      // Predicated region
      $region37: #{pointnet_cls_forward.6} parent=35 // pred_check
        %p274 = pneg %p54
      $region38: #{pointnet_cls_forward.6} parent=35 // pred_check_branch
        %276 = sbr.rel (%p274) target = $region40
      $region39: #{pointnet_cls_forward.6} parent=35 // pred_region
        %s277 = smul.u32 16, %s22
        %p278 = scmp.lt.s32.totalorder %s20, 1
        %s279 = scalar_select %p278, %s20, 1
        %p280 = scmp.lt.s32.totalorder %s277, 15
        %s281 = scalar_select %p280, %s277, 15
        %s282 = smul.addr %s279, 16
        %s283 = sadd.s32 %s281, %s282
        %s284 = smul.addr %s283, 8
        %s285 = scalar_lea.vmem %s0, %s284
        %s286 = smul.u32 16, %s22
      $region40: #{pointnet_cls_forward.6} parent=35 // pred_fallthru
        _
      // Predicated region
      $region41: #{pointnet_cls_forward.6} parent=35 // pred_check
        %p287 = pneg %p80
      $region42: #{pointnet_cls_forward.6} parent=35 // pred_check_branch
        %289 = sbr.rel (%p287) target = $region44
      $region43: #{pointnet_cls_forward.6} parent=35 // pred_region
        %p290 = scmp.lt.s32.totalorder %s20, 1
        %s291 = scalar_select %p290, %s20, 1
        %s292 = smul.addr %s291, 2
        %s293 = scalar_lea.vmem %s1, %s292
      $region44: #{pointnet_cls_forward.6} parent=35 // pred_fallthru
        _
    $region36: #{pointnet_cls_forward.6} parent=5 // pred_fallthru
      _
    %p294 = scmp.le.s32.totalorder 1, %s13
    %p295 = scmp.lt.s32.totalorder %s13, 3
    %p296 = pnand %p294, %p295
    %p297 = pneg %p296
    // Predicated region
    $region45: #{pointnet_cls_forward.6} parent=5 // pred_check
      _
    $region46: #{pointnet_cls_forward.6} parent=5 // pred_check_branch
      %299 = sbr.rel (%p296) target = $region48
    $region47: #{pointnet_cls_forward.6} parent=5 // pred_region
      %s300 = ssub.s32 %s13, 1
      %s301 = smul.u32 16, %s25
      %p302 = scmp.lt.s32.totalorder %s23, 1
      %s303 = scalar_select %p302, %s23, 1
      %p304 = scmp.lt.s32.totalorder %s301, 15
      %s305 = scalar_select %p304, %s301, 15
      %s306 = smul.addr %s303, 16
      %s307 = sadd.s32 %s305, %s306
      %s308 = smul.addr %s307, 8
      %s309 = scalar_lea.vmem %s0, %s308
      %p310 = pneg %p60
      %p311 = pneg %p57
      %p312 = scmp.lt.s32.totalorder %s23, 1
      %s313 = scalar_select %p312, %s23, 1
      %s314 = smul.addr %s313, 2
      %s315 = scalar_lea.vmem %s1, %s314
      %p316 = pneg %p86
      %p317 = pneg %p83
      %p318 = pneg %p107
      %p319 = pneg %p104
      %p320 = pneg %p128
      %p321 = pneg %p125
      %p322 = pneg %p149
      %p323 = pneg %p146
      %s324 = smul.u32 8, %s24
      %p325 = scmp.lt.s32.totalorder %s324, 7
      %s326 = scalar_select %p325, %s324, 7
      %s327 = smul.addr %s326, 4
      %s328 = scalar_lea.vmem %s5, %s327
      %p329 = pneg %p175
      %p330 = pneg %p172
      %s331 = smul.u32 8, %s24
      %p332 = scmp.lt.s32.totalorder %s331, 7
      %s333 = scalar_select %p332, %s331, 7
      %s334 = scalar_lea.vmem %s6, %s333
      %p335 = pneg %p201
      %p336 = pneg %p198
      %p337 = pneg %p229
      %p338 = pneg %p226
      %s339 = smul.u32 8, %s24
      %p340 = scmp.lt.s32.totalorder %s23, 1
      %s341 = scalar_select %p340, %s23, 1
      %p342 = scmp.lt.s32.totalorder %s339, 7
      %s343 = scalar_select %p342, %s339, 7
      %s344 = smul.addr %s341, 8
      %s345 = sadd.s32 %s343, %s344
      %s346 = scalar_lea.vmem %s7, %s345
      %s347 = smul.u32 16, %s25
      %p348 = scmp.lt.s32.totalorder %s23, 1
      %s349 = scalar_select %p348, %s23, 1
      %p350 = scmp.lt.s32.totalorder %s347, 15
      %s351 = scalar_select %p350, %s347, 15
      %s352 = smul.addr %s349, 16
      %s353 = sadd.s32 %s351, %s352
      %s354 = smul.addr %s353, 8
      %s355 = scalar_lea.vmem %s0, %s354
      %s356 = smul.u32 16, %s25
      %p357 = scmp.lt.s32.totalorder %s23, 1
      %s358 = scalar_select %p357, %s23, 1
      %s359 = smul.addr %s358, 2
      %s360 = scalar_lea.vmem %s1, %s359
      %s361 = smul.u32 8, %s24
      %p362 = scmp.lt.s32.totalorder %s361, 7
      %s363 = scalar_select %p362, %s361, 7
      %s364 = smul.addr %s363, 4
      %s365 = scalar_lea.vmem %s5, %s364
      %s366 = smul.u32 8, %s24
      %s367 = smul.u32 8, %s24
      %p368 = scmp.lt.s32.totalorder %s367, 7
      %s369 = scalar_select %p368, %s367, 7
      %s370 = scalar_lea.vmem %s6, %s369
      %s371 = smul.u32 8, %s24
      %s372 = smul.u32 8, %s24
      %p373 = scmp.lt.s32.totalorder %s23, 1
      %s374 = scalar_select %p373, %s23, 1
      %p375 = scmp.lt.s32.totalorder %s372, 7
      %s376 = scalar_select %p375, %s372, 7
      %s377 = smul.addr %s374, 8
      %s378 = sadd.s32 %s376, %s377
      %s379 = scalar_lea.vmem %s7, %s378
      %s380 = smul.u32 8, %s24
      %p382 = scmp.eq.s32.totalorder %s25, 0
      // Predicated region
      $region49: #{pointnet_cls_forward.6} parent=47 // pred_check
        %p383 = pneg %p382
      $region50: #{pointnet_cls_forward.6} parent=47 // pred_check_branch
        %385 = sbr.rel (%p383) target = $region52
      $region51: #{pointnet_cls_forward.6} parent=47 // pred_region
        %386 = vst [vmem:[#allocation2] sm:$0xff] -inf
      $region52: #{pointnet_cls_forward.6} parent=47 // pred_fallthru
        _
      %v387 = vld [vmem:[%s355] sm:$0xff]
      %v388 = vld [vmem:[%s355 + $0x8] sm:$0xff]
      %v389 = vld [vmem:[%s355 + $0x10] sm:$0xff]
      %v390 = vld [vmem:[%s355 + $0x18] sm:$0xff]
      %v391 = vld [vmem:[%s355 + $0x20] sm:$0xff]
      %v392 = vld [vmem:[%s355 + $0x28] sm:$0xff]
      %v393 = vld [vmem:[%s355 + $0x30] sm:$0xff]
      %v394 = vld [vmem:[%s355 + $0x38] sm:$0xff]
      %v395 = vld [vmem:[%s355 + $0x40] sm:$0xff]
      %v396 = vld [vmem:[%s355 + $0x48] sm:$0xff]
      %v397 = vld [vmem:[%s355 + $0x50] sm:$0xff]
      %v398 = vld [vmem:[%s355 + $0x58] sm:$0xff]
      %v399 = vld [vmem:[%s355 + $0x60] sm:$0xff]
      %v400 = vld [vmem:[%s355 + $0x68] sm:$0xff]
      %v401 = vld [vmem:[%s355 + $0x70] sm:$0xff]
      %v402 = vld [vmem:[%s355 + $0x78] sm:$0xff]
      %v403 = vpack.c.bf16 %v388, %v387
      %v404 = vpack.c.bf16 %v390, %v389
      %v405 = vpack.c.bf16 %v392, %v391
      %v406 = vpack.c.bf16 %v394, %v393
      %v407 = vpack.c.bf16 %v396, %v395
      %v408 = vpack.c.bf16 %v398, %v397
      %v409 = vpack.c.bf16 %v400, %v399
      %v410 = vpack.c.bf16 %v402, %v401
      %v411 = vld [vmem:[%s360] sm:$0x3]
      %v412 = vld [vmem:[%s2] sm:$0x1]
      %v414 = vlaneseq
      %v415 = vshrl.u32 %v414, 7
      %v416 = vsub.s32 0, %v415
      %v417 = vrot.slane %v412, %v416
      %vm419 = vcmask 23552
      %v421 = vsel %vm419, %v403, 0
      %v424 = vsel %vm419, %v404, 0
      %v427 = vsel %vm419, %v405, 0
      %v430 = vsel %vm419, %v406, 0
      %v433 = vsel %vm419, %v407, 0
      %v436 = vsel %vm419, %v408, 0
      %v439 = vsel %vm419, %v409, 0
      %v442 = vsel %vm419, %v410, 0
      %vm444 = vcmask 1040384
      %vm445 = vcmask 1041408
      %v446 = vsel %vm444, 4294967295, 65535
      %v447 = vsel %vm445, %v446, 0
      %v449 = vand.u32 %v411, %v447
      %451 = vmatprep.subr.bf16.mxu0 0
      %452 = vmatpush1.bf16.msra.mxu0 %v449
      %453 = vmatprep.subr.bf16.mxu0 0
      %454 = vmatpush1.bf16.msra.mxu0 0
      %455 = vmatprep.subr.bf16.mxu0 0
      %456 = vmatpush1.bf16.msra.mxu0 0
      %457 = vmatprep.subr.bf16.mxu0 0
      %458 = vmatpush1.bf16.msra.mxu0 0
      %459 = vmatprep.subr.bf16.mxu0 0
      %460 = vmatpush1.bf16.msra.mxu0 0
      %461 = vmatprep.subr.bf16.mxu0 0
      %462 = vmatpush1.bf16.msra.mxu0 0
      %463 = vmatprep.subr.bf16.mxu0 0
      %464 = vmatpush1.bf16.msra.mxu0 0
      %465 = vmatprep.subr.bf16.mxu0 0
      %466 = vmatpush1.bf16.msra.mxu0 0
      %467 = vmatprep.subr.bf16.mxu0 0
      %468 = vmatpush1.bf16.msra.mxu0 0
      %469 = vmatprep.subr.bf16.mxu0 0
      %470 = vmatpush1.bf16.msra.mxu0 0
      %471 = vmatprep.subr.bf16.mxu0 0
      %472 = vmatpush1.bf16.msra.mxu0 0
      %473 = vmatprep.subr.bf16.mxu0 0
      %474 = vmatpush1.bf16.msra.mxu0 0
      %475 = vmatprep.subr.bf16.mxu0 0
      %476 = vmatpush1.bf16.msra.mxu0 0
      %477 = vmatprep.subr.bf16.mxu0 0
      %478 = vmatpush1.bf16.msra.mxu0 0
      %479 = vmatprep.subr.bf16.mxu0 0
      %480 = vmatpush1.bf16.msra.mxu0 0
      %481 = vmatprep.subr.bf16.mxu0 0
      %482 = vmatpush1.bf16.msra.mxu0 0
      %483 = vmatprep.mubr.bf16.mxu0 0
      %484 = vmatmul.mubr.bf16.gmra.mrb[0].mxu0 %v421
      %v485 = vpop.f32.mrb[0].mxu0
      %v486 = vadd.f32 %v417, %v485
      %v487 = vpop.f32.mrb[0].mxu0
      %v488 = vpop.f32.mrb[0].mxu0
      %v489 = vadd.f32 %v417, %v488
      %v490 = vpop.f32.mrb[0].mxu0
      %491 = vmatprep.mubr.bf16.mxu0 0
      %492 = vmatmul.mubr.bf16.gmra.mrb[0].mxu0 %v424
      %v493 = vpop.f32.mrb[0].mxu0
      %v494 = vadd.f32 %v417, %v493
      %v495 = vpop.f32.mrb[0].mxu0
      %v496 = vpop.f32.mrb[0].mxu0
      %v497 = vadd.f32 %v417, %v496
      %v498 = vpop.f32.mrb[0].mxu0
      %499 = vmatprep.mubr.bf16.mxu0 0
      %500 = vmatmul.mubr.bf16.gmra.mrb[0].mxu0 %v427
      %v501 = vpop.f32.mrb[0].mxu0
      %v502 = vadd.f32 %v417, %v501
      %v503 = vpop.f32.mrb[0].mxu0
      %v504 = vpop.f32.mrb[0].mxu0
      %v505 = vadd.f32 %v417, %v504
      %v506 = vpop.f32.mrb[0].mxu0
      %507 = vmatprep.mubr.bf16.mxu0 0
      %508 = vmatmul.mubr.bf16.gmra.mrb[0].mxu0 %v430
      %v509 = vpop.f32.mrb[0].mxu0
      %v510 = vadd.f32 %v417, %v509
      %v511 = vpop.f32.mrb[0].mxu0
      %v512 = vpop.f32.mrb[0].mxu0
      %v513 = vadd.f32 %v417, %v512
      %v514 = vpop.f32.mrb[0].mxu0
      %515 = vmatprep.mubr.bf16.mxu0 0
      %516 = vmatmul.mubr.bf16.gmra.mrb[0].mxu0 %v433
      %v517 = vpop.f32.mrb[0].mxu0
      %v518 = vadd.f32 %v417, %v517
      %v519 = vpop.f32.mrb[0].mxu0
      %v520 = vpop.f32.mrb[0].mxu0
      %v521 = vadd.f32 %v417, %v520
      %v522 = vpop.f32.mrb[0].mxu0
      %523 = vmatprep.mubr.bf16.mxu0 0
      %524 = vmatmul.mubr.bf16.gmra.mrb[0].mxu0 %v436
      %v525 = vpop.f32.mrb[0].mxu0
      %v526 = vadd.f32 %v417, %v525
      %v527 = vpop.f32.mrb[0].mxu0
      %v528 = vpop.f32.mrb[0].mxu0
      %v529 = vadd.f32 %v417, %v528
      %v530 = vpop.f32.mrb[0].mxu0
      %531 = vmatprep.mubr.bf16.mxu0 0
      %532 = vmatmul.mubr.bf16.gmra.mrb[0].mxu0 %v439
      %v533 = vpop.f32.mrb[0].mxu0
      %v534 = vadd.f32 %v417, %v533
      %v535 = vpop.f32.mrb[0].mxu0
      %v536 = vpop.f32.mrb[0].mxu0
      %v537 = vadd.f32 %v417, %v536
      %v538 = vpop.f32.mrb[0].mxu0
      %539 = vmatprep.mubr.bf16.mxu0 0
      %540 = vmatmul.mubr.bf16.gmra.mrb[0].mxu0 %v442
      %v541 = vpop.f32.mrb[0].mxu0
      %v542 = vadd.f32 %v417, %v541
      %v543 = vpop.f32.mrb[0].mxu0
      %v544 = vpop.f32.mrb[0].mxu0
      %v545 = vadd.f32 %v417, %v544
      %v546 = vpop.f32.mrb[0].mxu0
      %547 = vdwg.mxu0
      %v548 = vmax.f32 %v486, 0.0
      %v549 = vmax.f32 %v489, 0.0
      %v550 = vmax.f32 %v494, 0.0
      %v551 = vmax.f32 %v497, 0.0
      %v552 = vmax.f32 %v502, 0.0
      %v553 = vmax.f32 %v505, 0.0
      %v554 = vmax.f32 %v510, 0.0
      %v555 = vmax.f32 %v513, 0.0
      %v556 = vmax.f32 %v518, 0.0
      %v557 = vmax.f32 %v521, 0.0
      %v558 = vmax.f32 %v526, 0.0
      %v559 = vmax.f32 %v529, 0.0
      %v560 = vmax.f32 %v534, 0.0
      %v561 = vmax.f32 %v537, 0.0
      %v562 = vmax.f32 %v542, 0.0
      %v563 = vmax.f32 %v545, 0.0
      %v564 = vpack.c.bf16 %v549, %v548
      %v565 = vpack.c.bf16 %v551, %v550
      %v566 = vpack.c.bf16 %v553, %v552
      %v567 = vpack.c.bf16 %v555, %v554
      %v568 = vpack.c.bf16 %v557, %v556
      %v569 = vpack.c.bf16 %v559, %v558
      %v570 = vpack.c.bf16 %v561, %v560
      %v571 = vpack.c.bf16 %v563, %v562
      %v572 = vld [vmem:[%s3] sm:$0xf]
      %v573 = vld [vmem:[%s3 + $0x4] sm:$0xf]
      %v574 = vld [vmem:[%s3 + $0x8] sm:$0xf]
      %v575 = vld [vmem:[%s3 + $0xc] sm:$0xf]
      %v576 = vld [vmem:[%s3 + $0x10] sm:$0xf]
      %v577 = vld [vmem:[%s3 + $0x14] sm:$0xf]
      %v578 = vld [vmem:[%s3 + $0x18] sm:$0xf]
      %v579 = vld [vmem:[%s3 + $0x1c] sm:$0xf]
      %v580 = vld [vmem:[%s4] sm:$0x1]
      %v582 = vlaneseq
      %v583 = vshrl.u32 %v582, 7
      %v584 = vsub.s32 0, %v583
      %v585 = vrot.slane %v580, %v584
      %v595 = vunpack.c.l.b16 %v572
      %v596 = vunpack.c.l.b16 %v573
      %v597 = vunpack.c.l.b16 %v574
      %v598 = vunpack.c.l.b16 %v575
      %v599 = vunpack.c.l.b16 %v576
      %v600 = vunpack.c.l.b16 %v577
      %v601 = vunpack.c.l.b16 %v578
      %v602 = vunpack.c.l.b16 %v579
      %v603 = vpack.c.b16 %v596, %v595
      %v604 = vpack.c.b16 %v598, %v597
      %v605 = vpack.c.b16 %v600, %v599
      %v606 = vpack.c.b16 %v602, %v601
      %vm611 = vcmask 523264
      %v613 = vsel %vm611, %v564, 0
      %v616 = vsel %vm611, %v565, 0
      %v619 = vsel %vm611, %v566, 0
      %v622 = vsel %vm611, %v567, 0
      %v625 = vsel %vm611, %v568, 0
      %v628 = vsel %vm611, %v569, 0
      %v631 = vsel %vm611, %v570, 0
      %v634 = vsel %vm611, %v571, 0
      %636 = vmatprep.subr.bf16.mxu0 0
      %637 = vmatpush1.bf16.msra.mxu0 %v603
      %638 = vmatprep.subr.bf16.mxu0 0
      %639 = vmatpush1.bf16.msra.mxu0 %v604
      %640 = vmatprep.subr.bf16.mxu0 0
      %641 = vmatpush1.bf16.msra.mxu0 %v605
      %642 = vmatprep.subr.bf16.mxu0 0
      %643 = vmatpush1.bf16.msra.mxu0 %v606
      %644 = vmatprep.subr.bf16.mxu0 0
      %645 = vmatpush1.bf16.msra.mxu0 0
      %646 = vmatprep.subr.bf16.mxu0 0
      %647 = vmatpush1.bf16.msra.mxu0 0
      %648 = vmatprep.subr.bf16.mxu0 0
      %649 = vmatpush1.bf16.msra.mxu0 0
      %650 = vmatprep.subr.bf16.mxu0 0
      %651 = vmatpush1.bf16.msra.mxu0 0
      %652 = vmatprep.subr.bf16.mxu0 0
      %653 = vmatpush1.bf16.msra.mxu0 0
      %654 = vmatprep.subr.bf16.mxu0 0
      %655 = vmatpush1.bf16.msra.mxu0 0
      %656 = vmatprep.subr.bf16.mxu0 0
      %657 = vmatpush1.bf16.msra.mxu0 0
      %658 = vmatprep.subr.bf16.mxu0 0
      %659 = vmatpush1.bf16.msra.mxu0 0
      %660 = vmatprep.subr.bf16.mxu0 0
      %661 = vmatpush1.bf16.msra.mxu0 0
      %662 = vmatprep.subr.bf16.mxu0 0
      %663 = vmatpush1.bf16.msra.mxu0 0
      %664 = vmatprep.subr.bf16.mxu0 0
      %665 = vmatpush1.bf16.msra.mxu0 0
      %666 = vmatprep.subr.bf16.mxu0 0
      %667 = vmatpush1.bf16.msra.mxu0 0
      %668 = vmatprep.mubr.bf16.mxu0 0
      %669 = vmatmul.mubr.bf16.gmra.mrb[0].mxu0 %v613
      %v670 = vpop.f32.mrb[0].mxu0
      %v671 = vadd.f32 %v585, %v670
      %v672 = vpop.f32.mrb[0].mxu0
      %v673 = vpop.f32.mrb[0].mxu0
      %v674 = vadd.f32 %v585, %v673
      %v675 = vpop.f32.mrb[0].mxu0
      %676 = vmatprep.mubr.bf16.mxu0 0
      %677 = vmatmul.mubr.bf16.gmra.mrb[0].mxu0 %v616
      %v678 = vpop.f32.mrb[0].mxu0
      %v679 = vadd.f32 %v585, %v678
      %v680 = vpop.f32.mrb[0].mxu0
      %v681 = vpop.f32.mrb[0].mxu0
      %v682 = vadd.f32 %v585, %v681
      %v683 = vpop.f32.mrb[0].mxu0
      %684 = vmatprep.mubr.bf16.mxu0 0
      %685 = vmatmul.mubr.bf16.gmra.mrb[0].mxu0 %v619
      %v686 = vpop.f32.mrb[0].mxu0
      %v687 = vadd.f32 %v585, %v686
      %v688 = vpop.f32.mrb[0].mxu0
      %v689 = vpop.f32.mrb[0].mxu0
      %v690 = vadd.f32 %v585, %v689
      %v691 = vpop.f32.mrb[0].mxu0
      %692 = vmatprep.mubr.bf16.mxu0 0
      %693 = vmatmul.mubr.bf16.gmra.mrb[0].mxu0 %v622
      %v694 = vpop.f32.mrb[0].mxu0
      %v695 = vadd.f32 %v585, %v694
      %v696 = vpop.f32.mrb[0].mxu0
      %v697 = vpop.f32.mrb[0].mxu0
      %v698 = vadd.f32 %v585, %v697
      %v699 = vpop.f32.mrb[0].mxu0
      %700 = vmatprep.mubr.bf16.mxu0 0
      %701 = vmatmul.mubr.bf16.gmra.mrb[0].mxu0 %v625
      %v702 = vpop.f32.mrb[0].mxu0
      %v703 = vadd.f32 %v585, %v702
      %v704 = vpop.f32.mrb[0].mxu0
      %v705 = vpop.f32.mrb[0].mxu0
      %v706 = vadd.f32 %v585, %v705
      %v707 = vpop.f32.mrb[0].mxu0
      %708 = vmatprep.mubr.bf16.mxu0 0
      %709 = vmatmul.mubr.bf16.gmra.mrb[0].mxu0 %v628
      %v710 = vpop.f32.mrb[0].mxu0
      %v711 = vadd.f32 %v585, %v710
      %v712 = vpop.f32.mrb[0].mxu0
      %v713 = vpop.f32.mrb[0].mxu0
      %v714 = vadd.f32 %v585, %v713
      %v715 = vpop.f32.mrb[0].mxu0
      %716 = vmatprep.mubr.bf16.mxu0 0
      %717 = vmatmul.mubr.bf16.gmra.mrb[0].mxu0 %v631
      %v718 = vpop.f32.mrb[0].mxu0
      %v719 = vadd.f32 %v585, %v718
      %v720 = vpop.f32.mrb[0].mxu0
      %v721 = vpop.f32.mrb[0].mxu0
      %v722 = vadd.f32 %v585, %v721
      %v723 = vpop.f32.mrb[0].mxu0
      %724 = vmatprep.mubr.bf16.mxu0 0
      %725 = vmatmul.mubr.bf16.gmra.mrb[0].mxu0 %v634
      %v726 = vpop.f32.mrb[0].mxu0
      %v727 = vadd.f32 %v585, %v726
      %v728 = vpop.f32.mrb[0].mxu0
      %v729 = vpop.f32.mrb[0].mxu0
      %v730 = vadd.f32 %v585, %v729
      %v731 = vpop.f32.mrb[0].mxu0
      %732 = vdwg.mxu0
      %v733 = vmax.f32 %v671, 0.0
      %v734 = vmax.f32 %v674, 0.0
      %v735 = vmax.f32 %v679, 0.0
      %v736 = vmax.f32 %v682, 0.0
      %v737 = vmax.f32 %v687, 0.0
      %v738 = vmax.f32 %v690, 0.0
      %v739 = vmax.f32 %v695, 0.0
      %v740 = vmax.f32 %v698, 0.0
      %v741 = vmax.f32 %v703, 0.0
      %v742 = vmax.f32 %v706, 0.0
      %v743 = vmax.f32 %v711, 0.0
      %v744 = vmax.f32 %v714, 0.0
      %v745 = vmax.f32 %v719, 0.0
      %v746 = vmax.f32 %v722, 0.0
      %v747 = vmax.f32 %v727, 0.0
      %v748 = vmax.f32 %v730, 0.0
      %v749 = vpack.c.bf16 %v734, %v733
      %v750 = vpack.c.bf16 %v736, %v735
      %v751 = vpack.c.bf16 %v738, %v737
      %v752 = vpack.c.bf16 %v740, %v739
      %v753 = vpack.c.bf16 %v742, %v741
      %v754 = vpack.c.bf16 %v744, %v743
      %v755 = vpack.c.bf16 %v746, %v745
      %v756 = vpack.c.bf16 %v748, %v747
      %v757 = vld [vmem:[%s365] sm:$0xff]
      %v758 = vld [vmem:[%s365 + $0x8] sm:$0xff]
      %v759 = vld [vmem:[%s365 + $0x10] sm:$0xff]
      %v760 = vld [vmem:[%s365 + $0x18] sm:$0xff]
      %v761 = vld [vmem:[%s365 + $0x20] sm:$0xff]
      %v762 = vld [vmem:[%s365 + $0x28] sm:$0xff]
      %v763 = vld [vmem:[%s365 + $0x30] sm:$0xff]
      %v764 = vld [vmem:[%s365 + $0x38] sm:$0xff]
      %v765 = vld [vmem:[%s365 + $0x40] sm:$0xff]
      %v766 = vld [vmem:[%s365 + $0x48] sm:$0xff]
      %v767 = vld [vmem:[%s365 + $0x50] sm:$0xff]
      %v768 = vld [vmem:[%s365 + $0x58] sm:$0xff]
      %v769 = vld [vmem:[%s365 + $0x60] sm:$0xff]
      %v770 = vld [vmem:[%s365 + $0x68] sm:$0xff]
      %v771 = vld [vmem:[%s365 + $0x70] sm:$0xff]
      %v772 = vld [vmem:[%s365 + $0x78] sm:$0xff]
      %v773 = vld [vmem:[%s365 + $0x80] sm:$0xff]
      %v774 = vld [vmem:[%s365 + $0x88] sm:$0xff]
      %v775 = vld [vmem:[%s365 + $0x90] sm:$0xff]
      %v776 = vld [vmem:[%s365 + $0x98] sm:$0xff]
      %v777 = vld [vmem:[%s365 + $0xa0] sm:$0xff]
      %v778 = vld [vmem:[%s365 + $0xa8] sm:$0xff]
      %v779 = vld [vmem:[%s365 + $0xb0] sm:$0xff]
      %v780 = vld [vmem:[%s365 + $0xb8] sm:$0xff]
      %v781 = vld [vmem:[%s365 + $0xc0] sm:$0xff]
      %v782 = vld [vmem:[%s365 + $0xc8] sm:$0xff]
      %v783 = vld [vmem:[%s365 + $0xd0] sm:$0xff]
      %v784 = vld [vmem:[%s365 + $0xd8] sm:$0xff]
      %v785 = vld [vmem:[%s365 + $0xe0] sm:$0xff]
      %v786 = vld [vmem:[%s365 + $0xe8] sm:$0xff]
      %v787 = vld [vmem:[%s365 + $0xf0] sm:$0xff]
      %v788 = vld [vmem:[%s365 + $0xf8] sm:$0xff]
      %v789 = vld [vmem:[%s365 + $0x100] sm:$0xff]
      %v790 = vld [vmem:[%s365 + $0x108] sm:$0xff]
      %v791 = vld [vmem:[%s365 + $0x110] sm:$0xff]
      %v792 = vld [vmem:[%s365 + $0x118] sm:$0xff]
      %v793 = vld [vmem:[%s365 + $0x120] sm:$0xff]
      %v794 = vld [vmem:[%s365 + $0x128] sm:$0xff]
      %v795 = vld [vmem:[%s365 + $0x130] sm:$0xff]
      %v796 = vld [vmem:[%s365 + $0x138] sm:$0xff]
      %v797 = vld [vmem:[%s365 + $0x140] sm:$0xff]
      %v798 = vld [vmem:[%s365 + $0x148] sm:$0xff]
      %v799 = vld [vmem:[%s365 + $0x150] sm:$0xff]
      %v800 = vld [vmem:[%s365 + $0x158] sm:$0xff]
      %v801 = vld [vmem:[%s365 + $0x160] sm:$0xff]
      %v802 = vld [vmem:[%s365 + $0x168] sm:$0xff]
      %v803 = vld [vmem:[%s365 + $0x170] sm:$0xff]
      %v804 = vld [vmem:[%s365 + $0x178] sm:$0xff]
      %v805 = vld [vmem:[%s365 + $0x180] sm:$0xff]
      %v806 = vld [vmem:[%s365 + $0x188] sm:$0xff]
      %v807 = vld [vmem:[%s365 + $0x190] sm:$0xff]
      %v808 = vld [vmem:[%s365 + $0x198] sm:$0xff]
      %v809 = vld [vmem:[%s365 + $0x1a0] sm:$0xff]
      %v810 = vld [vmem:[%s365 + $0x1a8] sm:$0xff]
      %v811 = vld [vmem:[%s365 + $0x1b0] sm:$0xff]
      %v812 = vld [vmem:[%s365 + $0x1b8] sm:$0xff]
      %v813 = vld [vmem:[%s365 + $0x1c0] sm:$0xff]
      %v814 = vld [vmem:[%s365 + $0x1c8] sm:$0xff]
      %v815 = vld [vmem:[%s365 + $0x1d0] sm:$0xff]
      %v816 = vld [vmem:[%s365 + $0x1d8] sm:$0xff]
      %v817 = vld [vmem:[%s365 + $0x1e0] sm:$0xff]
      %v818 = vld [vmem:[%s365 + $0x1e8] sm:$0xff]
      %v819 = vld [vmem:[%s365 + $0x1f0] sm:$0xff]
      %v820 = vld [vmem:[%s365 + $0x1f8] sm:$0xff]
      %v885 = vunpack.c.l.b16 %v757
      %v886 = vunpack.c.h.b16 %v757
      %v887 = vunpack.c.l.b16 %v758
      %v888 = vunpack.c.h.b16 %v758
      %v889 = vunpack.c.l.b16 %v759
      %v890 = vunpack.c.h.b16 %v759
      %v891 = vunpack.c.l.b16 %v760
      %v892 = vunpack.c.h.b16 %v760
      %v893 = vunpack.c.l.b16 %v761
      %v894 = vunpack.c.h.b16 %v761
      %v895 = vunpack.c.l.b16 %v762
      %v896 = vunpack.c.h.b16 %v762
      %v897 = vunpack.c.l.b16 %v763
      %v898 = vunpack.c.h.b16 %v763
      %v899 = vunpack.c.l.b16 %v764
      %v900 = vunpack.c.h.b16 %v764
      %v901 = vunpack.c.l.b16 %v765
      %v902 = vunpack.c.h.b16 %v765
      %v903 = vunpack.c.l.b16 %v766
      %v904 = vunpack.c.h.b16 %v766
      %v905 = vunpack.c.l.b16 %v767
      %v906 = vunpack.c.h.b16 %v767
      %v907 = vunpack.c.l.b16 %v768
      %v908 = vunpack.c.h.b16 %v768
      %v909 = vunpack.c.l.b16 %v769
      %v910 = vunpack.c.h.b16 %v769
      %v911 = vunpack.c.l.b16 %v770
      %v912 = vunpack.c.h.b16 %v770
      %v913 = vunpack.c.l.b16 %v771
      %v914 = vunpack.c.h.b16 %v771
      %v915 = vunpack.c.l.b16 %v772
      %v916 = vunpack.c.h.b16 %v772
      %v917 = vunpack.c.l.b16 %v773
      %v918 = vunpack.c.h.b16 %v773
      %v919 = vunpack.c.l.b16 %v774
      %v920 = vunpack.c.h.b16 %v774
      %v921 = vunpack.c.l.b16 %v775
      %v922 = vunpack.c.h.b16 %v775
      %v923 = vunpack.c.l.b16 %v776
      %v924 = vunpack.c.h.b16 %v776
      %v925 = vunpack.c.l.b16 %v777
      %v926 = vunpack.c.h.b16 %v777
      %v927 = vunpack.c.l.b16 %v778
      %v928 = vunpack.c.h.b16 %v778
      %v929 = vunpack.c.l.b16 %v779
      %v930 = vunpack.c.h.b16 %v779
      %v931 = vunpack.c.l.b16 %v780
      %v932 = vunpack.c.h.b16 %v780
      %v933 = vunpack.c.l.b16 %v781
      %v934 = vunpack.c.h.b16 %v781
      %v935 = vunpack.c.l.b16 %v782
      %v936 = vunpack.c.h.b16 %v782
      %v937 = vunpack.c.l.b16 %v783
      %v938 = vunpack.c.h.b16 %v783
      %v939 = vunpack.c.l.b16 %v784
      %v940 = vunpack.c.h.b16 %v784
      %v941 = vunpack.c.l.b16 %v785
      %v942 = vunpack.c.h.b16 %v785
      %v943 = vunpack.c.l.b16 %v786
      %v944 = vunpack.c.h.b16 %v786
      %v945 = vunpack.c.l.b16 %v787
      %v946 = vunpack.c.h.b16 %v787
      %v947 = vunpack.c.l.b16 %v788
      %v948 = vunpack.c.h.b16 %v788
      %v949 = vunpack.c.l.b16 %v789
      %v950 = vunpack.c.h.b16 %v789
      %v951 = vunpack.c.l.b16 %v790
      %v952 = vunpack.c.h.b16 %v790
      %v953 = vunpack.c.l.b16 %v791
      %v954 = vunpack.c.h.b16 %v791
      %v955 = vunpack.c.l.b16 %v792
      %v956 = vunpack.c.h.b16 %v792
      %v957 = vunpack.c.l.b16 %v793
      %v958 = vunpack.c.h.b16 %v793
      %v959 = vunpack.c.l.b16 %v794
      %v960 = vunpack.c.h.b16 %v794
      %v961 = vunpack.c.l.b16 %v795
      %v962 = vunpack.c.h.b16 %v795
      %v963 = vunpack.c.l.b16 %v796
      %v964 = vunpack.c.h.b16 %v796
      %v965 = vunpack.c.l.b16 %v797
      %v966 = vunpack.c.h.b16 %v797
      %v967 = vunpack.c.l.b16 %v798
      %v968 = vunpack.c.h.b16 %v798
      %v969 = vunpack.c.l.b16 %v799
      %v970 = vunpack.c.h.b16 %v799
      %v971 = vunpack.c.l.b16 %v800
      %v972 = vunpack.c.h.b16 %v800
      %v973 = vunpack.c.l.b16 %v801
      %v974 = vunpack.c.h.b16 %v801
      %v975 = vunpack.c.l.b16 %v802
      %v976 = vunpack.c.h.b16 %v802
      %v977 = vunpack.c.l.b16 %v803
      %v978 = vunpack.c.h.b16 %v803
      %v979 = vunpack.c.l.b16 %v804
      %v980 = vunpack.c.h.b16 %v804
      %v981 = vunpack.c.l.b16 %v805
      %v982 = vunpack.c.h.b16 %v805
      %v983 = vunpack.c.l.b16 %v806
      %v984 = vunpack.c.h.b16 %v806
      %v985 = vunpack.c.l.b16 %v807
      %v986 = vunpack.c.h.b16 %v807
      %v987 = vunpack.c.l.b16 %v808
      %v988 = vunpack.c.h.b16 %v808
      %v989 = vunpack.c.l.b16 %v809
      %v990 = vunpack.c.h.b16 %v809
      %v991 = vunpack.c.l.b16 %v810
      %v992 = vunpack.c.h.b16 %v810
      %v993 = vunpack.c.l.b16 %v811
      %v994 = vunpack.c.h.b16 %v811
      %v995 = vunpack.c.l.b16 %v812
      %v996 = vunpack.c.h.b16 %v812
      %v997 = vunpack.c.l.b16 %v813
      %v998 = vunpack.c.h.b16 %v813
      %v999 = vunpack.c.l.b16 %v814
      %v1000 = vunpack.c.h.b16 %v814
      %v1001 = vunpack.c.l.b16 %v815
      %v1002 = vunpack.c.h.b16 %v815
      %v1003 = vunpack.c.l.b16 %v816
      %v1004 = vunpack.c.h.b16 %v816
      %v1005 = vunpack.c.l.b16 %v817
      %v1006 = vunpack.c.h.b16 %v817
      %v1007 = vunpack.c.l.b16 %v818
      %v1008 = vunpack.c.h.b16 %v818
      %v1009 = vunpack.c.l.b16 %v819
      %v1010 = vunpack.c.h.b16 %v819
      %v1011 = vunpack.c.l.b16 %v820
      %v1012 = vunpack.c.h.b16 %v820
      %v1013 = vpack.c.b16 %v893, %v885
      %v1014 = vpack.c.b16 %v894, %v886
      %v1015 = vpack.c.b16 %v895, %v887
      %v1016 = vpack.c.b16 %v896, %v888
      %v1017 = vpack.c.b16 %v897, %v889
      %v1018 = vpack.c.b16 %v898, %v890
      %v1019 = vpack.c.b16 %v899, %v891
      %v1020 = vpack.c.b16 %v900, %v892
      %v1021 = vpack.c.b16 %v909, %v901
      %v1022 = vpack.c.b16 %v910, %v902
      %v1023 = vpack.c.b16 %v911, %v903
      %v1024 = vpack.c.b16 %v912, %v904
      %v1025 = vpack.c.b16 %v913, %v905
      %v1026 = vpack.c.b16 %v914, %v906
      %v1027 = vpack.c.b16 %v915, %v907
      %v1028 = vpack.c.b16 %v916, %v908
      %v1029 = vpack.c.b16 %v925, %v917
      %v1030 = vpack.c.b16 %v926, %v918
      %v1031 = vpack.c.b16 %v927, %v919
      %v1032 = vpack.c.b16 %v928, %v920
      %v1033 = vpack.c.b16 %v929, %v921
      %v1034 = vpack.c.b16 %v930, %v922
      %v1035 = vpack.c.b16 %v931, %v923
      %v1036 = vpack.c.b16 %v932, %v924
      %v1037 = vpack.c.b16 %v941, %v933
      %v1038 = vpack.c.b16 %v942, %v934
      %v1039 = vpack.c.b16 %v943, %v935
      %v1040 = vpack.c.b16 %v944, %v936
      %v1041 = vpack.c.b16 %v945, %v937
      %v1042 = vpack.c.b16 %v946, %v938
      %v1043 = vpack.c.b16 %v947, %v939
      %v1044 = vpack.c.b16 %v948, %v940
      %v1045 = vpack.c.b16 %v957, %v949
      %v1046 = vpack.c.b16 %v958, %v950
      %v1047 = vpack.c.b16 %v959, %v951
      %v1048 = vpack.c.b16 %v960, %v952
      %v1049 = vpack.c.b16 %v961, %v953
      %v1050 = vpack.c.b16 %v962, %v954
      %v1051 = vpack.c.b16 %v963, %v955
      %v1052 = vpack.c.b16 %v964, %v956
      %v1053 = vpack.c.b16 %v973, %v965
      %v1054 = vpack.c.b16 %v974, %v966
      %v1055 = vpack.c.b16 %v975, %v967
      %v1056 = vpack.c.b16 %v976, %v968
      %v1057 = vpack.c.b16 %v977, %v969
      %v1058 = vpack.c.b16 %v978, %v970
      %v1059 = vpack.c.b16 %v979, %v971
      %v1060 = vpack.c.b16 %v980, %v972
      %v1061 = vpack.c.b16 %v989, %v981
      %v1062 = vpack.c.b16 %v990, %v982
      %v1063 = vpack.c.b16 %v991, %v983
      %v1064 = vpack.c.b16 %v992, %v984
      %v1065 = vpack.c.b16 %v993, %v985
      %v1066 = vpack.c.b16 %v994, %v986
      %v1067 = vpack.c.b16 %v995, %v987
      %v1068 = vpack.c.b16 %v996, %v988
      %v1069 = vpack.c.b16 %v1005, %v997
      %v1070 = vpack.c.b16 %v1006, %v998
      %v1071 = vpack.c.b16 %v1007, %v999
      %v1072 = vpack.c.b16 %v1008, %v1000
      %v1073 = vpack.c.b16 %v1009, %v1001
      %v1074 = vpack.c.b16 %v1010, %v1002
      %v1075 = vpack.c.b16 %v1011, %v1003
      %v1076 = vpack.c.b16 %v1012, %v1004
      %1141 = vmatprep.subr.bf16.mxu0 %v1014
      %1142 = vmatpush1.bf16.msra.mxu0 %v1013
      %1143 = vmatprep.subr.bf16.mxu0 %v1022
      %1144 = vmatpush1.bf16.msra.mxu0 %v1021
      %1145 = vmatprep.subr.bf16.mxu0 %v1030
      %1146 = vmatpush1.bf16.msra.mxu0 %v1029
      %1147 = vmatprep.subr.bf16.mxu0 %v1038
      %1148 = vmatpush1.bf16.msra.mxu0 %v1037
      %1149 = vmatprep.subr.bf16.mxu0 %v1046
      %1150 = vmatpush1.bf16.msra.mxu0 %v1045
      %1151 = vmatprep.subr.bf16.mxu0 %v1054
      %1152 = vmatpush1.bf16.msra.mxu0 %v1053
      %1153 = vmatprep.subr.bf16.mxu0 %v1062
      %1154 = vmatpush1.bf16.msra.mxu0 %v1061
      %1155 = vmatprep.subr.bf16.mxu0 %v1070
      %1156 = vmatpush1.bf16.msra.mxu0 %v1069
      %1157 = vmatprep.subr.bf16.mxu0 0
      %1158 = vmatpush1.bf16.msra.mxu0 0
      %1159 = vmatprep.subr.bf16.mxu0 0
      %1160 = vmatpush1.bf16.msra.mxu0 0
      %1161 = vmatprep.subr.bf16.mxu0 0
      %1162 = vmatpush1.bf16.msra.mxu0 0
      %1163 = vmatprep.subr.bf16.mxu0 0
      %1164 = vmatpush1.bf16.msra.mxu0 0
      %1165 = vmatprep.subr.bf16.mxu0 0
      %1166 = vmatpush1.bf16.msra.mxu0 0
      %1167 = vmatprep.subr.bf16.mxu0 0
      %1168 = vmatpush1.bf16.msra.mxu0 0
      %1169 = vmatprep.subr.bf16.mxu0 0
      %1170 = vmatpush1.bf16.msra.mxu0 0
      %1171 = vmatprep.subr.bf16.mxu0 0
      %1172 = vmatpush1.bf16.msra.mxu0 0
      %1173 = vmatprep.mubr.bf16.mxu0 0
      %1174 = vmatmul.mubr.bf16.gmra.mrb[0].mxu0 %v749
      %v1175 = vpop.f32.mrb[0].mxu0
      %v1176 = vadd.f32 0.0, %v1175
      %v1177 = vpop.f32.mrb[0].mxu0
      %v1178 = vadd.f32 0.0, %v1177
      %v1179 = vpop.f32.mrb[0].mxu0
      %v1180 = vadd.f32 0.0, %v1179
      %v1181 = vpop.f32.mrb[0].mxu0
      %v1182 = vadd.f32 0.0, %v1181
      %1183 = vmatprep.mubr.bf16.mxu0 0
      %1184 = vmatmul.mubr.bf16.gmra.mrb[0].mxu0 %v750
      %v1185 = vpop.f32.mrb[0].mxu0
      %v1186 = vadd.f32 0.0, %v1185
      %v1187 = vpop.f32.mrb[0].mxu0
      %v1188 = vadd.f32 0.0, %v1187
      %v1189 = vpop.f32.mrb[0].mxu0
      %v1190 = vadd.f32 0.0, %v1189
      %v1191 = vpop.f32.mrb[0].mxu0
      %v1192 = vadd.f32 0.0, %v1191
      %1193 = vmatprep.mubr.bf16.mxu0 0
      %1194 = vmatmul.mubr.bf16.gmra.mrb[0].mxu0 %v751
      %v1195 = vpop.f32.mrb[0].mxu0
      %v1196 = vadd.f32 0.0, %v1195
      %v1197 = vpop.f32.mrb[0].mxu0
      %v1198 = vadd.f32 0.0, %v1197
      %v1199 = vpop.f32.mrb[0].mxu0
      %v1200 = vadd.f32 0.0, %v1199
      %v1201 = vpop.f32.mrb[0].mxu0
      %v1202 = vadd.f32 0.0, %v1201
      %1203 = vmatprep.mubr.bf16.mxu0 0
      %1204 = vmatmul.mubr.bf16.gmra.mrb[0].mxu0 %v752
      %v1205 = vpop.f32.mrb[0].mxu0
      %v1206 = vadd.f32 0.0, %v1205
      %v1207 = vpop.f32.mrb[0].mxu0
      %v1208 = vadd.f32 0.0, %v1207
      %v1209 = vpop.f32.mrb[0].mxu0
      %v1210 = vadd.f32 0.0, %v1209
      %v1211 = vpop.f32.mrb[0].mxu0
      %v1212 = vadd.f32 0.0, %v1211
      %1213 = vmatprep.mubr.bf16.mxu0 0
      %1214 = vmatmul.mubr.bf16.gmra.mrb[0].mxu0 %v753
      %v1215 = vpop.f32.mrb[0].mxu0
      %v1216 = vadd.f32 0.0, %v1215
      %v1217 = vpop.f32.mrb[0].mxu0
      %v1218 = vadd.f32 0.0, %v1217
      %v1219 = vpop.f32.mrb[0].mxu0
      %v1220 = vadd.f32 0.0, %v1219
      %v1221 = vpop.f32.mrb[0].mxu0
      %v1222 = vadd.f32 0.0, %v1221
      %1223 = vmatprep.mubr.bf16.mxu0 0
      %1224 = vmatmul.mubr.bf16.gmra.mrb[0].mxu0 %v754
      %v1225 = vpop.f32.mrb[0].mxu0
      %v1226 = vadd.f32 0.0, %v1225
      %v1227 = vpop.f32.mrb[0].mxu0
      %v1228 = vadd.f32 0.0, %v1227
      %v1229 = vpop.f32.mrb[0].mxu0
      %v1230 = vadd.f32 0.0, %v1229
      %v1231 = vpop.f32.mrb[0].mxu0
      %v1232 = vadd.f32 0.0, %v1231
      %1233 = vmatprep.mubr.bf16.mxu0 0
      %1234 = vmatmul.mubr.bf16.gmra.mrb[0].mxu0 %v755
      %v1235 = vpop.f32.mrb[0].mxu0
      %v1236 = vadd.f32 0.0, %v1235
      %v1237 = vpop.f32.mrb[0].mxu0
      %v1238 = vadd.f32 0.0, %v1237
      %v1239 = vpop.f32.mrb[0].mxu0
      %v1240 = vadd.f32 0.0, %v1239
      %v1241 = vpop.f32.mrb[0].mxu0
      %v1242 = vadd.f32 0.0, %v1241
      %1243 = vmatprep.mubr.bf16.mxu0 0
      %1244 = vmatmul.mubr.bf16.gmra.mrb[0].mxu0 %v756
      %v1245 = vpop.f32.mrb[0].mxu0
      %v1246 = vadd.f32 0.0, %v1245
      %v1247 = vpop.f32.mrb[0].mxu0
      %v1248 = vadd.f32 0.0, %v1247
      %v1249 = vpop.f32.mrb[0].mxu0
      %v1250 = vadd.f32 0.0, %v1249
      %v1251 = vpop.f32.mrb[0].mxu0
      %v1252 = vadd.f32 0.0, %v1251
      %1253 = vdwg.mxu0
      %1254 = vmatprep.subr.bf16.mxu0 %v1016
      %1255 = vmatpush1.bf16.msra.mxu0 %v1015
      %1256 = vmatprep.subr.bf16.mxu0 %v1024
      %1257 = vmatpush1.bf16.msra.mxu0 %v1023
      %1258 = vmatprep.subr.bf16.mxu0 %v1032
      %1259 = vmatpush1.bf16.msra.mxu0 %v1031
      %1260 = vmatprep.subr.bf16.mxu0 %v1040
      %1261 = vmatpush1.bf16.msra.mxu0 %v1039
      %1262 = vmatprep.subr.bf16.mxu0 %v1048
      %1263 = vmatpush1.bf16.msra.mxu0 %v1047
      %1264 = vmatprep.subr.bf16.mxu0 %v1056
      %1265 = vmatpush1.bf16.msra.mxu0 %v1055
      %1266 = vmatprep.subr.bf16.mxu0 %v1064
      %1267 = vmatpush1.bf16.msra.mxu0 %v1063
      %1268 = vmatprep.subr.bf16.mxu0 %v1072
      %1269 = vmatpush1.bf16.msra.mxu0 %v1071
      %1270 = vmatprep.subr.bf16.mxu0 0
      %1271 = vmatpush1.bf16.msra.mxu0 0
      %1272 = vmatprep.subr.bf16.mxu0 0
      %1273 = vmatpush1.bf16.msra.mxu0 0
      %1274 = vmatprep.subr.bf16.mxu0 0
      %1275 = vmatpush1.bf16.msra.mxu0 0
      %1276 = vmatprep.subr.bf16.mxu0 0
      %1277 = vmatpush1.bf16.msra.mxu0 0
      %1278 = vmatprep.subr.bf16.mxu0 0
      %1279 = vmatpush1.bf16.msra.mxu0 0
      %1280 = vmatprep.subr.bf16.mxu0 0
      %1281 = vmatpush1.bf16.msra.mxu0 0
      %1282 = vmatprep.subr.bf16.mxu0 0
      %1283 = vmatpush1.bf16.msra.mxu0 0
      %1284 = vmatprep.subr.bf16.mxu0 0
      %1285 = vmatpush1.bf16.msra.mxu0 0
      %1286 = vmatprep.mubr.bf16.mxu0 0
      %1287 = vmatmul.mubr.bf16.gmra.mrb[0].mxu0 %v749
      %v1288 = vpop.f32.mrb[0].mxu0
      %v1289 = vadd.f32 0.0, %v1288
      %v1290 = vpop.f32.mrb[0].mxu0
      %v1291 = vadd.f32 0.0, %v1290
      %v1292 = vpop.f32.mrb[0].mxu0
      %v1293 = vadd.f32 0.0, %v1292
      %v1294 = vpop.f32.mrb[0].mxu0
      %v1295 = vadd.f32 0.0, %v1294
      %1296 = vmatprep.mubr.bf16.mxu0 0
      %1297 = vmatmul.mubr.bf16.gmra.mrb[0].mxu0 %v750
      %v1298 = vpop.f32.mrb[0].mxu0
      %v1299 = vadd.f32 0.0, %v1298
      %v1300 = vpop.f32.mrb[0].mxu0
      %v1301 = vadd.f32 0.0, %v1300
      %v1302 = vpop.f32.mrb[0].mxu0
      %v1303 = vadd.f32 0.0, %v1302
      %v1304 = vpop.f32.mrb[0].mxu0
      %v1305 = vadd.f32 0.0, %v1304
      %1306 = vmatprep.mubr.bf16.mxu0 0
      %1307 = vmatmul.mubr.bf16.gmra.mrb[0].mxu0 %v751
      %v1308 = vpop.f32.mrb[0].mxu0
      %v1309 = vadd.f32 0.0, %v1308
      %v1310 = vpop.f32.mrb[0].mxu0
      %v1311 = vadd.f32 0.0, %v1310
      %v1312 = vpop.f32.mrb[0].mxu0
      %v1313 = vadd.f32 0.0, %v1312
      %v1314 = vpop.f32.mrb[0].mxu0
      %v1315 = vadd.f32 0.0, %v1314
      %1316 = vmatprep.mubr.bf16.mxu0 0
      %1317 = vmatmul.mubr.bf16.gmra.mrb[0].mxu0 %v752
      %v1318 = vpop.f32.mrb[0].mxu0
      %v1319 = vadd.f32 0.0, %v1318
      %v1320 = vpop.f32.mrb[0].mxu0
      %v1321 = vadd.f32 0.0, %v1320
      %v1322 = vpop.f32.mrb[0].mxu0
      %v1323 = vadd.f32 0.0, %v1322
      %v1324 = vpop.f32.mrb[0].mxu0
      %v1325 = vadd.f32 0.0, %v1324
      %1326 = vmatprep.mubr.bf16.mxu0 0
      %1327 = vmatmul.mubr.bf16.gmra.mrb[0].mxu0 %v753
      %v1328 = vpop.f32.mrb[0].mxu0
      %v1329 = vadd.f32 0.0, %v1328
      %v1330 = vpop.f32.mrb[0].mxu0
      %v1331 = vadd.f32 0.0, %v1330
      %v1332 = vpop.f32.mrb[0].mxu0
      %v1333 = vadd.f32 0.0, %v1332
      %v1334 = vpop.f32.mrb[0].mxu0
      %v1335 = vadd.f32 0.0, %v1334
      %1336 = vmatprep.mubr.bf16.mxu0 0
      %1337 = vmatmul.mubr.bf16.gmra.mrb[0].mxu0 %v754
      %v1338 = vpop.f32.mrb[0].mxu0
      %v1339 = vadd.f32 0.0, %v1338
      %v1340 = vpop.f32.mrb[0].mxu0
      %v1341 = vadd.f32 0.0, %v1340
      %v1342 = vpop.f32.mrb[0].mxu0
      %v1343 = vadd.f32 0.0, %v1342
      %v1344 = vpop.f32.mrb[0].mxu0
      %v1345 = vadd.f32 0.0, %v1344
      %1346 = vmatprep.mubr.bf16.mxu0 0
      %1347 = vmatmul.mubr.bf16.gmra.mrb[0].mxu0 %v755
      %v1348 = vpop.f32.mrb[0].mxu0
      %v1349 = vadd.f32 0.0, %v1348
      %v1350 = vpop.f32.mrb[0].mxu0
      %v1351 = vadd.f32 0.0, %v1350
      %v1352 = vpop.f32.mrb[0].mxu0
      %v1353 = vadd.f32 0.0, %v1352
      %v1354 = vpop.f32.mrb[0].mxu0
      %v1355 = vadd.f32 0.0, %v1354
      %1356 = vmatprep.mubr.bf16.mxu0 0
      %1357 = vmatmul.mubr.bf16.gmra.mrb[0].mxu0 %v756
      %v1358 = vpop.f32.mrb[0].mxu0
      %v1359 = vadd.f32 0.0, %v1358
      %v1360 = vpop.f32.mrb[0].mxu0
      %v1361 = vadd.f32 0.0, %v1360
      %v1362 = vpop.f32.mrb[0].mxu0
      %v1363 = vadd.f32 0.0, %v1362
      %v1364 = vpop.f32.mrb[0].mxu0
      %v1365 = vadd.f32 0.0, %v1364
      %1366 = vdwg.mxu0
      %1367 = vmatprep.subr.bf16.mxu0 %v1018
      %1368 = vmatpush1.bf16.msra.mxu0 %v1017
      %1369 = vmatprep.subr.bf16.mxu0 %v1026
      %1370 = vmatpush1.bf16.msra.mxu0 %v1025
      %1371 = vmatprep.subr.bf16.mxu0 %v1034
      %1372 = vmatpush1.bf16.msra.mxu0 %v1033
      %1373 = vmatprep.subr.bf16.mxu0 %v1042
      %1374 = vmatpush1.bf16.msra.mxu0 %v1041
      %1375 = vmatprep.subr.bf16.mxu0 %v1050
      %1376 = vmatpush1.bf16.msra.mxu0 %v1049
      %1377 = vmatprep.subr.bf16.mxu0 %v1058
      %1378 = vmatpush1.bf16.msra.mxu0 %v1057
      %1379 = vmatprep.subr.bf16.mxu0 %v1066
      %1380 = vmatpush1.bf16.msra.mxu0 %v1065
      %1381 = vmatprep.subr.bf16.mxu0 %v1074
      %1382 = vmatpush1.bf16.msra.mxu0 %v1073
      %1383 = vmatprep.subr.bf16.mxu0 0
      %1384 = vmatpush1.bf16.msra.mxu0 0
      %1385 = vmatprep.subr.bf16.mxu0 0
      %1386 = vmatpush1.bf16.msra.mxu0 0
      %1387 = vmatprep.subr.bf16.mxu0 0
      %1388 = vmatpush1.bf16.msra.mxu0 0
      %1389 = vmatprep.subr.bf16.mxu0 0
      %1390 = vmatpush1.bf16.msra.mxu0 0
      %1391 = vmatprep.subr.bf16.mxu0 0
      %1392 = vmatpush1.bf16.msra.mxu0 0
      %1393 = vmatprep.subr.bf16.mxu0 0
      %1394 = vmatpush1.bf16.msra.mxu0 0
      %1395 = vmatprep.subr.bf16.mxu0 0
      %1396 = vmatpush1.bf16.msra.mxu0 0
      %1397 = vmatprep.subr.bf16.mxu0 0
      %1398 = vmatpush1.bf16.msra.mxu0 0
      %1399 = vmatprep.mubr.bf16.mxu0 0
      %1400 = vmatmul.mubr.bf16.gmra.mrb[0].mxu0 %v749
      %v1401 = vpop.f32.mrb[0].mxu0
      %v1402 = vadd.f32 0.0, %v1401
      %v1403 = vpop.f32.mrb[0].mxu0
      %v1404 = vadd.f32 0.0, %v1403
      %v1405 = vpop.f32.mrb[0].mxu0
      %v1406 = vadd.f32 0.0, %v1405
      %v1407 = vpop.f32.mrb[0].mxu0
      %v1408 = vadd.f32 0.0, %v1407
      %1409 = vmatprep.mubr.bf16.mxu0 0
      %1410 = vmatmul.mubr.bf16.gmra.mrb[0].mxu0 %v750
      %v1411 = vpop.f32.mrb[0].mxu0
      %v1412 = vadd.f32 0.0, %v1411
      %v1413 = vpop.f32.mrb[0].mxu0
      %v1414 = vadd.f32 0.0, %v1413
      %v1415 = vpop.f32.mrb[0].mxu0
      %v1416 = vadd.f32 0.0, %v1415
      %v1417 = vpop.f32.mrb[0].mxu0
      %v1418 = vadd.f32 0.0, %v1417
      %1419 = vmatprep.mubr.bf16.mxu0 0
      %1420 = vmatmul.mubr.bf16.gmra.mrb[0].mxu0 %v751
      %v1421 = vpop.f32.mrb[0].mxu0
      %v1422 = vadd.f32 0.0, %v1421
      %v1423 = vpop.f32.mrb[0].mxu0
      %v1424 = vadd.f32 0.0, %v1423
      %v1425 = vpop.f32.mrb[0].mxu0
      %v1426 = vadd.f32 0.0, %v1425
      %v1427 = vpop.f32.mrb[0].mxu0
      %v1428 = vadd.f32 0.0, %v1427
      %1429 = vmatprep.mubr.bf16.mxu0 0
      %1430 = vmatmul.mubr.bf16.gmra.mrb[0].mxu0 %v752
      %v1431 = vpop.f32.mrb[0].mxu0
      %v1432 = vadd.f32 0.0, %v1431
      %v1433 = vpop.f32.mrb[0].mxu0
      %v1434 = vadd.f32 0.0, %v1433
      %v1435 = vpop.f32.mrb[0].mxu0
      %v1436 = vadd.f32 0.0, %v1435
      %v1437 = vpop.f32.mrb[0].mxu0
      %v1438 = vadd.f32 0.0, %v1437
      %1439 = vmatprep.mubr.bf16.mxu0 0
      %1440 = vmatmul.mubr.bf16.gmra.mrb[0].mxu0 %v753
      %v1441 = vpop.f32.mrb[0].mxu0
      %v1442 = vadd.f32 0.0, %v1441
      %v1443 = vpop.f32.mrb[0].mxu0
      %v1444 = vadd.f32 0.0, %v1443
      %v1445 = vpop.f32.mrb[0].mxu0
      %v1446 = vadd.f32 0.0, %v1445
      %v1447 = vpop.f32.mrb[0].mxu0
      %v1448 = vadd.f32 0.0, %v1447
      %1449 = vmatprep.mubr.bf16.mxu0 0
      %1450 = vmatmul.mubr.bf16.gmra.mrb[0].mxu0 %v754
      %v1451 = vpop.f32.mrb[0].mxu0
      %v1452 = vadd.f32 0.0, %v1451
      %v1453 = vpop.f32.mrb[0].mxu0
      %v1454 = vadd.f32 0.0, %v1453
      %v1455 = vpop.f32.mrb[0].mxu0
      %v1456 = vadd.f32 0.0, %v1455
      %v1457 = vpop.f32.mrb[0].mxu0
      %v1458 = vadd.f32 0.0, %v1457
      %1459 = vmatprep.mubr.bf16.mxu0 0
      %1460 = vmatmul.mubr.bf16.gmra.mrb[0].mxu0 %v755
      %v1461 = vpop.f32.mrb[0].mxu0
      %v1462 = vadd.f32 0.0, %v1461
      %v1463 = vpop.f32.mrb[0].mxu0
      %v1464 = vadd.f32 0.0, %v1463
      %v1465 = vpop.f32.mrb[0].mxu0
      %v1466 = vadd.f32 0.0, %v1465
      %v1467 = vpop.f32.mrb[0].mxu0
      %v1468 = vadd.f32 0.0, %v1467
      %1469 = vmatprep.mubr.bf16.mxu0 0
      %1470 = vmatmul.mubr.bf16.gmra.mrb[0].mxu0 %v756
      %v1471 = vpop.f32.mrb[0].mxu0
      %v1472 = vadd.f32 0.0, %v1471
      %v1473 = vpop.f32.mrb[0].mxu0
      %v1474 = vadd.f32 0.0, %v1473
      %v1475 = vpop.f32.mrb[0].mxu0
      %v1476 = vadd.f32 0.0, %v1475
      %v1477 = vpop.f32.mrb[0].mxu0
      %v1478 = vadd.f32 0.0, %v1477
      %1479 = vdwg.mxu0
      %1480 = vmatprep.subr.bf16.mxu0 %v1020
      %1481 = vmatpush1.bf16.msra.mxu0 %v1019
      %1482 = vmatprep.subr.bf16.mxu0 %v1028
      %1483 = vmatpush1.bf16.msra.mxu0 %v1027
      %1484 = vmatprep.subr.bf16.mxu0 %v1036
      %1485 = vmatpush1.bf16.msra.mxu0 %v1035
      %1486 = vmatprep.subr.bf16.mxu0 %v1044
      %1487 = vmatpush1.bf16.msra.mxu0 %v1043
      %1488 = vmatprep.subr.bf16.mxu0 %v1052
      %1489 = vmatpush1.bf16.msra.mxu0 %v1051
      %1490 = vmatprep.subr.bf16.mxu0 %v1060
      %1491 = vmatpush1.bf16.msra.mxu0 %v1059
      %1492 = vmatprep.subr.bf16.mxu0 %v1068
      %1493 = vmatpush1.bf16.msra.mxu0 %v1067
      %1494 = vmatprep.subr.bf16.mxu0 %v1076
      %1495 = vmatpush1.bf16.msra.mxu0 %v1075
      %1496 = vmatprep.subr.bf16.mxu0 0
      %1497 = vmatpush1.bf16.msra.mxu0 0
      %1498 = vmatprep.subr.bf16.mxu0 0
      %1499 = vmatpush1.bf16.msra.mxu0 0
      %1500 = vmatprep.subr.bf16.mxu0 0
      %1501 = vmatpush1.bf16.msra.mxu0 0
      %1502 = vmatprep.subr.bf16.mxu0 0
      %1503 = vmatpush1.bf16.msra.mxu0 0
      %1504 = vmatprep.subr.bf16.mxu0 0
      %1505 = vmatpush1.bf16.msra.mxu0 0
      %1506 = vmatprep.subr.bf16.mxu0 0
      %1507 = vmatpush1.bf16.msra.mxu0 0
      %1508 = vmatprep.subr.bf16.mxu0 0
      %1509 = vmatpush1.bf16.msra.mxu0 0
      %1510 = vmatprep.subr.bf16.mxu0 0
      %1511 = vmatpush1.bf16.msra.mxu0 0
      %1512 = vmatprep.mubr.bf16.mxu0 0
      %1513 = vmatmul.mubr.bf16.gmra.mrb[0].mxu0 %v749
      %v1514 = vpop.f32.mrb[0].mxu0
      %v1515 = vadd.f32 0.0, %v1514
      %v1516 = vpop.f32.mrb[0].mxu0
      %v1517 = vadd.f32 0.0, %v1516
      %v1518 = vpop.f32.mrb[0].mxu0
      %v1519 = vadd.f32 0.0, %v1518
      %v1520 = vpop.f32.mrb[0].mxu0
      %v1521 = vadd.f32 0.0, %v1520
      %1522 = vmatprep.mubr.bf16.mxu0 0
      %1523 = vmatmul.mubr.bf16.gmra.mrb[0].mxu0 %v750
      %v1524 = vpop.f32.mrb[0].mxu0
      %v1525 = vadd.f32 0.0, %v1524
      %v1526 = vpop.f32.mrb[0].mxu0
      %v1527 = vadd.f32 0.0, %v1526
      %v1528 = vpop.f32.mrb[0].mxu0
      %v1529 = vadd.f32 0.0, %v1528
      %v1530 = vpop.f32.mrb[0].mxu0
      %v1531 = vadd.f32 0.0, %v1530
      %1532 = vmatprep.mubr.bf16.mxu0 0
      %1533 = vmatmul.mubr.bf16.gmra.mrb[0].mxu0 %v751
      %v1534 = vpop.f32.mrb[0].mxu0
      %v1535 = vadd.f32 0.0, %v1534
      %v1536 = vpop.f32.mrb[0].mxu0
      %v1537 = vadd.f32 0.0, %v1536
      %v1538 = vpop.f32.mrb[0].mxu0
      %v1539 = vadd.f32 0.0, %v1538
      %v1540 = vpop.f32.mrb[0].mxu0
      %v1541 = vadd.f32 0.0, %v1540
      %1542 = vmatprep.mubr.bf16.mxu0 0
      %1543 = vmatmul.mubr.bf16.gmra.mrb[0].mxu0 %v752
      %v1544 = vpop.f32.mrb[0].mxu0
      %v1545 = vadd.f32 0.0, %v1544
      %v1546 = vpop.f32.mrb[0].mxu0
      %v1547 = vadd.f32 0.0, %v1546
      %v1548 = vpop.f32.mrb[0].mxu0
      %v1549 = vadd.f32 0.0, %v1548
      %v1550 = vpop.f32.mrb[0].mxu0
      %v1551 = vadd.f32 0.0, %v1550
      %1552 = vmatprep.mubr.bf16.mxu0 0
      %1553 = vmatmul.mubr.bf16.gmra.mrb[0].mxu0 %v753
      %v1554 = vpop.f32.mrb[0].mxu0
      %v1555 = vadd.f32 0.0, %v1554
      %v1556 = vpop.f32.mrb[0].mxu0
      %v1557 = vadd.f32 0.0, %v1556
      %v1558 = vpop.f32.mrb[0].mxu0
      %v1559 = vadd.f32 0.0, %v1558
      %v1560 = vpop.f32.mrb[0].mxu0
      %v1561 = vadd.f32 0.0, %v1560
      %1562 = vmatprep.mubr.bf16.mxu0 0
      %1563 = vmatmul.mubr.bf16.gmra.mrb[0].mxu0 %v754
      %v1564 = vpop.f32.mrb[0].mxu0
      %v1565 = vadd.f32 0.0, %v1564
      %v1566 = vpop.f32.mrb[0].mxu0
      %v1567 = vadd.f32 0.0, %v1566
      %v1568 = vpop.f32.mrb[0].mxu0
      %v1569 = vadd.f32 0.0, %v1568
      %v1570 = vpop.f32.mrb[0].mxu0
      %v1571 = vadd.f32 0.0, %v1570
      %1572 = vmatprep.mubr.bf16.mxu0 0
      %1573 = vmatmul.mubr.bf16.gmra.mrb[0].mxu0 %v755
      %v1574 = vpop.f32.mrb[0].mxu0
      %v1575 = vadd.f32 0.0, %v1574
      %v1576 = vpop.f32.mrb[0].mxu0
      %v1577 = vadd.f32 0.0, %v1576
      %v1578 = vpop.f32.mrb[0].mxu0
      %v1579 = vadd.f32 0.0, %v1578
      %v1580 = vpop.f32.mrb[0].mxu0
      %v1581 = vadd.f32 0.0, %v1580
      %1582 = vmatprep.mubr.bf16.mxu0 0
      %1583 = vmatmul.mubr.bf16.gmra.mrb[0].mxu0 %v756
      %v1584 = vpop.f32.mrb[0].mxu0
      %v1585 = vadd.f32 0.0, %v1584
      %v1586 = vpop.f32.mrb[0].mxu0
      %v1587 = vadd.f32 0.0, %v1586
      %v1588 = vpop.f32.mrb[0].mxu0
      %v1589 = vadd.f32 0.0, %v1588
      %v1590 = vpop.f32.mrb[0].mxu0
      %v1591 = vadd.f32 0.0, %v1590
      %1592 = vdwg.mxu0
      %v1593 = vld [vmem:[#allocation2] sm:$0xff]
      %v1594 = vmax.f32 %v1176, %v1180
      %v1595 = vmax.f32 %v1594, %v1186
      %v1596 = vmax.f32 %v1595, %v1190
      %v1597 = vmax.f32 %v1596, %v1196
      %v1598 = vmax.f32 %v1597, %v1200
      %v1599 = vmax.f32 %v1598, %v1206
      %v1600 = vmax.f32 %v1599, %v1210
      %v1601 = vmax.f32 %v1600, %v1216
      %v1602 = vmax.f32 %v1601, %v1220
      %v1603 = vmax.f32 %v1602, %v1226
      %v1604 = vmax.f32 %v1603, %v1230
      %v1605 = vmax.f32 %v1604, %v1236
      %v1606 = vmax.f32 %v1605, %v1240
      %v1607 = vmax.f32 %v1606, %v1246
      %v1608 = vmax.f32 %v1607, %v1250
      %v1609 = vrot.slane %v1608, 4
      %v1610 = vmax.f32 %v1608, %v1609
      %v1611 = vrot.slane %v1610, 2
      %v1612 = vmax.f32 %v1610, %v1611
      %v1613 = vrot.slane %v1612, 1
      %v1614 = vmax.f32 %v1612, %v1613
      %v1615 = vmax.f32 %v1178, %v1182
      %v1616 = vmax.f32 %v1615, %v1188
      %v1617 = vmax.f32 %v1616, %v1192
      %v1618 = vmax.f32 %v1617, %v1198
      %v1619 = vmax.f32 %v1618, %v1202
      %v1620 = vmax.f32 %v1619, %v1208
      %v1621 = vmax.f32 %v1620, %v1212
      %v1622 = vmax.f32 %v1621, %v1218
      %v1623 = vmax.f32 %v1622, %v1222
      %v1624 = vmax.f32 %v1623, %v1228
      %v1625 = vmax.f32 %v1624, %v1232
      %v1626 = vmax.f32 %v1625, %v1238
      %v1627 = vmax.f32 %v1626, %v1242
      %v1628 = vmax.f32 %v1627, %v1248
      %v1629 = vmax.f32 %v1628, %v1252
      %v1630 = vrot.slane %v1629, 4
      %v1631 = vmax.f32 %v1629, %v1630
      %v1632 = vrot.slane %v1631, 2
      %v1633 = vmax.f32 %v1631, %v1632
      %v1634 = vrot.slane %v1633, 1
      %v1635 = vmax.f32 %v1633, %v1634
      %v1636 = vmax.f32 %v1289, %v1293
      %v1637 = vmax.f32 %v1636, %v1299
      %v1638 = vmax.f32 %v1637, %v1303
      %v1639 = vmax.f32 %v1638, %v1309
      %v1640 = vmax.f32 %v1639, %v1313
      %v1641 = vmax.f32 %v1640, %v1319
      %v1642 = vmax.f32 %v1641, %v1323
      %v1643 = vmax.f32 %v1642, %v1329
      %v1644 = vmax.f32 %v1643, %v1333
      %v1645 = vmax.f32 %v1644, %v1339
      %v1646 = vmax.f32 %v1645, %v1343
      %v1647 = vmax.f32 %v1646, %v1349
      %v1648 = vmax.f32 %v1647, %v1353
      %v1649 = vmax.f32 %v1648, %v1359
      %v1650 = vmax.f32 %v1649, %v1363
      %v1651 = vrot.slane %v1650, 4
      %v1652 = vmax.f32 %v1650, %v1651
      %v1653 = vrot.slane %v1652, 2
      %v1654 = vmax.f32 %v1652, %v1653
      %v1655 = vrot.slane %v1654, 1
      %v1656 = vmax.f32 %v1654, %v1655
      %v1657 = vmax.f32 %v1291, %v1295
      %v1658 = vmax.f32 %v1657, %v1301
      %v1659 = vmax.f32 %v1658, %v1305
      %v1660 = vmax.f32 %v1659, %v1311
      %v1661 = vmax.f32 %v1660, %v1315
      %v1662 = vmax.f32 %v1661, %v1321
      %v1663 = vmax.f32 %v1662, %v1325
      %v1664 = vmax.f32 %v1663, %v1331
      %v1665 = vmax.f32 %v1664, %v1335
      %v1666 = vmax.f32 %v1665, %v1341
      %v1667 = vmax.f32 %v1666, %v1345
      %v1668 = vmax.f32 %v1667, %v1351
      %v1669 = vmax.f32 %v1668, %v1355
      %v1670 = vmax.f32 %v1669, %v1361
      %v1671 = vmax.f32 %v1670, %v1365
      %v1672 = vrot.slane %v1671, 4
      %v1673 = vmax.f32 %v1671, %v1672
      %v1674 = vrot.slane %v1673, 2
      %v1675 = vmax.f32 %v1673, %v1674
      %v1676 = vrot.slane %v1675, 1
      %v1677 = vmax.f32 %v1675, %v1676
      %v1678 = vmax.f32 %v1402, %v1406
      %v1679 = vmax.f32 %v1678, %v1412
      %v1680 = vmax.f32 %v1679, %v1416
      %v1681 = vmax.f32 %v1680, %v1422
      %v1682 = vmax.f32 %v1681, %v1426
      %v1683 = vmax.f32 %v1682, %v1432
      %v1684 = vmax.f32 %v1683, %v1436
      %v1685 = vmax.f32 %v1684, %v1442
      %v1686 = vmax.f32 %v1685, %v1446
      %v1687 = vmax.f32 %v1686, %v1452
      %v1688 = vmax.f32 %v1687, %v1456
      %v1689 = vmax.f32 %v1688, %v1462
      %v1690 = vmax.f32 %v1689, %v1466
      %v1691 = vmax.f32 %v1690, %v1472
      %v1692 = vmax.f32 %v1691, %v1476
      %v1693 = vrot.slane %v1692, 4
      %v1694 = vmax.f32 %v1692, %v1693
      %v1695 = vrot.slane %v1694, 2
      %v1696 = vmax.f32 %v1694, %v1695
      %v1697 = vrot.slane %v1696, 1
      %v1698 = vmax.f32 %v1696, %v1697
      %v1699 = vmax.f32 %v1404, %v1408
      %v1700 = vmax.f32 %v1699, %v1414
      %v1701 = vmax.f32 %v1700, %v1418
      %v1702 = vmax.f32 %v1701, %v1424
      %v1703 = vmax.f32 %v1702, %v1428
      %v1704 = vmax.f32 %v1703, %v1434
      %v1705 = vmax.f32 %v1704, %v1438
      %v1706 = vmax.f32 %v1705, %v1444
      %v1707 = vmax.f32 %v1706, %v1448
      %v1708 = vmax.f32 %v1707, %v1454
      %v1709 = vmax.f32 %v1708, %v1458
      %v1710 = vmax.f32 %v1709, %v1464
      %v1711 = vmax.f32 %v1710, %v1468
      %v1712 = vmax.f32 %v1711, %v1474
      %v1713 = vmax.f32 %v1712, %v1478
      %v1714 = vrot.slane %v1713, 4
      %v1715 = vmax.f32 %v1713, %v1714
      %v1716 = vrot.slane %v1715, 2
      %v1717 = vmax.f32 %v1715, %v1716
      %v1718 = vrot.slane %v1717, 1
      %v1719 = vmax.f32 %v1717, %v1718
      %v1720 = vmax.f32 %v1515, %v1519
      %v1721 = vmax.f32 %v1720, %v1525
      %v1722 = vmax.f32 %v1721, %v1529
      %v1723 = vmax.f32 %v1722, %v1535
      %v1724 = vmax.f32 %v1723, %v1539
      %v1725 = vmax.f32 %v1724, %v1545
      %v1726 = vmax.f32 %v1725, %v1549
      %v1727 = vmax.f32 %v1726, %v1555
      %v1728 = vmax.f32 %v1727, %v1559
      %v1729 = vmax.f32 %v1728, %v1565
      %v1730 = vmax.f32 %v1729, %v1569
      %v1731 = vmax.f32 %v1730, %v1575
      %v1732 = vmax.f32 %v1731, %v1579
      %v1733 = vmax.f32 %v1732, %v1585
      %v1734 = vmax.f32 %v1733, %v1589
      %v1735 = vrot.slane %v1734, 4
      %v1736 = vmax.f32 %v1734, %v1735
      %v1737 = vrot.slane %v1736, 2
      %v1738 = vmax.f32 %v1736, %v1737
      %v1739 = vrot.slane %v1738, 1
      %v1740 = vmax.f32 %v1738, %v1739
      %v1741 = vmax.f32 %v1517, %v1521
      %v1742 = vmax.f32 %v1741, %v1527
      %v1743 = vmax.f32 %v1742, %v1531
      %v1744 = vmax.f32 %v1743, %v1537
      %v1745 = vmax.f32 %v1744, %v1541
      %v1746 = vmax.f32 %v1745, %v1547
      %v1747 = vmax.f32 %v1746, %v1551
      %v1748 = vmax.f32 %v1747, %v1557
      %v1749 = vmax.f32 %v1748, %v1561
      %v1750 = vmax.f32 %v1749, %v1567
      %v1751 = vmax.f32 %v1750, %v1571
      %v1752 = vmax.f32 %v1751, %v1577
      %v1753 = vmax.f32 %v1752, %v1581
      %v1754 = vmax.f32 %v1753, %v1587
      %v1755 = vmax.f32 %v1754, %v1591
      %v1756 = vrot.slane %v1755, 4
      %v1757 = vmax.f32 %v1755, %v1756
      %v1758 = vrot.slane %v1757, 2
      %v1759 = vmax.f32 %v1757, %v1758
      %v1760 = vrot.slane %v1759, 1
      %v1761 = vmax.f32 %v1759, %v1760
      %v1770 = vcombine.low %v1614, %v1635
      %v1771 = vcombine.low %v1656, %v1677
      %v1772 = vcombine.low %v1698, %v1719
      %v1773 = vcombine.low %v1740, %v1761
      %v1775 = vunpack.c.l.s4 1966171168
      %v1776 = vunpack.c.0.s8 %v1775
      %v1777 = vlaneseq
      %v1778 = vshrl.u32 %v1777, 7
      %v1779 = vsub.s32 %v1776, %v1778
      %v1780 = vrot.slane %v1770, %v1779
      %v1782 = vunpack.c.l.s4 1966171168
      %v1783 = vunpack.c.0.s8 %v1782
      %v1784 = vlaneseq
      %v1785 = vshrl.u32 %v1784, 7
      %v1786 = vsub.s32 %v1783, %v1785
      %v1787 = vrot.slane %v1771, %v1786
      %v1789 = vunpack.c.l.s4 1966171168
      %v1790 = vunpack.c.0.s8 %v1789
      %v1791 = vlaneseq
      %v1792 = vshrl.u32 %v1791, 7
      %v1793 = vsub.s32 %v1790, %v1792
      %v1794 = vrot.slane %v1772, %v1793
      %v1796 = vunpack.c.l.s4 1966171168
      %v1797 = vunpack.c.0.s8 %v1796
      %v1798 = vlaneseq
      %v1799 = vshrl.u32 %v1798, 7
      %v1800 = vsub.s32 %v1797, %v1799
      %v1801 = vrot.slane %v1773, %v1800
      %v1802 = vcombine.low %v1780, %v1787
      %v1803 = vcombine.low %v1794, %v1801
      %v1805 = vunpack.c.l.s4 1966171168
      %v1806 = vunpack.c.0.s8 %v1805
      %v1807 = vlaneseq
      %v1808 = vshrl.u32 %v1807, 7
      %v1809 = vsub.s32 %v1806, %v1808
      %v1810 = vrot.slane %v1802, %v1809
      %v1812 = vunpack.c.l.s4 1966171168
      %v1813 = vunpack.c.0.s8 %v1812
      %v1814 = vlaneseq
      %v1815 = vshrl.u32 %v1814, 7
      %v1816 = vsub.s32 %v1813, %v1815
      %v1817 = vrot.slane %v1803, %v1816
      %v1818 = vcombine.low %v1810, %v1817
      %v1820 = vmax.f32 %v1593, %v1818
      %1821 = vst [vmem:[#allocation2] sm:$0xff] %v1820
      // Predicated region
      $region53: #{pointnet_cls_forward.6} parent=47 // pred_check
        %p1822 = pneg %p382
      $region54: #{pointnet_cls_forward.6} parent=47 // pred_check_branch
        %1824 = sbr.rel (%p1822) target = $region56
      $region55: #{pointnet_cls_forward.6} parent=47 // pred_region
        %v1825 = vld [vmem:[#allocation2] sm:$0xff]
        %v1826 = vld [vmem:[%s370] sm:$0xff]
        %v1827 = vadd.f32 %v1825, %v1826
        %1828 = vst [vmem:[%s379] sm:$0xff] %v1827
      $region56: #{pointnet_cls_forward.6} parent=47 // pred_fallthru
        _
      %s1829 = smul.u32 8, %s24
      %p1830 = scmp.lt.s32.totalorder %s23, 1
      %s1831 = scalar_select %p1830, %s23, 1
      %p1832 = scmp.lt.s32.totalorder %s1829, 7
      %s1833 = scalar_select %p1832, %s1829, 7
      %s1834 = smul.addr %s1831, 8
      %s1835 = sadd.s32 %s1833, %s1834
      %s1836 = scalar_lea.vmem %s7, %s1835
      // Predicated region
      $region57: #{pointnet_cls_forward.6} parent=47 // pred_check
        %p1837 = pneg %p226
      $region58: #{pointnet_cls_forward.6} parent=47 // pred_check_branch
        %1839 = sbr.rel (%p1837) target = $region60
      $region59: #{pointnet_cls_forward.6} parent=47 // pred_region
        %s1840 = smul.u32 8, %s24
      $region60: #{pointnet_cls_forward.6} parent=47 // pred_fallthru
        _
    $region48: #{pointnet_cls_forward.6} parent=5 // pred_fallthru
      _
    %p1841 = scmp.le.s32.totalorder 2, %s13
    // Predicated region
    $region61: #{pointnet_cls_forward.6} parent=5 // pred_check
      %p1842 = pneg %p1841
    $region62: #{pointnet_cls_forward.6} parent=5 // pred_check_branch
      %1844 = sbr.rel (%p1842) target = $region64
    $region63: #{pointnet_cls_forward.6} parent=5 // pred_region
      %s1845 = ssub.s32 %s13, 2
      // Predicated region
      $region65: #{pointnet_cls_forward.6} parent=63 // pred_check
        %p1846 = pneg %p232
      $region66: #{pointnet_cls_forward.6} parent=63 // pred_check_branch
        %1848 = sbr.rel (%p1846) target = $region68
      $region67: #{pointnet_cls_forward.6} parent=63 // pred_region
        %s1849 = smul.u32 8, %s27
        %p1850 = scmp.lt.s32.totalorder %s26, 1
        %s1851 = scalar_select %p1850, %s26, 1
        %p1852 = scmp.lt.s32.totalorder %s1849, 7
        %s1853 = scalar_select %p1852, %s1849, 7
        %s1854 = smul.addr %s1851, 8
        %s1855 = sadd.s32 %s1853, %s1854
        %s1856 = scalar_lea.vmem %s7, %s1855
      $region68: #{pointnet_cls_forward.6} parent=63 // pred_fallthru
        _
    $region64: #{pointnet_cls_forward.6} parent=5 // pred_fallthru
      _
  $region6: #{pointnet_cls_forward.6} parent=0 // loop_footer
    %s17 = sadd.s32 1, %s13
  $region7: #{pointnet_cls_forward.6} parent=0 // loop_footer_branch
    %12 = sbr.rel target = $region3
  $region8: #{pointnet_cls_forward.6} parent=0 // loop_exit
    _

// kernel: pointnet_cls_forward.7
$region0: #{pointnet_cls_forward.7}
  #allocation0 [shape = 'u32[]', space=smem, size = 0x4, offset = 0x4, fixed_abs, tag = 'smem constant byte address 0x4 - core index']
  #allocation1 [shape = 'u32[144,128]{1,0:T(1,128)}', space=vmem, size = 0x12000, scoped, tag = 'internal scratch']
  %s0 = inlined_call_operand.vmem [shape: f32[8,1024], index: 0, kind: input, shape index: {}]
  %s1 = inlined_call_operand.vmem [shape: bf16[1024,512], index: 1, kind: input, shape index: {}]
  %s2 = inlined_call_operand.vmem [shape: f32[1,512], index: 2, kind: input, shape index: {}]
  %s3 = inlined_call_operand.vmem [shape: bf16[512,256], index: 3, kind: input, shape index: {}]
  %s4 = inlined_call_operand.vmem [shape: f32[1,256], index: 4, kind: input, shape index: {}]
  %s5 = inlined_call_operand.vmem [shape: f32[256,2], index: 5, kind: input, shape index: {}]
  %s6 = inlined_call_operand.vmem [shape: f32[1,2], index: 6, kind: input, shape index: {}]
  %s7 = inlined_call_operand.vmem [shape: f32[8,2], index: 7, kind: output, shape index: {}]
  %s8 = sld [smem:[#allocation0]]
  $region38: #{pointnet_cls_forward.7} parent=0
    _
  %s10 = ssub.s32 1, %s8
  %s11 = scalar_select 0, %s10, %s8
  // Predicated region
  $region2: #{pointnet_cls_forward.7} parent=0 // pred_check
    _
  $region3: #{pointnet_cls_forward.7} parent=0 // pred_check_branch
    %13 = sbr.rel (0) target = $region5
  $region4: #{pointnet_cls_forward.7} parent=0 // pred_region
    _
  $region5: #{pointnet_cls_forward.7} parent=0 // pred_fallthru
    _
  // Predicated region
  $region6: #{pointnet_cls_forward.7} parent=0 // pred_check
    _
  $region7: #{pointnet_cls_forward.7} parent=0 // pred_check_branch
    %15 = sbr.rel (0) target = $region9
  $region8: #{pointnet_cls_forward.7} parent=0 // pred_region
    _
  $region9: #{pointnet_cls_forward.7} parent=0 // pred_fallthru
    _
  // Predicated region
  $region10: #{pointnet_cls_forward.7} parent=0 // pred_check
    _
  $region11: #{pointnet_cls_forward.7} parent=0 // pred_check_branch
    %17 = sbr.rel (0) target = $region13
  $region12: #{pointnet_cls_forward.7} parent=0 // pred_region
    _
  $region13: #{pointnet_cls_forward.7} parent=0 // pred_fallthru
    _
  // Predicated region
  $region14: #{pointnet_cls_forward.7} parent=0 // pred_check
    _
  $region15: #{pointnet_cls_forward.7} parent=0 // pred_check_branch
    %19 = sbr.rel (0) target = $region17
  $region16: #{pointnet_cls_forward.7} parent=0 // pred_region
    _
  $region17: #{pointnet_cls_forward.7} parent=0 // pred_fallthru
    _
  // Predicated region
  $region18: #{pointnet_cls_forward.7} parent=0 // pred_check
    _
  $region19: #{pointnet_cls_forward.7} parent=0 // pred_check_branch
    %21 = sbr.rel (0) target = $region21
  $region20: #{pointnet_cls_forward.7} parent=0 // pred_region
    _
  $region21: #{pointnet_cls_forward.7} parent=0 // pred_fallthru
    _
  // Predicated region
  $region22: #{pointnet_cls_forward.7} parent=0 // pred_check
    _
  $region23: #{pointnet_cls_forward.7} parent=0 // pred_check_branch
    %23 = sbr.rel (0) target = $region25
  $region24: #{pointnet_cls_forward.7} parent=0 // pred_region
    _
  $region25: #{pointnet_cls_forward.7} parent=0 // pred_fallthru
    _
  // Predicated region
  $region26: #{pointnet_cls_forward.7} parent=0 // pred_check
    _
  $region27: #{pointnet_cls_forward.7} parent=0 // pred_check_branch
    %25 = sbr.rel (0) target = $region29
  $region28: #{pointnet_cls_forward.7} parent=0 // pred_region
    _
  $region29: #{pointnet_cls_forward.7} parent=0 // pred_fallthru
    _
  %v26 = vld [vmem:[%s0] sm:$0xff]
  %v27 = vld [vmem:[%s0 + $0x8] sm:$0xff]
  %v28 = vld [vmem:[%s0 + $0x10] sm:$0xff]
  %v29 = vld [vmem:[%s0 + $0x18] sm:$0xff]
  %v30 = vld [vmem:[%s0 + $0x20] sm:$0xff]
  %v31 = vld [vmem:[%s0 + $0x28] sm:$0xff]
  %v32 = vld [vmem:[%s0 + $0x30] sm:$0xff]
  %v33 = vld [vmem:[%s0 + $0x38] sm:$0xff]
  %v34 = vpack.c.bf16 %v26, %v26
  %v35 = vpack.c.bf16 %v27, %v27
  %v36 = vpack.c.bf16 %v28, %v28
  %v37 = vpack.c.bf16 %v29, %v29
  %v38 = vpack.c.bf16 %v30, %v30
  %v39 = vpack.c.bf16 %v31, %v31
  %v40 = vpack.c.bf16 %v32, %v32
  %v41 = vpack.c.bf16 %v33, %v33
  %v42 = vld [vmem:[%s1] sm:$0xff]
  %v43 = vld [vmem:[%s1 + $0x8] sm:$0xff]
  %v44 = vld [vmem:[%s1 + $0x10] sm:$0xff]
  %v45 = vld [vmem:[%s1 + $0x18] sm:$0xff]
  %v46 = vld [vmem:[%s1 + $0x20] sm:$0xff]
  %v47 = vld [vmem:[%s1 + $0x28] sm:$0xff]
  %v48 = vld [vmem:[%s1 + $0x30] sm:$0xff]
  %v49 = vld [vmem:[%s1 + $0x38] sm:$0xff]
  %v50 = vld [vmem:[%s1 + $0x40] sm:$0xff]
  %v51 = vld [vmem:[%s1 + $0x48] sm:$0xff]
  %v52 = vld [vmem:[%s1 + $0x50] sm:$0xff]
  %v53 = vld [vmem:[%s1 + $0x58] sm:$0xff]
  %v54 = vld [vmem:[%s1 + $0x60] sm:$0xff]
  %v55 = vld [vmem:[%s1 + $0x68] sm:$0xff]
  %v56 = vld [vmem:[%s1 + $0x70] sm:$0xff]
  %v57 = vld [vmem:[%s1 + $0x78] sm:$0xff]
  %v58 = vld [vmem:[%s1 + $0x80] sm:$0xff]
  %v59 = vld [vmem:[%s1 + $0x88] sm:$0xff]
  %v60 = vld [vmem:[%s1 + $0x90] sm:$0xff]
  %v61 = vld [vmem:[%s1 + $0x98] sm:$0xff]
  %v62 = vld [vmem:[%s1 + $0xa0] sm:$0xff]
  %v63 = vld [vmem:[%s1 + $0xa8] sm:$0xff]
  %v64 = vld [vmem:[%s1 + $0xb0] sm:$0xff]
  %v65 = vld [vmem:[%s1 + $0xb8] sm:$0xff]
  %v66 = vld [vmem:[%s1 + $0xc0] sm:$0xff]
  %v67 = vld [vmem:[%s1 + $0xc8] sm:$0xff]
  %v68 = vld [vmem:[%s1 + $0xd0] sm:$0xff]
  %v69 = vld [vmem:[%s1 + $0xd8] sm:$0xff]
  %v70 = vld [vmem:[%s1 + $0xe0] sm:$0xff]
  %v71 = vld [vmem:[%s1 + $0xe8] sm:$0xff]
  %v72 = vld [vmem:[%s1 + $0xf0] sm:$0xff]
  %v73 = vld [vmem:[%s1 + $0xf8] sm:$0xff]
  %v74 = vld [vmem:[%s1 + $0x100] sm:$0xff]
  %v75 = vld [vmem:[%s1 + $0x108] sm:$0xff]
  %v76 = vld [vmem:[%s1 + $0x110] sm:$0xff]
  %v77 = vld [vmem:[%s1 + $0x118] sm:$0xff]
  %v78 = vld [vmem:[%s1 + $0x120] sm:$0xff]
  %v79 = vld [vmem:[%s1 + $0x128] sm:$0xff]
  %v80 = vld [vmem:[%s1 + $0x130] sm:$0xff]
  %v81 = vld [vmem:[%s1 + $0x138] sm:$0xff]
  %v82 = vld [vmem:[%s1 + $0x140] sm:$0xff]
  %v83 = vld [vmem:[%s1 + $0x148] sm:$0xff]
  %v84 = vld [vmem:[%s1 + $0x150] sm:$0xff]
  %v85 = vld [vmem:[%s1 + $0x158] sm:$0xff]
  %v86 = vld [vmem:[%s1 + $0x160] sm:$0xff]
  %v87 = vld [vmem:[%s1 + $0x168] sm:$0xff]
  %v88 = vld [vmem:[%s1 + $0x170] sm:$0xff]
  %v89 = vld [vmem:[%s1 + $0x178] sm:$0xff]
  %v90 = vld [vmem:[%s1 + $0x180] sm:$0xff]
  %v91 = vld [vmem:[%s1 + $0x188] sm:$0xff]
  %v92 = vld [vmem:[%s1 + $0x190] sm:$0xff]
  %v93 = vld [vmem:[%s1 + $0x198] sm:$0xff]
  %v94 = vld [vmem:[%s1 + $0x1a0] sm:$0xff]
  %v95 = vld [vmem:[%s1 + $0x1a8] sm:$0xff]
  %v96 = vld [vmem:[%s1 + $0x1b0] sm:$0xff]
  %v97 = vld [vmem:[%s1 + $0x1b8] sm:$0xff]
  %v98 = vld [vmem:[%s1 + $0x1c0] sm:$0xff]
  %v99 = vld [vmem:[%s1 + $0x1c8] sm:$0xff]
  %v100 = vld [vmem:[%s1 + $0x1d0] sm:$0xff]
  %v101 = vld [vmem:[%s1 + $0x1d8] sm:$0xff]
  %v102 = vld [vmem:[%s1 + $0x1e0] sm:$0xff]
  %v103 = vld [vmem:[%s1 + $0x1e8] sm:$0xff]
  %v104 = vld [vmem:[%s1 + $0x1f0] sm:$0xff]
  %v105 = vld [vmem:[%s1 + $0x1f8] sm:$0xff]
  %v106 = vld [vmem:[%s1 + $0x200] sm:$0xff]
  %v107 = vld [vmem:[%s1 + $0x208] sm:$0xff]
  %v108 = vld [vmem:[%s1 + $0x210] sm:$0xff]
  %v109 = vld [vmem:[%s1 + $0x218] sm:$0xff]
  %v110 = vld [vmem:[%s1 + $0x220] sm:$0xff]
  %v111 = vld [vmem:[%s1 + $0x228] sm:$0xff]
  %v112 = vld [vmem:[%s1 + $0x230] sm:$0xff]
  %v113 = vld [vmem:[%s1 + $0x238] sm:$0xff]
  %v114 = vld [vmem:[%s1 + $0x240] sm:$0xff]
  %v115 = vld [vmem:[%s1 + $0x248] sm:$0xff]
  %v116 = vld [vmem:[%s1 + $0x250] sm:$0xff]
  %v117 = vld [vmem:[%s1 + $0x258] sm:$0xff]
  %v118 = vld [vmem:[%s1 + $0x260] sm:$0xff]
  %v119 = vld [vmem:[%s1 + $0x268] sm:$0xff]
  %v120 = vld [vmem:[%s1 + $0x270] sm:$0xff]
  %v121 = vld [vmem:[%s1 + $0x278] sm:$0xff]
  %v122 = vld [vmem:[%s1 + $0x280] sm:$0xff]
  %v123 = vld [vmem:[%s1 + $0x288] sm:$0xff]
  %v124 = vld [vmem:[%s1 + $0x290] sm:$0xff]
  %v125 = vld [vmem:[%s1 + $0x298] sm:$0xff]
  %v126 = vld [vmem:[%s1 + $0x2a0] sm:$0xff]
  %v127 = vld [vmem:[%s1 + $0x2a8] sm:$0xff]
  %v128 = vld [vmem:[%s1 + $0x2b0] sm:$0xff]
  %v129 = vld [vmem:[%s1 + $0x2b8] sm:$0xff]
  %v130 = vld [vmem:[%s1 + $0x2c0] sm:$0xff]
  %v131 = vld [vmem:[%s1 + $0x2c8] sm:$0xff]
  %v132 = vld [vmem:[%s1 + $0x2d0] sm:$0xff]
  %v133 = vld [vmem:[%s1 + $0x2d8] sm:$0xff]
  %v134 = vld [vmem:[%s1 + $0x2e0] sm:$0xff]
  %v135 = vld [vmem:[%s1 + $0x2e8] sm:$0xff]
  %v136 = vld [vmem:[%s1 + $0x2f0] sm:$0xff]
  %v137 = vld [vmem:[%s1 + $0x2f8] sm:$0xff]
  %v138 = vld [vmem:[%s1 + $0x300] sm:$0xff]
  %v139 = vld [vmem:[%s1 + $0x308] sm:$0xff]
  %v140 = vld [vmem:[%s1 + $0x310] sm:$0xff]
  %v141 = vld [vmem:[%s1 + $0x318] sm:$0xff]
  %v142 = vld [vmem:[%s1 + $0x320] sm:$0xff]
  %v143 = vld [vmem:[%s1 + $0x328] sm:$0xff]
  %v144 = vld [vmem:[%s1 + $0x330] sm:$0xff]
  %v145 = vld [vmem:[%s1 + $0x338] sm:$0xff]
  %v146 = vld [vmem:[%s1 + $0x340] sm:$0xff]
  %v147 = vld [vmem:[%s1 + $0x348] sm:$0xff]
  %v148 = vld [vmem:[%s1 + $0x350] sm:$0xff]
  %v149 = vld [vmem:[%s1 + $0x358] sm:$0xff]
  %v150 = vld [vmem:[%s1 + $0x360] sm:$0xff]
  %v151 = vld [vmem:[%s1 + $0x368] sm:$0xff]
  %v152 = vld [vmem:[%s1 + $0x370] sm:$0xff]
  %v153 = vld [vmem:[%s1 + $0x378] sm:$0xff]
  %v154 = vld [vmem:[%s1 + $0x380] sm:$0xff]
  %v155 = vld [vmem:[%s1 + $0x388] sm:$0xff]
  %v156 = vld [vmem:[%s1 + $0x390] sm:$0xff]
  %v157 = vld [vmem:[%s1 + $0x398] sm:$0xff]
  %v158 = vld [vmem:[%s1 + $0x3a0] sm:$0xff]
  %v159 = vld [vmem:[%s1 + $0x3a8] sm:$0xff]
  %v160 = vld [vmem:[%s1 + $0x3b0] sm:$0xff]
  %v161 = vld [vmem:[%s1 + $0x3b8] sm:$0xff]
  %v162 = vld [vmem:[%s1 + $0x3c0] sm:$0xff]
  %v163 = vld [vmem:[%s1 + $0x3c8] sm:$0xff]
  %v164 = vld [vmem:[%s1 + $0x3d0] sm:$0xff]
  %v165 = vld [vmem:[%s1 + $0x3d8] sm:$0xff]
  %v166 = vld [vmem:[%s1 + $0x3e0] sm:$0xff]
  %v167 = vld [vmem:[%s1 + $0x3e8] sm:$0xff]
  %v168 = vld [vmem:[%s1 + $0x3f0] sm:$0xff]
  %v169 = vld [vmem:[%s1 + $0x3f8] sm:$0xff]
  %v170 = vld [vmem:[%s1 + $0x400] sm:$0xff]
  %v171 = vld [vmem:[%s1 + $0x408] sm:$0xff]
  %v172 = vld [vmem:[%s1 + $0x410] sm:$0xff]
  %v173 = vld [vmem:[%s1 + $0x418] sm:$0xff]
  %v174 = vld [vmem:[%s1 + $0x420] sm:$0xff]
  %v175 = vld [vmem:[%s1 + $0x428] sm:$0xff]
  %v176 = vld [vmem:[%s1 + $0x430] sm:$0xff]
  %v177 = vld [vmem:[%s1 + $0x438] sm:$0xff]
  %v178 = vld [vmem:[%s1 + $0x440] sm:$0xff]
  %v179 = vld [vmem:[%s1 + $0x448] sm:$0xff]
  %v180 = vld [vmem:[%s1 + $0x450] sm:$0xff]
  %v181 = vld [vmem:[%s1 + $0x458] sm:$0xff]
  %v182 = vld [vmem:[%s1 + $0x460] sm:$0xff]
  %v183 = vld [vmem:[%s1 + $0x468] sm:$0xff]
  %v184 = vld [vmem:[%s1 + $0x470] sm:$0xff]
  %v185 = vld [vmem:[%s1 + $0x478] sm:$0xff]
  %v186 = vld [vmem:[%s1 + $0x480] sm:$0xff]
  %v187 = vld [vmem:[%s1 + $0x488] sm:$0xff]
  %v188 = vld [vmem:[%s1 + $0x490] sm:$0xff]
  %v189 = vld [vmem:[%s1 + $0x498] sm:$0xff]
  %v190 = vld [vmem:[%s1 + $0x4a0] sm:$0xff]
  %v191 = vld [vmem:[%s1 + $0x4a8] sm:$0xff]
  %v192 = vld [vmem:[%s1 + $0x4b0] sm:$0xff]
  %v193 = vld [vmem:[%s1 + $0x4b8] sm:$0xff]
  %v194 = vld [vmem:[%s1 + $0x4c0] sm:$0xff]
  %v195 = vld [vmem:[%s1 + $0x4c8] sm:$0xff]
  %v196 = vld [vmem:[%s1 + $0x4d0] sm:$0xff]
  %v197 = vld [vmem:[%s1 + $0x4d8] sm:$0xff]
  %v198 = vld [vmem:[%s1 + $0x4e0] sm:$0xff]
  %v199 = vld [vmem:[%s1 + $0x4e8] sm:$0xff]
  %v200 = vld [vmem:[%s1 + $0x4f0] sm:$0xff]
  %v201 = vld [vmem:[%s1 + $0x4f8] sm:$0xff]
  %v202 = vld [vmem:[%s1 + $0x500] sm:$0xff]
  %v203 = vld [vmem:[%s1 + $0x508] sm:$0xff]
  %v204 = vld [vmem:[%s1 + $0x510] sm:$0xff]
  %v205 = vld [vmem:[%s1 + $0x518] sm:$0xff]
  %v206 = vld [vmem:[%s1 + $0x520] sm:$0xff]
  %v207 = vld [vmem:[%s1 + $0x528] sm:$0xff]
  %v208 = vld [vmem:[%s1 + $0x530] sm:$0xff]
  %v209 = vld [vmem:[%s1 + $0x538] sm:$0xff]
  %v210 = vld [vmem:[%s1 + $0x540] sm:$0xff]
  %v211 = vld [vmem:[%s1 + $0x548] sm:$0xff]
  %v212 = vld [vmem:[%s1 + $0x550] sm:$0xff]
  %v213 = vld [vmem:[%s1 + $0x558] sm:$0xff]
  %v214 = vld [vmem:[%s1 + $0x560] sm:$0xff]
  %v215 = vld [vmem:[%s1 + $0x568] sm:$0xff]
  %v216 = vld [vmem:[%s1 + $0x570] sm:$0xff]
  %v217 = vld [vmem:[%s1 + $0x578] sm:$0xff]
  %v218 = vld [vmem:[%s1 + $0x580] sm:$0xff]
  %v219 = vld [vmem:[%s1 + $0x588] sm:$0xff]
  %v220 = vld [vmem:[%s1 + $0x590] sm:$0xff]
  %v221 = vld [vmem:[%s1 + $0x598] sm:$0xff]
  %v222 = vld [vmem:[%s1 + $0x5a0] sm:$0xff]
  %v223 = vld [vmem:[%s1 + $0x5a8] sm:$0xff]
  %v224 = vld [vmem:[%s1 + $0x5b0] sm:$0xff]
  %v225 = vld [vmem:[%s1 + $0x5b8] sm:$0xff]
  %v226 = vld [vmem:[%s1 + $0x5c0] sm:$0xff]
  %v227 = vld [vmem:[%s1 + $0x5c8] sm:$0xff]
  %v228 = vld [vmem:[%s1 + $0x5d0] sm:$0xff]
  %v229 = vld [vmem:[%s1 + $0x5d8] sm:$0xff]
  %v230 = vld [vmem:[%s1 + $0x5e0] sm:$0xff]
  %v231 = vld [vmem:[%s1 + $0x5e8] sm:$0xff]
  %v232 = vld [vmem:[%s1 + $0x5f0] sm:$0xff]
  %v233 = vld [vmem:[%s1 + $0x5f8] sm:$0xff]
  %v234 = vld [vmem:[%s1 + $0x600] sm:$0xff]
  %v235 = vld [vmem:[%s1 + $0x608] sm:$0xff]
  %v236 = vld [vmem:[%s1 + $0x610] sm:$0xff]
  %v237 = vld [vmem:[%s1 + $0x618] sm:$0xff]
  %v238 = vld [vmem:[%s1 + $0x620] sm:$0xff]
  %v239 = vld [vmem:[%s1 + $0x628] sm:$0xff]
  %v240 = vld [vmem:[%s1 + $0x630] sm:$0xff]
  %v241 = vld [vmem:[%s1 + $0x638] sm:$0xff]
  %v242 = vld [vmem:[%s1 + $0x640] sm:$0xff]
  %v243 = vld [vmem:[%s1 + $0x648] sm:$0xff]
  %v244 = vld [vmem:[%s1 + $0x650] sm:$0xff]
  %v245 = vld [vmem:[%s1 + $0x658] sm:$0xff]
  %v246 = vld [vmem:[%s1 + $0x660] sm:$0xff]
  %v247 = vld [vmem:[%s1 + $0x668] sm:$0xff]
  %v248 = vld [vmem:[%s1 + $0x670] sm:$0xff]
  %v249 = vld [vmem:[%s1 + $0x678] sm:$0xff]
  %v250 = vld [vmem:[%s1 + $0x680] sm:$0xff]
  %v251 = vld [vmem:[%s1 + $0x688] sm:$0xff]
  %v252 = vld [vmem:[%s1 + $0x690] sm:$0xff]
  %v253 = vld [vmem:[%s1 + $0x698] sm:$0xff]
  %v254 = vld [vmem:[%s1 + $0x6a0] sm:$0xff]
  %v255 = vld [vmem:[%s1 + $0x6a8] sm:$0xff]
  %v256 = vld [vmem:[%s1 + $0x6b0] sm:$0xff]
  %v257 = vld [vmem:[%s1 + $0x6b8] sm:$0xff]
  %v258 = vld [vmem:[%s1 + $0x6c0] sm:$0xff]
  %v259 = vld [vmem:[%s1 + $0x6c8] sm:$0xff]
  %v260 = vld [vmem:[%s1 + $0x6d0] sm:$0xff]
  %v261 = vld [vmem:[%s1 + $0x6d8] sm:$0xff]
  %v262 = vld [vmem:[%s1 + $0x6e0] sm:$0xff]
  %v263 = vld [vmem:[%s1 + $0x6e8] sm:$0xff]
  %v264 = vld [vmem:[%s1 + $0x6f0] sm:$0xff]
  %v265 = vld [vmem:[%s1 + $0x6f8] sm:$0xff]
  %v266 = vld [vmem:[%s1 + $0x700] sm:$0xff]
  %v267 = vld [vmem:[%s1 + $0x708] sm:$0xff]
  %v268 = vld [vmem:[%s1 + $0x710] sm:$0xff]
  %v269 = vld [vmem:[%s1 + $0x718] sm:$0xff]
  %v270 = vld [vmem:[%s1 + $0x720] sm:$0xff]
  %v271 = vld [vmem:[%s1 + $0x728] sm:$0xff]
  %v272 = vld [vmem:[%s1 + $0x730] sm:$0xff]
  %v273 = vld [vmem:[%s1 + $0x738] sm:$0xff]
  %v274 = vld [vmem:[%s1 + $0x740] sm:$0xff]
  %v275 = vld [vmem:[%s1 + $0x748] sm:$0xff]
  %v276 = vld [vmem:[%s1 + $0x750] sm:$0xff]
  %v277 = vld [vmem:[%s1 + $0x758] sm:$0xff]
  %v278 = vld [vmem:[%s1 + $0x760] sm:$0xff]
  %v279 = vld [vmem:[%s1 + $0x768] sm:$0xff]
  %v280 = vld [vmem:[%s1 + $0x770] sm:$0xff]
  %v281 = vld [vmem:[%s1 + $0x778] sm:$0xff]
  %v282 = vld [vmem:[%s1 + $0x780] sm:$0xff]
  %v283 = vld [vmem:[%s1 + $0x788] sm:$0xff]
  %v284 = vld [vmem:[%s1 + $0x790] sm:$0xff]
  %v285 = vld [vmem:[%s1 + $0x798] sm:$0xff]
  %v286 = vld [vmem:[%s1 + $0x7a0] sm:$0xff]
  %v287 = vld [vmem:[%s1 + $0x7a8] sm:$0xff]
  %v288 = vld [vmem:[%s1 + $0x7b0] sm:$0xff]
  %v289 = vld [vmem:[%s1 + $0x7b8] sm:$0xff]
  %v290 = vld [vmem:[%s1 + $0x7c0] sm:$0xff]
  %v291 = vld [vmem:[%s1 + $0x7c8] sm:$0xff]
  %v292 = vld [vmem:[%s1 + $0x7d0] sm:$0xff]
  %v293 = vld [vmem:[%s1 + $0x7d8] sm:$0xff]
  %v294 = vld [vmem:[%s1 + $0x7e0] sm:$0xff]
  %v295 = vld [vmem:[%s1 + $0x7e8] sm:$0xff]
  %v296 = vld [vmem:[%s1 + $0x7f0] sm:$0xff]
  %v297 = vld [vmem:[%s1 + $0x7f8] sm:$0xff]
  %v298 = vld [vmem:[%s2] sm:$0xf]
  %v300 = vlaneseq
  %v301 = vshrl.u32 %v300, 7
  %v302 = vsub.s32 0, %v301
  %v303 = vrot.slane %v298, %v302
  %v304 = vlaneseq
  %v305 = vshrl.u32 %v304, 7
  %v306 = vsub.s32 1, %v305
  %v307 = vrot.slane %v298, %v306
  %v308 = vlaneseq
  %v309 = vshrl.u32 %v308, 7
  %v310 = vsub.s32 2, %v309
  %v311 = vrot.slane %v298, %v310
  %v312 = vlaneseq
  %v313 = vshrl.u32 %v312, 7
  %v314 = vsub.s32 3, %v313
  %v315 = vrot.slane %v298, %v314
  %v576 = vunpack.c.l.b16 %v42
  %v577 = vunpack.c.h.b16 %v42
  %v578 = vunpack.c.l.b16 %v43
  %v579 = vunpack.c.h.b16 %v43
  %v580 = vunpack.c.l.b16 %v44
  %v581 = vunpack.c.h.b16 %v44
  %v582 = vunpack.c.l.b16 %v45
  %v583 = vunpack.c.h.b16 %v45
  %v584 = vunpack.c.l.b16 %v46
  %v585 = vunpack.c.h.b16 %v46
  %v586 = vunpack.c.l.b16 %v47
  %v587 = vunpack.c.h.b16 %v47
  %v588 = vunpack.c.l.b16 %v48
  %v589 = vunpack.c.h.b16 %v48
  %v590 = vunpack.c.l.b16 %v49
  %v591 = vunpack.c.h.b16 %v49
  %v592 = vunpack.c.l.b16 %v50
  %v593 = vunpack.c.h.b16 %v50
  %v594 = vunpack.c.l.b16 %v51
  %v595 = vunpack.c.h.b16 %v51
  %v596 = vunpack.c.l.b16 %v52
  %v597 = vunpack.c.h.b16 %v52
  %v598 = vunpack.c.l.b16 %v53
  %v599 = vunpack.c.h.b16 %v53
  %v600 = vunpack.c.l.b16 %v54
  %v601 = vunpack.c.h.b16 %v54
  %v602 = vunpack.c.l.b16 %v55
  %v603 = vunpack.c.h.b16 %v55
  %v604 = vunpack.c.l.b16 %v56
  %v605 = vunpack.c.h.b16 %v56
  %v606 = vunpack.c.l.b16 %v57
  %v607 = vunpack.c.h.b16 %v57
  %v608 = vunpack.c.l.b16 %v58
  %v609 = vunpack.c.h.b16 %v58
  %v610 = vunpack.c.l.b16 %v59
  %v611 = vunpack.c.h.b16 %v59
  %v612 = vunpack.c.l.b16 %v60
  %v613 = vunpack.c.h.b16 %v60
  %v614 = vunpack.c.l.b16 %v61
  %v615 = vunpack.c.h.b16 %v61
  %v616 = vunpack.c.l.b16 %v62
  %v617 = vunpack.c.h.b16 %v62
  %v618 = vunpack.c.l.b16 %v63
  %v619 = vunpack.c.h.b16 %v63
  %v620 = vunpack.c.l.b16 %v64
  %v621 = vunpack.c.h.b16 %v64
  %v622 = vunpack.c.l.b16 %v65
  %v623 = vunpack.c.h.b16 %v65
  %v624 = vunpack.c.l.b16 %v66
  %v625 = vunpack.c.h.b16 %v66
  %v626 = vunpack.c.l.b16 %v67
  %v627 = vunpack.c.h.b16 %v67
  %v628 = vunpack.c.l.b16 %v68
  %v629 = vunpack.c.h.b16 %v68
  %v630 = vunpack.c.l.b16 %v69
  %v631 = vunpack.c.h.b16 %v69
  %v632 = vunpack.c.l.b16 %v70
  %v633 = vunpack.c.h.b16 %v70
  %v634 = vunpack.c.l.b16 %v71
  %v635 = vunpack.c.h.b16 %v71
  %v636 = vunpack.c.l.b16 %v72
  %v637 = vunpack.c.h.b16 %v72
  %v638 = vunpack.c.l.b16 %v73
  %v639 = vunpack.c.h.b16 %v73
  %v640 = vunpack.c.l.b16 %v74
  %v641 = vunpack.c.h.b16 %v74
  %v642 = vunpack.c.l.b16 %v75
  %v643 = vunpack.c.h.b16 %v75
  %v644 = vunpack.c.l.b16 %v76
  %v645 = vunpack.c.h.b16 %v76
  %v646 = vunpack.c.l.b16 %v77
  %v647 = vunpack.c.h.b16 %v77
  %v648 = vunpack.c.l.b16 %v78
  %v649 = vunpack.c.h.b16 %v78
  %v650 = vunpack.c.l.b16 %v79
  %v651 = vunpack.c.h.b16 %v79
  %v652 = vunpack.c.l.b16 %v80
  %v653 = vunpack.c.h.b16 %v80
  %v654 = vunpack.c.l.b16 %v81
  %v655 = vunpack.c.h.b16 %v81
  %v656 = vunpack.c.l.b16 %v82
  %v657 = vunpack.c.h.b16 %v82
  %v658 = vunpack.c.l.b16 %v83
  %v659 = vunpack.c.h.b16 %v83
  %v660 = vunpack.c.l.b16 %v84
  %v661 = vunpack.c.h.b16 %v84
  %v662 = vunpack.c.l.b16 %v85
  %v663 = vunpack.c.h.b16 %v85
  %v664 = vunpack.c.l.b16 %v86
  %v665 = vunpack.c.h.b16 %v86
  %v666 = vunpack.c.l.b16 %v87
  %v667 = vunpack.c.h.b16 %v87
  %v668 = vunpack.c.l.b16 %v88
  %v669 = vunpack.c.h.b16 %v88
  %v670 = vunpack.c.l.b16 %v89
  %v671 = vunpack.c.h.b16 %v89
  %v672 = vunpack.c.l.b16 %v90
  %v673 = vunpack.c.h.b16 %v90
  %v674 = vunpack.c.l.b16 %v91
  %v675 = vunpack.c.h.b16 %v91
  %v676 = vunpack.c.l.b16 %v92
  %v677 = vunpack.c.h.b16 %v92
  %v678 = vunpack.c.l.b16 %v93
  %v679 = vunpack.c.h.b16 %v93
  %v680 = vunpack.c.l.b16 %v94
  %v681 = vunpack.c.h.b16 %v94
  %v682 = vunpack.c.l.b16 %v95
  %v683 = vunpack.c.h.b16 %v95
  %v684 = vunpack.c.l.b16 %v96
  %v685 = vunpack.c.h.b16 %v96
  %v686 = vunpack.c.l.b16 %v97
  %v687 = vunpack.c.h.b16 %v97
  %v688 = vunpack.c.l.b16 %v98
  %v689 = vunpack.c.h.b16 %v98
  %v690 = vunpack.c.l.b16 %v99
  %v691 = vunpack.c.h.b16 %v99
  %v692 = vunpack.c.l.b16 %v100
  %v693 = vunpack.c.h.b16 %v100
  %v694 = vunpack.c.l.b16 %v101
  %v695 = vunpack.c.h.b16 %v101
  %v696 = vunpack.c.l.b16 %v102
  %v697 = vunpack.c.h.b16 %v102
  %v698 = vunpack.c.l.b16 %v103
  %v699 = vunpack.c.h.b16 %v103
  %v700 = vunpack.c.l.b16 %v104
  %v701 = vunpack.c.h.b16 %v104
  %v702 = vunpack.c.l.b16 %v105
  %v703 = vunpack.c.h.b16 %v105
  %v704 = vunpack.c.l.b16 %v106
  %v705 = vunpack.c.h.b16 %v106
  %v706 = vunpack.c.l.b16 %v107
  %v707 = vunpack.c.h.b16 %v107
  %v708 = vunpack.c.l.b16 %v108
  %v709 = vunpack.c.h.b16 %v108
  %v710 = vunpack.c.l.b16 %v109
  %v711 = vunpack.c.h.b16 %v109
  %v712 = vunpack.c.l.b16 %v110
  %v713 = vunpack.c.h.b16 %v110
  %v714 = vunpack.c.l.b16 %v111
  %v715 = vunpack.c.h.b16 %v111
  %v716 = vunpack.c.l.b16 %v112
  %v717 = vunpack.c.h.b16 %v112
  %v718 = vunpack.c.l.b16 %v113
  %v719 = vunpack.c.h.b16 %v113
  %v720 = vunpack.c.l.b16 %v114
  %v721 = vunpack.c.h.b16 %v114
  %v722 = vunpack.c.l.b16 %v115
  %v723 = vunpack.c.h.b16 %v115
  %v724 = vunpack.c.l.b16 %v116
  %v725 = vunpack.c.h.b16 %v116
  %v726 = vunpack.c.l.b16 %v117
  %v727 = vunpack.c.h.b16 %v117
  %v728 = vunpack.c.l.b16 %v118
  %v729 = vunpack.c.h.b16 %v118
  %v730 = vunpack.c.l.b16 %v119
  %v731 = vunpack.c.h.b16 %v119
  %v732 = vunpack.c.l.b16 %v120
  %v733 = vunpack.c.h.b16 %v120
  %v734 = vunpack.c.l.b16 %v121
  %v735 = vunpack.c.h.b16 %v121
  %v736 = vunpack.c.l.b16 %v122
  %v737 = vunpack.c.h.b16 %v122
  %v738 = vunpack.c.l.b16 %v123
  %v739 = vunpack.c.h.b16 %v123
  %v740 = vunpack.c.l.b16 %v124
  %v741 = vunpack.c.h.b16 %v124
  %v742 = vunpack.c.l.b16 %v125
  %v743 = vunpack.c.h.b16 %v125
  %v744 = vunpack.c.l.b16 %v126
  %v745 = vunpack.c.h.b16 %v126
  %v746 = vunpack.c.l.b16 %v127
  %v747 = vunpack.c.h.b16 %v127
  %v748 = vunpack.c.l.b16 %v128
  %v749 = vunpack.c.h.b16 %v128
  %v750 = vunpack.c.l.b16 %v129
  %v751 = vunpack.c.h.b16 %v129
  %v752 = vunpack.c.l.b16 %v130
  %v753 = vunpack.c.h.b16 %v130
  %v754 = vunpack.c.l.b16 %v131
  %v755 = vunpack.c.h.b16 %v131
  %v756 = vunpack.c.l.b16 %v132
  %v757 = vunpack.c.h.b16 %v132
  %v758 = vunpack.c.l.b16 %v133
  %v759 = vunpack.c.h.b16 %v133
  %v760 = vunpack.c.l.b16 %v134
  %v761 = vunpack.c.h.b16 %v134
  %v762 = vunpack.c.l.b16 %v135
  %v763 = vunpack.c.h.b16 %v135
  %v764 = vunpack.c.l.b16 %v136
  %v765 = vunpack.c.h.b16 %v136
  %v766 = vunpack.c.l.b16 %v137
  %v767 = vunpack.c.h.b16 %v137
  %v768 = vunpack.c.l.b16 %v138
  %v769 = vunpack.c.h.b16 %v138
  %v770 = vunpack.c.l.b16 %v139
  %v771 = vunpack.c.h.b16 %v139
  %v772 = vunpack.c.l.b16 %v140
  %v773 = vunpack.c.h.b16 %v140
  %v774 = vunpack.c.l.b16 %v141
  %v775 = vunpack.c.h.b16 %v141
  %v776 = vunpack.c.l.b16 %v142
  %v777 = vunpack.c.h.b16 %v142
  %v778 = vunpack.c.l.b16 %v143
  %v779 = vunpack.c.h.b16 %v143
  %v780 = vunpack.c.l.b16 %v144
  %v781 = vunpack.c.h.b16 %v144
  %v782 = vunpack.c.l.b16 %v145
  %v783 = vunpack.c.h.b16 %v145
  %v784 = vunpack.c.l.b16 %v146
  %v785 = vunpack.c.h.b16 %v146
  %v786 = vunpack.c.l.b16 %v147
  %v787 = vunpack.c.h.b16 %v147
  %v788 = vunpack.c.l.b16 %v148
  %v789 = vunpack.c.h.b16 %v148
  %v790 = vunpack.c.l.b16 %v149
  %v791 = vunpack.c.h.b16 %v149
  %v792 = vunpack.c.l.b16 %v150
  %v793 = vunpack.c.h.b16 %v150
  %v794 = vunpack.c.l.b16 %v151
  %v795 = vunpack.c.h.b16 %v151
  %v796 = vunpack.c.l.b16 %v152
  %v797 = vunpack.c.h.b16 %v152
  %v798 = vunpack.c.l.b16 %v153
  %v799 = vunpack.c.h.b16 %v153
  %v800 = vunpack.c.l.b16 %v154
  %v801 = vunpack.c.h.b16 %v154
  %v802 = vunpack.c.l.b16 %v155
  %v803 = vunpack.c.h.b16 %v155
  %v804 = vunpack.c.l.b16 %v156
  %v805 = vunpack.c.h.b16 %v156
  %v806 = vunpack.c.l.b16 %v157
  %v807 = vunpack.c.h.b16 %v157
  %v808 = vunpack.c.l.b16 %v158
  %v809 = vunpack.c.h.b16 %v158
  %v810 = vunpack.c.l.b16 %v159
  %v811 = vunpack.c.h.b16 %v159
  %v812 = vunpack.c.l.b16 %v160
  %v813 = vunpack.c.h.b16 %v160
  %v814 = vunpack.c.l.b16 %v161
  %v815 = vunpack.c.h.b16 %v161
  %v816 = vunpack.c.l.b16 %v162
  %v817 = vunpack.c.h.b16 %v162
  %v818 = vunpack.c.l.b16 %v163
  %v819 = vunpack.c.h.b16 %v163
  %v820 = vunpack.c.l.b16 %v164
  %v821 = vunpack.c.h.b16 %v164
  %v822 = vunpack.c.l.b16 %v165
  %v823 = vunpack.c.h.b16 %v165
  %v824 = vunpack.c.l.b16 %v166
  %v825 = vunpack.c.h.b16 %v166
  %v826 = vunpack.c.l.b16 %v167
  %v827 = vunpack.c.h.b16 %v167
  %v828 = vunpack.c.l.b16 %v168
  %v829 = vunpack.c.h.b16 %v168
  %v830 = vunpack.c.l.b16 %v169
  %v831 = vunpack.c.h.b16 %v169
  %v832 = vunpack.c.l.b16 %v170
  %v833 = vunpack.c.h.b16 %v170
  %v834 = vunpack.c.l.b16 %v171
  %v835 = vunpack.c.h.b16 %v171
  %v836 = vunpack.c.l.b16 %v172
  %v837 = vunpack.c.h.b16 %v172
  %v838 = vunpack.c.l.b16 %v173
  %v839 = vunpack.c.h.b16 %v173
  %v840 = vunpack.c.l.b16 %v174
  %v841 = vunpack.c.h.b16 %v174
  %v842 = vunpack.c.l.b16 %v175
  %v843 = vunpack.c.h.b16 %v175
  %v844 = vunpack.c.l.b16 %v176
  %v845 = vunpack.c.h.b16 %v176
  %v846 = vunpack.c.l.b16 %v177
  %v847 = vunpack.c.h.b16 %v177
  %v848 = vunpack.c.l.b16 %v178
  %v849 = vunpack.c.h.b16 %v178
  %v850 = vunpack.c.l.b16 %v179
  %v851 = vunpack.c.h.b16 %v179
  %v852 = vunpack.c.l.b16 %v180
  %v853 = vunpack.c.h.b16 %v180
  %v854 = vunpack.c.l.b16 %v181
  %v855 = vunpack.c.h.b16 %v181
  %v856 = vunpack.c.l.b16 %v182
  %v857 = vunpack.c.h.b16 %v182
  %v858 = vunpack.c.l.b16 %v183
  %v859 = vunpack.c.h.b16 %v183
  %v860 = vunpack.c.l.b16 %v184
  %v861 = vunpack.c.h.b16 %v184
  %v862 = vunpack.c.l.b16 %v185
  %v863 = vunpack.c.h.b16 %v185
  %v864 = vunpack.c.l.b16 %v186
  %v865 = vunpack.c.h.b16 %v186
  %v866 = vunpack.c.l.b16 %v187
  %v867 = vunpack.c.h.b16 %v187
  %v868 = vunpack.c.l.b16 %v188
  %v869 = vunpack.c.h.b16 %v188
  %v870 = vunpack.c.l.b16 %v189
  %v871 = vunpack.c.h.b16 %v189
  %v872 = vunpack.c.l.b16 %v190
  %v873 = vunpack.c.h.b16 %v190
  %v874 = vunpack.c.l.b16 %v191
  %v875 = vunpack.c.h.b16 %v191
  %v876 = vunpack.c.l.b16 %v192
  %v877 = vunpack.c.h.b16 %v192
  %v878 = vunpack.c.l.b16 %v193
  %v879 = vunpack.c.h.b16 %v193
  %v880 = vunpack.c.l.b16 %v194
  %v881 = vunpack.c.h.b16 %v194
  %v882 = vunpack.c.l.b16 %v195
  %v883 = vunpack.c.h.b16 %v195
  %v884 = vunpack.c.l.b16 %v196
  %v885 = vunpack.c.h.b16 %v196
  %v886 = vunpack.c.l.b16 %v197
  %v887 = vunpack.c.h.b16 %v197
  %v888 = vunpack.c.l.b16 %v198
  %v889 = vunpack.c.h.b16 %v198
  %v890 = vunpack.c.l.b16 %v199
  %v891 = vunpack.c.h.b16 %v199
  %v892 = vunpack.c.l.b16 %v200
  %v893 = vunpack.c.h.b16 %v200
  %v894 = vunpack.c.l.b16 %v201
  %v895 = vunpack.c.h.b16 %v201
  %v896 = vunpack.c.l.b16 %v202
  %v897 = vunpack.c.h.b16 %v202
  %v898 = vunpack.c.l.b16 %v203
  %v899 = vunpack.c.h.b16 %v203
  %v900 = vunpack.c.l.b16 %v204
  %v901 = vunpack.c.h.b16 %v204
  %v902 = vunpack.c.l.b16 %v205
  %v903 = vunpack.c.h.b16 %v205
  %v904 = vunpack.c.l.b16 %v206
  %v905 = vunpack.c.h.b16 %v206
  %v906 = vunpack.c.l.b16 %v207
  %v907 = vunpack.c.h.b16 %v207
  %v908 = vunpack.c.l.b16 %v208
  %v909 = vunpack.c.h.b16 %v208
  %v910 = vunpack.c.l.b16 %v209
  %v911 = vunpack.c.h.b16 %v209
  %v912 = vunpack.c.l.b16 %v210
  %v913 = vunpack.c.h.b16 %v210
  %v914 = vunpack.c.l.b16 %v211
  %v915 = vunpack.c.h.b16 %v211
  %v916 = vunpack.c.l.b16 %v212
  %v917 = vunpack.c.h.b16 %v212
  %v918 = vunpack.c.l.b16 %v213
  %v919 = vunpack.c.h.b16 %v213
  %v920 = vunpack.c.l.b16 %v214
  %v921 = vunpack.c.h.b16 %v214
  %v922 = vunpack.c.l.b16 %v215
  %v923 = vunpack.c.h.b16 %v215
  %v924 = vunpack.c.l.b16 %v216
  %v925 = vunpack.c.h.b16 %v216
  %v926 = vunpack.c.l.b16 %v217
  %v927 = vunpack.c.h.b16 %v217
  %v928 = vunpack.c.l.b16 %v218
  %v929 = vunpack.c.h.b16 %v218
  %v930 = vunpack.c.l.b16 %v219
  %v931 = vunpack.c.h.b16 %v219
  %v932 = vunpack.c.l.b16 %v220
  %v933 = vunpack.c.h.b16 %v220
  %v934 = vunpack.c.l.b16 %v221
  %v935 = vunpack.c.h.b16 %v221
  %v936 = vunpack.c.l.b16 %v222
  %v937 = vunpack.c.h.b16 %v222
  %v938 = vunpack.c.l.b16 %v223
  %v939 = vunpack.c.h.b16 %v223
  %v940 = vunpack.c.l.b16 %v224
  %v941 = vunpack.c.h.b16 %v224
  %v942 = vunpack.c.l.b16 %v225
  %v943 = vunpack.c.h.b16 %v225
  %v944 = vunpack.c.l.b16 %v226
  %v945 = vunpack.c.h.b16 %v226
  %v946 = vunpack.c.l.b16 %v227
  %v947 = vunpack.c.h.b16 %v227
  %v948 = vunpack.c.l.b16 %v228
  %v949 = vunpack.c.h.b16 %v228
  %v950 = vunpack.c.l.b16 %v229
  %v951 = vunpack.c.h.b16 %v229
  %v952 = vunpack.c.l.b16 %v230
  %v953 = vunpack.c.h.b16 %v230
  %v954 = vunpack.c.l.b16 %v231
  %v955 = vunpack.c.h.b16 %v231
  %v956 = vunpack.c.l.b16 %v232
  %v957 = vunpack.c.h.b16 %v232
  %v958 = vunpack.c.l.b16 %v233
  %v959 = vunpack.c.h.b16 %v233
  %v960 = vunpack.c.l.b16 %v234
  %v961 = vunpack.c.h.b16 %v234
  %v962 = vunpack.c.l.b16 %v235
  %v963 = vunpack.c.h.b16 %v235
  %v964 = vunpack.c.l.b16 %v236
  %v965 = vunpack.c.h.b16 %v236
  %v966 = vunpack.c.l.b16 %v237
  %v967 = vunpack.c.h.b16 %v237
  %v968 = vunpack.c.l.b16 %v238
  %v969 = vunpack.c.h.b16 %v238
  %v970 = vunpack.c.l.b16 %v239
  %v971 = vunpack.c.h.b16 %v239
  %v972 = vunpack.c.l.b16 %v240
  %v973 = vunpack.c.h.b16 %v240
  %v974 = vunpack.c.l.b16 %v241
  %v975 = vunpack.c.h.b16 %v241
  %v976 = vunpack.c.l.b16 %v242
  %v977 = vunpack.c.h.b16 %v242
  %v978 = vunpack.c.l.b16 %v243
  %v979 = vunpack.c.h.b16 %v243
  %v980 = vunpack.c.l.b16 %v244
  %v981 = vunpack.c.h.b16 %v244
  %v982 = vunpack.c.l.b16 %v245
  %v983 = vunpack.c.h.b16 %v245
  %v984 = vunpack.c.l.b16 %v246
  %v985 = vunpack.c.h.b16 %v246
  %v986 = vunpack.c.l.b16 %v247
  %v987 = vunpack.c.h.b16 %v247
  %v988 = vunpack.c.l.b16 %v248
  %v989 = vunpack.c.h.b16 %v248
  %v990 = vunpack.c.l.b16 %v249
  %v991 = vunpack.c.h.b16 %v249
  %v992 = vunpack.c.l.b16 %v250
  %v993 = vunpack.c.h.b16 %v250
  %v994 = vunpack.c.l.b16 %v251
  %v995 = vunpack.c.h.b16 %v251
  %v996 = vunpack.c.l.b16 %v252
  %v997 = vunpack.c.h.b16 %v252
  %v998 = vunpack.c.l.b16 %v253
  %v999 = vunpack.c.h.b16 %v253
  %v1000 = vunpack.c.l.b16 %v254
  %v1001 = vunpack.c.h.b16 %v254
  %v1002 = vunpack.c.l.b16 %v255
  %v1003 = vunpack.c.h.b16 %v255
  %v1004 = vunpack.c.l.b16 %v256
  %v1005 = vunpack.c.h.b16 %v256
  %v1006 = vunpack.c.l.b16 %v257
  %v1007 = vunpack.c.h.b16 %v257
  %v1008 = vunpack.c.l.b16 %v258
  %v1009 = vunpack.c.h.b16 %v258
  %v1010 = vunpack.c.l.b16 %v259
  %v1011 = vunpack.c.h.b16 %v259
  %v1012 = vunpack.c.l.b16 %v260
  %v1013 = vunpack.c.h.b16 %v260
  %v1014 = vunpack.c.l.b16 %v261
  %v1015 = vunpack.c.h.b16 %v261
  %v1016 = vunpack.c.l.b16 %v262
  %v1017 = vunpack.c.h.b16 %v262
  %v1018 = vunpack.c.l.b16 %v263
  %v1019 = vunpack.c.h.b16 %v263
  %v1020 = vunpack.c.l.b16 %v264
  %v1021 = vunpack.c.h.b16 %v264
  %v1022 = vunpack.c.l.b16 %v265
  %v1023 = vunpack.c.h.b16 %v265
  %v1024 = vunpack.c.l.b16 %v266
  %v1025 = vunpack.c.h.b16 %v266
  %v1026 = vunpack.c.l.b16 %v267
  %v1027 = vunpack.c.h.b16 %v267
  %v1028 = vunpack.c.l.b16 %v268
  %v1029 = vunpack.c.h.b16 %v268
  %v1030 = vunpack.c.l.b16 %v269
  %v1031 = vunpack.c.h.b16 %v269
  %v1032 = vunpack.c.l.b16 %v270
  %v1033 = vunpack.c.h.b16 %v270
  %v1034 = vunpack.c.l.b16 %v271
  %v1035 = vunpack.c.h.b16 %v271
  %v1036 = vunpack.c.l.b16 %v272
  %v1037 = vunpack.c.h.b16 %v272
  %v1038 = vunpack.c.l.b16 %v273
  %v1039 = vunpack.c.h.b16 %v273
  %v1040 = vunpack.c.l.b16 %v274
  %v1041 = vunpack.c.h.b16 %v274
  %v1042 = vunpack.c.l.b16 %v275
  %v1043 = vunpack.c.h.b16 %v275
  %v1044 = vunpack.c.l.b16 %v276
  %v1045 = vunpack.c.h.b16 %v276
  %v1046 = vunpack.c.l.b16 %v277
  %v1047 = vunpack.c.h.b16 %v277
  %v1048 = vunpack.c.l.b16 %v278
  %v1049 = vunpack.c.h.b16 %v278
  %v1050 = vunpack.c.l.b16 %v279
  %v1051 = vunpack.c.h.b16 %v279
  %v1052 = vunpack.c.l.b16 %v280
  %v1053 = vunpack.c.h.b16 %v280
  %v1054 = vunpack.c.l.b16 %v281
  %v1055 = vunpack.c.h.b16 %v281
  %v1056 = vunpack.c.l.b16 %v282
  %v1057 = vunpack.c.h.b16 %v282
  %v1058 = vunpack.c.l.b16 %v283
  %v1059 = vunpack.c.h.b16 %v283
  %v1060 = vunpack.c.l.b16 %v284
  %v1061 = vunpack.c.h.b16 %v284
  %v1062 = vunpack.c.l.b16 %v285
  %v1063 = vunpack.c.h.b16 %v285
  %v1064 = vunpack.c.l.b16 %v286
  %v1065 = vunpack.c.h.b16 %v286
  %v1066 = vunpack.c.l.b16 %v287
  %v1067 = vunpack.c.h.b16 %v287
  %v1068 = vunpack.c.l.b16 %v288
  %v1069 = vunpack.c.h.b16 %v288
  %v1070 = vunpack.c.l.b16 %v289
  %v1071 = vunpack.c.h.b16 %v289
  %v1072 = vunpack.c.l.b16 %v290
  %v1073 = vunpack.c.h.b16 %v290
  %v1074 = vunpack.c.l.b16 %v291
  %v1075 = vunpack.c.h.b16 %v291
  %v1076 = vunpack.c.l.b16 %v292
  %v1077 = vunpack.c.h.b16 %v292
  %v1078 = vunpack.c.l.b16 %v293
  %v1079 = vunpack.c.h.b16 %v293
  %v1080 = vunpack.c.l.b16 %v294
  %v1081 = vunpack.c.h.b16 %v294
  %v1082 = vunpack.c.l.b16 %v295
  %v1083 = vunpack.c.h.b16 %v295
  %v1084 = vunpack.c.l.b16 %v296
  %v1085 = vunpack.c.h.b16 %v296
  %v1086 = vunpack.c.l.b16 %v297
  %v1087 = vunpack.c.h.b16 %v297
  %v1088 = vpack.c.b16 %v580, %v576
  %v1089 = vpack.c.b16 %v581, %v577
  %v1090 = vpack.c.b16 %v582, %v578
  %v1091 = vpack.c.b16 %v583, %v579
  %v1092 = vpack.c.b16 %v588, %v584
  %v1093 = vpack.c.b16 %v589, %v585
  %v1094 = vpack.c.b16 %v590, %v586
  %v1095 = vpack.c.b16 %v591, %v587
  %v1096 = vpack.c.b16 %v596, %v592
  %v1097 = vpack.c.b16 %v597, %v593
  %v1098 = vpack.c.b16 %v598, %v594
  %v1099 = vpack.c.b16 %v599, %v595
  %v1100 = vpack.c.b16 %v604, %v600
  %v1101 = vpack.c.b16 %v605, %v601
  %v1102 = vpack.c.b16 %v606, %v602
  %v1103 = vpack.c.b16 %v607, %v603
  %v1104 = vpack.c.b16 %v612, %v608
  %v1105 = vpack.c.b16 %v613, %v609
  %v1106 = vpack.c.b16 %v614, %v610
  %v1107 = vpack.c.b16 %v615, %v611
  %v1108 = vpack.c.b16 %v620, %v616
  %v1109 = vpack.c.b16 %v621, %v617
  %v1110 = vpack.c.b16 %v622, %v618
  %v1111 = vpack.c.b16 %v623, %v619
  %v1112 = vpack.c.b16 %v628, %v624
  %v1113 = vpack.c.b16 %v629, %v625
  %v1114 = vpack.c.b16 %v630, %v626
  %v1115 = vpack.c.b16 %v631, %v627
  %v1116 = vpack.c.b16 %v636, %v632
  %v1117 = vpack.c.b16 %v637, %v633
  %v1118 = vpack.c.b16 %v638, %v634
  %v1119 = vpack.c.b16 %v639, %v635
  %v1120 = vpack.c.b16 %v644, %v640
  %v1121 = vpack.c.b16 %v645, %v641
  %v1122 = vpack.c.b16 %v646, %v642
  %v1123 = vpack.c.b16 %v647, %v643
  %v1124 = vpack.c.b16 %v652, %v648
  %v1125 = vpack.c.b16 %v653, %v649
  %v1126 = vpack.c.b16 %v654, %v650
  %v1127 = vpack.c.b16 %v655, %v651
  %v1128 = vpack.c.b16 %v660, %v656
  %v1129 = vpack.c.b16 %v661, %v657
  %v1130 = vpack.c.b16 %v662, %v658
  %v1131 = vpack.c.b16 %v663, %v659
  %v1132 = vpack.c.b16 %v668, %v664
  %v1133 = vpack.c.b16 %v669, %v665
  %v1134 = vpack.c.b16 %v670, %v666
  %v1135 = vpack.c.b16 %v671, %v667
  %v1136 = vpack.c.b16 %v676, %v672
  %v1137 = vpack.c.b16 %v677, %v673
  %v1138 = vpack.c.b16 %v678, %v674
  %v1139 = vpack.c.b16 %v679, %v675
  %v1140 = vpack.c.b16 %v684, %v680
  %v1141 = vpack.c.b16 %v685, %v681
  %v1142 = vpack.c.b16 %v686, %v682
  %v1143 = vpack.c.b16 %v687, %v683
  %v1144 = vpack.c.b16 %v692, %v688
  %v1145 = vpack.c.b16 %v693, %v689
  %v1146 = vpack.c.b16 %v694, %v690
  %v1147 = vpack.c.b16 %v695, %v691
  %v1148 = vpack.c.b16 %v700, %v696
  %v1149 = vpack.c.b16 %v701, %v697
  %v1150 = vpack.c.b16 %v702, %v698
  %v1151 = vpack.c.b16 %v703, %v699
  %v1152 = vpack.c.b16 %v708, %v704
  %v1153 = vpack.c.b16 %v709, %v705
  %v1154 = vpack.c.b16 %v710, %v706
  %v1155 = vpack.c.b16 %v711, %v707
  %v1156 = vpack.c.b16 %v716, %v712
  %v1157 = vpack.c.b16 %v717, %v713
  %v1158 = vpack.c.b16 %v718, %v714
  %v1159 = vpack.c.b16 %v719, %v715
  %v1160 = vpack.c.b16 %v724, %v720
  %v1161 = vpack.c.b16 %v725, %v721
  %v1162 = vpack.c.b16 %v726, %v722
  %v1163 = vpack.c.b16 %v727, %v723
  %v1164 = vpack.c.b16 %v732, %v728
  %v1165 = vpack.c.b16 %v733, %v729
  %v1166 = vpack.c.b16 %v734, %v730
  %v1167 = vpack.c.b16 %v735, %v731
  %v1168 = vpack.c.b16 %v740, %v736
  %v1169 = vpack.c.b16 %v741, %v737
  %v1170 = vpack.c.b16 %v742, %v738
  %v1171 = vpack.c.b16 %v743, %v739
  %v1172 = vpack.c.b16 %v748, %v744
  %v1173 = vpack.c.b16 %v749, %v745
  %v1174 = vpack.c.b16 %v750, %v746
  %v1175 = vpack.c.b16 %v751, %v747
  %v1176 = vpack.c.b16 %v756, %v752
  %v1177 = vpack.c.b16 %v757, %v753
  %v1178 = vpack.c.b16 %v758, %v754
  %v1179 = vpack.c.b16 %v759, %v755
  %v1180 = vpack.c.b16 %v764, %v760
  %v1181 = vpack.c.b16 %v765, %v761
  %v1182 = vpack.c.b16 %v766, %v762
  %v1183 = vpack.c.b16 %v767, %v763
  %v1184 = vpack.c.b16 %v772, %v768
  %v1185 = vpack.c.b16 %v773, %v769
  %v1186 = vpack.c.b16 %v774, %v770
  %v1187 = vpack.c.b16 %v775, %v771
  %v1188 = vpack.c.b16 %v780, %v776
  %v1189 = vpack.c.b16 %v781, %v777
  %v1190 = vpack.c.b16 %v782, %v778
  %v1191 = vpack.c.b16 %v783, %v779
  %v1192 = vpack.c.b16 %v788, %v784
  %v1193 = vpack.c.b16 %v789, %v785
  %v1194 = vpack.c.b16 %v790, %v786
  %v1195 = vpack.c.b16 %v791, %v787
  %v1196 = vpack.c.b16 %v796, %v792
  %v1197 = vpack.c.b16 %v797, %v793
  %v1198 = vpack.c.b16 %v798, %v794
  %v1199 = vpack.c.b16 %v799, %v795
  %v1200 = vpack.c.b16 %v804, %v800
  %v1201 = vpack.c.b16 %v805, %v801
  %v1202 = vpack.c.b16 %v806, %v802
  %v1203 = vpack.c.b16 %v807, %v803
  %v1204 = vpack.c.b16 %v812, %v808
  %v1205 = vpack.c.b16 %v813, %v809
  %v1206 = vpack.c.b16 %v814, %v810
  %v1207 = vpack.c.b16 %v815, %v811
  %v1208 = vpack.c.b16 %v820, %v816
  %v1209 = vpack.c.b16 %v821, %v817
  %v1210 = vpack.c.b16 %v822, %v818
  %v1211 = vpack.c.b16 %v823, %v819
  %v1212 = vpack.c.b16 %v828, %v824
  %v1213 = vpack.c.b16 %v829, %v825
  %v1214 = vpack.c.b16 %v830, %v826
  %v1215 = vpack.c.b16 %v831, %v827
  %v1216 = vpack.c.b16 %v836, %v832
  %v1217 = vpack.c.b16 %v837, %v833
  %v1218 = vpack.c.b16 %v838, %v834
  %v1219 = vpack.c.b16 %v839, %v835
  %v1220 = vpack.c.b16 %v844, %v840
  %v1221 = vpack.c.b16 %v845, %v841
  %v1222 = vpack.c.b16 %v846, %v842
  %v1223 = vpack.c.b16 %v847, %v843
  %v1224 = vpack.c.b16 %v852, %v848
  %v1225 = vpack.c.b16 %v853, %v849
  %v1226 = vpack.c.b16 %v854, %v850
  %v1227 = vpack.c.b16 %v855, %v851
  %v1228 = vpack.c.b16 %v860, %v856
  %v1229 = vpack.c.b16 %v861, %v857
  %v1230 = vpack.c.b16 %v862, %v858
  %v1231 = vpack.c.b16 %v863, %v859
  %v1232 = vpack.c.b16 %v868, %v864
  %v1233 = vpack.c.b16 %v869, %v865
  %v1234 = vpack.c.b16 %v870, %v866
  %v1235 = vpack.c.b16 %v871, %v867
  %v1236 = vpack.c.b16 %v876, %v872
  %v1237 = vpack.c.b16 %v877, %v873
  %v1238 = vpack.c.b16 %v878, %v874
  %v1239 = vpack.c.b16 %v879, %v875
  %v1240 = vpack.c.b16 %v884, %v880
  %v1241 = vpack.c.b16 %v885, %v881
  %v1242 = vpack.c.b16 %v886, %v882
  %v1243 = vpack.c.b16 %v887, %v883
  %v1244 = vpack.c.b16 %v892, %v888
  %v1245 = vpack.c.b16 %v893, %v889
  %v1246 = vpack.c.b16 %v894, %v890
  %v1247 = vpack.c.b16 %v895, %v891
  %v1248 = vpack.c.b16 %v900, %v896
  %v1249 = vpack.c.b16 %v901, %v897
  %v1250 = vpack.c.b16 %v902, %v898
  %v1251 = vpack.c.b16 %v903, %v899
  %v1252 = vpack.c.b16 %v908, %v904
  %v1253 = vpack.c.b16 %v909, %v905
  %v1254 = vpack.c.b16 %v910, %v906
  %v1255 = vpack.c.b16 %v911, %v907
  %v1256 = vpack.c.b16 %v916, %v912
  %v1257 = vpack.c.b16 %v917, %v913
  %v1258 = vpack.c.b16 %v918, %v914
  %v1259 = vpack.c.b16 %v919, %v915
  %v1260 = vpack.c.b16 %v924, %v920
  %v1261 = vpack.c.b16 %v925, %v921
  %v1262 = vpack.c.b16 %v926, %v922
  %v1263 = vpack.c.b16 %v927, %v923
  %v1264 = vpack.c.b16 %v932, %v928
  %v1265 = vpack.c.b16 %v933, %v929
  %v1266 = vpack.c.b16 %v934, %v930
  %v1267 = vpack.c.b16 %v935, %v931
  %v1268 = vpack.c.b16 %v940, %v936
  %v1269 = vpack.c.b16 %v941, %v937
  %v1270 = vpack.c.b16 %v942, %v938
  %v1271 = vpack.c.b16 %v943, %v939
  %v1272 = vpack.c.b16 %v948, %v944
  %v1273 = vpack.c.b16 %v949, %v945
  %v1274 = vpack.c.b16 %v950, %v946
  %v1275 = vpack.c.b16 %v951, %v947
  %v1276 = vpack.c.b16 %v956, %v952
  %v1277 = vpack.c.b16 %v957, %v953
  %v1278 = vpack.c.b16 %v958, %v954
  %v1279 = vpack.c.b16 %v959, %v955
  %v1280 = vpack.c.b16 %v964, %v960
  %v1281 = vpack.c.b16 %v965, %v961
  %v1282 = vpack.c.b16 %v966, %v962
  %v1283 = vpack.c.b16 %v967, %v963
  %v1284 = vpack.c.b16 %v972, %v968
  %v1285 = vpack.c.b16 %v973, %v969
  %v1286 = vpack.c.b16 %v974, %v970
  %v1287 = vpack.c.b16 %v975, %v971
  %v1288 = vpack.c.b16 %v980, %v976
  %v1289 = vpack.c.b16 %v981, %v977
  %v1290 = vpack.c.b16 %v982, %v978
  %v1291 = vpack.c.b16 %v983, %v979
  %v1292 = vpack.c.b16 %v988, %v984
  %v1293 = vpack.c.b16 %v989, %v985
  %v1294 = vpack.c.b16 %v990, %v986
  %v1295 = vpack.c.b16 %v991, %v987
  %v1296 = vpack.c.b16 %v996, %v992
  %v1297 = vpack.c.b16 %v997, %v993
  %v1298 = vpack.c.b16 %v998, %v994
  %v1299 = vpack.c.b16 %v999, %v995
  %v1300 = vpack.c.b16 %v1004, %v1000
  %v1301 = vpack.c.b16 %v1005, %v1001
  %v1302 = vpack.c.b16 %v1006, %v1002
  %v1303 = vpack.c.b16 %v1007, %v1003
  %v1304 = vpack.c.b16 %v1012, %v1008
  %v1305 = vpack.c.b16 %v1013, %v1009
  %v1306 = vpack.c.b16 %v1014, %v1010
  %v1307 = vpack.c.b16 %v1015, %v1011
  %v1308 = vpack.c.b16 %v1020, %v1016
  %v1309 = vpack.c.b16 %v1021, %v1017
  %v1310 = vpack.c.b16 %v1022, %v1018
  %v1311 = vpack.c.b16 %v1023, %v1019
  %v1312 = vpack.c.b16 %v1028, %v1024
  %v1313 = vpack.c.b16 %v1029, %v1025
  %v1314 = vpack.c.b16 %v1030, %v1026
  %v1315 = vpack.c.b16 %v1031, %v1027
  %v1316 = vpack.c.b16 %v1036, %v1032
  %v1317 = vpack.c.b16 %v1037, %v1033
  %v1318 = vpack.c.b16 %v1038, %v1034
  %v1319 = vpack.c.b16 %v1039, %v1035
  %v1320 = vpack.c.b16 %v1044, %v1040
  %v1321 = vpack.c.b16 %v1045, %v1041
  %v1322 = vpack.c.b16 %v1046, %v1042
  %v1323 = vpack.c.b16 %v1047, %v1043
  %v1324 = vpack.c.b16 %v1052, %v1048
  %v1325 = vpack.c.b16 %v1053, %v1049
  %v1326 = vpack.c.b16 %v1054, %v1050
  %v1327 = vpack.c.b16 %v1055, %v1051
  %v1328 = vpack.c.b16 %v1060, %v1056
  %v1329 = vpack.c.b16 %v1061, %v1057
  %v1330 = vpack.c.b16 %v1062, %v1058
  %v1331 = vpack.c.b16 %v1063, %v1059
  %v1332 = vpack.c.b16 %v1068, %v1064
  %v1333 = vpack.c.b16 %v1069, %v1065
  %v1334 = vpack.c.b16 %v1070, %v1066
  %v1335 = vpack.c.b16 %v1071, %v1067
  %v1336 = vpack.c.b16 %v1076, %v1072
  %v1337 = vpack.c.b16 %v1077, %v1073
  %v1338 = vpack.c.b16 %v1078, %v1074
  %v1339 = vpack.c.b16 %v1079, %v1075
  %v1340 = vpack.c.b16 %v1084, %v1080
  %v1341 = vpack.c.b16 %v1085, %v1081
  %v1342 = vpack.c.b16 %v1086, %v1082
  %v1343 = vpack.c.b16 %v1087, %v1083
  %1600 = vmatprep.subr.bf16.mxu0 %v1089
  %1601 = vmatpush1.bf16.msra.mxu0 %v1088
  %1602 = vmatprep.subr.bf16.mxu0 %v1093
  %1603 = vmatpush1.bf16.msra.mxu0 %v1092
  %1604 = vmatprep.subr.bf16.mxu0 %v1097
  %1605 = vmatpush1.bf16.msra.mxu0 %v1096
  %1606 = vmatprep.subr.bf16.mxu0 %v1101
  %1607 = vmatpush1.bf16.msra.mxu0 %v1100
  %1608 = vmatprep.subr.bf16.mxu0 %v1105
  %1609 = vmatpush1.bf16.msra.mxu0 %v1104
  %1610 = vmatprep.subr.bf16.mxu0 %v1109
  %1611 = vmatpush1.bf16.msra.mxu0 %v1108
  %1612 = vmatprep.subr.bf16.mxu0 %v1113
  %1613 = vmatpush1.bf16.msra.mxu0 %v1112
  %1614 = vmatprep.subr.bf16.mxu0 %v1117
  %1615 = vmatpush1.bf16.msra.mxu0 %v1116
  %1616 = vmatprep.subr.bf16.mxu0 %v1121
  %1617 = vmatpush1.bf16.msra.mxu0 %v1120
  %1618 = vmatprep.subr.bf16.mxu0 %v1125
  %1619 = vmatpush1.bf16.msra.mxu0 %v1124
  %1620 = vmatprep.subr.bf16.mxu0 %v1129
  %1621 = vmatpush1.bf16.msra.mxu0 %v1128
  %1622 = vmatprep.subr.bf16.mxu0 %v1133
  %1623 = vmatpush1.bf16.msra.mxu0 %v1132
  %1624 = vmatprep.subr.bf16.mxu0 %v1137
  %1625 = vmatpush1.bf16.msra.mxu0 %v1136
  %1626 = vmatprep.subr.bf16.mxu0 %v1141
  %1627 = vmatpush1.bf16.msra.mxu0 %v1140
  %1628 = vmatprep.subr.bf16.mxu0 %v1145
  %1629 = vmatpush1.bf16.msra.mxu0 %v1144
  %1630 = vmatprep.subr.bf16.mxu0 %v1149
  %1631 = vmatpush1.bf16.msra.mxu0 %v1148
  %1632 = vmatprep.mubr.bf16.mxu0 %v35
  %1633 = vmatmul.mubr.bf16.gmra.mrb[0].mxu0 %v34
  %v1634 = vpop.f32.mrb[0].mxu0
  %v1635 = vadd.f32 %v303, %v1634
  %v1636 = vpop.f32.mrb[0].mxu0
  %v1637 = vadd.f32 %v307, %v1636
  %v1638 = vpop.f32.mrb[0].mxu0
  %v1639 = vpop.f32.mrb[0].mxu0
  %1640 = vdwg.mxu0
  %1641 = vmatprep.subr.bf16.mxu0 %v1153
  %1642 = vmatpush1.bf16.msra.mxu0 %v1152
  %1643 = vmatprep.subr.bf16.mxu0 %v1157
  %1644 = vmatpush1.bf16.msra.mxu0 %v1156
  %1645 = vmatprep.subr.bf16.mxu0 %v1161
  %1646 = vmatpush1.bf16.msra.mxu0 %v1160
  %1647 = vmatprep.subr.bf16.mxu0 %v1165
  %1648 = vmatpush1.bf16.msra.mxu0 %v1164
  %1649 = vmatprep.subr.bf16.mxu0 %v1169
  %1650 = vmatpush1.bf16.msra.mxu0 %v1168
  %1651 = vmatprep.subr.bf16.mxu0 %v1173
  %1652 = vmatpush1.bf16.msra.mxu0 %v1172
  %1653 = vmatprep.subr.bf16.mxu0 %v1177
  %1654 = vmatpush1.bf16.msra.mxu0 %v1176
  %1655 = vmatprep.subr.bf16.mxu0 %v1181
  %1656 = vmatpush1.bf16.msra.mxu0 %v1180
  %1657 = vmatprep.subr.bf16.mxu0 %v1185
  %1658 = vmatpush1.bf16.msra.mxu0 %v1184
  %1659 = vmatprep.subr.bf16.mxu0 %v1189
  %1660 = vmatpush1.bf16.msra.mxu0 %v1188
  %1661 = vmatprep.subr.bf16.mxu0 %v1193
  %1662 = vmatpush1.bf16.msra.mxu0 %v1192
  %1663 = vmatprep.subr.bf16.mxu0 %v1197
  %1664 = vmatpush1.bf16.msra.mxu0 %v1196
  %1665 = vmatprep.subr.bf16.mxu0 %v1201
  %1666 = vmatpush1.bf16.msra.mxu0 %v1200
  %1667 = vmatprep.subr.bf16.mxu0 %v1205
  %1668 = vmatpush1.bf16.msra.mxu0 %v1204
  %1669 = vmatprep.subr.bf16.mxu0 %v1209
  %1670 = vmatpush1.bf16.msra.mxu0 %v1208
  %1671 = vmatprep.subr.bf16.mxu0 %v1213
  %1672 = vmatpush1.bf16.msra.mxu0 %v1212
  %1673 = vmatprep.mubr.bf16.mxu0 %v37
  %1674 = vmatmul.mubr.bf16.gmra.mrb[0].mxu0 %v36
  %v1675 = vpop.f32.mrb[0].mxu0
  %v1676 = vadd.f32 %v1635, %v1675
  %v1677 = vpop.f32.mrb[0].mxu0
  %v1678 = vadd.f32 %v1637, %v1677
  %v1679 = vpop.f32.mrb[0].mxu0
  %v1680 = vpop.f32.mrb[0].mxu0
  %1681 = vdwg.mxu0
  %1682 = vmatprep.subr.bf16.mxu0 %v1217
  %1683 = vmatpush1.bf16.msra.mxu0 %v1216
  %1684 = vmatprep.subr.bf16.mxu0 %v1221
  %1685 = vmatpush1.bf16.msra.mxu0 %v1220
  %1686 = vmatprep.subr.bf16.mxu0 %v1225
  %1687 = vmatpush1.bf16.msra.mxu0 %v1224
  %1688 = vmatprep.subr.bf16.mxu0 %v1229
  %1689 = vmatpush1.bf16.msra.mxu0 %v1228
  %1690 = vmatprep.subr.bf16.mxu0 %v1233
  %1691 = vmatpush1.bf16.msra.mxu0 %v1232
  %1692 = vmatprep.subr.bf16.mxu0 %v1237
  %1693 = vmatpush1.bf16.msra.mxu0 %v1236
  %1694 = vmatprep.subr.bf16.mxu0 %v1241
  %1695 = vmatpush1.bf16.msra.mxu0 %v1240
  %1696 = vmatprep.subr.bf16.mxu0 %v1245
  %1697 = vmatpush1.bf16.msra.mxu0 %v1244
  %1698 = vmatprep.subr.bf16.mxu0 %v1249
  %1699 = vmatpush1.bf16.msra.mxu0 %v1248
  %1700 = vmatprep.subr.bf16.mxu0 %v1253
  %1701 = vmatpush1.bf16.msra.mxu0 %v1252
  %1702 = vmatprep.subr.bf16.mxu0 %v1257
  %1703 = vmatpush1.bf16.msra.mxu0 %v1256
  %1704 = vmatprep.subr.bf16.mxu0 %v1261
  %1705 = vmatpush1.bf16.msra.mxu0 %v1260
  %1706 = vmatprep.subr.bf16.mxu0 %v1265
  %1707 = vmatpush1.bf16.msra.mxu0 %v1264
  %1708 = vmatprep.subr.bf16.mxu0 %v1269
  %1709 = vmatpush1.bf16.msra.mxu0 %v1268
  %1710 = vmatprep.subr.bf16.mxu0 %v1273
  %1711 = vmatpush1.bf16.msra.mxu0 %v1272
  %1712 = vmatprep.subr.bf16.mxu0 %v1277
  %1713 = vmatpush1.bf16.msra.mxu0 %v1276
  %1714 = vmatprep.mubr.bf16.mxu0 %v39
  %1715 = vmatmul.mubr.bf16.gmra.mrb[0].mxu0 %v38
  %v1716 = vpop.f32.mrb[0].mxu0
  %v1717 = vadd.f32 %v1676, %v1716
  %v1718 = vpop.f32.mrb[0].mxu0
  %v1719 = vadd.f32 %v1678, %v1718
  %v1720 = vpop.f32.mrb[0].mxu0
  %v1721 = vpop.f32.mrb[0].mxu0
  %1722 = vdwg.mxu0
  %1723 = vmatprep.subr.bf16.mxu0 %v1281
  %1724 = vmatpush1.bf16.msra.mxu0 %v1280
  %1725 = vmatprep.subr.bf16.mxu0 %v1285
  %1726 = vmatpush1.bf16.msra.mxu0 %v1284
  %1727 = vmatprep.subr.bf16.mxu0 %v1289
  %1728 = vmatpush1.bf16.msra.mxu0 %v1288
  %1729 = vmatprep.subr.bf16.mxu0 %v1293
  %1730 = vmatpush1.bf16.msra.mxu0 %v1292
  %1731 = vmatprep.subr.bf16.mxu0 %v1297
  %1732 = vmatpush1.bf16.msra.mxu0 %v1296
  %1733 = vmatprep.subr.bf16.mxu0 %v1301
  %1734 = vmatpush1.bf16.msra.mxu0 %v1300
  %1735 = vmatprep.subr.bf16.mxu0 %v1305
  %1736 = vmatpush1.bf16.msra.mxu0 %v1304
  %1737 = vmatprep.subr.bf16.mxu0 %v1309
  %1738 = vmatpush1.bf16.msra.mxu0 %v1308
  %1739 = vmatprep.subr.bf16.mxu0 %v1313
  %1740 = vmatpush1.bf16.msra.mxu0 %v1312
  %1741 = vmatprep.subr.bf16.mxu0 %v1317
  %1742 = vmatpush1.bf16.msra.mxu0 %v1316
  %1743 = vmatprep.subr.bf16.mxu0 %v1321
  %1744 = vmatpush1.bf16.msra.mxu0 %v1320
  %1745 = vmatprep.subr.bf16.mxu0 %v1325
  %1746 = vmatpush1.bf16.msra.mxu0 %v1324
  %1747 = vmatprep.subr.bf16.mxu0 %v1329
  %1748 = vmatpush1.bf16.msra.mxu0 %v1328
  %1749 = vmatprep.subr.bf16.mxu0 %v1333
  %1750 = vmatpush1.bf16.msra.mxu0 %v1332
  %1751 = vmatprep.subr.bf16.mxu0 %v1337
  %1752 = vmatpush1.bf16.msra.mxu0 %v1336
  %1753 = vmatprep.subr.bf16.mxu0 %v1341
  %1754 = vmatpush1.bf16.msra.mxu0 %v1340
  %1755 = vmatprep.mubr.bf16.mxu0 %v41
  %1756 = vmatmul.mubr.bf16.gmra.mrb[0].mxu0 %v40
  %v1757 = vpop.f32.mrb[0].mxu0
  %v1758 = vadd.f32 %v1717, %v1757
  %v1759 = vpop.f32.mrb[0].mxu0
  %v1760 = vadd.f32 %v1719, %v1759
  %v1761 = vpop.f32.mrb[0].mxu0
  %v1762 = vpop.f32.mrb[0].mxu0
  %1763 = vdwg.mxu0
  %1764 = vmatprep.subr.bf16.mxu0 %v1091
  %1765 = vmatpush1.bf16.msra.mxu0 %v1090
  %1766 = vmatprep.subr.bf16.mxu0 %v1095
  %1767 = vmatpush1.bf16.msra.mxu0 %v1094
  %1768 = vmatprep.subr.bf16.mxu0 %v1099
  %1769 = vmatpush1.bf16.msra.mxu0 %v1098
  %1770 = vmatprep.subr.bf16.mxu0 %v1103
  %1771 = vmatpush1.bf16.msra.mxu0 %v1102
  %1772 = vmatprep.subr.bf16.mxu0 %v1107
  %1773 = vmatpush1.bf16.msra.mxu0 %v1106
  %1774 = vmatprep.subr.bf16.mxu0 %v1111
  %1775 = vmatpush1.bf16.msra.mxu0 %v1110
  %1776 = vmatprep.subr.bf16.mxu0 %v1115
  %1777 = vmatpush1.bf16.msra.mxu0 %v1114
  %1778 = vmatprep.subr.bf16.mxu0 %v1119
  %1779 = vmatpush1.bf16.msra.mxu0 %v1118
  %1780 = vmatprep.subr.bf16.mxu0 %v1123
  %1781 = vmatpush1.bf16.msra.mxu0 %v1122
  %1782 = vmatprep.subr.bf16.mxu0 %v1127
  %1783 = vmatpush1.bf16.msra.mxu0 %v1126
  %1784 = vmatprep.subr.bf16.mxu0 %v1131
  %1785 = vmatpush1.bf16.msra.mxu0 %v1130
  %1786 = vmatprep.subr.bf16.mxu0 %v1135
  %1787 = vmatpush1.bf16.msra.mxu0 %v1134
  %1788 = vmatprep.subr.bf16.mxu0 %v1139
  %1789 = vmatpush1.bf16.msra.mxu0 %v1138
  %1790 = vmatprep.subr.bf16.mxu0 %v1143
  %1791 = vmatpush1.bf16.msra.mxu0 %v1142
  %1792 = vmatprep.subr.bf16.mxu0 %v1147
  %1793 = vmatpush1.bf16.msra.mxu0 %v1146
  %1794 = vmatprep.subr.bf16.mxu0 %v1151
  %1795 = vmatpush1.bf16.msra.mxu0 %v1150
  %1796 = vmatprep.mubr.bf16.mxu0 %v35
  %1797 = vmatmul.mubr.bf16.gmra.mrb[0].mxu0 %v34
  %v1798 = vpop.f32.mrb[0].mxu0
  %v1799 = vadd.f32 %v311, %v1798
  %v1800 = vpop.f32.mrb[0].mxu0
  %v1801 = vadd.f32 %v315, %v1800
  %v1802 = vpop.f32.mrb[0].mxu0
  %v1803 = vpop.f32.mrb[0].mxu0
  %1804 = vdwg.mxu0
  %1805 = vmatprep.subr.bf16.mxu0 %v1155
  %1806 = vmatpush1.bf16.msra.mxu0 %v1154
  %1807 = vmatprep.subr.bf16.mxu0 %v1159
  %1808 = vmatpush1.bf16.msra.mxu0 %v1158
  %1809 = vmatprep.subr.bf16.mxu0 %v1163
  %1810 = vmatpush1.bf16.msra.mxu0 %v1162
  %1811 = vmatprep.subr.bf16.mxu0 %v1167
  %1812 = vmatpush1.bf16.msra.mxu0 %v1166
  %1813 = vmatprep.subr.bf16.mxu0 %v1171
  %1814 = vmatpush1.bf16.msra.mxu0 %v1170
  %1815 = vmatprep.subr.bf16.mxu0 %v1175
  %1816 = vmatpush1.bf16.msra.mxu0 %v1174
  %1817 = vmatprep.subr.bf16.mxu0 %v1179
  %1818 = vmatpush1.bf16.msra.mxu0 %v1178
  %1819 = vmatprep.subr.bf16.mxu0 %v1183
  %1820 = vmatpush1.bf16.msra.mxu0 %v1182
  %1821 = vmatprep.subr.bf16.mxu0 %v1187
  %1822 = vmatpush1.bf16.msra.mxu0 %v1186
  %1823 = vmatprep.subr.bf16.mxu0 %v1191
  %1824 = vmatpush1.bf16.msra.mxu0 %v1190
  %1825 = vmatprep.subr.bf16.mxu0 %v1195
  %1826 = vmatpush1.bf16.msra.mxu0 %v1194
  %1827 = vmatprep.subr.bf16.mxu0 %v1199
  %1828 = vmatpush1.bf16.msra.mxu0 %v1198
  %1829 = vmatprep.subr.bf16.mxu0 %v1203
  %1830 = vmatpush1.bf16.msra.mxu0 %v1202
  %1831 = vmatprep.subr.bf16.mxu0 %v1207
  %1832 = vmatpush1.bf16.msra.mxu0 %v1206
  %1833 = vmatprep.subr.bf16.mxu0 %v1211
  %1834 = vmatpush1.bf16.msra.mxu0 %v1210
  %1835 = vmatprep.subr.bf16.mxu0 %v1215
  %1836 = vmatpush1.bf16.msra.mxu0 %v1214
  %1837 = vmatprep.mubr.bf16.mxu0 %v37
  %1838 = vmatmul.mubr.bf16.gmra.mrb[0].mxu0 %v36
  %v1839 = vpop.f32.mrb[0].mxu0
  %v1840 = vadd.f32 %v1799, %v1839
  %v1841 = vpop.f32.mrb[0].mxu0
  %v1842 = vadd.f32 %v1801, %v1841
  %v1843 = vpop.f32.mrb[0].mxu0
  %v1844 = vpop.f32.mrb[0].mxu0
  %1845 = vdwg.mxu0
  %1846 = vmatprep.subr.bf16.mxu0 %v1219
  %1847 = vmatpush1.bf16.msra.mxu0 %v1218
  %1848 = vmatprep.subr.bf16.mxu0 %v1223
  %1849 = vmatpush1.bf16.msra.mxu0 %v1222
  %1850 = vmatprep.subr.bf16.mxu0 %v1227
  %1851 = vmatpush1.bf16.msra.mxu0 %v1226
  %1852 = vmatprep.subr.bf16.mxu0 %v1231
  %1853 = vmatpush1.bf16.msra.mxu0 %v1230
  %1854 = vmatprep.subr.bf16.mxu0 %v1235
  %1855 = vmatpush1.bf16.msra.mxu0 %v1234
  %1856 = vmatprep.subr.bf16.mxu0 %v1239
  %1857 = vmatpush1.bf16.msra.mxu0 %v1238
  %1858 = vmatprep.subr.bf16.mxu0 %v1243
  %1859 = vmatpush1.bf16.msra.mxu0 %v1242
  %1860 = vmatprep.subr.bf16.mxu0 %v1247
  %1861 = vmatpush1.bf16.msra.mxu0 %v1246
  %1862 = vmatprep.subr.bf16.mxu0 %v1251
  %1863 = vmatpush1.bf16.msra.mxu0 %v1250
  %1864 = vmatprep.subr.bf16.mxu0 %v1255
  %1865 = vmatpush1.bf16.msra.mxu0 %v1254
  %1866 = vmatprep.subr.bf16.mxu0 %v1259
  %1867 = vmatpush1.bf16.msra.mxu0 %v1258
  %1868 = vmatprep.subr.bf16.mxu0 %v1263
  %1869 = vmatpush1.bf16.msra.mxu0 %v1262
  %1870 = vmatprep.subr.bf16.mxu0 %v1267
  %1871 = vmatpush1.bf16.msra.mxu0 %v1266
  %1872 = vmatprep.subr.bf16.mxu0 %v1271
  %1873 = vmatpush1.bf16.msra.mxu0 %v1270
  %1874 = vmatprep.subr.bf16.mxu0 %v1275
  %1875 = vmatpush1.bf16.msra.mxu0 %v1274
  %1876 = vmatprep.subr.bf16.mxu0 %v1279
  %1877 = vmatpush1.bf16.msra.mxu0 %v1278
  %1878 = vmatprep.mubr.bf16.mxu0 %v39
  %1879 = vmatmul.mubr.bf16.gmra.mrb[0].mxu0 %v38
  %v1880 = vpop.f32.mrb[0].mxu0
  %v1881 = vadd.f32 %v1840, %v1880
  %v1882 = vpop.f32.mrb[0].mxu0
  %v1883 = vadd.f32 %v1842, %v1882
  %v1884 = vpop.f32.mrb[0].mxu0
  %v1885 = vpop.f32.mrb[0].mxu0
  %1886 = vdwg.mxu0
  %1887 = vmatprep.subr.bf16.mxu0 %v1283
  %1888 = vmatpush1.bf16.msra.mxu0 %v1282
  %1889 = vmatprep.subr.bf16.mxu0 %v1287
  %1890 = vmatpush1.bf16.msra.mxu0 %v1286
  %1891 = vmatprep.subr.bf16.mxu0 %v1291
  %1892 = vmatpush1.bf16.msra.mxu0 %v1290
  %1893 = vmatprep.subr.bf16.mxu0 %v1295
  %1894 = vmatpush1.bf16.msra.mxu0 %v1294
  %1895 = vmatprep.subr.bf16.mxu0 %v1299
  %1896 = vmatpush1.bf16.msra.mxu0 %v1298
  %1897 = vmatprep.subr.bf16.mxu0 %v1303
  %1898 = vmatpush1.bf16.msra.mxu0 %v1302
  %1899 = vmatprep.subr.bf16.mxu0 %v1307
  %1900 = vmatpush1.bf16.msra.mxu0 %v1306
  %1901 = vmatprep.subr.bf16.mxu0 %v1311
  %1902 = vmatpush1.bf16.msra.mxu0 %v1310
  %1903 = vmatprep.subr.bf16.mxu0 %v1315
  %1904 = vmatpush1.bf16.msra.mxu0 %v1314
  %1905 = vmatprep.subr.bf16.mxu0 %v1319
  %1906 = vmatpush1.bf16.msra.mxu0 %v1318
  %1907 = vmatprep.subr.bf16.mxu0 %v1323
  %1908 = vmatpush1.bf16.msra.mxu0 %v1322
  %1909 = vmatprep.subr.bf16.mxu0 %v1327
  %1910 = vmatpush1.bf16.msra.mxu0 %v1326
  %1911 = vmatprep.subr.bf16.mxu0 %v1331
  %1912 = vmatpush1.bf16.msra.mxu0 %v1330
  %1913 = vmatprep.subr.bf16.mxu0 %v1335
  %1914 = vmatpush1.bf16.msra.mxu0 %v1334
  %1915 = vmatprep.subr.bf16.mxu0 %v1339
  %1916 = vmatpush1.bf16.msra.mxu0 %v1338
  %1917 = vmatprep.subr.bf16.mxu0 %v1343
  %1918 = vmatpush1.bf16.msra.mxu0 %v1342
  %1919 = vmatprep.mubr.bf16.mxu0 %v41
  %1920 = vmatmul.mubr.bf16.gmra.mrb[0].mxu0 %v40
  %v1921 = vpop.f32.mrb[0].mxu0
  %v1922 = vadd.f32 %v1881, %v1921
  %v1923 = vpop.f32.mrb[0].mxu0
  %v1924 = vadd.f32 %v1883, %v1923
  %v1925 = vpop.f32.mrb[0].mxu0
  %v1926 = vpop.f32.mrb[0].mxu0
  %1927 = vdwg.mxu0
  %v1928 = vmax.f32 %v1758, 0.0
  %v1929 = vmax.f32 %v1760, 0.0
  %v1930 = vmax.f32 %v1922, 0.0
  %v1931 = vmax.f32 %v1924, 0.0
  %v1932 = vpack.c.bf16 %v1928, %v1928
  %v1933 = vpack.c.bf16 %v1929, %v1929
  %v1934 = vpack.c.bf16 %v1930, %v1930
  %v1935 = vpack.c.bf16 %v1931, %v1931
  %v1936 = vld [vmem:[%s3] sm:$0xff]
  %v1937 = vld [vmem:[%s3 + $0x8] sm:$0xff]
  %v1938 = vld [vmem:[%s3 + $0x10] sm:$0xff]
  %v1939 = vld [vmem:[%s3 + $0x18] sm:$0xff]
  %v1940 = vld [vmem:[%s3 + $0x20] sm:$0xff]
  %v1941 = vld [vmem:[%s3 + $0x28] sm:$0xff]
  %v1942 = vld [vmem:[%s3 + $0x30] sm:$0xff]
  %v1943 = vld [vmem:[%s3 + $0x38] sm:$0xff]
  %v1944 = vld [vmem:[%s3 + $0x40] sm:$0xff]
  %v1945 = vld [vmem:[%s3 + $0x48] sm:$0xff]
  %v1946 = vld [vmem:[%s3 + $0x50] sm:$0xff]
  %v1947 = vld [vmem:[%s3 + $0x58] sm:$0xff]
  %v1948 = vld [vmem:[%s3 + $0x60] sm:$0xff]
  %v1949 = vld [vmem:[%s3 + $0x68] sm:$0xff]
  %v1950 = vld [vmem:[%s3 + $0x70] sm:$0xff]
  %v1951 = vld [vmem:[%s3 + $0x78] sm:$0xff]
  %v1952 = vld [vmem:[%s3 + $0x80] sm:$0xff]
  %v1953 = vld [vmem:[%s3 + $0x88] sm:$0xff]
  %v1954 = vld [vmem:[%s3 + $0x90] sm:$0xff]
  %v1955 = vld [vmem:[%s3 + $0x98] sm:$0xff]
  %v1956 = vld [vmem:[%s3 + $0xa0] sm:$0xff]
  %v1957 = vld [vmem:[%s3 + $0xa8] sm:$0xff]
  %v1958 = vld [vmem:[%s3 + $0xb0] sm:$0xff]
  %v1959 = vld [vmem:[%s3 + $0xb8] sm:$0xff]
  %v1960 = vld [vmem:[%s3 + $0xc0] sm:$0xff]
  %v1961 = vld [vmem:[%s3 + $0xc8] sm:$0xff]
  %v1962 = vld [vmem:[%s3 + $0xd0] sm:$0xff]
  %v1963 = vld [vmem:[%s3 + $0xd8] sm:$0xff]
  %v1964 = vld [vmem:[%s3 + $0xe0] sm:$0xff]
  %v1965 = vld [vmem:[%s3 + $0xe8] sm:$0xff]
  %v1966 = vld [vmem:[%s3 + $0xf0] sm:$0xff]
  %v1967 = vld [vmem:[%s3 + $0xf8] sm:$0xff]
  %v1968 = vld [vmem:[%s3 + $0x100] sm:$0xff]
  %v1969 = vld [vmem:[%s3 + $0x108] sm:$0xff]
  %v1970 = vld [vmem:[%s3 + $0x110] sm:$0xff]
  %v1971 = vld [vmem:[%s3 + $0x118] sm:$0xff]
  %v1972 = vld [vmem:[%s3 + $0x120] sm:$0xff]
  %v1973 = vld [vmem:[%s3 + $0x128] sm:$0xff]
  %v1974 = vld [vmem:[%s3 + $0x130] sm:$0xff]
  %v1975 = vld [vmem:[%s3 + $0x138] sm:$0xff]
  %v1976 = vld [vmem:[%s3 + $0x140] sm:$0xff]
  %v1977 = vld [vmem:[%s3 + $0x148] sm:$0xff]
  %v1978 = vld [vmem:[%s3 + $0x150] sm:$0xff]
  %v1979 = vld [vmem:[%s3 + $0x158] sm:$0xff]
  %v1980 = vld [vmem:[%s3 + $0x160] sm:$0xff]
  %v1981 = vld [vmem:[%s3 + $0x168] sm:$0xff]
  %v1982 = vld [vmem:[%s3 + $0x170] sm:$0xff]
  %v1983 = vld [vmem:[%s3 + $0x178] sm:$0xff]
  %v1984 = vld [vmem:[%s3 + $0x180] sm:$0xff]
  %v1985 = vld [vmem:[%s3 + $0x188] sm:$0xff]
  %v1986 = vld [vmem:[%s3 + $0x190] sm:$0xff]
  %v1987 = vld [vmem:[%s3 + $0x198] sm:$0xff]
  %v1988 = vld [vmem:[%s3 + $0x1a0] sm:$0xff]
  %v1989 = vld [vmem:[%s3 + $0x1a8] sm:$0xff]
  %v1990 = vld [vmem:[%s3 + $0x1b0] sm:$0xff]
  %v1991 = vld [vmem:[%s3 + $0x1b8] sm:$0xff]
  %v1992 = vld [vmem:[%s3 + $0x1c0] sm:$0xff]
  %v1993 = vld [vmem:[%s3 + $0x1c8] sm:$0xff]
  %v1994 = vld [vmem:[%s3 + $0x1d0] sm:$0xff]
  %v1995 = vld [vmem:[%s3 + $0x1d8] sm:$0xff]
  %v1996 = vld [vmem:[%s3 + $0x1e0] sm:$0xff]
  %v1997 = vld [vmem:[%s3 + $0x1e8] sm:$0xff]
  %v1998 = vld [vmem:[%s3 + $0x1f0] sm:$0xff]
  %v1999 = vld [vmem:[%s3 + $0x1f8] sm:$0xff]
  %v2000 = vld [vmem:[%s4] sm:$0x3]
  %v2002 = vlaneseq
  %v2003 = vshrl.u32 %v2002, 7
  %v2004 = vsub.s32 0, %v2003
  %v2005 = vrot.slane %v2000, %v2004
  %v2006 = vlaneseq
  %v2007 = vshrl.u32 %v2006, 7
  %v2008 = vsub.s32 1, %v2007
  %v2009 = vrot.slane %v2000, %v2008
  %v2076 = vunpack.c.l.b16 %v1936
  %v2077 = vunpack.c.h.b16 %v1936
  %v2078 = vunpack.c.l.b16 %v1937
  %v2079 = vunpack.c.h.b16 %v1937
  %v2080 = vunpack.c.l.b16 %v1938
  %v2081 = vunpack.c.h.b16 %v1938
  %v2082 = vunpack.c.l.b16 %v1939
  %v2083 = vunpack.c.h.b16 %v1939
  %v2084 = vunpack.c.l.b16 %v1940
  %v2085 = vunpack.c.h.b16 %v1940
  %v2086 = vunpack.c.l.b16 %v1941
  %v2087 = vunpack.c.h.b16 %v1941
  %v2088 = vunpack.c.l.b16 %v1942
  %v2089 = vunpack.c.h.b16 %v1942
  %v2090 = vunpack.c.l.b16 %v1943
  %v2091 = vunpack.c.h.b16 %v1943
  %v2092 = vunpack.c.l.b16 %v1944
  %v2093 = vunpack.c.h.b16 %v1944
  %v2094 = vunpack.c.l.b16 %v1945
  %v2095 = vunpack.c.h.b16 %v1945
  %v2096 = vunpack.c.l.b16 %v1946
  %v2097 = vunpack.c.h.b16 %v1946
  %v2098 = vunpack.c.l.b16 %v1947
  %v2099 = vunpack.c.h.b16 %v1947
  %v2100 = vunpack.c.l.b16 %v1948
  %v2101 = vunpack.c.h.b16 %v1948
  %v2102 = vunpack.c.l.b16 %v1949
  %v2103 = vunpack.c.h.b16 %v1949
  %v2104 = vunpack.c.l.b16 %v1950
  %v2105 = vunpack.c.h.b16 %v1950
  %v2106 = vunpack.c.l.b16 %v1951
  %v2107 = vunpack.c.h.b16 %v1951
  %v2108 = vunpack.c.l.b16 %v1952
  %v2109 = vunpack.c.h.b16 %v1952
  %v2110 = vunpack.c.l.b16 %v1953
  %v2111 = vunpack.c.h.b16 %v1953
  %v2112 = vunpack.c.l.b16 %v1954
  %v2113 = vunpack.c.h.b16 %v1954
  %v2114 = vunpack.c.l.b16 %v1955
  %v2115 = vunpack.c.h.b16 %v1955
  %v2116 = vunpack.c.l.b16 %v1956
  %v2117 = vunpack.c.h.b16 %v1956
  %v2118 = vunpack.c.l.b16 %v1957
  %v2119 = vunpack.c.h.b16 %v1957
  %v2120 = vunpack.c.l.b16 %v1958
  %v2121 = vunpack.c.h.b16 %v1958
  %v2122 = vunpack.c.l.b16 %v1959
  %v2123 = vunpack.c.h.b16 %v1959
  %v2124 = vunpack.c.l.b16 %v1960
  %v2125 = vunpack.c.h.b16 %v1960
  %v2126 = vunpack.c.l.b16 %v1961
  %v2127 = vunpack.c.h.b16 %v1961
  %v2128 = vunpack.c.l.b16 %v1962
  %v2129 = vunpack.c.h.b16 %v1962
  %v2130 = vunpack.c.l.b16 %v1963
  %v2131 = vunpack.c.h.b16 %v1963
  %v2132 = vunpack.c.l.b16 %v1964
  %v2133 = vunpack.c.h.b16 %v1964
  %v2134 = vunpack.c.l.b16 %v1965
  %v2135 = vunpack.c.h.b16 %v1965
  %v2136 = vunpack.c.l.b16 %v1966
  %v2137 = vunpack.c.h.b16 %v1966
  %v2138 = vunpack.c.l.b16 %v1967
  %v2139 = vunpack.c.h.b16 %v1967
  %v2140 = vunpack.c.l.b16 %v1968
  %v2141 = vunpack.c.h.b16 %v1968
  %v2142 = vunpack.c.l.b16 %v1969
  %v2143 = vunpack.c.h.b16 %v1969
  %v2144 = vunpack.c.l.b16 %v1970
  %v2145 = vunpack.c.h.b16 %v1970
  %v2146 = vunpack.c.l.b16 %v1971
  %v2147 = vunpack.c.h.b16 %v1971
  %v2148 = vunpack.c.l.b16 %v1972
  %v2149 = vunpack.c.h.b16 %v1972
  %v2150 = vunpack.c.l.b16 %v1973
  %v2151 = vunpack.c.h.b16 %v1973
  %v2152 = vunpack.c.l.b16 %v1974
  %v2153 = vunpack.c.h.b16 %v1974
  %v2154 = vunpack.c.l.b16 %v1975
  %v2155 = vunpack.c.h.b16 %v1975
  %v2156 = vunpack.c.l.b16 %v1976
  %v2157 = vunpack.c.h.b16 %v1976
  %v2158 = vunpack.c.l.b16 %v1977
  %v2159 = vunpack.c.h.b16 %v1977
  %v2160 = vunpack.c.l.b16 %v1978
  %v2161 = vunpack.c.h.b16 %v1978
  %v2162 = vunpack.c.l.b16 %v1979
  %v2163 = vunpack.c.h.b16 %v1979
  %v2164 = vunpack.c.l.b16 %v1980
  %v2165 = vunpack.c.h.b16 %v1980
  %v2166 = vunpack.c.l.b16 %v1981
  %v2167 = vunpack.c.h.b16 %v1981
  %v2168 = vunpack.c.l.b16 %v1982
  %v2169 = vunpack.c.h.b16 %v1982
  %v2170 = vunpack.c.l.b16 %v1983
  %v2171 = vunpack.c.h.b16 %v1983
  %v2172 = vunpack.c.l.b16 %v1984
  %v2173 = vunpack.c.h.b16 %v1984
  %v2174 = vunpack.c.l.b16 %v1985
  %v2175 = vunpack.c.h.b16 %v1985
  %v2176 = vunpack.c.l.b16 %v1986
  %v2177 = vunpack.c.h.b16 %v1986
  %v2178 = vunpack.c.l.b16 %v1987
  %v2179 = vunpack.c.h.b16 %v1987
  %v2180 = vunpack.c.l.b16 %v1988
  %v2181 = vunpack.c.h.b16 %v1988
  %v2182 = vunpack.c.l.b16 %v1989
  %v2183 = vunpack.c.h.b16 %v1989
  %v2184 = vunpack.c.l.b16 %v1990
  %v2185 = vunpack.c.h.b16 %v1990
  %v2186 = vunpack.c.l.b16 %v1991
  %v2187 = vunpack.c.h.b16 %v1991
  %v2188 = vunpack.c.l.b16 %v1992
  %v2189 = vunpack.c.h.b16 %v1992
  %v2190 = vunpack.c.l.b16 %v1993
  %v2191 = vunpack.c.h.b16 %v1993
  %v2192 = vunpack.c.l.b16 %v1994
  %v2193 = vunpack.c.h.b16 %v1994
  %v2194 = vunpack.c.l.b16 %v1995
  %v2195 = vunpack.c.h.b16 %v1995
  %v2196 = vunpack.c.l.b16 %v1996
  %v2197 = vunpack.c.h.b16 %v1996
  %v2198 = vunpack.c.l.b16 %v1997
  %v2199 = vunpack.c.h.b16 %v1997
  %v2200 = vunpack.c.l.b16 %v1998
  %v2201 = vunpack.c.h.b16 %v1998
  %v2202 = vunpack.c.l.b16 %v1999
  %v2203 = vunpack.c.h.b16 %v1999
  %v2204 = vpack.c.b16 %v2078, %v2076
  %v2205 = vpack.c.b16 %v2079, %v2077
  %v2206 = vpack.c.b16 %v2082, %v2080
  %v2207 = vpack.c.b16 %v2083, %v2081
  %v2208 = vpack.c.b16 %v2086, %v2084
  %v2209 = vpack.c.b16 %v2087, %v2085
  %v2210 = vpack.c.b16 %v2090, %v2088
  %v2211 = vpack.c.b16 %v2091, %v2089
  %v2212 = vpack.c.b16 %v2094, %v2092
  %v2213 = vpack.c.b16 %v2095, %v2093
  %v2214 = vpack.c.b16 %v2098, %v2096
  %v2215 = vpack.c.b16 %v2099, %v2097
  %v2216 = vpack.c.b16 %v2102, %v2100
  %v2217 = vpack.c.b16 %v2103, %v2101
  %v2218 = vpack.c.b16 %v2106, %v2104
  %v2219 = vpack.c.b16 %v2107, %v2105
  %v2220 = vpack.c.b16 %v2110, %v2108
  %v2221 = vpack.c.b16 %v2111, %v2109
  %v2222 = vpack.c.b16 %v2114, %v2112
  %v2223 = vpack.c.b16 %v2115, %v2113
  %v2224 = vpack.c.b16 %v2118, %v2116
  %v2225 = vpack.c.b16 %v2119, %v2117
  %v2226 = vpack.c.b16 %v2122, %v2120
  %v2227 = vpack.c.b16 %v2123, %v2121
  %v2228 = vpack.c.b16 %v2126, %v2124
  %v2229 = vpack.c.b16 %v2127, %v2125
  %v2230 = vpack.c.b16 %v2130, %v2128
  %v2231 = vpack.c.b16 %v2131, %v2129
  %v2232 = vpack.c.b16 %v2134, %v2132
  %v2233 = vpack.c.b16 %v2135, %v2133
  %v2234 = vpack.c.b16 %v2138, %v2136
  %v2235 = vpack.c.b16 %v2139, %v2137
  %v2236 = vpack.c.b16 %v2142, %v2140
  %v2237 = vpack.c.b16 %v2143, %v2141
  %v2238 = vpack.c.b16 %v2146, %v2144
  %v2239 = vpack.c.b16 %v2147, %v2145
  %v2240 = vpack.c.b16 %v2150, %v2148
  %v2241 = vpack.c.b16 %v2151, %v2149
  %v2242 = vpack.c.b16 %v2154, %v2152
  %v2243 = vpack.c.b16 %v2155, %v2153
  %v2244 = vpack.c.b16 %v2158, %v2156
  %v2245 = vpack.c.b16 %v2159, %v2157
  %v2246 = vpack.c.b16 %v2162, %v2160
  %v2247 = vpack.c.b16 %v2163, %v2161
  %v2248 = vpack.c.b16 %v2166, %v2164
  %v2249 = vpack.c.b16 %v2167, %v2165
  %v2250 = vpack.c.b16 %v2170, %v2168
  %v2251 = vpack.c.b16 %v2171, %v2169
  %v2252 = vpack.c.b16 %v2174, %v2172
  %v2253 = vpack.c.b16 %v2175, %v2173
  %v2254 = vpack.c.b16 %v2178, %v2176
  %v2255 = vpack.c.b16 %v2179, %v2177
  %v2256 = vpack.c.b16 %v2182, %v2180
  %v2257 = vpack.c.b16 %v2183, %v2181
  %v2258 = vpack.c.b16 %v2186, %v2184
  %v2259 = vpack.c.b16 %v2187, %v2185
  %v2260 = vpack.c.b16 %v2190, %v2188
  %v2261 = vpack.c.b16 %v2191, %v2189
  %v2262 = vpack.c.b16 %v2194, %v2192
  %v2263 = vpack.c.b16 %v2195, %v2193
  %v2264 = vpack.c.b16 %v2198, %v2196
  %v2265 = vpack.c.b16 %v2199, %v2197
  %v2266 = vpack.c.b16 %v2202, %v2200
  %v2267 = vpack.c.b16 %v2203, %v2201
  %2332 = vmatprep.subr.bf16.mxu0 %v2205
  %2333 = vmatpush1.bf16.msra.mxu0 %v2204
  %2334 = vmatprep.subr.bf16.mxu0 %v2207
  %2335 = vmatpush1.bf16.msra.mxu0 %v2206
  %2336 = vmatprep.subr.bf16.mxu0 %v2209
  %2337 = vmatpush1.bf16.msra.mxu0 %v2208
  %2338 = vmatprep.subr.bf16.mxu0 %v2211
  %2339 = vmatpush1.bf16.msra.mxu0 %v2210
  %2340 = vmatprep.subr.bf16.mxu0 %v2213
  %2341 = vmatpush1.bf16.msra.mxu0 %v2212
  %2342 = vmatprep.subr.bf16.mxu0 %v2215
  %2343 = vmatpush1.bf16.msra.mxu0 %v2214
  %2344 = vmatprep.subr.bf16.mxu0 %v2217
  %2345 = vmatpush1.bf16.msra.mxu0 %v2216
  %2346 = vmatprep.subr.bf16.mxu0 %v2219
  %2347 = vmatpush1.bf16.msra.mxu0 %v2218
  %2348 = vmatprep.subr.bf16.mxu0 %v2221
  %2349 = vmatpush1.bf16.msra.mxu0 %v2220
  %2350 = vmatprep.subr.bf16.mxu0 %v2223
  %2351 = vmatpush1.bf16.msra.mxu0 %v2222
  %2352 = vmatprep.subr.bf16.mxu0 %v2225
  %2353 = vmatpush1.bf16.msra.mxu0 %v2224
  %2354 = vmatprep.subr.bf16.mxu0 %v2227
  %2355 = vmatpush1.bf16.msra.mxu0 %v2226
  %2356 = vmatprep.subr.bf16.mxu0 %v2229
  %2357 = vmatpush1.bf16.msra.mxu0 %v2228
  %2358 = vmatprep.subr.bf16.mxu0 %v2231
  %2359 = vmatpush1.bf16.msra.mxu0 %v2230
  %2360 = vmatprep.subr.bf16.mxu0 %v2233
  %2361 = vmatpush1.bf16.msra.mxu0 %v2232
  %2362 = vmatprep.subr.bf16.mxu0 %v2235
  %2363 = vmatpush1.bf16.msra.mxu0 %v2234
  %2364 = vmatprep.mubr.bf16.mxu0 %v1933
  %2365 = vmatmul.mubr.bf16.gmra.mrb[0].mxu0 %v1932
  %v2366 = vpop.f32.mrb[0].mxu0
  %v2367 = vadd.f32 %v2005, %v2366
  %v2368 = vpop.f32.mrb[0].mxu0
  %v2369 = vadd.f32 %v2009, %v2368
  %v2370 = vpop.f32.mrb[0].mxu0
  %v2371 = vpop.f32.mrb[0].mxu0
  %2372 = vdwg.mxu0
  %2373 = vmatprep.subr.bf16.mxu0 %v2237
  %2374 = vmatpush1.bf16.msra.mxu0 %v2236
  %2375 = vmatprep.subr.bf16.mxu0 %v2239
  %2376 = vmatpush1.bf16.msra.mxu0 %v2238
  %2377 = vmatprep.subr.bf16.mxu0 %v2241
  %2378 = vmatpush1.bf16.msra.mxu0 %v2240
  %2379 = vmatprep.subr.bf16.mxu0 %v2243
  %2380 = vmatpush1.bf16.msra.mxu0 %v2242
  %2381 = vmatprep.subr.bf16.mxu0 %v2245
  %2382 = vmatpush1.bf16.msra.mxu0 %v2244
  %2383 = vmatprep.subr.bf16.mxu0 %v2247
  %2384 = vmatpush1.bf16.msra.mxu0 %v2246
  %2385 = vmatprep.subr.bf16.mxu0 %v2249
  %2386 = vmatpush1.bf16.msra.mxu0 %v2248
  %2387 = vmatprep.subr.bf16.mxu0 %v2251
  %2388 = vmatpush1.bf16.msra.mxu0 %v2250
  %2389 = vmatprep.subr.bf16.mxu0 %v2253
  %2390 = vmatpush1.bf16.msra.mxu0 %v2252
  %2391 = vmatprep.subr.bf16.mxu0 %v2255
  %2392 = vmatpush1.bf16.msra.mxu0 %v2254
  %2393 = vmatprep.subr.bf16.mxu0 %v2257
  %2394 = vmatpush1.bf16.msra.mxu0 %v2256
  %2395 = vmatprep.subr.bf16.mxu0 %v2259
  %2396 = vmatpush1.bf16.msra.mxu0 %v2258
  %2397 = vmatprep.subr.bf16.mxu0 %v2261
  %2398 = vmatpush1.bf16.msra.mxu0 %v2260
  %2399 = vmatprep.subr.bf16.mxu0 %v2263
  %2400 = vmatpush1.bf16.msra.mxu0 %v2262
  %2401 = vmatprep.subr.bf16.mxu0 %v2265
  %2402 = vmatpush1.bf16.msra.mxu0 %v2264
  %2403 = vmatprep.subr.bf16.mxu0 %v2267
  %2404 = vmatpush1.bf16.msra.mxu0 %v2266
  %2405 = vmatprep.mubr.bf16.mxu0 %v1935
  %2406 = vmatmul.mubr.bf16.gmra.mrb[0].mxu0 %v1934
  %v2407 = vpop.f32.mrb[0].mxu0
  %v2408 = vadd.f32 %v2367, %v2407
  %v2409 = vpop.f32.mrb[0].mxu0
  %v2410 = vadd.f32 %v2369, %v2409
  %v2411 = vpop.f32.mrb[0].mxu0
  %v2412 = vpop.f32.mrb[0].mxu0
  %2413 = vdwg.mxu0
  %v2414 = vmax.f32 %v2408, 0.0
  %v2415 = vmax.f32 %v2410, 0.0
  %v2416 = vld [vmem:[%s5] sm:$0xff]
  %v2417 = vld [vmem:[%s5 + $0x8] sm:$0xff]
  %v2418 = vld [vmem:[%s5 + $0x10] sm:$0xff]
  %v2419 = vld [vmem:[%s5 + $0x18] sm:$0xff]
  %v2420 = vld [vmem:[%s5 + $0x20] sm:$0xff]
  %v2421 = vld [vmem:[%s5 + $0x28] sm:$0xff]
  %v2422 = vld [vmem:[%s5 + $0x30] sm:$0xff]
  %v2423 = vld [vmem:[%s5 + $0x38] sm:$0xff]
  %v2424 = vld [vmem:[%s5 + $0x40] sm:$0xff]
  %v2425 = vld [vmem:[%s5 + $0x48] sm:$0xff]
  %v2426 = vld [vmem:[%s5 + $0x50] sm:$0xff]
  %v2427 = vld [vmem:[%s5 + $0x58] sm:$0xff]
  %v2428 = vld [vmem:[%s5 + $0x60] sm:$0xff]
  %v2429 = vld [vmem:[%s5 + $0x68] sm:$0xff]
  %v2430 = vld [vmem:[%s5 + $0x70] sm:$0xff]
  %v2431 = vld [vmem:[%s5 + $0x78] sm:$0xff]
  %v2432 = vld [vmem:[%s5 + $0x80] sm:$0xff]
  %v2433 = vld [vmem:[%s5 + $0x88] sm:$0xff]
  %v2434 = vld [vmem:[%s5 + $0x90] sm:$0xff]
  %v2435 = vld [vmem:[%s5 + $0x98] sm:$0xff]
  %v2436 = vld [vmem:[%s5 + $0xa0] sm:$0xff]
  %v2437 = vld [vmem:[%s5 + $0xa8] sm:$0xff]
  %v2438 = vld [vmem:[%s5 + $0xb0] sm:$0xff]
  %v2439 = vld [vmem:[%s5 + $0xb8] sm:$0xff]
  %v2440 = vld [vmem:[%s5 + $0xc0] sm:$0xff]
  %v2441 = vld [vmem:[%s5 + $0xc8] sm:$0xff]
  %v2442 = vld [vmem:[%s5 + $0xd0] sm:$0xff]
  %v2443 = vld [vmem:[%s5 + $0xd8] sm:$0xff]
  %v2444 = vld [vmem:[%s5 + $0xe0] sm:$0xff]
  %v2445 = vld [vmem:[%s5 + $0xe8] sm:$0xff]
  %v2446 = vld [vmem:[%s5 + $0xf0] sm:$0xff]
  %v2447 = vld [vmem:[%s5 + $0xf8] sm:$0xff]
  %v2448 = vld [vmem:[%s6] sm:$0x1]
  %v2450 = vlaneseq
  %v2451 = vshrl.u32 %v2450, 7
  %v2452 = vsub.s32 0, %v2451
  %v2453 = vrot.slane %v2448, %v2452
  %2455 = vmatprep.subr.mxu0 0.0
  %2456 = vmatpush1.msra.mxu0 %v2416
  %2457 = vmatprep.subr.mxu0 0.0
  %2458 = vmatpush1.msra.mxu0 %v2417
  %2459 = vmatprep.subr.mxu0 0.0
  %2460 = vmatpush1.msra.mxu0 %v2418
  %2461 = vmatprep.subr.mxu0 0.0
  %2462 = vmatpush1.msra.mxu0 %v2419
  %2463 = vmatprep.subr.mxu0 0.0
  %2464 = vmatpush1.msra.mxu0 %v2420
  %2465 = vmatprep.subr.mxu0 0.0
  %2466 = vmatpush1.msra.mxu0 %v2421
  %2467 = vmatprep.subr.mxu0 0.0
  %2468 = vmatpush1.msra.mxu0 %v2422
  %2469 = vmatprep.subr.mxu0 0.0
  %2470 = vmatpush1.msra.mxu0 %v2423
  %2471 = vmatprep.subr.mxu0 0.0
  %2472 = vmatpush1.msra.mxu0 %v2424
  %2473 = vmatprep.subr.mxu0 0.0
  %2474 = vmatpush1.msra.mxu0 %v2425
  %2475 = vmatprep.subr.mxu0 0.0
  %2476 = vmatpush1.msra.mxu0 %v2426
  %2477 = vmatprep.subr.mxu0 0.0
  %2478 = vmatpush1.msra.mxu0 %v2427
  %2479 = vmatprep.subr.mxu0 0.0
  %2480 = vmatpush1.msra.mxu0 %v2428
  %2481 = vmatprep.subr.mxu0 0.0
  %2482 = vmatpush1.msra.mxu0 %v2429
  %2483 = vmatprep.subr.mxu0 0.0
  %2484 = vmatpush1.msra.mxu0 %v2430
  %2485 = vmatprep.subr.mxu0 0.0
  %2486 = vmatpush1.msra.mxu0 %v2431
  %2487 = vmatprep.subr.mxu0 0.0
  %2488 = vmatpush1.msra.mxu0 %v2432
  %2489 = vmatprep.subr.mxu0 0.0
  %2490 = vmatpush1.msra.mxu0 %v2433
  %2491 = vmatprep.subr.mxu0 0.0
  %2492 = vmatpush1.msra.mxu0 %v2434
  %2493 = vmatprep.subr.mxu0 0.0
  %2494 = vmatpush1.msra.mxu0 %v2435
  %2495 = vmatprep.subr.mxu0 0.0
  %2496 = vmatpush1.msra.mxu0 %v2436
  %2497 = vmatprep.subr.mxu0 0.0
  %2498 = vmatpush1.msra.mxu0 %v2437
  %2499 = vmatprep.subr.mxu0 0.0
  %2500 = vmatpush1.msra.mxu0 %v2438
  %2501 = vmatprep.subr.mxu0 0.0
  %2502 = vmatpush1.msra.mxu0 %v2439
  %2503 = vmatprep.subr.mxu0 0.0
  %2504 = vmatpush1.msra.mxu0 %v2440
  %2505 = vmatprep.subr.mxu0 0.0
  %2506 = vmatpush1.msra.mxu0 %v2441
  %2507 = vmatprep.subr.mxu0 0.0
  %2508 = vmatpush1.msra.mxu0 %v2442
  %2509 = vmatprep.subr.mxu0 0.0
  %2510 = vmatpush1.msra.mxu0 %v2443
  %2511 = vmatprep.subr.mxu0 0.0
  %2512 = vmatpush1.msra.mxu0 %v2444
  %2513 = vmatprep.subr.mxu0 0.0
  %2514 = vmatpush1.msra.mxu0 %v2445
  %2515 = vmatprep.subr.mxu0 0.0
  %2516 = vmatpush1.msra.mxu0 %v2446
  %2517 = vmatprep.subr.mxu0 0.0
  %2518 = vmatpush1.msra.mxu0 %v2447
  %2519 = vmatprep.mubr.f32.mxu0 %v2415
  %2520 = vmatmul.mubr.f32.gmra.mrb[0].mxu0 %v2414
  %v2521 = vpop.f32.mrb[0].mxu0
  %v2522 = vadd.f32 %v2453, %v2521
  %v2523 = vpop.f32.mrb[0].mxu0
  %2524 = vdwg.mxu0
  %vm2525 = vcmask 15360
  %v2526 = vsel %vm2525, %v2522, -inf
  %2527 = vmax.xlane.f32.xlu0 %v2526
  %v2528 = vpop.xlane.xlu0 %2527
  %v2529 = vsub.f32 %v2522, %v2528
  %v2530 = vmul.f32 %v2529, 1.442695
  %v2531 = vpow.pop %v2530
  %v2532 = vsel %vm2525, %v2531, 0.0
  %2533 = vadd.xlane.f32.xlu0 %v2532
  %v2534 = vpop.xlane.xlu0 %2533
  %v2535 = vlog2.pop %v2534
  %v2536 = vmul.f32 %v2535, 0.6931472
  %v2537 = vadd.f32 %v2528, %v2536
  %v2538 = vsub.f32 %v2522, %v2537
  %2539 = vst.msk [vmem:[%s7] sm:$0xff] %vm2525, %v2538
  // Predicated region
  $region30: #{pointnet_cls_forward.7} parent=0 // pred_check
    _
  $region31: #{pointnet_cls_forward.7} parent=0 // pred_check_branch
    %2541 = sbr.rel (0) target = $region33
  $region32: #{pointnet_cls_forward.7} parent=0 // pred_region
    _
  $region33: #{pointnet_cls_forward.7} parent=0 // pred_fallthru
    _
  // Predicated region
  $region34: #{pointnet_cls_forward.7} parent=0 // pred_check
    _
  $region35: #{pointnet_cls_forward.7} parent=0 // pred_check_branch
    %2543 = sbr.rel (0) target = $region37
  $region36: #{pointnet_cls_forward.7} parent=0 // pred_region
    _
  $region37: #{pointnet_cls_forward.7} parent=0 // pred_fallthru
    _

</llo_original>
